<compile_context>
chip_gen: v7x
topology: tpu7x:2x2x1
jax: 0.10.0
libtpu: 0.0.40
codegen_flags: <defaults>
</compile_context>

<pallas_src>
import functools

import jax
import jax.numpy as jnp
import numpy as np
from jax.experimental import pallas as pl
from jax.experimental.pallas import tpu as pltpu


_VMEM_SPEC = pl.BlockSpec(memory_space=pltpu.MemorySpace.VMEM)
GP = 128  # per-gate lane padding: one full vreg per gate block / hidden state


def _dot(a, b):
    # Default precision -> single-pass bf16 MXU matmul (review item #1).
    return jnp.dot(a, b, preferred_element_type=jnp.float32)


def _lstm_step(gates, c):
    """One LSTM cell update. gates: (1, 4*GP), gate-block order [i | f | o | g],
    each block exactly one vreg wide, so every slice below is vreg-aligned."""
    sig = jax.nn.sigmoid(gates[:, :3 * GP])            # [i | f | o] in one aligned slice
    g = jnp.tanh(gates[:, 3 * GP:])                    # g
    c = sig[:, GP:2 * GP] * c + sig[:, :GP] * g        # c = f*c + i*g
    h = sig[:, 2 * GP:3 * GP] * jnp.tanh(c)            # h = o*tanh(c)
    return h, c


# ----------------------------------------------------------------------------
# Fused Pallas kernel: enc_rnn1 + enc_rnn2 + dec_rnn1 + dec_rnn2 + Linear
# ----------------------------------------------------------------------------
def _fused_ae_kernel(x_ref,
                     wih1_ref, whh1_ref, b1_ref,     # enc_rnn1: in=n_feat, H=2E
                     wih2_ref, whh2_ref, b2_ref,     # enc_rnn2: in=2E,     H=E
                     wih3_ref, whh3_ref, b3_ref,     # dec_rnn1: in=E,      H=E
                     wih4_ref, whh4_ref, b4_ref,     # dec_rnn2: in=E,      H=2E
                     wout_ref, bout_ref,             # Linear:   2E -> n_feat(=1)
                     o_ref,
                     d2_scr):
    S = x_ref.shape[0]
    zero = jnp.zeros((1, GP), jnp.float32)

    # Hoist weight loads out of the unrolled loops.
    whh1 = whh1_ref[...]
    wih2 = wih2_ref[...]; whh2 = whh2_ref[...]; b2 = b2_ref[...]
    whh3 = whh3_ref[...]
    wih4 = wih4_ref[...]; whh4 = whh4_ref[...]; b4 = b4_ref[...]

    # ---- Encoder: enc_rnn1 and enc_rnn2 interleaved ------------------------------
    # enc_rnn1 input projection is rank-1 (K = n_features = 1): VPU broadcast multiply.
    xw1 = x_ref[...] * wih1_ref[...] + b1_ref[...]              # (S, 4*GP)

    h1, c1 = zero, zero
    h2, c2 = zero, zero
    for t in range(S):
        g1 = xw1[t:t + 1, :] + _dot(h1, whh1)
        h1, c1 = _lstm_step(g1, c1)
        # enc_rnn2 step t depends only on enc_rnn1 step t -> two chains in flight.
        g2 = _dot(h1, wih2) + _dot(h2, whh2) + b2
        h2, c2 = _lstm_step(g2, c2)
    z = h2                                                       # (1, GP), real [:E]

    # ---- Decoder: dec_rnn1 and dec_rnn2 interleaved ------------------------------
    # dec_rnn1 sees the same z at every timestep: its input projection is computed ONCE
    # (torch's repeat/reshape just broadcasts z over time for n_features == 1).
    xw3 = _dot(z, wih3_ref[...]) + b3_ref[...]                   # (1, 4*GP)

    h3, c3 = zero, zero
    h4, c4 = zero, zero
    for t in range(S):
        g3 = xw3 + _dot(h3, whh3)
        h3, c3 = _lstm_step(g3, c3)
        g4 = _dot(h3, wih4) + _dot(h4, whh4) + b4
        h4, c4 = _lstm_step(g4, c4)
        d2_scr[t:t + 1, :] = h4          # static row store; off the recurrence path

    # ---- Output Linear (2E -> 1): N=1 -> VPU multiply + XLU lane reduction --------
    o_ref[...] = (jnp.sum(d2_scr[...] * wout_ref[...], axis=-1, keepdims=True)
                  + bout_ref[...])


# ----------------------------------------------------------------------------
# One-time parameter preparation (out of the hot path)
# ----------------------------------------------------------------------------
def _reorder_gate_blocks(a, hidden):
    """Rows grouped [i, f, g, o] (PyTorch) -> [i, f, o, g]."""
    return jnp.concatenate(
        [a[:2 * hidden], a[3 * hidden:], a[2 * hidden:3 * hidden]], axis=0)


def _pad_gate_cols(a, hidden):
    """(R, 4H) with gate column-blocks [i,f,o,g] -> (R, 4*GP): each gate block is
    zero-padded to one full 128-lane vreg."""
    blocks = [a[:, k * hidden:(k + 1) * hidden] for k in range(4)]
    return jnp.concatenate(
        [jnp.pad(b, ((0, 0), (0, GP - hidden))) for b in blocks], axis=1)


def _pad_rows(a, rows):
    return jnp.pad(a, ((0, rows - a.shape[0]), (0, 0)))


def _prep_lstm(w_ih, w_hh, b_ih, b_hh, *, pad_input_rows):
    """Gate reorder [i,f,g,o]->[i,f,o,g], transpose, fold b_ih+b_hh, zero-pad each
    gate block to GP lanes.  Padded lanes stay exactly 0 through the recurrence
    (zero weights/bias + sigmoid(0)*0 and tanh(0) terms), so results are unchanged."""
    hidden = w_hh.shape[1]
    wih = _pad_gate_cols(
        jnp.transpose(_reorder_gate_blocks(w_ih, hidden)).astype(jnp.float32), hidden)
    whh = _pad_gate_cols(
        jnp.transpose(_reorder_gate_blocks(w_hh, hidden)).astype(jnp.float32), hidden)
    b = _pad_gate_cols(
        _reorder_gate_blocks((b_ih + b_hh).astype(jnp.float32), hidden).reshape(1, -1),
        hidden)
    if pad_input_rows:
        wih = _pad_rows(wih, GP)   # input is a GP-padded hidden state from another layer
    whh = _pad_rows(whh, GP)       # hidden state is carried GP-padded
    return wih, whh, b


def prepare_params(params):
    """Reorder/transpose/pad/cast once; reuse for every forward."""
    wih1, whh1, b1 = _prep_lstm(*params["enc_rnn1"], pad_input_rows=False)  # (1,4GP)
    wih2, whh2, b2 = _prep_lstm(*params["enc_rnn2"], pad_input_rows=True)
    wih3, whh3, b3 = _prep_lstm(*params["dec_rnn1"], pad_input_rows=True)
    wih4, whh4, b4 = _prep_lstm(*params["dec_rnn2"], pad_input_rows=True)
    w_out, b_out = params["dec_out"]
    wout = jnp.pad(w_out.astype(jnp.float32).reshape(1, -1),
                   ((0, 0), (0, GP - w_out.shape[1])))                      # (1, GP)
    bout = b_out.astype(jnp.float32).reshape(1, 1)
    return (wih1, whh1, b1, wih2, whh2, b2,
            wih3, whh3, b3, wih4, whh4, b4, wout, bout)


# ----------------------------------------------------------------------------
# Forward: one pallas_call for the whole autoencoder
# ----------------------------------------------------------------------------
def recurrent_autoencoder_forward(prepared, x, *, seq_len, n_features):
    # TODO(synk): decoder replication + rank-1 encoder projection assume n_features == 1
    # (same restriction as the torch repeat/reshape semantics of the original module).
    xe = x.reshape(seq_len, n_features).astype(jnp.float32)
    return pl.pallas_call(
        _fused_ae_kernel,
        out_shape=jax.ShapeDtypeStruct((seq_len, n_features), jnp.float32),
        in_specs=[_VMEM_SPEC] * 15,
        out_specs=_VMEM_SPEC,
        scratch_shapes=[pltpu.VMEM((seq_len, GP), jnp.float32)],   # dec_rnn2 rows
    )(xe, *prepared)


# ----------------------------------------------------------------------------
# Parameter init (deterministic, mimics PyTorch default uniform(-1/sqrt(H), ..))
# ----------------------------------------------------------------------------
def init_lstm_params(key, input_size, hidden_size):
    k = 1.0 / np.sqrt(hidden_size)
    ks = jax.random.split(key, 4)
    w_ih = jax.random.uniform(ks[0], (4 * hidden_size, input_size), jnp.float32, -k, k)
    w_hh = jax.random.uniform(ks[1], (4 * hidden_size, hidden_size), jnp.float32, -k, k)
    b_ih = jax.random.uniform(ks[2], (4 * hidden_size,), jnp.float32, -k, k)
    b_hh = jax.random.uniform(ks[3], (4 * hidden_size,), jnp.float32, -k, k)
    return (w_ih, w_hh, b_ih, b_hh)


def init_linear_params(key, in_features, out_features):
    k = 1.0 / np.sqrt(in_features)
    ks = jax.random.split(key, 2)
    w = jax.random.uniform(ks[0], (out_features, in_features), jnp.float32, -k, k)
    b = jax.random.uniform(ks[1], (out_features,), jnp.float32, -k, k)
    return (w, b)


def init_autoencoder_params(key, seq_len, n_features, embedding_dim):
    hidden = 2 * embedding_dim
    ks = jax.random.split(key, 5)
    return {
        "enc_rnn1": init_lstm_params(ks[0], n_features, hidden),
        "enc_rnn2": init_lstm_params(ks[1], hidden, embedding_dim),
        "dec_rnn1": init_lstm_params(ks[2], embedding_dim, embedding_dim),
        "dec_rnn2": init_lstm_params(ks[3], embedding_dim, hidden),
        "dec_out": init_linear_params(ks[4], hidden, n_features),
    }


# ----------------------------------------------------------------------------
# Pure-JAX reference (PyTorch gate order / layout)
# ----------------------------------------------------------------------------
def _lstm_ref(x, w_ih, w_hh, b_ih, b_hh):
    hidden = w_hh.shape[1]

    def step(carry, x_t):
        h, c = carry
        gates = jnp.dot(x_t, w_ih.T) + jnp.dot(h, w_hh.T) + b_ih + b_hh
        i = jax.nn.sigmoid(gates[0:hidden])
        f = jax.nn.sigmoid(gates[hidden:2 * hidden])
        g = jnp.tanh(gates[2 * hidden:3 * hidden])
        o = jax.nn.sigmoid(gates[3 * hidden:4 * hidden])
        c = f * c + i * g
        h = o * jnp.tanh(c)
        return (h, c), h

    (_, _), ys = jax.lax.scan(step, (jnp.zeros(hidden), jnp.zeros(hidden)), x)
    return ys


def _forward_ref(params, x, seq_len, n_features, embedding_dim):
    xe = x.reshape(seq_len, n_features)
    y1 = _lstm_ref(xe, *params["enc_rnn1"])
    y2 = _lstm_ref(y1, *params["enc_rnn2"])
    z = y2[-1:].reshape(n_features, embedding_dim)
    d = jnp.tile(z, (seq_len, n_features)).reshape(n_features, seq_len, embedding_dim)[0]
    d1 = _lstm_ref(d, *params["dec_rnn1"])
    d2 = _lstm_ref(d1, *params["dec_rnn2"])
    w, b = params["dec_out"]
    return jnp.dot(d2, w.T) + b


# ----------------------------------------------------------------------------
if __name__ == "__main__":
    seq_len, n_features, embedding_dim = 8, 1, 32

    key = jax.random.PRNGKey(0)
    k_param, k_x = jax.random.split(key)
    params = init_autoencoder_params(k_param, seq_len, n_features, embedding_dim)
    x = jax.random.normal(k_x, (seq_len, n_features), jnp.float32)

    # One-time parameter preparation (transpose / gate reorder / bias fold / pad).
    prepared = jax.block_until_ready(prepare_params(params))

    fwd = jax.jit(functools.partial(recurrent_autoencoder_forward,
                                    seq_len=seq_len, n_features=n_features))
    out = jax.block_until_ready(fwd(prepared, x))
    assert out.shape == (seq_len, n_features), out.shape

    ref = jax.block_until_ready(
        _forward_ref(params, x, seq_len, n_features, embedding_dim))
    # Both sides now use default (bf16-pass) matmul precision -> slightly looser check.
    np.testing.assert_allclose(np.asarray(out), np.asarray(ref), rtol=5e-2, atol=3e-2)

    print("KERNEL_OK")
</pallas_src>

<mosaic_0001>
module attributes {stable_mosaic.version = 11 : i64} {
  func.func @_fused_ae_kernel(%arg0: memref<8x1xf32, #tpu.memory_space<vmem>>, %arg1: memref<1x512xf32, #tpu.memory_space<vmem>>, %arg2: memref<128x512xf32, #tpu.memory_space<vmem>>, %arg3: memref<1x512xf32, #tpu.memory_space<vmem>>, %arg4: memref<128x512xf32, #tpu.memory_space<vmem>>, %arg5: memref<128x512xf32, #tpu.memory_space<vmem>>, %arg6: memref<1x512xf32, #tpu.memory_space<vmem>>, %arg7: memref<128x512xf32, #tpu.memory_space<vmem>>, %arg8: memref<128x512xf32, #tpu.memory_space<vmem>>, %arg9: memref<1x512xf32, #tpu.memory_space<vmem>>, %arg10: memref<128x512xf32, #tpu.memory_space<vmem>>, %arg11: memref<128x512xf32, #tpu.memory_space<vmem>>, %arg12: memref<1x512xf32, #tpu.memory_space<vmem>>, %arg13: memref<1x128xf32, #tpu.memory_space<vmem>>, %arg14: memref<1x1xf32, #tpu.memory_space<vmem>>, %arg15: memref<8x1xf32, #tpu.memory_space<vmem>>, %arg16: memref<8x128xf32, #tpu.memory_space<vmem>>) attributes {dimension_semantics = [], scalar_prefetch = 0 : i64, scratch_operands = 1 : i64, tpu.core_type = #tpu.core_type<tc>} {
    %cst = arith.constant 0.000000e+00 : f32
    %0 = vector.broadcast %cst : f32 to vector<1x128xf32>
    %c0 = arith.constant 0 : index
    %c0_0 = arith.constant 0 : index
    %1 = vector.load %arg2[%c0, %c0_0] : memref<128x512xf32, #tpu.memory_space<vmem>>, vector<128x512xf32>
    %c0_1 = arith.constant 0 : index
    %c0_2 = arith.constant 0 : index
    %2 = vector.load %arg4[%c0_1, %c0_2] : memref<128x512xf32, #tpu.memory_space<vmem>>, vector<128x512xf32>
    %c0_3 = arith.constant 0 : index
    %c0_4 = arith.constant 0 : index
    %3 = vector.load %arg5[%c0_3, %c0_4] : memref<128x512xf32, #tpu.memory_space<vmem>>, vector<128x512xf32>
    %c0_5 = arith.constant 0 : index
    %c0_6 = arith.constant 0 : index
    %4 = vector.load %arg6[%c0_5, %c0_6] : memref<1x512xf32, #tpu.memory_space<vmem>>, vector<1x512xf32>
    %c0_7 = arith.constant 0 : index
    %c0_8 = arith.constant 0 : index
    %5 = vector.load %arg8[%c0_7, %c0_8] : memref<128x512xf32, #tpu.memory_space<vmem>>, vector<128x512xf32>
    %c0_9 = arith.constant 0 : index
    %c0_10 = arith.constant 0 : index
    %6 = vector.load %arg10[%c0_9, %c0_10] : memref<128x512xf32, #tpu.memory_space<vmem>>, vector<128x512xf32>
    %c0_11 = arith.constant 0 : index
    %c0_12 = arith.constant 0 : index
    %7 = vector.load %arg11[%c0_11, %c0_12] : memref<128x512xf32, #tpu.memory_space<vmem>>, vector<128x512xf32>
    %c0_13 = arith.constant 0 : index
    %c0_14 = arith.constant 0 : index
    %8 = vector.load %arg12[%c0_13, %c0_14] : memref<1x512xf32, #tpu.memory_space<vmem>>, vector<1x512xf32>
    %c0_15 = arith.constant 0 : index
    %c0_16 = arith.constant 0 : index
    %9 = vector.load %arg0[%c0_15, %c0_16] : memref<8x1xf32, #tpu.memory_space<vmem>>, vector<8x1xf32>
    %c0_17 = arith.constant 0 : index
    %c0_18 = arith.constant 0 : index
    %10 = vector.load %arg1[%c0_17, %c0_18] : memref<1x512xf32, #tpu.memory_space<vmem>>, vector<1x512xf32>
    %11 = vector.broadcast %9 : vector<8x1xf32> to vector<8x512xf32>
    %12 = vector.broadcast %10 : vector<1x512xf32> to vector<8x512xf32>
    %13 = arith.mulf %11, %12 : vector<8x512xf32>
    %c0_19 = arith.constant 0 : index
    %c0_20 = arith.constant 0 : index
    %14 = vector.load %arg3[%c0_19, %c0_20] : memref<1x512xf32, #tpu.memory_space<vmem>>, vector<1x512xf32>
    %15 = vector.broadcast %14 : vector<1x512xf32> to vector<8x512xf32>
    %16 = arith.addf %13, %15 : vector<8x512xf32>
    %17 = vector.extract_strided_slice %16 {offsets = [0, 0], sizes = [1, 512], strides = [1, 1]} : vector<8x512xf32> to vector<1x512xf32>
    %cst_21 = arith.constant dense<0.000000e+00> : vector<1x512xf32>
    %18 = tpu.matmul %0, %1, %cst_21 {dimension_numbers = #tpu.dot_dimension_numbers<[1], [0], [0], [1], [0, 0, 1, 1], [], []>} : vector<1x128xf32>, vector<128x512xf32>, vector<1x512xf32> -> vector<1x512xf32>
    %19 = arith.addf %17, %18 : vector<1x512xf32>
    %20 = vector.extract_strided_slice %19 {offsets = [0, 0], sizes = [1, 384], strides = [1, 1]} : vector<1x512xf32> to vector<1x384xf32>
    %21 = arith.negf %20 : vector<1x384xf32>
    %22 = math.exp %21 : vector<1x384xf32>
    %cst_22 = arith.constant 1.000000e+00 : f32
    %23 = vector.broadcast %cst_22 : f32 to vector<1x384xf32>
    %24 = arith.addf %23, %22 : vector<1x384xf32>
    %25 = arith.divf %23, %24 : vector<1x384xf32>
    %26 = vector.extract_strided_slice %19 {offsets = [0, 384], sizes = [1, 128], strides = [1, 1]} : vector<1x512xf32> to vector<1x128xf32>
    %27 = math.tanh %26 : vector<1x128xf32>
    %28 = vector.extract_strided_slice %25 {offsets = [0, 128], sizes = [1, 128], strides = [1, 1]} : vector<1x384xf32> to vector<1x128xf32>
    %29 = arith.mulf %28, %0 : vector<1x128xf32>
    %30 = vector.extract_strided_slice %25 {offsets = [0, 0], sizes = [1, 128], strides = [1, 1]} : vector<1x384xf32> to vector<1x128xf32>
    %31 = arith.mulf %30, %27 : vector<1x128xf32>
    %32 = arith.addf %29, %31 : vector<1x128xf32>
    %33 = vector.extract_strided_slice %25 {offsets = [0, 256], sizes = [1, 128], strides = [1, 1]} : vector<1x384xf32> to vector<1x128xf32>
    %34 = math.tanh %32 : vector<1x128xf32>
    %35 = arith.mulf %33, %34 : vector<1x128xf32>
    %cst_23 = arith.constant dense<0.000000e+00> : vector<1x512xf32>
    %36 = tpu.matmul %35, %2, %cst_23 {dimension_numbers = #tpu.dot_dimension_numbers<[1], [0], [0], [1], [0, 0, 1, 1], [], []>} : vector<1x128xf32>, vector<128x512xf32>, vector<1x512xf32> -> vector<1x512xf32>
    %cst_24 = arith.constant dense<0.000000e+00> : vector<1x512xf32>
    %37 = tpu.matmul %0, %3, %cst_24 {dimension_numbers = #tpu.dot_dimension_numbers<[1], [0], [0], [1], [0, 0, 1, 1], [], []>} : vector<1x128xf32>, vector<128x512xf32>, vector<1x512xf32> -> vector<1x512xf32>
    %38 = arith.addf %36, %37 : vector<1x512xf32>
    %39 = arith.addf %38, %4 : vector<1x512xf32>
    %40 = vector.extract_strided_slice %39 {offsets = [0, 0], sizes = [1, 384], strides = [1, 1]} : vector<1x512xf32> to vector<1x384xf32>
    %41 = arith.negf %40 : vector<1x384xf32>
    %42 = math.exp %41 : vector<1x384xf32>
    %cst_25 = arith.constant 1.000000e+00 : f32
    %43 = vector.broadcast %cst_25 : f32 to vector<1x384xf32>
    %44 = arith.addf %43, %42 : vector<1x384xf32>
    %45 = arith.divf %43, %44 : vector<1x384xf32>
    %46 = vector.extract_strided_slice %39 {offsets = [0, 384], sizes = [1, 128], strides = [1, 1]} : vector<1x512xf32> to vector<1x128xf32>
    %47 = math.tanh %46 : vector<1x128xf32>
    %48 = vector.extract_strided_slice %45 {offsets = [0, 128], sizes = [1, 128], strides = [1, 1]} : vector<1x384xf32> to vector<1x128xf32>
    %49 = arith.mulf %48, %0 : vector<1x128xf32>
    %50 = vector.extract_strided_slice %45 {offsets = [0, 0], sizes = [1, 128], strides = [1, 1]} : vector<1x384xf32> to vector<1x128xf32>
    %51 = arith.mulf %50, %47 : vector<1x128xf32>
    %52 = arith.addf %49, %51 : vector<1x128xf32>
    %53 = vector.extract_strided_slice %45 {offsets = [0, 256], sizes = [1, 128], strides = [1, 1]} : vector<1x384xf32> to vector<1x128xf32>
    %54 = math.tanh %52 : vector<1x128xf32>
    %55 = arith.mulf %53, %54 : vector<1x128xf32>
    %56 = vector.extract_strided_slice %16 {offsets = [1, 0], sizes = [1, 512], strides = [1, 1]} : vector<8x512xf32> to vector<1x512xf32>
    %cst_26 = arith.constant dense<0.000000e+00> : vector<1x512xf32>
    %57 = tpu.matmul %35, %1, %cst_26 {dimension_numbers = #tpu.dot_dimension_numbers<[1], [0], [0], [1], [0, 0, 1, 1], [], []>} : vector<1x128xf32>, vector<128x512xf32>, vector<1x512xf32> -> vector<1x512xf32>
    %58 = arith.addf %56, %57 : vector<1x512xf32>
    %59 = vector.extract_strided_slice %58 {offsets = [0, 0], sizes = [1, 384], strides = [1, 1]} : vector<1x512xf32> to vector<1x384xf32>
    %60 = arith.negf %59 : vector<1x384xf32>
    %61 = math.exp %60 : vector<1x384xf32>
    %cst_27 = arith.constant 1.000000e+00 : f32
    %62 = vector.broadcast %cst_27 : f32 to vector<1x384xf32>
    %63 = arith.addf %62, %61 : vector<1x384xf32>
    %64 = arith.divf %62, %63 : vector<1x384xf32>
    %65 = vector.extract_strided_slice %58 {offsets = [0, 384], sizes = [1, 128], strides = [1, 1]} : vector<1x512xf32> to vector<1x128xf32>
    %66 = math.tanh %65 : vector<1x128xf32>
    %67 = vector.extract_strided_slice %64 {offsets = [0, 128], sizes = [1, 128], strides = [1, 1]} : vector<1x384xf32> to vector<1x128xf32>
    %68 = arith.mulf %67, %32 : vector<1x128xf32>
    %69 = vector.extract_strided_slice %64 {offsets = [0, 0], sizes = [1, 128], strides = [1, 1]} : vector<1x384xf32> to vector<1x128xf32>
    %70 = arith.mulf %69, %66 : vector<1x128xf32>
    %71 = arith.addf %68, %70 : vector<1x128xf32>
    %72 = vector.extract_strided_slice %64 {offsets = [0, 256], sizes = [1, 128], strides = [1, 1]} : vector<1x384xf32> to vector<1x128xf32>
    %73 = math.tanh %71 : vector<1x128xf32>
    %74 = arith.mulf %72, %73 : vector<1x128xf32>
    %cst_28 = arith.constant dense<0.000000e+00> : vector<1x512xf32>
    %75 = tpu.matmul %74, %2, %cst_28 {dimension_numbers = #tpu.dot_dimension_numbers<[1], [0], [0], [1], [0, 0, 1, 1], [], []>} : vector<1x128xf32>, vector<128x512xf32>, vector<1x512xf32> -> vector<1x512xf32>
    %cst_29 = arith.constant dense<0.000000e+00> : vector<1x512xf32>
    %76 = tpu.matmul %55, %3, %cst_29 {dimension_numbers = #tpu.dot_dimension_numbers<[1], [0], [0], [1], [0, 0, 1, 1], [], []>} : vector<1x128xf32>, vector<128x512xf32>, vector<1x512xf32> -> vector<1x512xf32>
    %77 = arith.addf %75, %76 : vector<1x512xf32>
    %78 = arith.addf %77, %4 : vector<1x512xf32>
    %79 = vector.extract_strided_slice %78 {offsets = [0, 0], sizes = [1, 384], strides = [1, 1]} : vector<1x512xf32> to vector<1x384xf32>
    %80 = arith.negf %79 : vector<1x384xf32>
    %81 = math.exp %80 : vector<1x384xf32>
    %cst_30 = arith.constant 1.000000e+00 : f32
    %82 = vector.broadcast %cst_30 : f32 to vector<1x384xf32>
    %83 = arith.addf %82, %81 : vector<1x384xf32>
    %84 = arith.divf %82, %83 : vector<1x384xf32>
    %85 = vector.extract_strided_slice %78 {offsets = [0, 384], sizes = [1, 128], strides = [1, 1]} : vector<1x512xf32> to vector<1x128xf32>
    %86 = math.tanh %85 : vector<1x128xf32>
    %87 = vector.extract_strided_slice %84 {offsets = [0, 128], sizes = [1, 128], strides = [1, 1]} : vector<1x384xf32> to vector<1x128xf32>
    %88 = arith.mulf %87, %52 : vector<1x128xf32>
    %89 = vector.extract_strided_slice %84 {offsets = [0, 0], sizes = [1, 128], strides = [1, 1]} : vector<1x384xf32> to vector<1x128xf32>
    %90 = arith.mulf %89, %86 : vector<1x128xf32>
    %91 = arith.addf %88, %90 : vector<1x128xf32>
    %92 = vector.extract_strided_slice %84 {offsets = [0, 256], sizes = [1, 128], strides = [1, 1]} : vector<1x384xf32> to vector<1x128xf32>
    %93 = math.tanh %91 : vector<1x128xf32>
    %94 = arith.mulf %92, %93 : vector<1x128xf32>
    %95 = vector.extract_strided_slice %16 {offsets = [2, 0], sizes = [1, 512], strides = [1, 1]} : vector<8x512xf32> to vector<1x512xf32>
    %cst_31 = arith.constant dense<0.000000e+00> : vector<1x512xf32>
    %96 = tpu.matmul %74, %1, %cst_31 {dimension_numbers = #tpu.dot_dimension_numbers<[1], [0], [0], [1], [0, 0, 1, 1], [], []>} : vector<1x128xf32>, vector<128x512xf32>, vector<1x512xf32> -> vector<1x512xf32>
    %97 = arith.addf %95, %96 : vector<1x512xf32>
    %98 = vector.extract_strided_slice %97 {offsets = [0, 0], sizes = [1, 384], strides = [1, 1]} : vector<1x512xf32> to vector<1x384xf32>
    %99 = arith.negf %98 : vector<1x384xf32>
    %100 = math.exp %99 : vector<1x384xf32>
    %cst_32 = arith.constant 1.000000e+00 : f32
    %101 = vector.broadcast %cst_32 : f32 to vector<1x384xf32>
    %102 = arith.addf %101, %100 : vector<1x384xf32>
    %103 = arith.divf %101, %102 : vector<1x384xf32>
    %104 = vector.extract_strided_slice %97 {offsets = [0, 384], sizes = [1, 128], strides = [1, 1]} : vector<1x512xf32> to vector<1x128xf32>
    %105 = math.tanh %104 : vector<1x128xf32>
    %106 = vector.extract_strided_slice %103 {offsets = [0, 128], sizes = [1, 128], strides = [1, 1]} : vector<1x384xf32> to vector<1x128xf32>
    %107 = arith.mulf %106, %71 : vector<1x128xf32>
    %108 = vector.extract_strided_slice %103 {offsets = [0, 0], sizes = [1, 128], strides = [1, 1]} : vector<1x384xf32> to vector<1x128xf32>
    %109 = arith.mulf %108, %105 : vector<1x128xf32>
    %110 = arith.addf %107, %109 : vector<1x128xf32>
    %111 = vector.extract_strided_slice %103 {offsets = [0, 256], sizes = [1, 128], strides = [1, 1]} : vector<1x384xf32> to vector<1x128xf32>
    %112 = math.tanh %110 : vector<1x128xf32>
    %113 = arith.mulf %111, %112 : vector<1x128xf32>
    %cst_33 = arith.constant dense<0.000000e+00> : vector<1x512xf32>
    %114 = tpu.matmul %113, %2, %cst_33 {dimension_numbers = #tpu.dot_dimension_numbers<[1], [0], [0], [1], [0, 0, 1, 1], [], []>} : vector<1x128xf32>, vector<128x512xf32>, vector<1x512xf32> -> vector<1x512xf32>
    %cst_34 = arith.constant dense<0.000000e+00> : vector<1x512xf32>
    %115 = tpu.matmul %94, %3, %cst_34 {dimension_numbers = #tpu.dot_dimension_numbers<[1], [0], [0], [1], [0, 0, 1, 1], [], []>} : vector<1x128xf32>, vector<128x512xf32>, vector<1x512xf32> -> vector<1x512xf32>
    %116 = arith.addf %114, %115 : vector<1x512xf32>
    %117 = arith.addf %116, %4 : vector<1x512xf32>
    %118 = vector.extract_strided_slice %117 {offsets = [0, 0], sizes = [1, 384], strides = [1, 1]} : vector<1x512xf32> to vector<1x384xf32>
    %119 = arith.negf %118 : vector<1x384xf32>
    %120 = math.exp %119 : vector<1x384xf32>
    %cst_35 = arith.constant 1.000000e+00 : f32
    %121 = vector.broadcast %cst_35 : f32 to vector<1x384xf32>
    %122 = arith.addf %121, %120 : vector<1x384xf32>
    %123 = arith.divf %121, %122 : vector<1x384xf32>
    %124 = vector.extract_strided_slice %117 {offsets = [0, 384], sizes = [1, 128], strides = [1, 1]} : vector<1x512xf32> to vector<1x128xf32>
    %125 = math.tanh %124 : vector<1x128xf32>
    %126 = vector.extract_strided_slice %123 {offsets = [0, 128], sizes = [1, 128], strides = [1, 1]} : vector<1x384xf32> to vector<1x128xf32>
    %127 = arith.mulf %126, %91 : vector<1x128xf32>
    %128 = vector.extract_strided_slice %123 {offsets = [0, 0], sizes = [1, 128], strides = [1, 1]} : vector<1x384xf32> to vector<1x128xf32>
    %129 = arith.mulf %128, %125 : vector<1x128xf32>
    %130 = arith.addf %127, %129 : vector<1x128xf32>
    %131 = vector.extract_strided_slice %123 {offsets = [0, 256], sizes = [1, 128], strides = [1, 1]} : vector<1x384xf32> to vector<1x128xf32>
    %132 = math.tanh %130 : vector<1x128xf32>
    %133 = arith.mulf %131, %132 : vector<1x128xf32>
    %134 = vector.extract_strided_slice %16 {offsets = [3, 0], sizes = [1, 512], strides = [1, 1]} : vector<8x512xf32> to vector<1x512xf32>
    %cst_36 = arith.constant dense<0.000000e+00> : vector<1x512xf32>
    %135 = tpu.matmul %113, %1, %cst_36 {dimension_numbers = #tpu.dot_dimension_numbers<[1], [0], [0], [1], [0, 0, 1, 1], [], []>} : vector<1x128xf32>, vector<128x512xf32>, vector<1x512xf32> -> vector<1x512xf32>
    %136 = arith.addf %134, %135 : vector<1x512xf32>
    %137 = vector.extract_strided_slice %136 {offsets = [0, 0], sizes = [1, 384], strides = [1, 1]} : vector<1x512xf32> to vector<1x384xf32>
    %138 = arith.negf %137 : vector<1x384xf32>
    %139 = math.exp %138 : vector<1x384xf32>
    %cst_37 = arith.constant 1.000000e+00 : f32
    %140 = vector.broadcast %cst_37 : f32 to vector<1x384xf32>
    %141 = arith.addf %140, %139 : vector<1x384xf32>
    %142 = arith.divf %140, %141 : vector<1x384xf32>
    %143 = vector.extract_strided_slice %136 {offsets = [0, 384], sizes = [1, 128], strides = [1, 1]} : vector<1x512xf32> to vector<1x128xf32>
    %144 = math.tanh %143 : vector<1x128xf32>
    %145 = vector.extract_strided_slice %142 {offsets = [0, 128], sizes = [1, 128], strides = [1, 1]} : vector<1x384xf32> to vector<1x128xf32>
    %146 = arith.mulf %145, %110 : vector<1x128xf32>
    %147 = vector.extract_strided_slice %142 {offsets = [0, 0], sizes = [1, 128], strides = [1, 1]} : vector<1x384xf32> to vector<1x128xf32>
    %148 = arith.mulf %147, %144 : vector<1x128xf32>
    %149 = arith.addf %146, %148 : vector<1x128xf32>
    %150 = vector.extract_strided_slice %142 {offsets = [0, 256], sizes = [1, 128], strides = [1, 1]} : vector<1x384xf32> to vector<1x128xf32>
    %151 = math.tanh %149 : vector<1x128xf32>
    %152 = arith.mulf %150, %151 : vector<1x128xf32>
    %cst_38 = arith.constant dense<0.000000e+00> : vector<1x512xf32>
    %153 = tpu.matmul %152, %2, %cst_38 {dimension_numbers = #tpu.dot_dimension_numbers<[1], [0], [0], [1], [0, 0, 1, 1], [], []>} : vector<1x128xf32>, vector<128x512xf32>, vector<1x512xf32> -> vector<1x512xf32>
    %cst_39 = arith.constant dense<0.000000e+00> : vector<1x512xf32>
    %154 = tpu.matmul %133, %3, %cst_39 {dimension_numbers = #tpu.dot_dimension_numbers<[1], [0], [0], [1], [0, 0, 1, 1], [], []>} : vector<1x128xf32>, vector<128x512xf32>, vector<1x512xf32> -> vector<1x512xf32>
    %155 = arith.addf %153, %154 : vector<1x512xf32>
    %156 = arith.addf %155, %4 : vector<1x512xf32>
    %157 = vector.extract_strided_slice %156 {offsets = [0, 0], sizes = [1, 384], strides = [1, 1]} : vector<1x512xf32> to vector<1x384xf32>
    %158 = arith.negf %157 : vector<1x384xf32>
    %159 = math.exp %158 : vector<1x384xf32>
    %cst_40 = arith.constant 1.000000e+00 : f32
    %160 = vector.broadcast %cst_40 : f32 to vector<1x384xf32>
    %161 = arith.addf %160, %159 : vector<1x384xf32>
    %162 = arith.divf %160, %161 : vector<1x384xf32>
    %163 = vector.extract_strided_slice %156 {offsets = [0, 384], sizes = [1, 128], strides = [1, 1]} : vector<1x512xf32> to vector<1x128xf32>
    %164 = math.tanh %163 : vector<1x128xf32>
    %165 = vector.extract_strided_slice %162 {offsets = [0, 128], sizes = [1, 128], strides = [1, 1]} : vector<1x384xf32> to vector<1x128xf32>
    %166 = arith.mulf %165, %130 : vector<1x128xf32>
    %167 = vector.extract_strided_slice %162 {offsets = [0, 0], sizes = [1, 128], strides = [1, 1]} : vector<1x384xf32> to vector<1x128xf32>
    %168 = arith.mulf %167, %164 : vector<1x128xf32>
    %169 = arith.addf %166, %168 : vector<1x128xf32>
    %170 = vector.extract_strided_slice %162 {offsets = [0, 256], sizes = [1, 128], strides = [1, 1]} : vector<1x384xf32> to vector<1x128xf32>
    %171 = math.tanh %169 : vector<1x128xf32>
    %172 = arith.mulf %170, %171 : vector<1x128xf32>
    %173 = vector.extract_strided_slice %16 {offsets = [4, 0], sizes = [1, 512], strides = [1, 1]} : vector<8x512xf32> to vector<1x512xf32>
    %cst_41 = arith.constant dense<0.000000e+00> : vector<1x512xf32>
    %174 = tpu.matmul %152, %1, %cst_41 {dimension_numbers = #tpu.dot_dimension_numbers<[1], [0], [0], [1], [0, 0, 1, 1], [], []>} : vector<1x128xf32>, vector<128x512xf32>, vector<1x512xf32> -> vector<1x512xf32>
    %175 = arith.addf %173, %174 : vector<1x512xf32>
    %176 = vector.extract_strided_slice %175 {offsets = [0, 0], sizes = [1, 384], strides = [1, 1]} : vector<1x512xf32> to vector<1x384xf32>
    %177 = arith.negf %176 : vector<1x384xf32>
    %178 = math.exp %177 : vector<1x384xf32>
    %cst_42 = arith.constant 1.000000e+00 : f32
    %179 = vector.broadcast %cst_42 : f32 to vector<1x384xf32>
    %180 = arith.addf %179, %178 : vector<1x384xf32>
    %181 = arith.divf %179, %180 : vector<1x384xf32>
    %182 = vector.extract_strided_slice %175 {offsets = [0, 384], sizes = [1, 128], strides = [1, 1]} : vector<1x512xf32> to vector<1x128xf32>
    %183 = math.tanh %182 : vector<1x128xf32>
    %184 = vector.extract_strided_slice %181 {offsets = [0, 128], sizes = [1, 128], strides = [1, 1]} : vector<1x384xf32> to vector<1x128xf32>
    %185 = arith.mulf %184, %149 : vector<1x128xf32>
    %186 = vector.extract_strided_slice %181 {offsets = [0, 0], sizes = [1, 128], strides = [1, 1]} : vector<1x384xf32> to vector<1x128xf32>
    %187 = arith.mulf %186, %183 : vector<1x128xf32>
    %188 = arith.addf %185, %187 : vector<1x128xf32>
    %189 = vector.extract_strided_slice %181 {offsets = [0, 256], sizes = [1, 128], strides = [1, 1]} : vector<1x384xf32> to vector<1x128xf32>
    %190 = math.tanh %188 : vector<1x128xf32>
    %191 = arith.mulf %189, %190 : vector<1x128xf32>
    %cst_43 = arith.constant dense<0.000000e+00> : vector<1x512xf32>
    %192 = tpu.matmul %191, %2, %cst_43 {dimension_numbers = #tpu.dot_dimension_numbers<[1], [0], [0], [1], [0, 0, 1, 1], [], []>} : vector<1x128xf32>, vector<128x512xf32>, vector<1x512xf32> -> vector<1x512xf32>
    %cst_44 = arith.constant dense<0.000000e+00> : vector<1x512xf32>
    %193 = tpu.matmul %172, %3, %cst_44 {dimension_numbers = #tpu.dot_dimension_numbers<[1], [0], [0], [1], [0, 0, 1, 1], [], []>} : vector<1x128xf32>, vector<128x512xf32>, vector<1x512xf32> -> vector<1x512xf32>
    %194 = arith.addf %192, %193 : vector<1x512xf32>
    %195 = arith.addf %194, %4 : vector<1x512xf32>
    %196 = vector.extract_strided_slice %195 {offsets = [0, 0], sizes = [1, 384], strides = [1, 1]} : vector<1x512xf32> to vector<1x384xf32>
    %197 = arith.negf %196 : vector<1x384xf32>
    %198 = math.exp %197 : vector<1x384xf32>
    %cst_45 = arith.constant 1.000000e+00 : f32
    %199 = vector.broadcast %cst_45 : f32 to vector<1x384xf32>
    %200 = arith.addf %199, %198 : vector<1x384xf32>
    %201 = arith.divf %199, %200 : vector<1x384xf32>
    %202 = vector.extract_strided_slice %195 {offsets = [0, 384], sizes = [1, 128], strides = [1, 1]} : vector<1x512xf32> to vector<1x128xf32>
    %203 = math.tanh %202 : vector<1x128xf32>
    %204 = vector.extract_strided_slice %201 {offsets = [0, 128], sizes = [1, 128], strides = [1, 1]} : vector<1x384xf32> to vector<1x128xf32>
    %205 = arith.mulf %204, %169 : vector<1x128xf32>
    %206 = vector.extract_strided_slice %201 {offsets = [0, 0], sizes = [1, 128], strides = [1, 1]} : vector<1x384xf32> to vector<1x128xf32>
    %207 = arith.mulf %206, %203 : vector<1x128xf32>
    %208 = arith.addf %205, %207 : vector<1x128xf32>
    %209 = vector.extract_strided_slice %201 {offsets = [0, 256], sizes = [1, 128], strides = [1, 1]} : vector<1x384xf32> to vector<1x128xf32>
    %210 = math.tanh %208 : vector<1x128xf32>
    %211 = arith.mulf %209, %210 : vector<1x128xf32>
    %212 = vector.extract_strided_slice %16 {offsets = [5, 0], sizes = [1, 512], strides = [1, 1]} : vector<8x512xf32> to vector<1x512xf32>
    %cst_46 = arith.constant dense<0.000000e+00> : vector<1x512xf32>
    %213 = tpu.matmul %191, %1, %cst_46 {dimension_numbers = #tpu.dot_dimension_numbers<[1], [0], [0], [1], [0, 0, 1, 1], [], []>} : vector<1x128xf32>, vector<128x512xf32>, vector<1x512xf32> -> vector<1x512xf32>
    %214 = arith.addf %212, %213 : vector<1x512xf32>
    %215 = vector.extract_strided_slice %214 {offsets = [0, 0], sizes = [1, 384], strides = [1, 1]} : vector<1x512xf32> to vector<1x384xf32>
    %216 = arith.negf %215 : vector<1x384xf32>
    %217 = math.exp %216 : vector<1x384xf32>
    %cst_47 = arith.constant 1.000000e+00 : f32
    %218 = vector.broadcast %cst_47 : f32 to vector<1x384xf32>
    %219 = arith.addf %218, %217 : vector<1x384xf32>
    %220 = arith.divf %218, %219 : vector<1x384xf32>
    %221 = vector.extract_strided_slice %214 {offsets = [0, 384], sizes = [1, 128], strides = [1, 1]} : vector<1x512xf32> to vector<1x128xf32>
    %222 = math.tanh %221 : vector<1x128xf32>
    %223 = vector.extract_strided_slice %220 {offsets = [0, 128], sizes = [1, 128], strides = [1, 1]} : vector<1x384xf32> to vector<1x128xf32>
    %224 = arith.mulf %223, %188 : vector<1x128xf32>
    %225 = vector.extract_strided_slice %220 {offsets = [0, 0], sizes = [1, 128], strides = [1, 1]} : vector<1x384xf32> to vector<1x128xf32>
    %226 = arith.mulf %225, %222 : vector<1x128xf32>
    %227 = arith.addf %224, %226 : vector<1x128xf32>
    %228 = vector.extract_strided_slice %220 {offsets = [0, 256], sizes = [1, 128], strides = [1, 1]} : vector<1x384xf32> to vector<1x128xf32>
    %229 = math.tanh %227 : vector<1x128xf32>
    %230 = arith.mulf %228, %229 : vector<1x128xf32>
    %cst_48 = arith.constant dense<0.000000e+00> : vector<1x512xf32>
    %231 = tpu.matmul %230, %2, %cst_48 {dimension_numbers = #tpu.dot_dimension_numbers<[1], [0], [0], [1], [0, 0, 1, 1], [], []>} : vector<1x128xf32>, vector<128x512xf32>, vector<1x512xf32> -> vector<1x512xf32>
    %cst_49 = arith.constant dense<0.000000e+00> : vector<1x512xf32>
    %232 = tpu.matmul %211, %3, %cst_49 {dimension_numbers = #tpu.dot_dimension_numbers<[1], [0], [0], [1], [0, 0, 1, 1], [], []>} : vector<1x128xf32>, vector<128x512xf32>, vector<1x512xf32> -> vector<1x512xf32>
    %233 = arith.addf %231, %232 : vector<1x512xf32>
    %234 = arith.addf %233, %4 : vector<1x512xf32>
    %235 = vector.extract_strided_slice %234 {offsets = [0, 0], sizes = [1, 384], strides = [1, 1]} : vector<1x512xf32> to vector<1x384xf32>
    %236 = arith.negf %235 : vector<1x384xf32>
    %237 = math.exp %236 : vector<1x384xf32>
    %cst_50 = arith.constant 1.000000e+00 : f32
    %238 = vector.broadcast %cst_50 : f32 to vector<1x384xf32>
    %239 = arith.addf %238, %237 : vector<1x384xf32>
    %240 = arith.divf %238, %239 : vector<1x384xf32>
    %241 = vector.extract_strided_slice %234 {offsets = [0, 384], sizes = [1, 128], strides = [1, 1]} : vector<1x512xf32> to vector<1x128xf32>
    %242 = math.tanh %241 : vector<1x128xf32>
    %243 = vector.extract_strided_slice %240 {offsets = [0, 128], sizes = [1, 128], strides = [1, 1]} : vector<1x384xf32> to vector<1x128xf32>
    %244 = arith.mulf %243, %208 : vector<1x128xf32>
    %245 = vector.extract_strided_slice %240 {offsets = [0, 0], sizes = [1, 128], strides = [1, 1]} : vector<1x384xf32> to vector<1x128xf32>
    %246 = arith.mulf %245, %242 : vector<1x128xf32>
    %247 = arith.addf %244, %246 : vector<1x128xf32>
    %248 = vector.extract_strided_slice %240 {offsets = [0, 256], sizes = [1, 128], strides = [1, 1]} : vector<1x384xf32> to vector<1x128xf32>
    %249 = math.tanh %247 : vector<1x128xf32>
    %250 = arith.mulf %248, %249 : vector<1x128xf32>
    %251 = vector.extract_strided_slice %16 {offsets = [6, 0], sizes = [1, 512], strides = [1, 1]} : vector<8x512xf32> to vector<1x512xf32>
    %cst_51 = arith.constant dense<0.000000e+00> : vector<1x512xf32>
    %252 = tpu.matmul %230, %1, %cst_51 {dimension_numbers = #tpu.dot_dimension_numbers<[1], [0], [0], [1], [0, 0, 1, 1], [], []>} : vector<1x128xf32>, vector<128x512xf32>, vector<1x512xf32> -> vector<1x512xf32>
    %253 = arith.addf %251, %252 : vector<1x512xf32>
    %254 = vector.extract_strided_slice %253 {offsets = [0, 0], sizes = [1, 384], strides = [1, 1]} : vector<1x512xf32> to vector<1x384xf32>
    %255 = arith.negf %254 : vector<1x384xf32>
    %256 = math.exp %255 : vector<1x384xf32>
    %cst_52 = arith.constant 1.000000e+00 : f32
    %257 = vector.broadcast %cst_52 : f32 to vector<1x384xf32>
    %258 = arith.addf %257, %256 : vector<1x384xf32>
    %259 = arith.divf %257, %258 : vector<1x384xf32>
    %260 = vector.extract_strided_slice %253 {offsets = [0, 384], sizes = [1, 128], strides = [1, 1]} : vector<1x512xf32> to vector<1x128xf32>
    %261 = math.tanh %260 : vector<1x128xf32>
    %262 = vector.extract_strided_slice %259 {offsets = [0, 128], sizes = [1, 128], strides = [1, 1]} : vector<1x384xf32> to vector<1x128xf32>
    %263 = arith.mulf %262, %227 : vector<1x128xf32>
    %264 = vector.extract_strided_slice %259 {offsets = [0, 0], sizes = [1, 128], strides = [1, 1]} : vector<1x384xf32> to vector<1x128xf32>
    %265 = arith.mulf %264, %261 : vector<1x128xf32>
    %266 = arith.addf %263, %265 : vector<1x128xf32>
    %267 = vector.extract_strided_slice %259 {offsets = [0, 256], sizes = [1, 128], strides = [1, 1]} : vector<1x384xf32> to vector<1x128xf32>
    %268 = math.tanh %266 : vector<1x128xf32>
    %269 = arith.mulf %267, %268 : vector<1x128xf32>
    %cst_53 = arith.constant dense<0.000000e+00> : vector<1x512xf32>
    %270 = tpu.matmul %269, %2, %cst_53 {dimension_numbers = #tpu.dot_dimension_numbers<[1], [0], [0], [1], [0, 0, 1, 1], [], []>} : vector<1x128xf32>, vector<128x512xf32>, vector<1x512xf32> -> vector<1x512xf32>
    %cst_54 = arith.constant dense<0.000000e+00> : vector<1x512xf32>
    %271 = tpu.matmul %250, %3, %cst_54 {dimension_numbers = #tpu.dot_dimension_numbers<[1], [0], [0], [1], [0, 0, 1, 1], [], []>} : vector<1x128xf32>, vector<128x512xf32>, vector<1x512xf32> -> vector<1x512xf32>
    %272 = arith.addf %270, %271 : vector<1x512xf32>
    %273 = arith.addf %272, %4 : vector<1x512xf32>
    %274 = vector.extract_strided_slice %273 {offsets = [0, 0], sizes = [1, 384], strides = [1, 1]} : vector<1x512xf32> to vector<1x384xf32>
    %275 = arith.negf %274 : vector<1x384xf32>
    %276 = math.exp %275 : vector<1x384xf32>
    %cst_55 = arith.constant 1.000000e+00 : f32
    %277 = vector.broadcast %cst_55 : f32 to vector<1x384xf32>
    %278 = arith.addf %277, %276 : vector<1x384xf32>
    %279 = arith.divf %277, %278 : vector<1x384xf32>
    %280 = vector.extract_strided_slice %273 {offsets = [0, 384], sizes = [1, 128], strides = [1, 1]} : vector<1x512xf32> to vector<1x128xf32>
    %281 = math.tanh %280 : vector<1x128xf32>
    %282 = vector.extract_strided_slice %279 {offsets = [0, 128], sizes = [1, 128], strides = [1, 1]} : vector<1x384xf32> to vector<1x128xf32>
    %283 = arith.mulf %282, %247 : vector<1x128xf32>
    %284 = vector.extract_strided_slice %279 {offsets = [0, 0], sizes = [1, 128], strides = [1, 1]} : vector<1x384xf32> to vector<1x128xf32>
    %285 = arith.mulf %284, %281 : vector<1x128xf32>
    %286 = arith.addf %283, %285 : vector<1x128xf32>
    %287 = vector.extract_strided_slice %279 {offsets = [0, 256], sizes = [1, 128], strides = [1, 1]} : vector<1x384xf32> to vector<1x128xf32>
    %288 = math.tanh %286 : vector<1x128xf32>
    %289 = arith.mulf %287, %288 : vector<1x128xf32>
    %290 = vector.extract_strided_slice %16 {offsets = [7, 0], sizes = [1, 512], strides = [1, 1]} : vector<8x512xf32> to vector<1x512xf32>
    %cst_56 = arith.constant dense<0.000000e+00> : vector<1x512xf32>
    %291 = tpu.matmul %269, %1, %cst_56 {dimension_numbers = #tpu.dot_dimension_numbers<[1], [0], [0], [1], [0, 0, 1, 1], [], []>} : vector<1x128xf32>, vector<128x512xf32>, vector<1x512xf32> -> vector<1x512xf32>
    %292 = arith.addf %290, %291 : vector<1x512xf32>
    %293 = vector.extract_strided_slice %292 {offsets = [0, 0], sizes = [1, 384], strides = [1, 1]} : vector<1x512xf32> to vector<1x384xf32>
    %294 = arith.negf %293 : vector<1x384xf32>
    %295 = math.exp %294 : vector<1x384xf32>
    %cst_57 = arith.constant 1.000000e+00 : f32
    %296 = vector.broadcast %cst_57 : f32 to vector<1x384xf32>
    %297 = arith.addf %296, %295 : vector<1x384xf32>
    %298 = arith.divf %296, %297 : vector<1x384xf32>
    %299 = vector.extract_strided_slice %292 {offsets = [0, 384], sizes = [1, 128], strides = [1, 1]} : vector<1x512xf32> to vector<1x128xf32>
    %300 = math.tanh %299 : vector<1x128xf32>
    %301 = vector.extract_strided_slice %298 {offsets = [0, 128], sizes = [1, 128], strides = [1, 1]} : vector<1x384xf32> to vector<1x128xf32>
    %302 = arith.mulf %301, %266 : vector<1x128xf32>
    %303 = vector.extract_strided_slice %298 {offsets = [0, 0], sizes = [1, 128], strides = [1, 1]} : vector<1x384xf32> to vector<1x128xf32>
    %304 = arith.mulf %303, %300 : vector<1x128xf32>
    %305 = arith.addf %302, %304 : vector<1x128xf32>
    %306 = vector.extract_strided_slice %298 {offsets = [0, 256], sizes = [1, 128], strides = [1, 1]} : vector<1x384xf32> to vector<1x128xf32>
    %307 = math.tanh %305 : vector<1x128xf32>
    %308 = arith.mulf %306, %307 : vector<1x128xf32>
    %cst_58 = arith.constant dense<0.000000e+00> : vector<1x512xf32>
    %309 = tpu.matmul %308, %2, %cst_58 {dimension_numbers = #tpu.dot_dimension_numbers<[1], [0], [0], [1], [0, 0, 1, 1], [], []>} : vector<1x128xf32>, vector<128x512xf32>, vector<1x512xf32> -> vector<1x512xf32>
    %cst_59 = arith.constant dense<0.000000e+00> : vector<1x512xf32>
    %310 = tpu.matmul %289, %3, %cst_59 {dimension_numbers = #tpu.dot_dimension_numbers<[1], [0], [0], [1], [0, 0, 1, 1], [], []>} : vector<1x128xf32>, vector<128x512xf32>, vector<1x512xf32> -> vector<1x512xf32>
    %311 = arith.addf %309, %310 : vector<1x512xf32>
    %312 = arith.addf %311, %4 : vector<1x512xf32>
    %313 = vector.extract_strided_slice %312 {offsets = [0, 0], sizes = [1, 384], strides = [1, 1]} : vector<1x512xf32> to vector<1x384xf32>
    %314 = arith.negf %313 : vector<1x384xf32>
    %315 = math.exp %314 : vector<1x384xf32>
    %cst_60 = arith.constant 1.000000e+00 : f32
    %316 = vector.broadcast %cst_60 : f32 to vector<1x384xf32>
    %317 = arith.addf %316, %315 : vector<1x384xf32>
    %318 = arith.divf %316, %317 : vector<1x384xf32>
    %319 = vector.extract_strided_slice %312 {offsets = [0, 384], sizes = [1, 128], strides = [1, 1]} : vector<1x512xf32> to vector<1x128xf32>
    %320 = math.tanh %319 : vector<1x128xf32>
    %321 = vector.extract_strided_slice %318 {offsets = [0, 128], sizes = [1, 128], strides = [1, 1]} : vector<1x384xf32> to vector<1x128xf32>
    %322 = arith.mulf %321, %286 : vector<1x128xf32>
    %323 = vector.extract_strided_slice %318 {offsets = [0, 0], sizes = [1, 128], strides = [1, 1]} : vector<1x384xf32> to vector<1x128xf32>
    %324 = arith.mulf %323, %320 : vector<1x128xf32>
    %325 = arith.addf %322, %324 : vector<1x128xf32>
    %326 = vector.extract_strided_slice %318 {offsets = [0, 256], sizes = [1, 128], strides = [1, 1]} : vector<1x384xf32> to vector<1x128xf32>
    %327 = math.tanh %325 : vector<1x128xf32>
    %328 = arith.mulf %326, %327 : vector<1x128xf32>
    %c0_61 = arith.constant 0 : index
    %c0_62 = arith.constant 0 : index
    %329 = vector.load %arg7[%c0_61, %c0_62] : memref<128x512xf32, #tpu.memory_space<vmem>>, vector<128x512xf32>
    %cst_63 = arith.constant dense<0.000000e+00> : vector<1x512xf32>
    %330 = tpu.matmul %328, %329, %cst_63 {dimension_numbers = #tpu.dot_dimension_numbers<[1], [0], [0], [1], [0, 0, 1, 1], [], []>} : vector<1x128xf32>, vector<128x512xf32>, vector<1x512xf32> -> vector<1x512xf32>
    %c0_64 = arith.constant 0 : index
    %c0_65 = arith.constant 0 : index
    %331 = vector.load %arg9[%c0_64, %c0_65] : memref<1x512xf32, #tpu.memory_space<vmem>>, vector<1x512xf32>
    %332 = arith.addf %330, %331 : vector<1x512xf32>
    %cst_66 = arith.constant dense<0.000000e+00> : vector<1x512xf32>
    %333 = tpu.matmul %0, %5, %cst_66 {dimension_numbers = #tpu.dot_dimension_numbers<[1], [0], [0], [1], [0, 0, 1, 1], [], []>} : vector<1x128xf32>, vector<128x512xf32>, vector<1x512xf32> -> vector<1x512xf32>
    %334 = arith.addf %332, %333 : vector<1x512xf32>
    %335 = vector.extract_strided_slice %334 {offsets = [0, 0], sizes = [1, 384], strides = [1, 1]} : vector<1x512xf32> to vector<1x384xf32>
    %336 = arith.negf %335 : vector<1x384xf32>
    %337 = math.exp %336 : vector<1x384xf32>
    %cst_67 = arith.constant 1.000000e+00 : f32
    %338 = vector.broadcast %cst_67 : f32 to vector<1x384xf32>
    %339 = arith.addf %338, %337 : vector<1x384xf32>
    %340 = arith.divf %338, %339 : vector<1x384xf32>
    %341 = vector.extract_strided_slice %334 {offsets = [0, 384], sizes = [1, 128], strides = [1, 1]} : vector<1x512xf32> to vector<1x128xf32>
    %342 = math.tanh %341 : vector<1x128xf32>
    %343 = vector.extract_strided_slice %340 {offsets = [0, 128], sizes = [1, 128], strides = [1, 1]} : vector<1x384xf32> to vector<1x128xf32>
    %344 = arith.mulf %343, %0 : vector<1x128xf32>
    %345 = vector.extract_strided_slice %340 {offsets = [0, 0], sizes = [1, 128], strides = [1, 1]} : vector<1x384xf32> to vector<1x128xf32>
    %346 = arith.mulf %345, %342 : vector<1x128xf32>
    %347 = arith.addf %344, %346 : vector<1x128xf32>
    %348 = vector.extract_strided_slice %340 {offsets = [0, 256], sizes = [1, 128], strides = [1, 1]} : vector<1x384xf32> to vector<1x128xf32>
    %349 = math.tanh %347 : vector<1x128xf32>
    %350 = arith.mulf %348, %349 : vector<1x128xf32>
    %cst_68 = arith.constant dense<0.000000e+00> : vector<1x512xf32>
    %351 = tpu.matmul %350, %6, %cst_68 {dimension_numbers = #tpu.dot_dimension_numbers<[1], [0], [0], [1], [0, 0, 1, 1], [], []>} : vector<1x128xf32>, vector<128x512xf32>, vector<1x512xf32> -> vector<1x512xf32>
    %cst_69 = arith.constant dense<0.000000e+00> : vector<1x512xf32>
    %352 = tpu.matmul %0, %7, %cst_69 {dimension_numbers = #tpu.dot_dimension_numbers<[1], [0], [0], [1], [0, 0, 1, 1], [], []>} : vector<1x128xf32>, vector<128x512xf32>, vector<1x512xf32> -> vector<1x512xf32>
    %353 = arith.addf %351, %352 : vector<1x512xf32>
    %354 = arith.addf %353, %8 : vector<1x512xf32>
    %355 = vector.extract_strided_slice %354 {offsets = [0, 0], sizes = [1, 384], strides = [1, 1]} : vector<1x512xf32> to vector<1x384xf32>
    %356 = arith.negf %355 : vector<1x384xf32>
    %357 = math.exp %356 : vector<1x384xf32>
    %cst_70 = arith.constant 1.000000e+00 : f32
    %358 = vector.broadcast %cst_70 : f32 to vector<1x384xf32>
    %359 = arith.addf %358, %357 : vector<1x384xf32>
    %360 = arith.divf %358, %359 : vector<1x384xf32>
    %361 = vector.extract_strided_slice %354 {offsets = [0, 384], sizes = [1, 128], strides = [1, 1]} : vector<1x512xf32> to vector<1x128xf32>
    %362 = math.tanh %361 : vector<1x128xf32>
    %363 = vector.extract_strided_slice %360 {offsets = [0, 128], sizes = [1, 128], strides = [1, 1]} : vector<1x384xf32> to vector<1x128xf32>
    %364 = arith.mulf %363, %0 : vector<1x128xf32>
    %365 = vector.extract_strided_slice %360 {offsets = [0, 0], sizes = [1, 128], strides = [1, 1]} : vector<1x384xf32> to vector<1x128xf32>
    %366 = arith.mulf %365, %362 : vector<1x128xf32>
    %367 = arith.addf %364, %366 : vector<1x128xf32>
    %368 = vector.extract_strided_slice %360 {offsets = [0, 256], sizes = [1, 128], strides = [1, 1]} : vector<1x384xf32> to vector<1x128xf32>
    %369 = math.tanh %367 : vector<1x128xf32>
    %370 = arith.mulf %368, %369 : vector<1x128xf32>
    %c0_71 = arith.constant 0 : index
    %c0_72 = arith.constant 0 : index
    %371 = vector.load %arg16[%c0_71, %c0_72] : memref<8x128xf32, #tpu.memory_space<vmem>>, vector<1x128xf32>
    tpu.vector_store %arg16[%c0_71, %c0_72], %370 {strides = array<i32>} : memref<8x128xf32, #tpu.memory_space<vmem>>, vector<1x128xf32>,
    %cst_73 = arith.constant dense<0.000000e+00> : vector<1x512xf32>
    %372 = tpu.matmul %350, %5, %cst_73 {dimension_numbers = #tpu.dot_dimension_numbers<[1], [0], [0], [1], [0, 0, 1, 1], [], []>} : vector<1x128xf32>, vector<128x512xf32>, vector<1x512xf32> -> vector<1x512xf32>
    %373 = arith.addf %332, %372 : vector<1x512xf32>
    %374 = vector.extract_strided_slice %373 {offsets = [0, 0], sizes = [1, 384], strides = [1, 1]} : vector<1x512xf32> to vector<1x384xf32>
    %375 = arith.negf %374 : vector<1x384xf32>
    %376 = math.exp %375 : vector<1x384xf32>
    %cst_74 = arith.constant 1.000000e+00 : f32
    %377 = vector.broadcast %cst_74 : f32 to vector<1x384xf32>
    %378 = arith.addf %377, %376 : vector<1x384xf32>
    %379 = arith.divf %377, %378 : vector<1x384xf32>
    %380 = vector.extract_strided_slice %373 {offsets = [0, 384], sizes = [1, 128], strides = [1, 1]} : vector<1x512xf32> to vector<1x128xf32>
    %381 = math.tanh %380 : vector<1x128xf32>
    %382 = vector.extract_strided_slice %379 {offsets = [0, 128], sizes = [1, 128], strides = [1, 1]} : vector<1x384xf32> to vector<1x128xf32>
    %383 = arith.mulf %382, %347 : vector<1x128xf32>
    %384 = vector.extract_strided_slice %379 {offsets = [0, 0], sizes = [1, 128], strides = [1, 1]} : vector<1x384xf32> to vector<1x128xf32>
    %385 = arith.mulf %384, %381 : vector<1x128xf32>
    %386 = arith.addf %383, %385 : vector<1x128xf32>
    %387 = vector.extract_strided_slice %379 {offsets = [0, 256], sizes = [1, 128], strides = [1, 1]} : vector<1x384xf32> to vector<1x128xf32>
    %388 = math.tanh %386 : vector<1x128xf32>
    %389 = arith.mulf %387, %388 : vector<1x128xf32>
    %cst_75 = arith.constant dense<0.000000e+00> : vector<1x512xf32>
    %390 = tpu.matmul %389, %6, %cst_75 {dimension_numbers = #tpu.dot_dimension_numbers<[1], [0], [0], [1], [0, 0, 1, 1], [], []>} : vector<1x128xf32>, vector<128x512xf32>, vector<1x512xf32> -> vector<1x512xf32>
    %cst_76 = arith.constant dense<0.000000e+00> : vector<1x512xf32>
    %391 = tpu.matmul %370, %7, %cst_76 {dimension_numbers = #tpu.dot_dimension_numbers<[1], [0], [0], [1], [0, 0, 1, 1], [], []>} : vector<1x128xf32>, vector<128x512xf32>, vector<1x512xf32> -> vector<1x512xf32>
    %392 = arith.addf %390, %391 : vector<1x512xf32>
    %393 = arith.addf %392, %8 : vector<1x512xf32>
    %394 = vector.extract_strided_slice %393 {offsets = [0, 0], sizes = [1, 384], strides = [1, 1]} : vector<1x512xf32> to vector<1x384xf32>
    %395 = arith.negf %394 : vector<1x384xf32>
    %396 = math.exp %395 : vector<1x384xf32>
    %cst_77 = arith.constant 1.000000e+00 : f32
    %397 = vector.broadcast %cst_77 : f32 to vector<1x384xf32>
    %398 = arith.addf %397, %396 : vector<1x384xf32>
    %399 = arith.divf %397, %398 : vector<1x384xf32>
    %400 = vector.extract_strided_slice %393 {offsets = [0, 384], sizes = [1, 128], strides = [1, 1]} : vector<1x512xf32> to vector<1x128xf32>
    %401 = math.tanh %400 : vector<1x128xf32>
    %402 = vector.extract_strided_slice %399 {offsets = [0, 128], sizes = [1, 128], strides = [1, 1]} : vector<1x384xf32> to vector<1x128xf32>
    %403 = arith.mulf %402, %367 : vector<1x128xf32>
    %404 = vector.extract_strided_slice %399 {offsets = [0, 0], sizes = [1, 128], strides = [1, 1]} : vector<1x384xf32> to vector<1x128xf32>
    %405 = arith.mulf %404, %401 : vector<1x128xf32>
    %406 = arith.addf %403, %405 : vector<1x128xf32>
    %407 = vector.extract_strided_slice %399 {offsets = [0, 256], sizes = [1, 128], strides = [1, 1]} : vector<1x384xf32> to vector<1x128xf32>
    %408 = math.tanh %406 : vector<1x128xf32>
    %409 = arith.mulf %407, %408 : vector<1x128xf32>
    %c1 = arith.constant 1 : index
    %c0_78 = arith.constant 0 : index
    %410 = vector.load %arg16[%c1, %c0_78] : memref<8x128xf32, #tpu.memory_space<vmem>>, vector<1x128xf32>
    tpu.vector_store %arg16[%c1, %c0_78], %409 {strides = array<i32>} : memref<8x128xf32, #tpu.memory_space<vmem>>, vector<1x128xf32>,
    %cst_79 = arith.constant dense<0.000000e+00> : vector<1x512xf32>
    %411 = tpu.matmul %389, %5, %cst_79 {dimension_numbers = #tpu.dot_dimension_numbers<[1], [0], [0], [1], [0, 0, 1, 1], [], []>} : vector<1x128xf32>, vector<128x512xf32>, vector<1x512xf32> -> vector<1x512xf32>
    %412 = arith.addf %332, %411 : vector<1x512xf32>
    %413 = vector.extract_strided_slice %412 {offsets = [0, 0], sizes = [1, 384], strides = [1, 1]} : vector<1x512xf32> to vector<1x384xf32>
    %414 = arith.negf %413 : vector<1x384xf32>
    %415 = math.exp %414 : vector<1x384xf32>
    %cst_80 = arith.constant 1.000000e+00 : f32
    %416 = vector.broadcast %cst_80 : f32 to vector<1x384xf32>
    %417 = arith.addf %416, %415 : vector<1x384xf32>
    %418 = arith.divf %416, %417 : vector<1x384xf32>
    %419 = vector.extract_strided_slice %412 {offsets = [0, 384], sizes = [1, 128], strides = [1, 1]} : vector<1x512xf32> to vector<1x128xf32>
    %420 = math.tanh %419 : vector<1x128xf32>
    %421 = vector.extract_strided_slice %418 {offsets = [0, 128], sizes = [1, 128], strides = [1, 1]} : vector<1x384xf32> to vector<1x128xf32>
    %422 = arith.mulf %421, %386 : vector<1x128xf32>
    %423 = vector.extract_strided_slice %418 {offsets = [0, 0], sizes = [1, 128], strides = [1, 1]} : vector<1x384xf32> to vector<1x128xf32>
    %424 = arith.mulf %423, %420 : vector<1x128xf32>
    %425 = arith.addf %422, %424 : vector<1x128xf32>
    %426 = vector.extract_strided_slice %418 {offsets = [0, 256], sizes = [1, 128], strides = [1, 1]} : vector<1x384xf32> to vector<1x128xf32>
    %427 = math.tanh %425 : vector<1x128xf32>
    %428 = arith.mulf %426, %427 : vector<1x128xf32>
    %cst_81 = arith.constant dense<0.000000e+00> : vector<1x512xf32>
    %429 = tpu.matmul %428, %6, %cst_81 {dimension_numbers = #tpu.dot_dimension_numbers<[1], [0], [0], [1], [0, 0, 1, 1], [], []>} : vector<1x128xf32>, vector<128x512xf32>, vector<1x512xf32> -> vector<1x512xf32>
    %cst_82 = arith.constant dense<0.000000e+00> : vector<1x512xf32>
    %430 = tpu.matmul %409, %7, %cst_82 {dimension_numbers = #tpu.dot_dimension_numbers<[1], [0], [0], [1], [0, 0, 1, 1], [], []>} : vector<1x128xf32>, vector<128x512xf32>, vector<1x512xf32> -> vector<1x512xf32>
    %431 = arith.addf %429, %430 : vector<1x512xf32>
    %432 = arith.addf %431, %8 : vector<1x512xf32>
    %433 = vector.extract_strided_slice %432 {offsets = [0, 0], sizes = [1, 384], strides = [1, 1]} : vector<1x512xf32> to vector<1x384xf32>
    %434 = arith.negf %433 : vector<1x384xf32>
    %435 = math.exp %434 : vector<1x384xf32>
    %cst_83 = arith.constant 1.000000e+00 : f32
    %436 = vector.broadcast %cst_83 : f32 to vector<1x384xf32>
    %437 = arith.addf %436, %435 : vector<1x384xf32>
    %438 = arith.divf %436, %437 : vector<1x384xf32>
    %439 = vector.extract_strided_slice %432 {offsets = [0, 384], sizes = [1, 128], strides = [1, 1]} : vector<1x512xf32> to vector<1x128xf32>
    %440 = math.tanh %439 : vector<1x128xf32>
    %441 = vector.extract_strided_slice %438 {offsets = [0, 128], sizes = [1, 128], strides = [1, 1]} : vector<1x384xf32> to vector<1x128xf32>
    %442 = arith.mulf %441, %406 : vector<1x128xf32>
    %443 = vector.extract_strided_slice %438 {offsets = [0, 0], sizes = [1, 128], strides = [1, 1]} : vector<1x384xf32> to vector<1x128xf32>
    %444 = arith.mulf %443, %440 : vector<1x128xf32>
    %445 = arith.addf %442, %444 : vector<1x128xf32>
    %446 = vector.extract_strided_slice %438 {offsets = [0, 256], sizes = [1, 128], strides = [1, 1]} : vector<1x384xf32> to vector<1x128xf32>
    %447 = math.tanh %445 : vector<1x128xf32>
    %448 = arith.mulf %446, %447 : vector<1x128xf32>
    %c2 = arith.constant 2 : index
    %c0_84 = arith.constant 0 : index
    %449 = vector.load %arg16[%c2, %c0_84] : memref<8x128xf32, #tpu.memory_space<vmem>>, vector<1x128xf32>
    tpu.vector_store %arg16[%c2, %c0_84], %448 {strides = array<i32>} : memref<8x128xf32, #tpu.memory_space<vmem>>, vector<1x128xf32>,
    %cst_85 = arith.constant dense<0.000000e+00> : vector<1x512xf32>
    %450 = tpu.matmul %428, %5, %cst_85 {dimension_numbers = #tpu.dot_dimension_numbers<[1], [0], [0], [1], [0, 0, 1, 1], [], []>} : vector<1x128xf32>, vector<128x512xf32>, vector<1x512xf32> -> vector<1x512xf32>
    %451 = arith.addf %332, %450 : vector<1x512xf32>
    %452 = vector.extract_strided_slice %451 {offsets = [0, 0], sizes = [1, 384], strides = [1, 1]} : vector<1x512xf32> to vector<1x384xf32>
    %453 = arith.negf %452 : vector<1x384xf32>
    %454 = math.exp %453 : vector<1x384xf32>
    %cst_86 = arith.constant 1.000000e+00 : f32
    %455 = vector.broadcast %cst_86 : f32 to vector<1x384xf32>
    %456 = arith.addf %455, %454 : vector<1x384xf32>
    %457 = arith.divf %455, %456 : vector<1x384xf32>
    %458 = vector.extract_strided_slice %451 {offsets = [0, 384], sizes = [1, 128], strides = [1, 1]} : vector<1x512xf32> to vector<1x128xf32>
    %459 = math.tanh %458 : vector<1x128xf32>
    %460 = vector.extract_strided_slice %457 {offsets = [0, 128], sizes = [1, 128], strides = [1, 1]} : vector<1x384xf32> to vector<1x128xf32>
    %461 = arith.mulf %460, %425 : vector<1x128xf32>
    %462 = vector.extract_strided_slice %457 {offsets = [0, 0], sizes = [1, 128], strides = [1, 1]} : vector<1x384xf32> to vector<1x128xf32>
    %463 = arith.mulf %462, %459 : vector<1x128xf32>
    %464 = arith.addf %461, %463 : vector<1x128xf32>
    %465 = vector.extract_strided_slice %457 {offsets = [0, 256], sizes = [1, 128], strides = [1, 1]} : vector<1x384xf32> to vector<1x128xf32>
    %466 = math.tanh %464 : vector<1x128xf32>
    %467 = arith.mulf %465, %466 : vector<1x128xf32>
    %cst_87 = arith.constant dense<0.000000e+00> : vector<1x512xf32>
    %468 = tpu.matmul %467, %6, %cst_87 {dimension_numbers = #tpu.dot_dimension_numbers<[1], [0], [0], [1], [0, 0, 1, 1], [], []>} : vector<1x128xf32>, vector<128x512xf32>, vector<1x512xf32> -> vector<1x512xf32>
    %cst_88 = arith.constant dense<0.000000e+00> : vector<1x512xf32>
    %469 = tpu.matmul %448, %7, %cst_88 {dimension_numbers = #tpu.dot_dimension_numbers<[1], [0], [0], [1], [0, 0, 1, 1], [], []>} : vector<1x128xf32>, vector<128x512xf32>, vector<1x512xf32> -> vector<1x512xf32>
    %470 = arith.addf %468, %469 : vector<1x512xf32>
    %471 = arith.addf %470, %8 : vector<1x512xf32>
    %472 = vector.extract_strided_slice %471 {offsets = [0, 0], sizes = [1, 384], strides = [1, 1]} : vector<1x512xf32> to vector<1x384xf32>
    %473 = arith.negf %472 : vector<1x384xf32>
    %474 = math.exp %473 : vector<1x384xf32>
    %cst_89 = arith.constant 1.000000e+00 : f32
    %475 = vector.broadcast %cst_89 : f32 to vector<1x384xf32>
    %476 = arith.addf %475, %474 : vector<1x384xf32>
    %477 = arith.divf %475, %476 : vector<1x384xf32>
    %478 = vector.extract_strided_slice %471 {offsets = [0, 384], sizes = [1, 128], strides = [1, 1]} : vector<1x512xf32> to vector<1x128xf32>
    %479 = math.tanh %478 : vector<1x128xf32>
    %480 = vector.extract_strided_slice %477 {offsets = [0, 128], sizes = [1, 128], strides = [1, 1]} : vector<1x384xf32> to vector<1x128xf32>
    %481 = arith.mulf %480, %445 : vector<1x128xf32>
    %482 = vector.extract_strided_slice %477 {offsets = [0, 0], sizes = [1, 128], strides = [1, 1]} : vector<1x384xf32> to vector<1x128xf32>
    %483 = arith.mulf %482, %479 : vector<1x128xf32>
    %484 = arith.addf %481, %483 : vector<1x128xf32>
    %485 = vector.extract_strided_slice %477 {offsets = [0, 256], sizes = [1, 128], strides = [1, 1]} : vector<1x384xf32> to vector<1x128xf32>
    %486 = math.tanh %484 : vector<1x128xf32>
    %487 = arith.mulf %485, %486 : vector<1x128xf32>
    %c3 = arith.constant 3 : index
    %c0_90 = arith.constant 0 : index
    %488 = vector.load %arg16[%c3, %c0_90] : memref<8x128xf32, #tpu.memory_space<vmem>>, vector<1x128xf32>
    tpu.vector_store %arg16[%c3, %c0_90], %487 {strides = array<i32>} : memref<8x128xf32, #tpu.memory_space<vmem>>, vector<1x128xf32>,
    %cst_91 = arith.constant dense<0.000000e+00> : vector<1x512xf32>
    %489 = tpu.matmul %467, %5, %cst_91 {dimension_numbers = #tpu.dot_dimension_numbers<[1], [0], [0], [1], [0, 0, 1, 1], [], []>} : vector<1x128xf32>, vector<128x512xf32>, vector<1x512xf32> -> vector<1x512xf32>
    %490 = arith.addf %332, %489 : vector<1x512xf32>
    %491 = vector.extract_strided_slice %490 {offsets = [0, 0], sizes = [1, 384], strides = [1, 1]} : vector<1x512xf32> to vector<1x384xf32>
    %492 = arith.negf %491 : vector<1x384xf32>
    %493 = math.exp %492 : vector<1x384xf32>
    %cst_92 = arith.constant 1.000000e+00 : f32
    %494 = vector.broadcast %cst_92 : f32 to vector<1x384xf32>
    %495 = arith.addf %494, %493 : vector<1x384xf32>
    %496 = arith.divf %494, %495 : vector<1x384xf32>
    %497 = vector.extract_strided_slice %490 {offsets = [0, 384], sizes = [1, 128], strides = [1, 1]} : vector<1x512xf32> to vector<1x128xf32>
    %498 = math.tanh %497 : vector<1x128xf32>
    %499 = vector.extract_strided_slice %496 {offsets = [0, 128], sizes = [1, 128], strides = [1, 1]} : vector<1x384xf32> to vector<1x128xf32>
    %500 = arith.mulf %499, %464 : vector<1x128xf32>
    %501 = vector.extract_strided_slice %496 {offsets = [0, 0], sizes = [1, 128], strides = [1, 1]} : vector<1x384xf32> to vector<1x128xf32>
    %502 = arith.mulf %501, %498 : vector<1x128xf32>
    %503 = arith.addf %500, %502 : vector<1x128xf32>
    %504 = vector.extract_strided_slice %496 {offsets = [0, 256], sizes = [1, 128], strides = [1, 1]} : vector<1x384xf32> to vector<1x128xf32>
    %505 = math.tanh %503 : vector<1x128xf32>
    %506 = arith.mulf %504, %505 : vector<1x128xf32>
    %cst_93 = arith.constant dense<0.000000e+00> : vector<1x512xf32>
    %507 = tpu.matmul %506, %6, %cst_93 {dimension_numbers = #tpu.dot_dimension_numbers<[1], [0], [0], [1], [0, 0, 1, 1], [], []>} : vector<1x128xf32>, vector<128x512xf32>, vector<1x512xf32> -> vector<1x512xf32>
    %cst_94 = arith.constant dense<0.000000e+00> : vector<1x512xf32>
    %508 = tpu.matmul %487, %7, %cst_94 {dimension_numbers = #tpu.dot_dimension_numbers<[1], [0], [0], [1], [0, 0, 1, 1], [], []>} : vector<1x128xf32>, vector<128x512xf32>, vector<1x512xf32> -> vector<1x512xf32>
    %509 = arith.addf %507, %508 : vector<1x512xf32>
    %510 = arith.addf %509, %8 : vector<1x512xf32>
    %511 = vector.extract_strided_slice %510 {offsets = [0, 0], sizes = [1, 384], strides = [1, 1]} : vector<1x512xf32> to vector<1x384xf32>
    %512 = arith.negf %511 : vector<1x384xf32>
    %513 = math.exp %512 : vector<1x384xf32>
    %cst_95 = arith.constant 1.000000e+00 : f32
    %514 = vector.broadcast %cst_95 : f32 to vector<1x384xf32>
    %515 = arith.addf %514, %513 : vector<1x384xf32>
    %516 = arith.divf %514, %515 : vector<1x384xf32>
    %517 = vector.extract_strided_slice %510 {offsets = [0, 384], sizes = [1, 128], strides = [1, 1]} : vector<1x512xf32> to vector<1x128xf32>
    %518 = math.tanh %517 : vector<1x128xf32>
    %519 = vector.extract_strided_slice %516 {offsets = [0, 128], sizes = [1, 128], strides = [1, 1]} : vector<1x384xf32> to vector<1x128xf32>
    %520 = arith.mulf %519, %484 : vector<1x128xf32>
    %521 = vector.extract_strided_slice %516 {offsets = [0, 0], sizes = [1, 128], strides = [1, 1]} : vector<1x384xf32> to vector<1x128xf32>
    %522 = arith.mulf %521, %518 : vector<1x128xf32>
    %523 = arith.addf %520, %522 : vector<1x128xf32>
    %524 = vector.extract_strided_slice %516 {offsets = [0, 256], sizes = [1, 128], strides = [1, 1]} : vector<1x384xf32> to vector<1x128xf32>
    %525 = math.tanh %523 : vector<1x128xf32>
    %526 = arith.mulf %524, %525 : vector<1x128xf32>
    %c4 = arith.constant 4 : index
    %c0_96 = arith.constant 0 : index
    %527 = vector.load %arg16[%c4, %c0_96] : memref<8x128xf32, #tpu.memory_space<vmem>>, vector<1x128xf32>
    tpu.vector_store %arg16[%c4, %c0_96], %526 {strides = array<i32>} : memref<8x128xf32, #tpu.memory_space<vmem>>, vector<1x128xf32>,
    %cst_97 = arith.constant dense<0.000000e+00> : vector<1x512xf32>
    %528 = tpu.matmul %506, %5, %cst_97 {dimension_numbers = #tpu.dot_dimension_numbers<[1], [0], [0], [1], [0, 0, 1, 1], [], []>} : vector<1x128xf32>, vector<128x512xf32>, vector<1x512xf32> -> vector<1x512xf32>
    %529 = arith.addf %332, %528 : vector<1x512xf32>
    %530 = vector.extract_strided_slice %529 {offsets = [0, 0], sizes = [1, 384], strides = [1, 1]} : vector<1x512xf32> to vector<1x384xf32>
    %531 = arith.negf %530 : vector<1x384xf32>
    %532 = math.exp %531 : vector<1x384xf32>
    %cst_98 = arith.constant 1.000000e+00 : f32
    %533 = vector.broadcast %cst_98 : f32 to vector<1x384xf32>
    %534 = arith.addf %533, %532 : vector<1x384xf32>
    %535 = arith.divf %533, %534 : vector<1x384xf32>
    %536 = vector.extract_strided_slice %529 {offsets = [0, 384], sizes = [1, 128], strides = [1, 1]} : vector<1x512xf32> to vector<1x128xf32>
    %537 = math.tanh %536 : vector<1x128xf32>
    %538 = vector.extract_strided_slice %535 {offsets = [0, 128], sizes = [1, 128], strides = [1, 1]} : vector<1x384xf32> to vector<1x128xf32>
    %539 = arith.mulf %538, %503 : vector<1x128xf32>
    %540 = vector.extract_strided_slice %535 {offsets = [0, 0], sizes = [1, 128], strides = [1, 1]} : vector<1x384xf32> to vector<1x128xf32>
    %541 = arith.mulf %540, %537 : vector<1x128xf32>
    %542 = arith.addf %539, %541 : vector<1x128xf32>
    %543 = vector.extract_strided_slice %535 {offsets = [0, 256], sizes = [1, 128], strides = [1, 1]} : vector<1x384xf32> to vector<1x128xf32>
    %544 = math.tanh %542 : vector<1x128xf32>
    %545 = arith.mulf %543, %544 : vector<1x128xf32>
    %cst_99 = arith.constant dense<0.000000e+00> : vector<1x512xf32>
    %546 = tpu.matmul %545, %6, %cst_99 {dimension_numbers = #tpu.dot_dimension_numbers<[1], [0], [0], [1], [0, 0, 1, 1], [], []>} : vector<1x128xf32>, vector<128x512xf32>, vector<1x512xf32> -> vector<1x512xf32>
    %cst_100 = arith.constant dense<0.000000e+00> : vector<1x512xf32>
    %547 = tpu.matmul %526, %7, %cst_100 {dimension_numbers = #tpu.dot_dimension_numbers<[1], [0], [0], [1], [0, 0, 1, 1], [], []>} : vector<1x128xf32>, vector<128x512xf32>, vector<1x512xf32> -> vector<1x512xf32>
    %548 = arith.addf %546, %547 : vector<1x512xf32>
    %549 = arith.addf %548, %8 : vector<1x512xf32>
    %550 = vector.extract_strided_slice %549 {offsets = [0, 0], sizes = [1, 384], strides = [1, 1]} : vector<1x512xf32> to vector<1x384xf32>
    %551 = arith.negf %550 : vector<1x384xf32>
    %552 = math.exp %551 : vector<1x384xf32>
    %cst_101 = arith.constant 1.000000e+00 : f32
    %553 = vector.broadcast %cst_101 : f32 to vector<1x384xf32>
    %554 = arith.addf %553, %552 : vector<1x384xf32>
    %555 = arith.divf %553, %554 : vector<1x384xf32>
    %556 = vector.extract_strided_slice %549 {offsets = [0, 384], sizes = [1, 128], strides = [1, 1]} : vector<1x512xf32> to vector<1x128xf32>
    %557 = math.tanh %556 : vector<1x128xf32>
    %558 = vector.extract_strided_slice %555 {offsets = [0, 128], sizes = [1, 128], strides = [1, 1]} : vector<1x384xf32> to vector<1x128xf32>
    %559 = arith.mulf %558, %523 : vector<1x128xf32>
    %560 = vector.extract_strided_slice %555 {offsets = [0, 0], sizes = [1, 128], strides = [1, 1]} : vector<1x384xf32> to vector<1x128xf32>
    %561 = arith.mulf %560, %557 : vector<1x128xf32>
    %562 = arith.addf %559, %561 : vector<1x128xf32>
    %563 = vector.extract_strided_slice %555 {offsets = [0, 256], sizes = [1, 128], strides = [1, 1]} : vector<1x384xf32> to vector<1x128xf32>
    %564 = math.tanh %562 : vector<1x128xf32>
    %565 = arith.mulf %563, %564 : vector<1x128xf32>
    %c5 = arith.constant 5 : index
    %c0_102 = arith.constant 0 : index
    %566 = vector.load %arg16[%c5, %c0_102] : memref<8x128xf32, #tpu.memory_space<vmem>>, vector<1x128xf32>
    tpu.vector_store %arg16[%c5, %c0_102], %565 {strides = array<i32>} : memref<8x128xf32, #tpu.memory_space<vmem>>, vector<1x128xf32>,
    %cst_103 = arith.constant dense<0.000000e+00> : vector<1x512xf32>
    %567 = tpu.matmul %545, %5, %cst_103 {dimension_numbers = #tpu.dot_dimension_numbers<[1], [0], [0], [1], [0, 0, 1, 1], [], []>} : vector<1x128xf32>, vector<128x512xf32>, vector<1x512xf32> -> vector<1x512xf32>
    %568 = arith.addf %332, %567 : vector<1x512xf32>
    %569 = vector.extract_strided_slice %568 {offsets = [0, 0], sizes = [1, 384], strides = [1, 1]} : vector<1x512xf32> to vector<1x384xf32>
    %570 = arith.negf %569 : vector<1x384xf32>
    %571 = math.exp %570 : vector<1x384xf32>
    %cst_104 = arith.constant 1.000000e+00 : f32
    %572 = vector.broadcast %cst_104 : f32 to vector<1x384xf32>
    %573 = arith.addf %572, %571 : vector<1x384xf32>
    %574 = arith.divf %572, %573 : vector<1x384xf32>
    %575 = vector.extract_strided_slice %568 {offsets = [0, 384], sizes = [1, 128], strides = [1, 1]} : vector<1x512xf32> to vector<1x128xf32>
    %576 = math.tanh %575 : vector<1x128xf32>
    %577 = vector.extract_strided_slice %574 {offsets = [0, 128], sizes = [1, 128], strides = [1, 1]} : vector<1x384xf32> to vector<1x128xf32>
    %578 = arith.mulf %577, %542 : vector<1x128xf32>
    %579 = vector.extract_strided_slice %574 {offsets = [0, 0], sizes = [1, 128], strides = [1, 1]} : vector<1x384xf32> to vector<1x128xf32>
    %580 = arith.mulf %579, %576 : vector<1x128xf32>
    %581 = arith.addf %578, %580 : vector<1x128xf32>
    %582 = vector.extract_strided_slice %574 {offsets = [0, 256], sizes = [1, 128], strides = [1, 1]} : vector<1x384xf32> to vector<1x128xf32>
    %583 = math.tanh %581 : vector<1x128xf32>
    %584 = arith.mulf %582, %583 : vector<1x128xf32>
    %cst_105 = arith.constant dense<0.000000e+00> : vector<1x512xf32>
    %585 = tpu.matmul %584, %6, %cst_105 {dimension_numbers = #tpu.dot_dimension_numbers<[1], [0], [0], [1], [0, 0, 1, 1], [], []>} : vector<1x128xf32>, vector<128x512xf32>, vector<1x512xf32> -> vector<1x512xf32>
    %cst_106 = arith.constant dense<0.000000e+00> : vector<1x512xf32>
    %586 = tpu.matmul %565, %7, %cst_106 {dimension_numbers = #tpu.dot_dimension_numbers<[1], [0], [0], [1], [0, 0, 1, 1], [], []>} : vector<1x128xf32>, vector<128x512xf32>, vector<1x512xf32> -> vector<1x512xf32>
    %587 = arith.addf %585, %586 : vector<1x512xf32>
    %588 = arith.addf %587, %8 : vector<1x512xf32>
    %589 = vector.extract_strided_slice %588 {offsets = [0, 0], sizes = [1, 384], strides = [1, 1]} : vector<1x512xf32> to vector<1x384xf32>
    %590 = arith.negf %589 : vector<1x384xf32>
    %591 = math.exp %590 : vector<1x384xf32>
    %cst_107 = arith.constant 1.000000e+00 : f32
    %592 = vector.broadcast %cst_107 : f32 to vector<1x384xf32>
    %593 = arith.addf %592, %591 : vector<1x384xf32>
    %594 = arith.divf %592, %593 : vector<1x384xf32>
    %595 = vector.extract_strided_slice %588 {offsets = [0, 384], sizes = [1, 128], strides = [1, 1]} : vector<1x512xf32> to vector<1x128xf32>
    %596 = math.tanh %595 : vector<1x128xf32>
    %597 = vector.extract_strided_slice %594 {offsets = [0, 128], sizes = [1, 128], strides = [1, 1]} : vector<1x384xf32> to vector<1x128xf32>
    %598 = arith.mulf %597, %562 : vector<1x128xf32>
    %599 = vector.extract_strided_slice %594 {offsets = [0, 0], sizes = [1, 128], strides = [1, 1]} : vector<1x384xf32> to vector<1x128xf32>
    %600 = arith.mulf %599, %596 : vector<1x128xf32>
    %601 = arith.addf %598, %600 : vector<1x128xf32>
    %602 = vector.extract_strided_slice %594 {offsets = [0, 256], sizes = [1, 128], strides = [1, 1]} : vector<1x384xf32> to vector<1x128xf32>
    %603 = math.tanh %601 : vector<1x128xf32>
    %604 = arith.mulf %602, %603 : vector<1x128xf32>
    %c6 = arith.constant 6 : index
    %c0_108 = arith.constant 0 : index
    %605 = vector.load %arg16[%c6, %c0_108] : memref<8x128xf32, #tpu.memory_space<vmem>>, vector<1x128xf32>
    tpu.vector_store %arg16[%c6, %c0_108], %604 {strides = array<i32>} : memref<8x128xf32, #tpu.memory_space<vmem>>, vector<1x128xf32>,
    %cst_109 = arith.constant dense<0.000000e+00> : vector<1x512xf32>
    %606 = tpu.matmul %584, %5, %cst_109 {dimension_numbers = #tpu.dot_dimension_numbers<[1], [0], [0], [1], [0, 0, 1, 1], [], []>} : vector<1x128xf32>, vector<128x512xf32>, vector<1x512xf32> -> vector<1x512xf32>
    %607 = arith.addf %332, %606 : vector<1x512xf32>
    %608 = vector.extract_strided_slice %607 {offsets = [0, 0], sizes = [1, 384], strides = [1, 1]} : vector<1x512xf32> to vector<1x384xf32>
    %609 = arith.negf %608 : vector<1x384xf32>
    %610 = math.exp %609 : vector<1x384xf32>
    %cst_110 = arith.constant 1.000000e+00 : f32
    %611 = vector.broadcast %cst_110 : f32 to vector<1x384xf32>
    %612 = arith.addf %611, %610 : vector<1x384xf32>
    %613 = arith.divf %611, %612 : vector<1x384xf32>
    %614 = vector.extract_strided_slice %607 {offsets = [0, 384], sizes = [1, 128], strides = [1, 1]} : vector<1x512xf32> to vector<1x128xf32>
    %615 = math.tanh %614 : vector<1x128xf32>
    %616 = vector.extract_strided_slice %613 {offsets = [0, 128], sizes = [1, 128], strides = [1, 1]} : vector<1x384xf32> to vector<1x128xf32>
    %617 = arith.mulf %616, %581 : vector<1x128xf32>
    %618 = vector.extract_strided_slice %613 {offsets = [0, 0], sizes = [1, 128], strides = [1, 1]} : vector<1x384xf32> to vector<1x128xf32>
    %619 = arith.mulf %618, %615 : vector<1x128xf32>
    %620 = arith.addf %617, %619 : vector<1x128xf32>
    %621 = vector.extract_strided_slice %613 {offsets = [0, 256], sizes = [1, 128], strides = [1, 1]} : vector<1x384xf32> to vector<1x128xf32>
    %622 = math.tanh %620 : vector<1x128xf32>
    %623 = arith.mulf %621, %622 : vector<1x128xf32>
    %cst_111 = arith.constant dense<0.000000e+00> : vector<1x512xf32>
    %624 = tpu.matmul %623, %6, %cst_111 {dimension_numbers = #tpu.dot_dimension_numbers<[1], [0], [0], [1], [0, 0, 1, 1], [], []>} : vector<1x128xf32>, vector<128x512xf32>, vector<1x512xf32> -> vector<1x512xf32>
    %cst_112 = arith.constant dense<0.000000e+00> : vector<1x512xf32>
    %625 = tpu.matmul %604, %7, %cst_112 {dimension_numbers = #tpu.dot_dimension_numbers<[1], [0], [0], [1], [0, 0, 1, 1], [], []>} : vector<1x128xf32>, vector<128x512xf32>, vector<1x512xf32> -> vector<1x512xf32>
    %626 = arith.addf %624, %625 : vector<1x512xf32>
    %627 = arith.addf %626, %8 : vector<1x512xf32>
    %628 = vector.extract_strided_slice %627 {offsets = [0, 0], sizes = [1, 384], strides = [1, 1]} : vector<1x512xf32> to vector<1x384xf32>
    %629 = arith.negf %628 : vector<1x384xf32>
    %630 = math.exp %629 : vector<1x384xf32>
    %cst_113 = arith.constant 1.000000e+00 : f32
    %631 = vector.broadcast %cst_113 : f32 to vector<1x384xf32>
    %632 = arith.addf %631, %630 : vector<1x384xf32>
    %633 = arith.divf %631, %632 : vector<1x384xf32>
    %634 = vector.extract_strided_slice %627 {offsets = [0, 384], sizes = [1, 128], strides = [1, 1]} : vector<1x512xf32> to vector<1x128xf32>
    %635 = math.tanh %634 : vector<1x128xf32>
    %636 = vector.extract_strided_slice %633 {offsets = [0, 128], sizes = [1, 128], strides = [1, 1]} : vector<1x384xf32> to vector<1x128xf32>
    %637 = arith.mulf %636, %601 : vector<1x128xf32>
    %638 = vector.extract_strided_slice %633 {offsets = [0, 0], sizes = [1, 128], strides = [1, 1]} : vector<1x384xf32> to vector<1x128xf32>
    %639 = arith.mulf %638, %635 : vector<1x128xf32>
    %640 = arith.addf %637, %639 : vector<1x128xf32>
    %641 = vector.extract_strided_slice %633 {offsets = [0, 256], sizes = [1, 128], strides = [1, 1]} : vector<1x384xf32> to vector<1x128xf32>
    %642 = math.tanh %640 : vector<1x128xf32>
    %643 = arith.mulf %641, %642 : vector<1x128xf32>
    %c7 = arith.constant 7 : index
    %c0_114 = arith.constant 0 : index
    %644 = vector.load %arg16[%c7, %c0_114] : memref<8x128xf32, #tpu.memory_space<vmem>>, vector<1x128xf32>
    tpu.vector_store %arg16[%c7, %c0_114], %643 {strides = array<i32>} : memref<8x128xf32, #tpu.memory_space<vmem>>, vector<1x128xf32>,
    %c0_115 = arith.constant 0 : index
    %c0_116 = arith.constant 0 : index
    %645 = vector.load %arg16[%c0_115, %c0_116] : memref<8x128xf32, #tpu.memory_space<vmem>>, vector<8x128xf32>
    %c0_117 = arith.constant 0 : index
    %c0_118 = arith.constant 0 : index
    %646 = vector.load %arg13[%c0_117, %c0_118] : memref<1x128xf32, #tpu.memory_space<vmem>>, vector<1x128xf32>
    %647 = vector.broadcast %646 : vector<1x128xf32> to vector<8x128xf32>
    %648 = arith.mulf %645, %647 : vector<8x128xf32>
    %cst_119 = arith.constant dense<0.000000e+00> : vector<8xf32>
    %649 = vector.multi_reduction <add>, %648, %cst_119 [1] : vector<8x128xf32> to vector<8xf32>
    %650 = vector.shape_cast %649 : vector<8xf32> to vector<8x1xf32>
    %c0_120 = arith.constant 0 : index
    %c0_121 = arith.constant 0 : index
    %651 = vector.load %arg14[%c0_120, %c0_121] : memref<1x1xf32, #tpu.memory_space<vmem>>, vector<1x1xf32>
    %652 = vector.broadcast %651 : vector<1x1xf32> to vector<8x1xf32>
    %653 = arith.addf %650, %652 : vector<8x1xf32>
    %c0_122 = arith.constant 0 : index
    %c0_123 = arith.constant 0 : index
    %654 = vector.load %arg15[%c0_122, %c0_123] : memref<8x1xf32, #tpu.memory_space<vmem>>, vector<8x1xf32>
    tpu.vector_store %arg15[%c0_122, %c0_123], %653 {strides = array<i32>} : memref<8x1xf32, #tpu.memory_space<vmem>>, vector<8x1xf32>,
    return
  }
}

</mosaic_0001>

<llo_original>
// kernel: recurrent_autoencoder_forward.1
$region0: #{recurrent_autoencoder_forward.1}
  #allocation0 [shape = 'u32[]', space=smem, size = 0x4, offset = 0x4, fixed_abs, tag = 'smem constant byte address 0x4 - core index']
  #allocation1 [shape = 'u32[144,128]{1,0:T(1,128)}', space=vmem, size = 0x12000, scoped, tag = 'internal scratch']
  #allocation2 [shape = 'f32[8,128]{1,0:T(8,128)}', space=vmem, size = 0x1000, scoped, tag = 'scratch operand']
  #allocation3 [shape = 'f32[1,1]{1,0:T(1,128)S(1)}', space=vmem, size = 0x200, scoped, tag = 'scoped memory for recurrent_autoencoder_forward.1']
  %s0 = inlined_call_operand.vmem [shape: f32[8,1], index: 0, kind: input, shape index: {}]
  %s1 = inlined_call_operand.vmem [shape: f32[1,512], index: 1, kind: input, shape index: {}]
  %s2 = inlined_call_operand.hbm [shape: f32[128,512], index: 2, kind: input, shape index: {}]
  %s3 = inlined_call_operand.vmem [shape: f32[1,512], index: 3, kind: input, shape index: {}]
  %s4 = inlined_call_operand.hbm [shape: f32[128,512], index: 4, kind: input, shape index: {}]
  %s5 = inlined_call_operand.hbm [shape: f32[128,512], index: 5, kind: input, shape index: {}]
  %s6 = inlined_call_operand.vmem [shape: f32[1,512], index: 6, kind: input, shape index: {}]
  %s7 = inlined_call_operand.hbm [shape: f32[128,512], index: 7, kind: input, shape index: {}]
  %s8 = inlined_call_operand.hbm [shape: f32[128,512], index: 8, kind: input, shape index: {}]
  %s9 = inlined_call_operand.vmem [shape: f32[1,512], index: 9, kind: input, shape index: {}]
  %s10 = inlined_call_operand.hbm [shape: f32[128,512], index: 10, kind: input, shape index: {}]
  %s11 = inlined_call_operand.hbm [shape: f32[128,512], index: 11, kind: input, shape index: {}]
  %s12 = inlined_call_operand.vmem [shape: f32[1,512], index: 12, kind: input, shape index: {}]
  %s13 = inlined_call_operand.vmem [shape: f32[1,128], index: 13, kind: input, shape index: {}]
  %s14 = inlined_call_operand.<no memory space> [shape: f32[1,1], index: 14, kind: input, shape index: {}]
  %s15 = inlined_call_operand.vmem [shape: f32[8,1], index: 15, kind: output, shape index: {}]
  %s16 = sld [smem:[#allocation0]]
  $region98: #{recurrent_autoencoder_forward.1} parent=0
    _
  %s18 = ssub.s32 1, %s16
  %s19 = scalar_select 0, %s18, %s16
  %v20 = vstv %s14
  %21 = vst [vmem:[#allocation3] sm:$0x1] %v20
  $region1: #{recurrent_autoencoder_forward.1} parent=0
    #allocation4 [shape = 'u8[262144]{0}', space=vmem, size = 0x40000, scoped, tag = 'input window, operand 2, single buffered']
    #allocation5 [shape = 's32[1]{0}', space=sflag, size = 0x4, scoped, tag = 'scoped memory for recurrent_autoencoder_forward.1']
    #allocation6 [shape = 'u8[262144]{0}', space=vmem, size = 0x40000, scoped, tag = 'input window, operand 4, single buffered']
    #allocation7 [shape = 's32[1]{0}', space=sflag, size = 0x4, scoped, tag = 'scoped memory for recurrent_autoencoder_forward.1']
    #allocation8 [shape = 'u8[262144]{0}', space=vmem, size = 0x40000, scoped, tag = 'input window, operand 5, single buffered']
    #allocation9 [shape = 'u8[262144]{0}', space=vmem, size = 0x40000, scoped, tag = 'input window, operand 7, single buffered']
    #allocation10 [shape = 's32[1]{0}', space=sflag, size = 0x4, scoped, tag = 'scoped memory for recurrent_autoencoder_forward.1']
    #allocation11 [shape = 'u8[262144]{0}', space=vmem, size = 0x40000, scoped, tag = 'input window, operand 8, single buffered']
    #allocation12 [shape = 'u8[262144]{0}', space=vmem, size = 0x40000, scoped, tag = 'input window, operand 10, single buffered']
    #allocation13 [shape = 's32[1]{0}', space=sflag, size = 0x4, scoped, tag = 'scoped memory for recurrent_autoencoder_forward.1']
    #allocation14 [shape = 'u8[262144]{0}', space=vmem, size = 0x40000, scoped, tag = 'input window, operand 11, single buffered']
    %22 = vsyncpa [#allocation5], 0
    %23 = vsyncpa [#allocation7], 0
    %24 = vsyncpa [#allocation10], 0
    %25 = vsyncpa [#allocation13], 0
    // Predicated region
    $region2: #{recurrent_autoencoder_forward.1} parent=1 // pred_check
      _
    $region3: #{recurrent_autoencoder_forward.1} parent=1 // pred_check_branch
      %27 = sbr.rel (0) target = $region5
    $region4: #{recurrent_autoencoder_forward.1} parent=1 // pred_region
      _
    $region5: #{recurrent_autoencoder_forward.1} parent=1 // pred_fallthru
      _
    // Predicated region
    $region6: #{recurrent_autoencoder_forward.1} parent=1 // pred_check
      _
    $region7: #{recurrent_autoencoder_forward.1} parent=1 // pred_check_branch
      %29 = sbr.rel (0) target = $region9
    $region8: #{recurrent_autoencoder_forward.1} parent=1 // pred_region
      _
    $region9: #{recurrent_autoencoder_forward.1} parent=1 // pred_fallthru
      _
    // Predicated region
    $region10: #{recurrent_autoencoder_forward.1} parent=1 // pred_check
      _
    $region11: #{recurrent_autoencoder_forward.1} parent=1 // pred_check_branch
      %31 = sbr.rel (0) target = $region13
    $region12: #{recurrent_autoencoder_forward.1} parent=1 // pred_region
      %s33 = ssub.s32 8192, 8192
      %34 = vsyncadd [#allocation5], %s33
      %s35 = sshll.u32 [#allocation4], 4
      %s36 = int_to_ptr.vmem [resolvable:$true] %s35
      %41 = dma.hbm_to_vmem [thread:$0]  %s2, 8192, %s36, [#allocation5], 512, 512, 32
    $region13: #{recurrent_autoencoder_forward.1} parent=1 // pred_fallthru
      _
    // Predicated region
    $region14: #{recurrent_autoencoder_forward.1} parent=1 // pred_check
      _
    $region15: #{recurrent_autoencoder_forward.1} parent=1 // pred_check_branch
      %43 = sbr.rel (0) target = $region17
    $region16: #{recurrent_autoencoder_forward.1} parent=1 // pred_region
      _
    $region17: #{recurrent_autoencoder_forward.1} parent=1 // pred_fallthru
      _
    // Predicated region
    $region18: #{recurrent_autoencoder_forward.1} parent=1 // pred_check
      _
    $region19: #{recurrent_autoencoder_forward.1} parent=1 // pred_check_branch
      %45 = sbr.rel (0) target = $region21
    $region20: #{recurrent_autoencoder_forward.1} parent=1 // pred_region
      %s47 = ssub.s32 8192, 8192
      %48 = vsyncadd [#allocation7], %s47
      %s49 = sshll.u32 [#allocation6], 4
      %s50 = int_to_ptr.vmem [resolvable:$true] %s49
      %55 = dma.hbm_to_vmem [thread:$0]  %s4, 8192, %s50, [#allocation7], 512, 512, 32
    $region21: #{recurrent_autoencoder_forward.1} parent=1 // pred_fallthru
      _
    // Predicated region
    $region22: #{recurrent_autoencoder_forward.1} parent=1 // pred_check
      _
    $region23: #{recurrent_autoencoder_forward.1} parent=1 // pred_check_branch
      %57 = sbr.rel (0) target = $region25
    $region24: #{recurrent_autoencoder_forward.1} parent=1 // pred_region
      %s59 = ssub.s32 8192, 8192
      %60 = vsyncadd [#allocation7], %s59
      %s61 = sshll.u32 [#allocation8], 4
      %s62 = int_to_ptr.vmem [resolvable:$true] %s61
      %67 = dma.hbm_to_vmem [thread:$0]  %s5, 8192, %s62, [#allocation7], 512, 512, 32
    $region25: #{recurrent_autoencoder_forward.1} parent=1 // pred_fallthru
      _
    // Predicated region
    $region26: #{recurrent_autoencoder_forward.1} parent=1 // pred_check
      _
    $region27: #{recurrent_autoencoder_forward.1} parent=1 // pred_check_branch
      %69 = sbr.rel (0) target = $region29
    $region28: #{recurrent_autoencoder_forward.1} parent=1 // pred_region
      _
    $region29: #{recurrent_autoencoder_forward.1} parent=1 // pred_fallthru
      _
    // Predicated region
    $region30: #{recurrent_autoencoder_forward.1} parent=1 // pred_check
      _
    $region31: #{recurrent_autoencoder_forward.1} parent=1 // pred_check_branch
      %71 = sbr.rel (0) target = $region33
    $region32: #{recurrent_autoencoder_forward.1} parent=1 // pred_region
      %s73 = ssub.s32 8192, 8192
      %74 = vsyncadd [#allocation10], %s73
      %s75 = sshll.u32 [#allocation9], 4
      %s76 = int_to_ptr.vmem [resolvable:$true] %s75
      %81 = dma.hbm_to_vmem [thread:$0]  %s7, 8192, %s76, [#allocation10], 512, 512, 32
    $region33: #{recurrent_autoencoder_forward.1} parent=1 // pred_fallthru
      _
    // Predicated region
    $region34: #{recurrent_autoencoder_forward.1} parent=1 // pred_check
      _
    $region35: #{recurrent_autoencoder_forward.1} parent=1 // pred_check_branch
      %83 = sbr.rel (0) target = $region37
    $region36: #{recurrent_autoencoder_forward.1} parent=1 // pred_region
      %s85 = ssub.s32 8192, 8192
      %86 = vsyncadd [#allocation10], %s85
      %s87 = sshll.u32 [#allocation11], 4
      %s88 = int_to_ptr.vmem [resolvable:$true] %s87
      %93 = dma.hbm_to_vmem [thread:$0]  %s8, 8192, %s88, [#allocation10], 512, 512, 32
    $region37: #{recurrent_autoencoder_forward.1} parent=1 // pred_fallthru
      _
    // Predicated region
    $region38: #{recurrent_autoencoder_forward.1} parent=1 // pred_check
      _
    $region39: #{recurrent_autoencoder_forward.1} parent=1 // pred_check_branch
      %95 = sbr.rel (0) target = $region41
    $region40: #{recurrent_autoencoder_forward.1} parent=1 // pred_region
      _
    $region41: #{recurrent_autoencoder_forward.1} parent=1 // pred_fallthru
      _
    // Predicated region
    $region42: #{recurrent_autoencoder_forward.1} parent=1 // pred_check
      _
    $region43: #{recurrent_autoencoder_forward.1} parent=1 // pred_check_branch
      %97 = sbr.rel (0) target = $region45
    $region44: #{recurrent_autoencoder_forward.1} parent=1 // pred_region
      %s99 = ssub.s32 8192, 8192
      %100 = vsyncadd [#allocation13], %s99
      %s101 = sshll.u32 [#allocation12], 4
      %s102 = int_to_ptr.vmem [resolvable:$true] %s101
      %107 = dma.hbm_to_vmem [thread:$0]  %s10, 8192, %s102, [#allocation13], 512, 512, 32
    $region45: #{recurrent_autoencoder_forward.1} parent=1 // pred_fallthru
      _
    // Predicated region
    $region46: #{recurrent_autoencoder_forward.1} parent=1 // pred_check
      _
    $region47: #{recurrent_autoencoder_forward.1} parent=1 // pred_check_branch
      %109 = sbr.rel (0) target = $region49
    $region48: #{recurrent_autoencoder_forward.1} parent=1 // pred_region
      %s111 = ssub.s32 8192, 8192
      %112 = vsyncadd [#allocation13], %s111
      %s113 = sshll.u32 [#allocation14], 4
      %s114 = int_to_ptr.vmem [resolvable:$true] %s113
      %119 = dma.hbm_to_vmem [thread:$0]  %s11, 8192, %s114, [#allocation13], 512, 512, 32
    $region49: #{recurrent_autoencoder_forward.1} parent=1 // pred_fallthru
      _
    // Predicated region
    $region50: #{recurrent_autoencoder_forward.1} parent=1 // pred_check
      _
    $region51: #{recurrent_autoencoder_forward.1} parent=1 // pred_check_branch
      %121 = sbr.rel (0) target = $region53
    $region52: #{recurrent_autoencoder_forward.1} parent=1 // pred_region
      _
    $region53: #{recurrent_autoencoder_forward.1} parent=1 // pred_fallthru
      _
    // Predicated region
    $region54: #{recurrent_autoencoder_forward.1} parent=1 // pred_check
      _
    $region55: #{recurrent_autoencoder_forward.1} parent=1 // pred_check_branch
      %123 = sbr.rel (0) target = $region57
    $region56: #{recurrent_autoencoder_forward.1} parent=1 // pred_region
      _
    $region57: #{recurrent_autoencoder_forward.1} parent=1 // pred_fallthru
      _
    // Predicated region
    $region58: #{recurrent_autoencoder_forward.1} parent=1 // pred_check
      _
    $region59: #{recurrent_autoencoder_forward.1} parent=1 // pred_check_branch
      %125 = sbr.rel (0) target = $region61
    $region60: #{recurrent_autoencoder_forward.1} parent=1 // pred_region
      _
    $region61: #{recurrent_autoencoder_forward.1} parent=1 // pred_fallthru
      _
    // Predicated region
    $region62: #{recurrent_autoencoder_forward.1} parent=1 // pred_check
      _
    $region63: #{recurrent_autoencoder_forward.1} parent=1 // pred_check_branch
      %127 = sbr.rel (0) target = $region65
    $region64: #{recurrent_autoencoder_forward.1} parent=1 // pred_region
      %128 = dma.done [#allocation5], 8192
    $region65: #{recurrent_autoencoder_forward.1} parent=1 // pred_fallthru
      _
    // Predicated region
    $region66: #{recurrent_autoencoder_forward.1} parent=1 // pred_check
      _
    $region67: #{recurrent_autoencoder_forward.1} parent=1 // pred_check_branch
      %130 = sbr.rel (0) target = $region69
    $region68: #{recurrent_autoencoder_forward.1} parent=1 // pred_region
      %131 = dma.done [#allocation7], 8192
    $region69: #{recurrent_autoencoder_forward.1} parent=1 // pred_fallthru
      _
    // Predicated region
    $region70: #{recurrent_autoencoder_forward.1} parent=1 // pred_check
      _
    $region71: #{recurrent_autoencoder_forward.1} parent=1 // pred_check_branch
      %133 = sbr.rel (0) target = $region73
    $region72: #{recurrent_autoencoder_forward.1} parent=1 // pred_region
      %134 = dma.done [#allocation7], 8192
    $region73: #{recurrent_autoencoder_forward.1} parent=1 // pred_fallthru
      _
    // Predicated region
    $region74: #{recurrent_autoencoder_forward.1} parent=1 // pred_check
      _
    $region75: #{recurrent_autoencoder_forward.1} parent=1 // pred_check_branch
      %136 = sbr.rel (0) target = $region77
    $region76: #{recurrent_autoencoder_forward.1} parent=1 // pred_region
      %137 = dma.done [#allocation10], 8192
    $region77: #{recurrent_autoencoder_forward.1} parent=1 // pred_fallthru
      _
    // Predicated region
    $region78: #{recurrent_autoencoder_forward.1} parent=1 // pred_check
      _
    $region79: #{recurrent_autoencoder_forward.1} parent=1 // pred_check_branch
      %139 = sbr.rel (0) target = $region81
    $region80: #{recurrent_autoencoder_forward.1} parent=1 // pred_region
      %140 = dma.done [#allocation10], 8192
    $region81: #{recurrent_autoencoder_forward.1} parent=1 // pred_fallthru
      _
    // Predicated region
    $region82: #{recurrent_autoencoder_forward.1} parent=1 // pred_check
      _
    $region83: #{recurrent_autoencoder_forward.1} parent=1 // pred_check_branch
      %142 = sbr.rel (0) target = $region85
    $region84: #{recurrent_autoencoder_forward.1} parent=1 // pred_region
      %143 = dma.done [#allocation13], 8192
    $region85: #{recurrent_autoencoder_forward.1} parent=1 // pred_fallthru
      _
    // Predicated region
    $region86: #{recurrent_autoencoder_forward.1} parent=1 // pred_check
      _
    $region87: #{recurrent_autoencoder_forward.1} parent=1 // pred_check_branch
      %145 = sbr.rel (0) target = $region89
    $region88: #{recurrent_autoencoder_forward.1} parent=1 // pred_region
      %146 = dma.done [#allocation13], 8192
    $region89: #{recurrent_autoencoder_forward.1} parent=1 // pred_fallthru
      _
    %v147 = vld [vmem:[#allocation4] sm:$0xff]
    %v148 = vld [vmem:[#allocation4 + $0x8] sm:$0xff]
    %v149 = vld [vmem:[#allocation4 + $0x10] sm:$0xff]
    %v150 = vld [vmem:[#allocation4 + $0x18] sm:$0xff]
    %v151 = vld [vmem:[#allocation4 + $0x20] sm:$0xff]
    %v152 = vld [vmem:[#allocation4 + $0x28] sm:$0xff]
    %v153 = vld [vmem:[#allocation4 + $0x30] sm:$0xff]
    %v154 = vld [vmem:[#allocation4 + $0x38] sm:$0xff]
    %v155 = vld [vmem:[#allocation4 + $0x40] sm:$0xff]
    %v156 = vld [vmem:[#allocation4 + $0x48] sm:$0xff]
    %v157 = vld [vmem:[#allocation4 + $0x50] sm:$0xff]
    %v158 = vld [vmem:[#allocation4 + $0x58] sm:$0xff]
    %v159 = vld [vmem:[#allocation4 + $0x60] sm:$0xff]
    %v160 = vld [vmem:[#allocation4 + $0x68] sm:$0xff]
    %v161 = vld [vmem:[#allocation4 + $0x70] sm:$0xff]
    %v162 = vld [vmem:[#allocation4 + $0x78] sm:$0xff]
    %v163 = vld [vmem:[#allocation4 + $0x80] sm:$0xff]
    %v164 = vld [vmem:[#allocation4 + $0x88] sm:$0xff]
    %v165 = vld [vmem:[#allocation4 + $0x90] sm:$0xff]
    %v166 = vld [vmem:[#allocation4 + $0x98] sm:$0xff]
    %v167 = vld [vmem:[#allocation4 + $0xa0] sm:$0xff]
    %v168 = vld [vmem:[#allocation4 + $0xa8] sm:$0xff]
    %v169 = vld [vmem:[#allocation4 + $0xb0] sm:$0xff]
    %v170 = vld [vmem:[#allocation4 + $0xb8] sm:$0xff]
    %v171 = vld [vmem:[#allocation4 + $0xc0] sm:$0xff]
    %v172 = vld [vmem:[#allocation4 + $0xc8] sm:$0xff]
    %v173 = vld [vmem:[#allocation4 + $0xd0] sm:$0xff]
    %v174 = vld [vmem:[#allocation4 + $0xd8] sm:$0xff]
    %v175 = vld [vmem:[#allocation4 + $0xe0] sm:$0xff]
    %v176 = vld [vmem:[#allocation4 + $0xe8] sm:$0xff]
    %v177 = vld [vmem:[#allocation4 + $0xf0] sm:$0xff]
    %v178 = vld [vmem:[#allocation4 + $0xf8] sm:$0xff]
    %v179 = vld [vmem:[#allocation4 + $0x100] sm:$0xff]
    %v180 = vld [vmem:[#allocation4 + $0x108] sm:$0xff]
    %v181 = vld [vmem:[#allocation4 + $0x110] sm:$0xff]
    %v182 = vld [vmem:[#allocation4 + $0x118] sm:$0xff]
    %v183 = vld [vmem:[#allocation4 + $0x120] sm:$0xff]
    %v184 = vld [vmem:[#allocation4 + $0x128] sm:$0xff]
    %v185 = vld [vmem:[#allocation4 + $0x130] sm:$0xff]
    %v186 = vld [vmem:[#allocation4 + $0x138] sm:$0xff]
    %v187 = vld [vmem:[#allocation4 + $0x140] sm:$0xff]
    %v188 = vld [vmem:[#allocation4 + $0x148] sm:$0xff]
    %v189 = vld [vmem:[#allocation4 + $0x150] sm:$0xff]
    %v190 = vld [vmem:[#allocation4 + $0x158] sm:$0xff]
    %v191 = vld [vmem:[#allocation4 + $0x160] sm:$0xff]
    %v192 = vld [vmem:[#allocation4 + $0x168] sm:$0xff]
    %v193 = vld [vmem:[#allocation4 + $0x170] sm:$0xff]
    %v194 = vld [vmem:[#allocation4 + $0x178] sm:$0xff]
    %v195 = vld [vmem:[#allocation4 + $0x180] sm:$0xff]
    %v196 = vld [vmem:[#allocation4 + $0x188] sm:$0xff]
    %v197 = vld [vmem:[#allocation4 + $0x190] sm:$0xff]
    %v198 = vld [vmem:[#allocation4 + $0x198] sm:$0xff]
    %v199 = vld [vmem:[#allocation4 + $0x1a0] sm:$0xff]
    %v200 = vld [vmem:[#allocation4 + $0x1a8] sm:$0xff]
    %v201 = vld [vmem:[#allocation4 + $0x1b0] sm:$0xff]
    %v202 = vld [vmem:[#allocation4 + $0x1b8] sm:$0xff]
    %v203 = vld [vmem:[#allocation4 + $0x1c0] sm:$0xff]
    %v204 = vld [vmem:[#allocation4 + $0x1c8] sm:$0xff]
    %v205 = vld [vmem:[#allocation4 + $0x1d0] sm:$0xff]
    %v206 = vld [vmem:[#allocation4 + $0x1d8] sm:$0xff]
    %v207 = vld [vmem:[#allocation4 + $0x1e0] sm:$0xff]
    %v208 = vld [vmem:[#allocation4 + $0x1e8] sm:$0xff]
    %v209 = vld [vmem:[#allocation4 + $0x1f0] sm:$0xff]
    %v210 = vld [vmem:[#allocation4 + $0x1f8] sm:$0xff]
    %v211 = vld [vmem:[#allocation6] sm:$0xff]
    %v212 = vld [vmem:[#allocation6 + $0x8] sm:$0xff]
    %v213 = vld [vmem:[#allocation6 + $0x10] sm:$0xff]
    %v214 = vld [vmem:[#allocation6 + $0x18] sm:$0xff]
    %v215 = vld [vmem:[#allocation6 + $0x20] sm:$0xff]
    %v216 = vld [vmem:[#allocation6 + $0x28] sm:$0xff]
    %v217 = vld [vmem:[#allocation6 + $0x30] sm:$0xff]
    %v218 = vld [vmem:[#allocation6 + $0x38] sm:$0xff]
    %v219 = vld [vmem:[#allocation6 + $0x40] sm:$0xff]
    %v220 = vld [vmem:[#allocation6 + $0x48] sm:$0xff]
    %v221 = vld [vmem:[#allocation6 + $0x50] sm:$0xff]
    %v222 = vld [vmem:[#allocation6 + $0x58] sm:$0xff]
    %v223 = vld [vmem:[#allocation6 + $0x60] sm:$0xff]
    %v224 = vld [vmem:[#allocation6 + $0x68] sm:$0xff]
    %v225 = vld [vmem:[#allocation6 + $0x70] sm:$0xff]
    %v226 = vld [vmem:[#allocation6 + $0x78] sm:$0xff]
    %v227 = vld [vmem:[#allocation6 + $0x80] sm:$0xff]
    %v228 = vld [vmem:[#allocation6 + $0x88] sm:$0xff]
    %v229 = vld [vmem:[#allocation6 + $0x90] sm:$0xff]
    %v230 = vld [vmem:[#allocation6 + $0x98] sm:$0xff]
    %v231 = vld [vmem:[#allocation6 + $0xa0] sm:$0xff]
    %v232 = vld [vmem:[#allocation6 + $0xa8] sm:$0xff]
    %v233 = vld [vmem:[#allocation6 + $0xb0] sm:$0xff]
    %v234 = vld [vmem:[#allocation6 + $0xb8] sm:$0xff]
    %v235 = vld [vmem:[#allocation6 + $0xc0] sm:$0xff]
    %v236 = vld [vmem:[#allocation6 + $0xc8] sm:$0xff]
    %v237 = vld [vmem:[#allocation6 + $0xd0] sm:$0xff]
    %v238 = vld [vmem:[#allocation6 + $0xd8] sm:$0xff]
    %v239 = vld [vmem:[#allocation6 + $0xe0] sm:$0xff]
    %v240 = vld [vmem:[#allocation6 + $0xe8] sm:$0xff]
    %v241 = vld [vmem:[#allocation6 + $0xf0] sm:$0xff]
    %v242 = vld [vmem:[#allocation6 + $0xf8] sm:$0xff]
    %v243 = vld [vmem:[#allocation6 + $0x100] sm:$0xff]
    %v244 = vld [vmem:[#allocation6 + $0x108] sm:$0xff]
    %v245 = vld [vmem:[#allocation6 + $0x110] sm:$0xff]
    %v246 = vld [vmem:[#allocation6 + $0x118] sm:$0xff]
    %v247 = vld [vmem:[#allocation6 + $0x120] sm:$0xff]
    %v248 = vld [vmem:[#allocation6 + $0x128] sm:$0xff]
    %v249 = vld [vmem:[#allocation6 + $0x130] sm:$0xff]
    %v250 = vld [vmem:[#allocation6 + $0x138] sm:$0xff]
    %v251 = vld [vmem:[#allocation6 + $0x140] sm:$0xff]
    %v252 = vld [vmem:[#allocation6 + $0x148] sm:$0xff]
    %v253 = vld [vmem:[#allocation6 + $0x150] sm:$0xff]
    %v254 = vld [vmem:[#allocation6 + $0x158] sm:$0xff]
    %v255 = vld [vmem:[#allocation6 + $0x160] sm:$0xff]
    %v256 = vld [vmem:[#allocation6 + $0x168] sm:$0xff]
    %v257 = vld [vmem:[#allocation6 + $0x170] sm:$0xff]
    %v258 = vld [vmem:[#allocation6 + $0x178] sm:$0xff]
    %v259 = vld [vmem:[#allocation6 + $0x180] sm:$0xff]
    %v260 = vld [vmem:[#allocation6 + $0x188] sm:$0xff]
    %v261 = vld [vmem:[#allocation6 + $0x190] sm:$0xff]
    %v262 = vld [vmem:[#allocation6 + $0x198] sm:$0xff]
    %v263 = vld [vmem:[#allocation6 + $0x1a0] sm:$0xff]
    %v264 = vld [vmem:[#allocation6 + $0x1a8] sm:$0xff]
    %v265 = vld [vmem:[#allocation6 + $0x1b0] sm:$0xff]
    %v266 = vld [vmem:[#allocation6 + $0x1b8] sm:$0xff]
    %v267 = vld [vmem:[#allocation6 + $0x1c0] sm:$0xff]
    %v268 = vld [vmem:[#allocation6 + $0x1c8] sm:$0xff]
    %v269 = vld [vmem:[#allocation6 + $0x1d0] sm:$0xff]
    %v270 = vld [vmem:[#allocation6 + $0x1d8] sm:$0xff]
    %v271 = vld [vmem:[#allocation6 + $0x1e0] sm:$0xff]
    %v272 = vld [vmem:[#allocation6 + $0x1e8] sm:$0xff]
    %v273 = vld [vmem:[#allocation6 + $0x1f0] sm:$0xff]
    %v274 = vld [vmem:[#allocation6 + $0x1f8] sm:$0xff]
    %v275 = vld [vmem:[#allocation8] sm:$0xff]
    %v276 = vld [vmem:[#allocation8 + $0x8] sm:$0xff]
    %v277 = vld [vmem:[#allocation8 + $0x10] sm:$0xff]
    %v278 = vld [vmem:[#allocation8 + $0x18] sm:$0xff]
    %v279 = vld [vmem:[#allocation8 + $0x20] sm:$0xff]
    %v280 = vld [vmem:[#allocation8 + $0x28] sm:$0xff]
    %v281 = vld [vmem:[#allocation8 + $0x30] sm:$0xff]
    %v282 = vld [vmem:[#allocation8 + $0x38] sm:$0xff]
    %v283 = vld [vmem:[#allocation8 + $0x40] sm:$0xff]
    %v284 = vld [vmem:[#allocation8 + $0x48] sm:$0xff]
    %v285 = vld [vmem:[#allocation8 + $0x50] sm:$0xff]
    %v286 = vld [vmem:[#allocation8 + $0x58] sm:$0xff]
    %v287 = vld [vmem:[#allocation8 + $0x60] sm:$0xff]
    %v288 = vld [vmem:[#allocation8 + $0x68] sm:$0xff]
    %v289 = vld [vmem:[#allocation8 + $0x70] sm:$0xff]
    %v290 = vld [vmem:[#allocation8 + $0x78] sm:$0xff]
    %v291 = vld [vmem:[#allocation8 + $0x80] sm:$0xff]
    %v292 = vld [vmem:[#allocation8 + $0x88] sm:$0xff]
    %v293 = vld [vmem:[#allocation8 + $0x90] sm:$0xff]
    %v294 = vld [vmem:[#allocation8 + $0x98] sm:$0xff]
    %v295 = vld [vmem:[#allocation8 + $0xa0] sm:$0xff]
    %v296 = vld [vmem:[#allocation8 + $0xa8] sm:$0xff]
    %v297 = vld [vmem:[#allocation8 + $0xb0] sm:$0xff]
    %v298 = vld [vmem:[#allocation8 + $0xb8] sm:$0xff]
    %v299 = vld [vmem:[#allocation8 + $0xc0] sm:$0xff]
    %v300 = vld [vmem:[#allocation8 + $0xc8] sm:$0xff]
    %v301 = vld [vmem:[#allocation8 + $0xd0] sm:$0xff]
    %v302 = vld [vmem:[#allocation8 + $0xd8] sm:$0xff]
    %v303 = vld [vmem:[#allocation8 + $0xe0] sm:$0xff]
    %v304 = vld [vmem:[#allocation8 + $0xe8] sm:$0xff]
    %v305 = vld [vmem:[#allocation8 + $0xf0] sm:$0xff]
    %v306 = vld [vmem:[#allocation8 + $0xf8] sm:$0xff]
    %v307 = vld [vmem:[#allocation8 + $0x100] sm:$0xff]
    %v308 = vld [vmem:[#allocation8 + $0x108] sm:$0xff]
    %v309 = vld [vmem:[#allocation8 + $0x110] sm:$0xff]
    %v310 = vld [vmem:[#allocation8 + $0x118] sm:$0xff]
    %v311 = vld [vmem:[#allocation8 + $0x120] sm:$0xff]
    %v312 = vld [vmem:[#allocation8 + $0x128] sm:$0xff]
    %v313 = vld [vmem:[#allocation8 + $0x130] sm:$0xff]
    %v314 = vld [vmem:[#allocation8 + $0x138] sm:$0xff]
    %v315 = vld [vmem:[#allocation8 + $0x140] sm:$0xff]
    %v316 = vld [vmem:[#allocation8 + $0x148] sm:$0xff]
    %v317 = vld [vmem:[#allocation8 + $0x150] sm:$0xff]
    %v318 = vld [vmem:[#allocation8 + $0x158] sm:$0xff]
    %v319 = vld [vmem:[#allocation8 + $0x160] sm:$0xff]
    %v320 = vld [vmem:[#allocation8 + $0x168] sm:$0xff]
    %v321 = vld [vmem:[#allocation8 + $0x170] sm:$0xff]
    %v322 = vld [vmem:[#allocation8 + $0x178] sm:$0xff]
    %v323 = vld [vmem:[#allocation8 + $0x180] sm:$0xff]
    %v324 = vld [vmem:[#allocation8 + $0x188] sm:$0xff]
    %v325 = vld [vmem:[#allocation8 + $0x190] sm:$0xff]
    %v326 = vld [vmem:[#allocation8 + $0x198] sm:$0xff]
    %v327 = vld [vmem:[#allocation8 + $0x1a0] sm:$0xff]
    %v328 = vld [vmem:[#allocation8 + $0x1a8] sm:$0xff]
    %v329 = vld [vmem:[#allocation8 + $0x1b0] sm:$0xff]
    %v330 = vld [vmem:[#allocation8 + $0x1b8] sm:$0xff]
    %v331 = vld [vmem:[#allocation8 + $0x1c0] sm:$0xff]
    %v332 = vld [vmem:[#allocation8 + $0x1c8] sm:$0xff]
    %v333 = vld [vmem:[#allocation8 + $0x1d0] sm:$0xff]
    %v334 = vld [vmem:[#allocation8 + $0x1d8] sm:$0xff]
    %v335 = vld [vmem:[#allocation8 + $0x1e0] sm:$0xff]
    %v336 = vld [vmem:[#allocation8 + $0x1e8] sm:$0xff]
    %v337 = vld [vmem:[#allocation8 + $0x1f0] sm:$0xff]
    %v338 = vld [vmem:[#allocation8 + $0x1f8] sm:$0xff]
    %v339 = vld [vmem:[%s6] sm:$0xf]
    %v340 = vld [vmem:[#allocation11] sm:$0xff]
    %v341 = vld [vmem:[#allocation11 + $0x8] sm:$0xff]
    %v342 = vld [vmem:[#allocation11 + $0x10] sm:$0xff]
    %v343 = vld [vmem:[#allocation11 + $0x18] sm:$0xff]
    %v344 = vld [vmem:[#allocation11 + $0x20] sm:$0xff]
    %v345 = vld [vmem:[#allocation11 + $0x28] sm:$0xff]
    %v346 = vld [vmem:[#allocation11 + $0x30] sm:$0xff]
    %v347 = vld [vmem:[#allocation11 + $0x38] sm:$0xff]
    %v348 = vld [vmem:[#allocation11 + $0x40] sm:$0xff]
    %v349 = vld [vmem:[#allocation11 + $0x48] sm:$0xff]
    %v350 = vld [vmem:[#allocation11 + $0x50] sm:$0xff]
    %v351 = vld [vmem:[#allocation11 + $0x58] sm:$0xff]
    %v352 = vld [vmem:[#allocation11 + $0x60] sm:$0xff]
    %v353 = vld [vmem:[#allocation11 + $0x68] sm:$0xff]
    %v354 = vld [vmem:[#allocation11 + $0x70] sm:$0xff]
    %v355 = vld [vmem:[#allocation11 + $0x78] sm:$0xff]
    %v356 = vld [vmem:[#allocation11 + $0x80] sm:$0xff]
    %v357 = vld [vmem:[#allocation11 + $0x88] sm:$0xff]
    %v358 = vld [vmem:[#allocation11 + $0x90] sm:$0xff]
    %v359 = vld [vmem:[#allocation11 + $0x98] sm:$0xff]
    %v360 = vld [vmem:[#allocation11 + $0xa0] sm:$0xff]
    %v361 = vld [vmem:[#allocation11 + $0xa8] sm:$0xff]
    %v362 = vld [vmem:[#allocation11 + $0xb0] sm:$0xff]
    %v363 = vld [vmem:[#allocation11 + $0xb8] sm:$0xff]
    %v364 = vld [vmem:[#allocation11 + $0xc0] sm:$0xff]
    %v365 = vld [vmem:[#allocation11 + $0xc8] sm:$0xff]
    %v366 = vld [vmem:[#allocation11 + $0xd0] sm:$0xff]
    %v367 = vld [vmem:[#allocation11 + $0xd8] sm:$0xff]
    %v368 = vld [vmem:[#allocation11 + $0xe0] sm:$0xff]
    %v369 = vld [vmem:[#allocation11 + $0xe8] sm:$0xff]
    %v370 = vld [vmem:[#allocation11 + $0xf0] sm:$0xff]
    %v371 = vld [vmem:[#allocation11 + $0xf8] sm:$0xff]
    %v372 = vld [vmem:[#allocation11 + $0x100] sm:$0xff]
    %v373 = vld [vmem:[#allocation11 + $0x108] sm:$0xff]
    %v374 = vld [vmem:[#allocation11 + $0x110] sm:$0xff]
    %v375 = vld [vmem:[#allocation11 + $0x118] sm:$0xff]
    %v376 = vld [vmem:[#allocation11 + $0x120] sm:$0xff]
    %v377 = vld [vmem:[#allocation11 + $0x128] sm:$0xff]
    %v378 = vld [vmem:[#allocation11 + $0x130] sm:$0xff]
    %v379 = vld [vmem:[#allocation11 + $0x138] sm:$0xff]
    %v380 = vld [vmem:[#allocation11 + $0x140] sm:$0xff]
    %v381 = vld [vmem:[#allocation11 + $0x148] sm:$0xff]
    %v382 = vld [vmem:[#allocation11 + $0x150] sm:$0xff]
    %v383 = vld [vmem:[#allocation11 + $0x158] sm:$0xff]
    %v384 = vld [vmem:[#allocation11 + $0x160] sm:$0xff]
    %v385 = vld [vmem:[#allocation11 + $0x168] sm:$0xff]
    %v386 = vld [vmem:[#allocation11 + $0x170] sm:$0xff]
    %v387 = vld [vmem:[#allocation11 + $0x178] sm:$0xff]
    %v388 = vld [vmem:[#allocation11 + $0x180] sm:$0xff]
    %v389 = vld [vmem:[#allocation11 + $0x188] sm:$0xff]
    %v390 = vld [vmem:[#allocation11 + $0x190] sm:$0xff]
    %v391 = vld [vmem:[#allocation11 + $0x198] sm:$0xff]
    %v392 = vld [vmem:[#allocation11 + $0x1a0] sm:$0xff]
    %v393 = vld [vmem:[#allocation11 + $0x1a8] sm:$0xff]
    %v394 = vld [vmem:[#allocation11 + $0x1b0] sm:$0xff]
    %v395 = vld [vmem:[#allocation11 + $0x1b8] sm:$0xff]
    %v396 = vld [vmem:[#allocation11 + $0x1c0] sm:$0xff]
    %v397 = vld [vmem:[#allocation11 + $0x1c8] sm:$0xff]
    %v398 = vld [vmem:[#allocation11 + $0x1d0] sm:$0xff]
    %v399 = vld [vmem:[#allocation11 + $0x1d8] sm:$0xff]
    %v400 = vld [vmem:[#allocation11 + $0x1e0] sm:$0xff]
    %v401 = vld [vmem:[#allocation11 + $0x1e8] sm:$0xff]
    %v402 = vld [vmem:[#allocation11 + $0x1f0] sm:$0xff]
    %v403 = vld [vmem:[#allocation11 + $0x1f8] sm:$0xff]
    %v404 = vld [vmem:[#allocation12] sm:$0xff]
    %v405 = vld [vmem:[#allocation12 + $0x8] sm:$0xff]
    %v406 = vld [vmem:[#allocation12 + $0x10] sm:$0xff]
    %v407 = vld [vmem:[#allocation12 + $0x18] sm:$0xff]
    %v408 = vld [vmem:[#allocation12 + $0x20] sm:$0xff]
    %v409 = vld [vmem:[#allocation12 + $0x28] sm:$0xff]
    %v410 = vld [vmem:[#allocation12 + $0x30] sm:$0xff]
    %v411 = vld [vmem:[#allocation12 + $0x38] sm:$0xff]
    %v412 = vld [vmem:[#allocation12 + $0x40] sm:$0xff]
    %v413 = vld [vmem:[#allocation12 + $0x48] sm:$0xff]
    %v414 = vld [vmem:[#allocation12 + $0x50] sm:$0xff]
    %v415 = vld [vmem:[#allocation12 + $0x58] sm:$0xff]
    %v416 = vld [vmem:[#allocation12 + $0x60] sm:$0xff]
    %v417 = vld [vmem:[#allocation12 + $0x68] sm:$0xff]
    %v418 = vld [vmem:[#allocation12 + $0x70] sm:$0xff]
    %v419 = vld [vmem:[#allocation12 + $0x78] sm:$0xff]
    %v420 = vld [vmem:[#allocation12 + $0x80] sm:$0xff]
    %v421 = vld [vmem:[#allocation12 + $0x88] sm:$0xff]
    %v422 = vld [vmem:[#allocation12 + $0x90] sm:$0xff]
    %v423 = vld [vmem:[#allocation12 + $0x98] sm:$0xff]
    %v424 = vld [vmem:[#allocation12 + $0xa0] sm:$0xff]
    %v425 = vld [vmem:[#allocation12 + $0xa8] sm:$0xff]
    %v426 = vld [vmem:[#allocation12 + $0xb0] sm:$0xff]
    %v427 = vld [vmem:[#allocation12 + $0xb8] sm:$0xff]
    %v428 = vld [vmem:[#allocation12 + $0xc0] sm:$0xff]
    %v429 = vld [vmem:[#allocation12 + $0xc8] sm:$0xff]
    %v430 = vld [vmem:[#allocation12 + $0xd0] sm:$0xff]
    %v431 = vld [vmem:[#allocation12 + $0xd8] sm:$0xff]
    %v432 = vld [vmem:[#allocation12 + $0xe0] sm:$0xff]
    %v433 = vld [vmem:[#allocation12 + $0xe8] sm:$0xff]
    %v434 = vld [vmem:[#allocation12 + $0xf0] sm:$0xff]
    %v435 = vld [vmem:[#allocation12 + $0xf8] sm:$0xff]
    %v436 = vld [vmem:[#allocation12 + $0x100] sm:$0xff]
    %v437 = vld [vmem:[#allocation12 + $0x108] sm:$0xff]
    %v438 = vld [vmem:[#allocation12 + $0x110] sm:$0xff]
    %v439 = vld [vmem:[#allocation12 + $0x118] sm:$0xff]
    %v440 = vld [vmem:[#allocation12 + $0x120] sm:$0xff]
    %v441 = vld [vmem:[#allocation12 + $0x128] sm:$0xff]
    %v442 = vld [vmem:[#allocation12 + $0x130] sm:$0xff]
    %v443 = vld [vmem:[#allocation12 + $0x138] sm:$0xff]
    %v444 = vld [vmem:[#allocation12 + $0x140] sm:$0xff]
    %v445 = vld [vmem:[#allocation12 + $0x148] sm:$0xff]
    %v446 = vld [vmem:[#allocation12 + $0x150] sm:$0xff]
    %v447 = vld [vmem:[#allocation12 + $0x158] sm:$0xff]
    %v448 = vld [vmem:[#allocation12 + $0x160] sm:$0xff]
    %v449 = vld [vmem:[#allocation12 + $0x168] sm:$0xff]
    %v450 = vld [vmem:[#allocation12 + $0x170] sm:$0xff]
    %v451 = vld [vmem:[#allocation12 + $0x178] sm:$0xff]
    %v452 = vld [vmem:[#allocation12 + $0x180] sm:$0xff]
    %v453 = vld [vmem:[#allocation12 + $0x188] sm:$0xff]
    %v454 = vld [vmem:[#allocation12 + $0x190] sm:$0xff]
    %v455 = vld [vmem:[#allocation12 + $0x198] sm:$0xff]
    %v456 = vld [vmem:[#allocation12 + $0x1a0] sm:$0xff]
    %v457 = vld [vmem:[#allocation12 + $0x1a8] sm:$0xff]
    %v458 = vld [vmem:[#allocation12 + $0x1b0] sm:$0xff]
    %v459 = vld [vmem:[#allocation12 + $0x1b8] sm:$0xff]
    %v460 = vld [vmem:[#allocation12 + $0x1c0] sm:$0xff]
    %v461 = vld [vmem:[#allocation12 + $0x1c8] sm:$0xff]
    %v462 = vld [vmem:[#allocation12 + $0x1d0] sm:$0xff]
    %v463 = vld [vmem:[#allocation12 + $0x1d8] sm:$0xff]
    %v464 = vld [vmem:[#allocation12 + $0x1e0] sm:$0xff]
    %v465 = vld [vmem:[#allocation12 + $0x1e8] sm:$0xff]
    %v466 = vld [vmem:[#allocation12 + $0x1f0] sm:$0xff]
    %v467 = vld [vmem:[#allocation12 + $0x1f8] sm:$0xff]
    %v468 = vld [vmem:[#allocation14] sm:$0xff]
    %v469 = vld [vmem:[#allocation14 + $0x8] sm:$0xff]
    %v470 = vld [vmem:[#allocation14 + $0x10] sm:$0xff]
    %v471 = vld [vmem:[#allocation14 + $0x18] sm:$0xff]
    %v472 = vld [vmem:[#allocation14 + $0x20] sm:$0xff]
    %v473 = vld [vmem:[#allocation14 + $0x28] sm:$0xff]
    %v474 = vld [vmem:[#allocation14 + $0x30] sm:$0xff]
    %v475 = vld [vmem:[#allocation14 + $0x38] sm:$0xff]
    %v476 = vld [vmem:[#allocation14 + $0x40] sm:$0xff]
    %v477 = vld [vmem:[#allocation14 + $0x48] sm:$0xff]
    %v478 = vld [vmem:[#allocation14 + $0x50] sm:$0xff]
    %v479 = vld [vmem:[#allocation14 + $0x58] sm:$0xff]
    %v480 = vld [vmem:[#allocation14 + $0x60] sm:$0xff]
    %v481 = vld [vmem:[#allocation14 + $0x68] sm:$0xff]
    %v482 = vld [vmem:[#allocation14 + $0x70] sm:$0xff]
    %v483 = vld [vmem:[#allocation14 + $0x78] sm:$0xff]
    %v484 = vld [vmem:[#allocation14 + $0x80] sm:$0xff]
    %v485 = vld [vmem:[#allocation14 + $0x88] sm:$0xff]
    %v486 = vld [vmem:[#allocation14 + $0x90] sm:$0xff]
    %v487 = vld [vmem:[#allocation14 + $0x98] sm:$0xff]
    %v488 = vld [vmem:[#allocation14 + $0xa0] sm:$0xff]
    %v489 = vld [vmem:[#allocation14 + $0xa8] sm:$0xff]
    %v490 = vld [vmem:[#allocation14 + $0xb0] sm:$0xff]
    %v491 = vld [vmem:[#allocation14 + $0xb8] sm:$0xff]
    %v492 = vld [vmem:[#allocation14 + $0xc0] sm:$0xff]
    %v493 = vld [vmem:[#allocation14 + $0xc8] sm:$0xff]
    %v494 = vld [vmem:[#allocation14 + $0xd0] sm:$0xff]
    %v495 = vld [vmem:[#allocation14 + $0xd8] sm:$0xff]
    %v496 = vld [vmem:[#allocation14 + $0xe0] sm:$0xff]
    %v497 = vld [vmem:[#allocation14 + $0xe8] sm:$0xff]
    %v498 = vld [vmem:[#allocation14 + $0xf0] sm:$0xff]
    %v499 = vld [vmem:[#allocation14 + $0xf8] sm:$0xff]
    %v500 = vld [vmem:[#allocation14 + $0x100] sm:$0xff]
    %v501 = vld [vmem:[#allocation14 + $0x108] sm:$0xff]
    %v502 = vld [vmem:[#allocation14 + $0x110] sm:$0xff]
    %v503 = vld [vmem:[#allocation14 + $0x118] sm:$0xff]
    %v504 = vld [vmem:[#allocation14 + $0x120] sm:$0xff]
    %v505 = vld [vmem:[#allocation14 + $0x128] sm:$0xff]
    %v506 = vld [vmem:[#allocation14 + $0x130] sm:$0xff]
    %v507 = vld [vmem:[#allocation14 + $0x138] sm:$0xff]
    %v508 = vld [vmem:[#allocation14 + $0x140] sm:$0xff]
    %v509 = vld [vmem:[#allocation14 + $0x148] sm:$0xff]
    %v510 = vld [vmem:[#allocation14 + $0x150] sm:$0xff]
    %v511 = vld [vmem:[#allocation14 + $0x158] sm:$0xff]
    %v512 = vld [vmem:[#allocation14 + $0x160] sm:$0xff]
    %v513 = vld [vmem:[#allocation14 + $0x168] sm:$0xff]
    %v514 = vld [vmem:[#allocation14 + $0x170] sm:$0xff]
    %v515 = vld [vmem:[#allocation14 + $0x178] sm:$0xff]
    %v516 = vld [vmem:[#allocation14 + $0x180] sm:$0xff]
    %v517 = vld [vmem:[#allocation14 + $0x188] sm:$0xff]
    %v518 = vld [vmem:[#allocation14 + $0x190] sm:$0xff]
    %v519 = vld [vmem:[#allocation14 + $0x198] sm:$0xff]
    %v520 = vld [vmem:[#allocation14 + $0x1a0] sm:$0xff]
    %v521 = vld [vmem:[#allocation14 + $0x1a8] sm:$0xff]
    %v522 = vld [vmem:[#allocation14 + $0x1b0] sm:$0xff]
    %v523 = vld [vmem:[#allocation14 + $0x1b8] sm:$0xff]
    %v524 = vld [vmem:[#allocation14 + $0x1c0] sm:$0xff]
    %v525 = vld [vmem:[#allocation14 + $0x1c8] sm:$0xff]
    %v526 = vld [vmem:[#allocation14 + $0x1d0] sm:$0xff]
    %v527 = vld [vmem:[#allocation14 + $0x1d8] sm:$0xff]
    %v528 = vld [vmem:[#allocation14 + $0x1e0] sm:$0xff]
    %v529 = vld [vmem:[#allocation14 + $0x1e8] sm:$0xff]
    %v530 = vld [vmem:[#allocation14 + $0x1f0] sm:$0xff]
    %v531 = vld [vmem:[#allocation14 + $0x1f8] sm:$0xff]
    %v532 = vld [vmem:[%s12] sm:$0xf]
    %v533 = vld [vmem:[%s0] sm:$0xff]
    %v534 = vld [vmem:[%s1] sm:$0xf]
    %536 = vset.pattern.permute.xlu0 0
    %537 = vperm.xlu0 %536, %v533
    %v538 = vpop.permute.xlu0 %537
    %v541 = vlaneseq
    %v542 = vshrl.u32 %v541, 7
    %v543 = vsub.s32 0, %v542
    %v544 = vrot.slane %v534, %v543
    %v545 = vlaneseq
    %v546 = vshrl.u32 %v545, 7
    %v547 = vsub.s32 1, %v546
    %v548 = vrot.slane %v534, %v547
    %v549 = vlaneseq
    %v550 = vshrl.u32 %v549, 7
    %v551 = vsub.s32 2, %v550
    %v552 = vrot.slane %v534, %v551
    %v553 = vlaneseq
    %v554 = vshrl.u32 %v553, 7
    %v555 = vsub.s32 3, %v554
    %v556 = vrot.slane %v534, %v555
    %v561 = vmul.f32 %v538, %v544
    %v562 = vmul.f32 %v538, %v548
    %v563 = vmul.f32 %v538, %v552
    %v564 = vmul.f32 %v538, %v556
    %v565 = vld [vmem:[%s3] sm:$0xf]
    %v567 = vlaneseq
    %v568 = vshrl.u32 %v567, 7
    %v569 = vsub.s32 0, %v568
    %v570 = vrot.slane %v565, %v569
    %v571 = vlaneseq
    %v572 = vshrl.u32 %v571, 7
    %v573 = vsub.s32 1, %v572
    %v574 = vrot.slane %v565, %v573
    %v575 = vlaneseq
    %v576 = vshrl.u32 %v575, 7
    %v577 = vsub.s32 2, %v576
    %v578 = vrot.slane %v565, %v577
    %v579 = vlaneseq
    %v580 = vshrl.u32 %v579, 7
    %v581 = vsub.s32 3, %v580
    %v582 = vrot.slane %v565, %v581
    %v587 = vadd.f32 %v561, %v570
    %v588 = vadd.f32 %v562, %v574
    %v589 = vadd.f32 %v563, %v578
    %v590 = vadd.f32 %v564, %v582
    %591 = vmatprep.subr.mxu0 %v148
    %592 = vmatpush1.msra.mxu0 %v147
    %593 = vmatprep.subr.mxu0 %v152
    %594 = vmatpush1.msra.mxu0 %v151
    %595 = vmatprep.subr.mxu0 %v156
    %596 = vmatpush1.msra.mxu0 %v155
    %597 = vmatprep.subr.mxu0 %v160
    %598 = vmatpush1.msra.mxu0 %v159
    %599 = vmatprep.subr.mxu0 %v164
    %600 = vmatpush1.msra.mxu0 %v163
    %601 = vmatprep.subr.mxu0 %v168
    %602 = vmatpush1.msra.mxu0 %v167
    %603 = vmatprep.subr.mxu0 %v172
    %604 = vmatpush1.msra.mxu0 %v171
    %605 = vmatprep.subr.mxu0 %v176
    %606 = vmatpush1.msra.mxu0 %v175
    %607 = vmatprep.subr.mxu0 %v180
    %608 = vmatpush1.msra.mxu0 %v179
    %609 = vmatprep.subr.mxu0 %v184
    %610 = vmatpush1.msra.mxu0 %v183
    %611 = vmatprep.subr.mxu0 %v188
    %612 = vmatpush1.msra.mxu0 %v187
    %613 = vmatprep.subr.mxu0 %v192
    %614 = vmatpush1.msra.mxu0 %v191
    %615 = vmatprep.subr.mxu0 %v196
    %616 = vmatpush1.msra.mxu0 %v195
    %617 = vmatprep.subr.mxu0 %v200
    %618 = vmatpush1.msra.mxu0 %v199
    %619 = vmatprep.subr.mxu0 %v204
    %620 = vmatpush1.msra.mxu0 %v203
    %621 = vmatprep.subr.mxu0 %v208
    %622 = vmatpush1.msra.mxu0 %v207
    %623 = vmatprep.subr.mxu0 0.0
    %624 = vmatpush1.msra.mxu0 0.0
    %625 = vmatprep.subr.mxu0 0.0
    %626 = vmatpush1.msra.mxu0 0.0
    %627 = vmatprep.subr.mxu0 0.0
    %628 = vmatpush1.msra.mxu0 0.0
    %629 = vmatprep.subr.mxu0 0.0
    %630 = vmatpush1.msra.mxu0 0.0
    %631 = vmatprep.subr.mxu0 0.0
    %632 = vmatpush1.msra.mxu0 0.0
    %633 = vmatprep.subr.mxu0 0.0
    %634 = vmatpush1.msra.mxu0 0.0
    %635 = vmatprep.subr.mxu0 0.0
    %636 = vmatpush1.msra.mxu0 0.0
    %637 = vmatprep.subr.mxu0 0.0
    %638 = vmatpush1.msra.mxu0 0.0
    %639 = vmatprep.subr.mxu0 0.0
    %640 = vmatpush1.msra.mxu0 0.0
    %641 = vmatprep.subr.mxu0 0.0
    %642 = vmatpush1.msra.mxu0 0.0
    %643 = vmatprep.subr.mxu0 0.0
    %644 = vmatpush1.msra.mxu0 0.0
    %645 = vmatprep.subr.mxu0 0.0
    %646 = vmatpush1.msra.mxu0 0.0
    %647 = vmatprep.subr.mxu0 0.0
    %648 = vmatpush1.msra.mxu0 0.0
    %649 = vmatprep.subr.mxu0 0.0
    %650 = vmatpush1.msra.mxu0 0.0
    %651 = vmatprep.subr.mxu0 0.0
    %652 = vmatpush1.msra.mxu0 0.0
    %653 = vmatprep.subr.mxu0 0.0
    %654 = vmatpush1.msra.mxu0 0.0
    %655 = vmatprep.mubr.f32.mxu0 0.0
    %656 = vmatmul.mubr.f32.gmra.mrb[0].mxu0 0.0
    %v657 = vpop.f32.mrb[0].mxu0
    %v658 = vadd.f32 0.0, %v657
    %v659 = vpop.f32.mrb[0].mxu0
    %v660 = vadd.f32 0.0, %v659
    %661 = vdwg.mxu0
    %662 = vmatprep.subr.mxu0 %v150
    %663 = vmatpush1.msra.mxu0 %v149
    %664 = vmatprep.subr.mxu0 %v154
    %665 = vmatpush1.msra.mxu0 %v153
    %666 = vmatprep.subr.mxu0 %v158
    %667 = vmatpush1.msra.mxu0 %v157
    %668 = vmatprep.subr.mxu0 %v162
    %669 = vmatpush1.msra.mxu0 %v161
    %670 = vmatprep.subr.mxu0 %v166
    %671 = vmatpush1.msra.mxu0 %v165
    %672 = vmatprep.subr.mxu0 %v170
    %673 = vmatpush1.msra.mxu0 %v169
    %674 = vmatprep.subr.mxu0 %v174
    %675 = vmatpush1.msra.mxu0 %v173
    %676 = vmatprep.subr.mxu0 %v178
    %677 = vmatpush1.msra.mxu0 %v177
    %678 = vmatprep.subr.mxu0 %v182
    %679 = vmatpush1.msra.mxu0 %v181
    %680 = vmatprep.subr.mxu0 %v186
    %681 = vmatpush1.msra.mxu0 %v185
    %682 = vmatprep.subr.mxu0 %v190
    %683 = vmatpush1.msra.mxu0 %v189
    %684 = vmatprep.subr.mxu0 %v194
    %685 = vmatpush1.msra.mxu0 %v193
    %686 = vmatprep.subr.mxu0 %v198
    %687 = vmatpush1.msra.mxu0 %v197
    %688 = vmatprep.subr.mxu0 %v202
    %689 = vmatpush1.msra.mxu0 %v201
    %690 = vmatprep.subr.mxu0 %v206
    %691 = vmatpush1.msra.mxu0 %v205
    %692 = vmatprep.subr.mxu0 %v210
    %693 = vmatpush1.msra.mxu0 %v209
    %694 = vmatprep.subr.mxu0 0.0
    %695 = vmatpush1.msra.mxu0 0.0
    %696 = vmatprep.subr.mxu0 0.0
    %697 = vmatpush1.msra.mxu0 0.0
    %698 = vmatprep.subr.mxu0 0.0
    %699 = vmatpush1.msra.mxu0 0.0
    %700 = vmatprep.subr.mxu0 0.0
    %701 = vmatpush1.msra.mxu0 0.0
    %702 = vmatprep.subr.mxu0 0.0
    %703 = vmatpush1.msra.mxu0 0.0
    %704 = vmatprep.subr.mxu0 0.0
    %705 = vmatpush1.msra.mxu0 0.0
    %706 = vmatprep.subr.mxu0 0.0
    %707 = vmatpush1.msra.mxu0 0.0
    %708 = vmatprep.subr.mxu0 0.0
    %709 = vmatpush1.msra.mxu0 0.0
    %710 = vmatprep.subr.mxu0 0.0
    %711 = vmatpush1.msra.mxu0 0.0
    %712 = vmatprep.subr.mxu0 0.0
    %713 = vmatpush1.msra.mxu0 0.0
    %714 = vmatprep.subr.mxu0 0.0
    %715 = vmatpush1.msra.mxu0 0.0
    %716 = vmatprep.subr.mxu0 0.0
    %717 = vmatpush1.msra.mxu0 0.0
    %718 = vmatprep.subr.mxu0 0.0
    %719 = vmatpush1.msra.mxu0 0.0
    %720 = vmatprep.subr.mxu0 0.0
    %721 = vmatpush1.msra.mxu0 0.0
    %722 = vmatprep.subr.mxu0 0.0
    %723 = vmatpush1.msra.mxu0 0.0
    %724 = vmatprep.subr.mxu0 0.0
    %725 = vmatpush1.msra.mxu0 0.0
    %726 = vmatprep.mubr.f32.mxu0 0.0
    %727 = vmatmul.mubr.f32.gmra.mrb[0].mxu0 0.0
    %v728 = vpop.f32.mrb[0].mxu0
    %v729 = vadd.f32 0.0, %v728
    %v730 = vpop.f32.mrb[0].mxu0
    %v731 = vadd.f32 0.0, %v730
    %732 = vdwg.mxu0
    %v733 = vadd.f32 %v587, %v658
    %v734 = vadd.f32 %v588, %v660
    %v735 = vadd.f32 %v589, %v729
    %v736 = vadd.f32 %v590, %v731
    %v737 = vxor.u32 %v733, 2147483648
    %v738 = vxor.u32 %v734, 2147483648
    %v739 = vxor.u32 %v735, 2147483648
    %v740 = vmul.f32 %v737, 1.442695
    %v741 = vpow.pop %v740
    %v742 = vmul.f32 %v738, 1.442695
    %v743 = vpow.pop %v742
    %v744 = vmul.f32 %v739, 1.442695
    %v745 = vpow.pop %v744
    %v746 = vadd.f32 %v741, 1.0
    %v747 = vadd.f32 %v743, 1.0
    %v748 = vadd.f32 %v745, 1.0
    %v749 = vrcp.pop %v746
    %v750 = vmul.f32 1.0, %v749
    %v751 = vrcp.pop %v747
    %v752 = vmul.f32 1.0, %v751
    %v753 = vrcp.pop %v748
    %v754 = vmul.f32 1.0, %v753
    %v755 = vtanh.pop %v736
    %v756 = vmul.f32 %v752, 0.0
    %v757 = vmul.f32 %v750, %v755
    %v758 = vadd.f32 %v756, %v757
    %v759 = vtanh.pop %v758
    %v760 = vmul.f32 %v754, %v759
    %761 = vmatprep.subr.mxu0 %v276
    %762 = vmatpush1.msra.mxu0 %v275
    %763 = vmatprep.subr.mxu0 %v280
    %764 = vmatpush1.msra.mxu0 %v279
    %765 = vmatprep.subr.mxu0 %v284
    %766 = vmatpush1.msra.mxu0 %v283
    %767 = vmatprep.subr.mxu0 %v288
    %768 = vmatpush1.msra.mxu0 %v287
    %769 = vmatprep.subr.mxu0 %v292
    %770 = vmatpush1.msra.mxu0 %v291
    %771 = vmatprep.subr.mxu0 %v296
    %772 = vmatpush1.msra.mxu0 %v295
    %773 = vmatprep.subr.mxu0 %v300
    %774 = vmatpush1.msra.mxu0 %v299
    %775 = vmatprep.subr.mxu0 %v304
    %776 = vmatpush1.msra.mxu0 %v303
    %777 = vmatprep.subr.mxu0 %v308
    %778 = vmatpush1.msra.mxu0 %v307
    %779 = vmatprep.subr.mxu0 %v312
    %780 = vmatpush1.msra.mxu0 %v311
    %781 = vmatprep.subr.mxu0 %v316
    %782 = vmatpush1.msra.mxu0 %v315
    %783 = vmatprep.subr.mxu0 %v320
    %784 = vmatpush1.msra.mxu0 %v319
    %785 = vmatprep.subr.mxu0 %v324
    %786 = vmatpush1.msra.mxu0 %v323
    %787 = vmatprep.subr.mxu0 %v328
    %788 = vmatpush1.msra.mxu0 %v327
    %789 = vmatprep.subr.mxu0 %v332
    %790 = vmatpush1.msra.mxu0 %v331
    %791 = vmatprep.subr.mxu0 %v336
    %792 = vmatpush1.msra.mxu0 %v335
    %793 = vmatprep.subr.mxu0 0.0
    %794 = vmatpush1.msra.mxu0 0.0
    %795 = vmatprep.subr.mxu0 0.0
    %796 = vmatpush1.msra.mxu0 0.0
    %797 = vmatprep.subr.mxu0 0.0
    %798 = vmatpush1.msra.mxu0 0.0
    %799 = vmatprep.subr.mxu0 0.0
    %800 = vmatpush1.msra.mxu0 0.0
    %801 = vmatprep.subr.mxu0 0.0
    %802 = vmatpush1.msra.mxu0 0.0
    %803 = vmatprep.subr.mxu0 0.0
    %804 = vmatpush1.msra.mxu0 0.0
    %805 = vmatprep.subr.mxu0 0.0
    %806 = vmatpush1.msra.mxu0 0.0
    %807 = vmatprep.subr.mxu0 0.0
    %808 = vmatpush1.msra.mxu0 0.0
    %809 = vmatprep.subr.mxu0 0.0
    %810 = vmatpush1.msra.mxu0 0.0
    %811 = vmatprep.subr.mxu0 0.0
    %812 = vmatpush1.msra.mxu0 0.0
    %813 = vmatprep.subr.mxu0 0.0
    %814 = vmatpush1.msra.mxu0 0.0
    %815 = vmatprep.subr.mxu0 0.0
    %816 = vmatpush1.msra.mxu0 0.0
    %817 = vmatprep.subr.mxu0 0.0
    %818 = vmatpush1.msra.mxu0 0.0
    %819 = vmatprep.subr.mxu0 0.0
    %820 = vmatpush1.msra.mxu0 0.0
    %821 = vmatprep.subr.mxu0 0.0
    %822 = vmatpush1.msra.mxu0 0.0
    %823 = vmatprep.subr.mxu0 0.0
    %824 = vmatpush1.msra.mxu0 0.0
    %825 = vmatprep.mubr.f32.mxu0 0.0
    %826 = vmatmul.mubr.f32.gmra.mrb[0].mxu0 0.0
    %v827 = vpop.f32.mrb[0].mxu0
    %v828 = vadd.f32 0.0, %v827
    %v829 = vpop.f32.mrb[0].mxu0
    %v830 = vadd.f32 0.0, %v829
    %831 = vdwg.mxu0
    %832 = vmatprep.subr.mxu0 %v278
    %833 = vmatpush1.msra.mxu0 %v277
    %834 = vmatprep.subr.mxu0 %v282
    %835 = vmatpush1.msra.mxu0 %v281
    %836 = vmatprep.subr.mxu0 %v286
    %837 = vmatpush1.msra.mxu0 %v285
    %838 = vmatprep.subr.mxu0 %v290
    %839 = vmatpush1.msra.mxu0 %v289
    %840 = vmatprep.subr.mxu0 %v294
    %841 = vmatpush1.msra.mxu0 %v293
    %842 = vmatprep.subr.mxu0 %v298
    %843 = vmatpush1.msra.mxu0 %v297
    %844 = vmatprep.subr.mxu0 %v302
    %845 = vmatpush1.msra.mxu0 %v301
    %846 = vmatprep.subr.mxu0 %v306
    %847 = vmatpush1.msra.mxu0 %v305
    %848 = vmatprep.subr.mxu0 %v310
    %849 = vmatpush1.msra.mxu0 %v309
    %850 = vmatprep.subr.mxu0 %v314
    %851 = vmatpush1.msra.mxu0 %v313
    %852 = vmatprep.subr.mxu0 %v318
    %853 = vmatpush1.msra.mxu0 %v317
    %854 = vmatprep.subr.mxu0 %v322
    %855 = vmatpush1.msra.mxu0 %v321
    %856 = vmatprep.subr.mxu0 %v326
    %857 = vmatpush1.msra.mxu0 %v325
    %858 = vmatprep.subr.mxu0 %v330
    %859 = vmatpush1.msra.mxu0 %v329
    %860 = vmatprep.subr.mxu0 %v334
    %861 = vmatpush1.msra.mxu0 %v333
    %862 = vmatprep.subr.mxu0 %v338
    %863 = vmatpush1.msra.mxu0 %v337
    %864 = vmatprep.subr.mxu0 0.0
    %865 = vmatpush1.msra.mxu0 0.0
    %866 = vmatprep.subr.mxu0 0.0
    %867 = vmatpush1.msra.mxu0 0.0
    %868 = vmatprep.subr.mxu0 0.0
    %869 = vmatpush1.msra.mxu0 0.0
    %870 = vmatprep.subr.mxu0 0.0
    %871 = vmatpush1.msra.mxu0 0.0
    %872 = vmatprep.subr.mxu0 0.0
    %873 = vmatpush1.msra.mxu0 0.0
    %874 = vmatprep.subr.mxu0 0.0
    %875 = vmatpush1.msra.mxu0 0.0
    %876 = vmatprep.subr.mxu0 0.0
    %877 = vmatpush1.msra.mxu0 0.0
    %878 = vmatprep.subr.mxu0 0.0
    %879 = vmatpush1.msra.mxu0 0.0
    %880 = vmatprep.subr.mxu0 0.0
    %881 = vmatpush1.msra.mxu0 0.0
    %882 = vmatprep.subr.mxu0 0.0
    %883 = vmatpush1.msra.mxu0 0.0
    %884 = vmatprep.subr.mxu0 0.0
    %885 = vmatpush1.msra.mxu0 0.0
    %886 = vmatprep.subr.mxu0 0.0
    %887 = vmatpush1.msra.mxu0 0.0
    %888 = vmatprep.subr.mxu0 0.0
    %889 = vmatpush1.msra.mxu0 0.0
    %890 = vmatprep.subr.mxu0 0.0
    %891 = vmatpush1.msra.mxu0 0.0
    %892 = vmatprep.subr.mxu0 0.0
    %893 = vmatpush1.msra.mxu0 0.0
    %894 = vmatprep.subr.mxu0 0.0
    %895 = vmatpush1.msra.mxu0 0.0
    %896 = vmatprep.mubr.f32.mxu0 0.0
    %897 = vmatmul.mubr.f32.gmra.mrb[0].mxu0 0.0
    %v898 = vpop.f32.mrb[0].mxu0
    %v899 = vadd.f32 0.0, %v898
    %v900 = vpop.f32.mrb[0].mxu0
    %v901 = vadd.f32 0.0, %v900
    %902 = vdwg.mxu0
    %903 = vmatprep.subr.mxu0 %v212
    %904 = vmatpush1.msra.mxu0 %v211
    %905 = vmatprep.subr.mxu0 %v216
    %906 = vmatpush1.msra.mxu0 %v215
    %907 = vmatprep.subr.mxu0 %v220
    %908 = vmatpush1.msra.mxu0 %v219
    %909 = vmatprep.subr.mxu0 %v224
    %910 = vmatpush1.msra.mxu0 %v223
    %911 = vmatprep.subr.mxu0 %v228
    %912 = vmatpush1.msra.mxu0 %v227
    %913 = vmatprep.subr.mxu0 %v232
    %914 = vmatpush1.msra.mxu0 %v231
    %915 = vmatprep.subr.mxu0 %v236
    %916 = vmatpush1.msra.mxu0 %v235
    %917 = vmatprep.subr.mxu0 %v240
    %918 = vmatpush1.msra.mxu0 %v239
    %919 = vmatprep.subr.mxu0 %v244
    %920 = vmatpush1.msra.mxu0 %v243
    %921 = vmatprep.subr.mxu0 %v248
    %922 = vmatpush1.msra.mxu0 %v247
    %923 = vmatprep.subr.mxu0 %v252
    %924 = vmatpush1.msra.mxu0 %v251
    %925 = vmatprep.subr.mxu0 %v256
    %926 = vmatpush1.msra.mxu0 %v255
    %927 = vmatprep.subr.mxu0 %v260
    %928 = vmatpush1.msra.mxu0 %v259
    %929 = vmatprep.subr.mxu0 %v264
    %930 = vmatpush1.msra.mxu0 %v263
    %931 = vmatprep.subr.mxu0 %v268
    %932 = vmatpush1.msra.mxu0 %v267
    %933 = vmatprep.subr.mxu0 %v272
    %934 = vmatpush1.msra.mxu0 %v271
    %935 = vmatprep.subr.mxu0 0.0
    %936 = vmatpush1.msra.mxu0 0.0
    %937 = vmatprep.subr.mxu0 0.0
    %938 = vmatpush1.msra.mxu0 0.0
    %939 = vmatprep.subr.mxu0 0.0
    %940 = vmatpush1.msra.mxu0 0.0
    %941 = vmatprep.subr.mxu0 0.0
    %942 = vmatpush1.msra.mxu0 0.0
    %943 = vmatprep.subr.mxu0 0.0
    %944 = vmatpush1.msra.mxu0 0.0
    %945 = vmatprep.subr.mxu0 0.0
    %946 = vmatpush1.msra.mxu0 0.0
    %947 = vmatprep.subr.mxu0 0.0
    %948 = vmatpush1.msra.mxu0 0.0
    %949 = vmatprep.subr.mxu0 0.0
    %950 = vmatpush1.msra.mxu0 0.0
    %951 = vmatprep.subr.mxu0 0.0
    %952 = vmatpush1.msra.mxu0 0.0
    %953 = vmatprep.subr.mxu0 0.0
    %954 = vmatpush1.msra.mxu0 0.0
    %955 = vmatprep.subr.mxu0 0.0
    %956 = vmatpush1.msra.mxu0 0.0
    %957 = vmatprep.subr.mxu0 0.0
    %958 = vmatpush1.msra.mxu0 0.0
    %959 = vmatprep.subr.mxu0 0.0
    %960 = vmatpush1.msra.mxu0 0.0
    %961 = vmatprep.subr.mxu0 0.0
    %962 = vmatpush1.msra.mxu0 0.0
    %963 = vmatprep.subr.mxu0 0.0
    %964 = vmatpush1.msra.mxu0 0.0
    %965 = vmatprep.subr.mxu0 0.0
    %966 = vmatpush1.msra.mxu0 0.0
    %967 = vmatprep.mubr.f32.mxu0 0.0
    %968 = vmatmul.mubr.f32.gmra.mrb[0].mxu0 %v760
    %v969 = vpop.f32.mrb[0].mxu0
    %v970 = vadd.f32 %v828, %v969
    %v971 = vpop.f32.mrb[0].mxu0
    %v972 = vadd.f32 %v830, %v971
    %973 = vdwg.mxu0
    %974 = vmatprep.subr.mxu0 %v214
    %975 = vmatpush1.msra.mxu0 %v213
    %976 = vmatprep.subr.mxu0 %v218
    %977 = vmatpush1.msra.mxu0 %v217
    %978 = vmatprep.subr.mxu0 %v222
    %979 = vmatpush1.msra.mxu0 %v221
    %980 = vmatprep.subr.mxu0 %v226
    %981 = vmatpush1.msra.mxu0 %v225
    %982 = vmatprep.subr.mxu0 %v230
    %983 = vmatpush1.msra.mxu0 %v229
    %984 = vmatprep.subr.mxu0 %v234
    %985 = vmatpush1.msra.mxu0 %v233
    %986 = vmatprep.subr.mxu0 %v238
    %987 = vmatpush1.msra.mxu0 %v237
    %988 = vmatprep.subr.mxu0 %v242
    %989 = vmatpush1.msra.mxu0 %v241
    %990 = vmatprep.subr.mxu0 %v246
    %991 = vmatpush1.msra.mxu0 %v245
    %992 = vmatprep.subr.mxu0 %v250
    %993 = vmatpush1.msra.mxu0 %v249
    %994 = vmatprep.subr.mxu0 %v254
    %995 = vmatpush1.msra.mxu0 %v253
    %996 = vmatprep.subr.mxu0 %v258
    %997 = vmatpush1.msra.mxu0 %v257
    %998 = vmatprep.subr.mxu0 %v262
    %999 = vmatpush1.msra.mxu0 %v261
    %1000 = vmatprep.subr.mxu0 %v266
    %1001 = vmatpush1.msra.mxu0 %v265
    %1002 = vmatprep.subr.mxu0 %v270
    %1003 = vmatpush1.msra.mxu0 %v269
    %1004 = vmatprep.subr.mxu0 %v274
    %1005 = vmatpush1.msra.mxu0 %v273
    %1006 = vmatprep.subr.mxu0 0.0
    %1007 = vmatpush1.msra.mxu0 0.0
    %1008 = vmatprep.subr.mxu0 0.0
    %1009 = vmatpush1.msra.mxu0 0.0
    %1010 = vmatprep.subr.mxu0 0.0
    %1011 = vmatpush1.msra.mxu0 0.0
    %1012 = vmatprep.subr.mxu0 0.0
    %1013 = vmatpush1.msra.mxu0 0.0
    %1014 = vmatprep.subr.mxu0 0.0
    %1015 = vmatpush1.msra.mxu0 0.0
    %1016 = vmatprep.subr.mxu0 0.0
    %1017 = vmatpush1.msra.mxu0 0.0
    %1018 = vmatprep.subr.mxu0 0.0
    %1019 = vmatpush1.msra.mxu0 0.0
    %1020 = vmatprep.subr.mxu0 0.0
    %1021 = vmatpush1.msra.mxu0 0.0
    %1022 = vmatprep.subr.mxu0 0.0
    %1023 = vmatpush1.msra.mxu0 0.0
    %1024 = vmatprep.subr.mxu0 0.0
    %1025 = vmatpush1.msra.mxu0 0.0
    %1026 = vmatprep.subr.mxu0 0.0
    %1027 = vmatpush1.msra.mxu0 0.0
    %1028 = vmatprep.subr.mxu0 0.0
    %1029 = vmatpush1.msra.mxu0 0.0
    %1030 = vmatprep.subr.mxu0 0.0
    %1031 = vmatpush1.msra.mxu0 0.0
    %1032 = vmatprep.subr.mxu0 0.0
    %1033 = vmatpush1.msra.mxu0 0.0
    %1034 = vmatprep.subr.mxu0 0.0
    %1035 = vmatpush1.msra.mxu0 0.0
    %1036 = vmatprep.subr.mxu0 0.0
    %1037 = vmatpush1.msra.mxu0 0.0
    %1038 = vmatprep.mubr.f32.mxu0 0.0
    %1039 = vmatmul.mubr.f32.gmra.mrb[0].mxu0 %v760
    %v1040 = vpop.f32.mrb[0].mxu0
    %v1041 = vadd.f32 %v899, %v1040
    %v1042 = vpop.f32.mrb[0].mxu0
    %v1043 = vadd.f32 %v901, %v1042
    %1044 = vdwg.mxu0
    %v1046 = vlaneseq
    %v1047 = vshrl.u32 %v1046, 7
    %v1048 = vsub.s32 0, %v1047
    %v1049 = vrot.slane %v339, %v1048
    %v1050 = vlaneseq
    %v1051 = vshrl.u32 %v1050, 7
    %v1052 = vsub.s32 1, %v1051
    %v1053 = vrot.slane %v339, %v1052
    %v1054 = vlaneseq
    %v1055 = vshrl.u32 %v1054, 7
    %v1056 = vsub.s32 2, %v1055
    %v1057 = vrot.slane %v339, %v1056
    %v1058 = vlaneseq
    %v1059 = vshrl.u32 %v1058, 7
    %v1060 = vsub.s32 3, %v1059
    %v1061 = vrot.slane %v339, %v1060
    %v1066 = vadd.f32 %v970, %v1049
    %v1067 = vadd.f32 %v972, %v1053
    %v1068 = vadd.f32 %v1041, %v1057
    %v1069 = vadd.f32 %v1043, %v1061
    %v1070 = vxor.u32 %v1066, 2147483648
    %v1071 = vxor.u32 %v1067, 2147483648
    %v1072 = vxor.u32 %v1068, 2147483648
    %v1073 = vmul.f32 %v1070, 1.442695
    %v1074 = vpow.pop %v1073
    %v1075 = vmul.f32 %v1071, 1.442695
    %v1076 = vpow.pop %v1075
    %v1077 = vmul.f32 %v1072, 1.442695
    %v1078 = vpow.pop %v1077
    %v1079 = vadd.f32 %v1074, 1.0
    %v1080 = vadd.f32 %v1076, 1.0
    %v1081 = vadd.f32 %v1078, 1.0
    %v1082 = vrcp.pop %v1079
    %v1083 = vmul.f32 1.0, %v1082
    %v1084 = vrcp.pop %v1080
    %v1085 = vmul.f32 1.0, %v1084
    %v1086 = vrcp.pop %v1081
    %v1087 = vmul.f32 1.0, %v1086
    %v1088 = vtanh.pop %v1069
    %v1089 = vmul.f32 %v1085, 0.0
    %v1090 = vmul.f32 %v1083, %v1088
    %v1091 = vadd.f32 %v1089, %v1090
    %v1092 = vtanh.pop %v1091
    %v1093 = vmul.f32 %v1087, %v1092
    %1094 = vmatprep.subr.mxu0 %v148
    %1095 = vmatpush1.msra.mxu0 %v147
    %1096 = vmatprep.subr.mxu0 %v152
    %1097 = vmatpush1.msra.mxu0 %v151
    %1098 = vmatprep.subr.mxu0 %v156
    %1099 = vmatpush1.msra.mxu0 %v155
    %1100 = vmatprep.subr.mxu0 %v160
    %1101 = vmatpush1.msra.mxu0 %v159
    %1102 = vmatprep.subr.mxu0 %v164
    %1103 = vmatpush1.msra.mxu0 %v163
    %1104 = vmatprep.subr.mxu0 %v168
    %1105 = vmatpush1.msra.mxu0 %v167
    %1106 = vmatprep.subr.mxu0 %v172
    %1107 = vmatpush1.msra.mxu0 %v171
    %1108 = vmatprep.subr.mxu0 %v176
    %1109 = vmatpush1.msra.mxu0 %v175
    %1110 = vmatprep.subr.mxu0 %v180
    %1111 = vmatpush1.msra.mxu0 %v179
    %1112 = vmatprep.subr.mxu0 %v184
    %1113 = vmatpush1.msra.mxu0 %v183
    %1114 = vmatprep.subr.mxu0 %v188
    %1115 = vmatpush1.msra.mxu0 %v187
    %1116 = vmatprep.subr.mxu0 %v192
    %1117 = vmatpush1.msra.mxu0 %v191
    %1118 = vmatprep.subr.mxu0 %v196
    %1119 = vmatpush1.msra.mxu0 %v195
    %1120 = vmatprep.subr.mxu0 %v200
    %1121 = vmatpush1.msra.mxu0 %v199
    %1122 = vmatprep.subr.mxu0 %v204
    %1123 = vmatpush1.msra.mxu0 %v203
    %1124 = vmatprep.subr.mxu0 %v208
    %1125 = vmatpush1.msra.mxu0 %v207
    %1126 = vmatprep.subr.mxu0 0.0
    %1127 = vmatpush1.msra.mxu0 0.0
    %1128 = vmatprep.subr.mxu0 0.0
    %1129 = vmatpush1.msra.mxu0 0.0
    %1130 = vmatprep.subr.mxu0 0.0
    %1131 = vmatpush1.msra.mxu0 0.0
    %1132 = vmatprep.subr.mxu0 0.0
    %1133 = vmatpush1.msra.mxu0 0.0
    %1134 = vmatprep.subr.mxu0 0.0
    %1135 = vmatpush1.msra.mxu0 0.0
    %1136 = vmatprep.subr.mxu0 0.0
    %1137 = vmatpush1.msra.mxu0 0.0
    %1138 = vmatprep.subr.mxu0 0.0
    %1139 = vmatpush1.msra.mxu0 0.0
    %1140 = vmatprep.subr.mxu0 0.0
    %1141 = vmatpush1.msra.mxu0 0.0
    %1142 = vmatprep.subr.mxu0 0.0
    %1143 = vmatpush1.msra.mxu0 0.0
    %1144 = vmatprep.subr.mxu0 0.0
    %1145 = vmatpush1.msra.mxu0 0.0
    %1146 = vmatprep.subr.mxu0 0.0
    %1147 = vmatpush1.msra.mxu0 0.0
    %1148 = vmatprep.subr.mxu0 0.0
    %1149 = vmatpush1.msra.mxu0 0.0
    %1150 = vmatprep.subr.mxu0 0.0
    %1151 = vmatpush1.msra.mxu0 0.0
    %1152 = vmatprep.subr.mxu0 0.0
    %1153 = vmatpush1.msra.mxu0 0.0
    %1154 = vmatprep.subr.mxu0 0.0
    %1155 = vmatpush1.msra.mxu0 0.0
    %1156 = vmatprep.subr.mxu0 0.0
    %1157 = vmatpush1.msra.mxu0 0.0
    %1158 = vmatprep.mubr.f32.mxu0 0.0
    %1159 = vmatmul.mubr.f32.gmra.mrb[0].mxu0 %v760
    %v1160 = vpop.f32.mrb[0].mxu0
    %v1161 = vadd.f32 0.0, %v1160
    %v1162 = vpop.f32.mrb[0].mxu0
    %v1163 = vadd.f32 0.0, %v1162
    %1164 = vdwg.mxu0
    %1165 = vmatprep.subr.mxu0 %v150
    %1166 = vmatpush1.msra.mxu0 %v149
    %1167 = vmatprep.subr.mxu0 %v154
    %1168 = vmatpush1.msra.mxu0 %v153
    %1169 = vmatprep.subr.mxu0 %v158
    %1170 = vmatpush1.msra.mxu0 %v157
    %1171 = vmatprep.subr.mxu0 %v162
    %1172 = vmatpush1.msra.mxu0 %v161
    %1173 = vmatprep.subr.mxu0 %v166
    %1174 = vmatpush1.msra.mxu0 %v165
    %1175 = vmatprep.subr.mxu0 %v170
    %1176 = vmatpush1.msra.mxu0 %v169
    %1177 = vmatprep.subr.mxu0 %v174
    %1178 = vmatpush1.msra.mxu0 %v173
    %1179 = vmatprep.subr.mxu0 %v178
    %1180 = vmatpush1.msra.mxu0 %v177
    %1181 = vmatprep.subr.mxu0 %v182
    %1182 = vmatpush1.msra.mxu0 %v181
    %1183 = vmatprep.subr.mxu0 %v186
    %1184 = vmatpush1.msra.mxu0 %v185
    %1185 = vmatprep.subr.mxu0 %v190
    %1186 = vmatpush1.msra.mxu0 %v189
    %1187 = vmatprep.subr.mxu0 %v194
    %1188 = vmatpush1.msra.mxu0 %v193
    %1189 = vmatprep.subr.mxu0 %v198
    %1190 = vmatpush1.msra.mxu0 %v197
    %1191 = vmatprep.subr.mxu0 %v202
    %1192 = vmatpush1.msra.mxu0 %v201
    %1193 = vmatprep.subr.mxu0 %v206
    %1194 = vmatpush1.msra.mxu0 %v205
    %1195 = vmatprep.subr.mxu0 %v210
    %1196 = vmatpush1.msra.mxu0 %v209
    %1197 = vmatprep.subr.mxu0 0.0
    %1198 = vmatpush1.msra.mxu0 0.0
    %1199 = vmatprep.subr.mxu0 0.0
    %1200 = vmatpush1.msra.mxu0 0.0
    %1201 = vmatprep.subr.mxu0 0.0
    %1202 = vmatpush1.msra.mxu0 0.0
    %1203 = vmatprep.subr.mxu0 0.0
    %1204 = vmatpush1.msra.mxu0 0.0
    %1205 = vmatprep.subr.mxu0 0.0
    %1206 = vmatpush1.msra.mxu0 0.0
    %1207 = vmatprep.subr.mxu0 0.0
    %1208 = vmatpush1.msra.mxu0 0.0
    %1209 = vmatprep.subr.mxu0 0.0
    %1210 = vmatpush1.msra.mxu0 0.0
    %1211 = vmatprep.subr.mxu0 0.0
    %1212 = vmatpush1.msra.mxu0 0.0
    %1213 = vmatprep.subr.mxu0 0.0
    %1214 = vmatpush1.msra.mxu0 0.0
    %1215 = vmatprep.subr.mxu0 0.0
    %1216 = vmatpush1.msra.mxu0 0.0
    %1217 = vmatprep.subr.mxu0 0.0
    %1218 = vmatpush1.msra.mxu0 0.0
    %1219 = vmatprep.subr.mxu0 0.0
    %1220 = vmatpush1.msra.mxu0 0.0
    %1221 = vmatprep.subr.mxu0 0.0
    %1222 = vmatpush1.msra.mxu0 0.0
    %1223 = vmatprep.subr.mxu0 0.0
    %1224 = vmatpush1.msra.mxu0 0.0
    %1225 = vmatprep.subr.mxu0 0.0
    %1226 = vmatpush1.msra.mxu0 0.0
    %1227 = vmatprep.subr.mxu0 0.0
    %1228 = vmatpush1.msra.mxu0 0.0
    %1229 = vmatprep.mubr.f32.mxu0 0.0
    %1230 = vmatmul.mubr.f32.gmra.mrb[0].mxu0 %v760
    %v1231 = vpop.f32.mrb[0].mxu0
    %v1232 = vadd.f32 0.0, %v1231
    %v1233 = vpop.f32.mrb[0].mxu0
    %v1234 = vadd.f32 0.0, %v1233
    %1235 = vdwg.mxu0
    %v1240 = vrot.slane %v1161, 7
    %v1241 = vrot.slane %v1163, 7
    %v1242 = vrot.slane %v1232, 7
    %v1243 = vrot.slane %v1234, 7
    %v1248 = vadd.f32 %v587, %v1240
    %v1249 = vadd.f32 %v588, %v1241
    %v1250 = vadd.f32 %v589, %v1242
    %v1251 = vadd.f32 %v590, %v1243
    %v1252 = vxor.u32 %v1248, 2147483648
    %v1253 = vxor.u32 %v1249, 2147483648
    %v1254 = vxor.u32 %v1250, 2147483648
    %v1255 = vmul.f32 %v1252, 1.442695
    %v1256 = vpow.pop %v1255
    %v1257 = vmul.f32 %v1253, 1.442695
    %v1258 = vpow.pop %v1257
    %v1259 = vmul.f32 %v1254, 1.442695
    %v1260 = vpow.pop %v1259
    %v1261 = vadd.f32 %v1256, 1.0
    %v1262 = vadd.f32 %v1258, 1.0
    %v1263 = vadd.f32 %v1260, 1.0
    %v1264 = vrcp.pop %v1261
    %v1265 = vmul.f32 1.0, %v1264
    %v1266 = vrcp.pop %v1262
    %v1267 = vmul.f32 1.0, %v1266
    %v1268 = vrcp.pop %v1263
    %v1269 = vmul.f32 1.0, %v1268
    %v1270 = vtanh.pop %v1251
    %v1272 = vrot.slane %v758, 7
    %v1274 = vmul.f32 %v1267, %v1272
    %v1275 = vmul.f32 %v1265, %v1270
    %v1276 = vadd.f32 %v1274, %v1275
    %v1277 = vtanh.pop %v1276
    %v1278 = vmul.f32 %v1269, %v1277
    %1279 = vmatprep.subr.mxu0 %v276
    %1280 = vmatpush1.msra.mxu0 %v275
    %1281 = vmatprep.subr.mxu0 %v280
    %1282 = vmatpush1.msra.mxu0 %v279
    %1283 = vmatprep.subr.mxu0 %v284
    %1284 = vmatpush1.msra.mxu0 %v283
    %1285 = vmatprep.subr.mxu0 %v288
    %1286 = vmatpush1.msra.mxu0 %v287
    %1287 = vmatprep.subr.mxu0 %v292
    %1288 = vmatpush1.msra.mxu0 %v291
    %1289 = vmatprep.subr.mxu0 %v296
    %1290 = vmatpush1.msra.mxu0 %v295
    %1291 = vmatprep.subr.mxu0 %v300
    %1292 = vmatpush1.msra.mxu0 %v299
    %1293 = vmatprep.subr.mxu0 %v304
    %1294 = vmatpush1.msra.mxu0 %v303
    %1295 = vmatprep.subr.mxu0 %v308
    %1296 = vmatpush1.msra.mxu0 %v307
    %1297 = vmatprep.subr.mxu0 %v312
    %1298 = vmatpush1.msra.mxu0 %v311
    %1299 = vmatprep.subr.mxu0 %v316
    %1300 = vmatpush1.msra.mxu0 %v315
    %1301 = vmatprep.subr.mxu0 %v320
    %1302 = vmatpush1.msra.mxu0 %v319
    %1303 = vmatprep.subr.mxu0 %v324
    %1304 = vmatpush1.msra.mxu0 %v323
    %1305 = vmatprep.subr.mxu0 %v328
    %1306 = vmatpush1.msra.mxu0 %v327
    %1307 = vmatprep.subr.mxu0 %v332
    %1308 = vmatpush1.msra.mxu0 %v331
    %1309 = vmatprep.subr.mxu0 %v336
    %1310 = vmatpush1.msra.mxu0 %v335
    %1311 = vmatprep.subr.mxu0 0.0
    %1312 = vmatpush1.msra.mxu0 0.0
    %1313 = vmatprep.subr.mxu0 0.0
    %1314 = vmatpush1.msra.mxu0 0.0
    %1315 = vmatprep.subr.mxu0 0.0
    %1316 = vmatpush1.msra.mxu0 0.0
    %1317 = vmatprep.subr.mxu0 0.0
    %1318 = vmatpush1.msra.mxu0 0.0
    %1319 = vmatprep.subr.mxu0 0.0
    %1320 = vmatpush1.msra.mxu0 0.0
    %1321 = vmatprep.subr.mxu0 0.0
    %1322 = vmatpush1.msra.mxu0 0.0
    %1323 = vmatprep.subr.mxu0 0.0
    %1324 = vmatpush1.msra.mxu0 0.0
    %1325 = vmatprep.subr.mxu0 0.0
    %1326 = vmatpush1.msra.mxu0 0.0
    %1327 = vmatprep.subr.mxu0 0.0
    %1328 = vmatpush1.msra.mxu0 0.0
    %1329 = vmatprep.subr.mxu0 0.0
    %1330 = vmatpush1.msra.mxu0 0.0
    %1331 = vmatprep.subr.mxu0 0.0
    %1332 = vmatpush1.msra.mxu0 0.0
    %1333 = vmatprep.subr.mxu0 0.0
    %1334 = vmatpush1.msra.mxu0 0.0
    %1335 = vmatprep.subr.mxu0 0.0
    %1336 = vmatpush1.msra.mxu0 0.0
    %1337 = vmatprep.subr.mxu0 0.0
    %1338 = vmatpush1.msra.mxu0 0.0
    %1339 = vmatprep.subr.mxu0 0.0
    %1340 = vmatpush1.msra.mxu0 0.0
    %1341 = vmatprep.subr.mxu0 0.0
    %1342 = vmatpush1.msra.mxu0 0.0
    %1343 = vmatprep.mubr.f32.mxu0 0.0
    %1344 = vmatmul.mubr.f32.gmra.mrb[0].mxu0 %v1093
    %v1345 = vpop.f32.mrb[0].mxu0
    %v1346 = vadd.f32 0.0, %v1345
    %v1347 = vpop.f32.mrb[0].mxu0
    %v1348 = vadd.f32 0.0, %v1347
    %1349 = vdwg.mxu0
    %1350 = vmatprep.subr.mxu0 %v278
    %1351 = vmatpush1.msra.mxu0 %v277
    %1352 = vmatprep.subr.mxu0 %v282
    %1353 = vmatpush1.msra.mxu0 %v281
    %1354 = vmatprep.subr.mxu0 %v286
    %1355 = vmatpush1.msra.mxu0 %v285
    %1356 = vmatprep.subr.mxu0 %v290
    %1357 = vmatpush1.msra.mxu0 %v289
    %1358 = vmatprep.subr.mxu0 %v294
    %1359 = vmatpush1.msra.mxu0 %v293
    %1360 = vmatprep.subr.mxu0 %v298
    %1361 = vmatpush1.msra.mxu0 %v297
    %1362 = vmatprep.subr.mxu0 %v302
    %1363 = vmatpush1.msra.mxu0 %v301
    %1364 = vmatprep.subr.mxu0 %v306
    %1365 = vmatpush1.msra.mxu0 %v305
    %1366 = vmatprep.subr.mxu0 %v310
    %1367 = vmatpush1.msra.mxu0 %v309
    %1368 = vmatprep.subr.mxu0 %v314
    %1369 = vmatpush1.msra.mxu0 %v313
    %1370 = vmatprep.subr.mxu0 %v318
    %1371 = vmatpush1.msra.mxu0 %v317
    %1372 = vmatprep.subr.mxu0 %v322
    %1373 = vmatpush1.msra.mxu0 %v321
    %1374 = vmatprep.subr.mxu0 %v326
    %1375 = vmatpush1.msra.mxu0 %v325
    %1376 = vmatprep.subr.mxu0 %v330
    %1377 = vmatpush1.msra.mxu0 %v329
    %1378 = vmatprep.subr.mxu0 %v334
    %1379 = vmatpush1.msra.mxu0 %v333
    %1380 = vmatprep.subr.mxu0 %v338
    %1381 = vmatpush1.msra.mxu0 %v337
    %1382 = vmatprep.subr.mxu0 0.0
    %1383 = vmatpush1.msra.mxu0 0.0
    %1384 = vmatprep.subr.mxu0 0.0
    %1385 = vmatpush1.msra.mxu0 0.0
    %1386 = vmatprep.subr.mxu0 0.0
    %1387 = vmatpush1.msra.mxu0 0.0
    %1388 = vmatprep.subr.mxu0 0.0
    %1389 = vmatpush1.msra.mxu0 0.0
    %1390 = vmatprep.subr.mxu0 0.0
    %1391 = vmatpush1.msra.mxu0 0.0
    %1392 = vmatprep.subr.mxu0 0.0
    %1393 = vmatpush1.msra.mxu0 0.0
    %1394 = vmatprep.subr.mxu0 0.0
    %1395 = vmatpush1.msra.mxu0 0.0
    %1396 = vmatprep.subr.mxu0 0.0
    %1397 = vmatpush1.msra.mxu0 0.0
    %1398 = vmatprep.subr.mxu0 0.0
    %1399 = vmatpush1.msra.mxu0 0.0
    %1400 = vmatprep.subr.mxu0 0.0
    %1401 = vmatpush1.msra.mxu0 0.0
    %1402 = vmatprep.subr.mxu0 0.0
    %1403 = vmatpush1.msra.mxu0 0.0
    %1404 = vmatprep.subr.mxu0 0.0
    %1405 = vmatpush1.msra.mxu0 0.0
    %1406 = vmatprep.subr.mxu0 0.0
    %1407 = vmatpush1.msra.mxu0 0.0
    %1408 = vmatprep.subr.mxu0 0.0
    %1409 = vmatpush1.msra.mxu0 0.0
    %1410 = vmatprep.subr.mxu0 0.0
    %1411 = vmatpush1.msra.mxu0 0.0
    %1412 = vmatprep.subr.mxu0 0.0
    %1413 = vmatpush1.msra.mxu0 0.0
    %1414 = vmatprep.mubr.f32.mxu0 0.0
    %1415 = vmatmul.mubr.f32.gmra.mrb[0].mxu0 %v1093
    %v1416 = vpop.f32.mrb[0].mxu0
    %v1417 = vadd.f32 0.0, %v1416
    %v1418 = vpop.f32.mrb[0].mxu0
    %v1419 = vadd.f32 0.0, %v1418
    %1420 = vdwg.mxu0
    %v1422 = vrot.slane %v1278, 1
    %1424 = vmatprep.subr.mxu0 %v212
    %1425 = vmatpush1.msra.mxu0 %v211
    %1426 = vmatprep.subr.mxu0 %v216
    %1427 = vmatpush1.msra.mxu0 %v215
    %1428 = vmatprep.subr.mxu0 %v220
    %1429 = vmatpush1.msra.mxu0 %v219
    %1430 = vmatprep.subr.mxu0 %v224
    %1431 = vmatpush1.msra.mxu0 %v223
    %1432 = vmatprep.subr.mxu0 %v228
    %1433 = vmatpush1.msra.mxu0 %v227
    %1434 = vmatprep.subr.mxu0 %v232
    %1435 = vmatpush1.msra.mxu0 %v231
    %1436 = vmatprep.subr.mxu0 %v236
    %1437 = vmatpush1.msra.mxu0 %v235
    %1438 = vmatprep.subr.mxu0 %v240
    %1439 = vmatpush1.msra.mxu0 %v239
    %1440 = vmatprep.subr.mxu0 %v244
    %1441 = vmatpush1.msra.mxu0 %v243
    %1442 = vmatprep.subr.mxu0 %v248
    %1443 = vmatpush1.msra.mxu0 %v247
    %1444 = vmatprep.subr.mxu0 %v252
    %1445 = vmatpush1.msra.mxu0 %v251
    %1446 = vmatprep.subr.mxu0 %v256
    %1447 = vmatpush1.msra.mxu0 %v255
    %1448 = vmatprep.subr.mxu0 %v260
    %1449 = vmatpush1.msra.mxu0 %v259
    %1450 = vmatprep.subr.mxu0 %v264
    %1451 = vmatpush1.msra.mxu0 %v263
    %1452 = vmatprep.subr.mxu0 %v268
    %1453 = vmatpush1.msra.mxu0 %v267
    %1454 = vmatprep.subr.mxu0 %v272
    %1455 = vmatpush1.msra.mxu0 %v271
    %1456 = vmatprep.subr.mxu0 0.0
    %1457 = vmatpush1.msra.mxu0 0.0
    %1458 = vmatprep.subr.mxu0 0.0
    %1459 = vmatpush1.msra.mxu0 0.0
    %1460 = vmatprep.subr.mxu0 0.0
    %1461 = vmatpush1.msra.mxu0 0.0
    %1462 = vmatprep.subr.mxu0 0.0
    %1463 = vmatpush1.msra.mxu0 0.0
    %1464 = vmatprep.subr.mxu0 0.0
    %1465 = vmatpush1.msra.mxu0 0.0
    %1466 = vmatprep.subr.mxu0 0.0
    %1467 = vmatpush1.msra.mxu0 0.0
    %1468 = vmatprep.subr.mxu0 0.0
    %1469 = vmatpush1.msra.mxu0 0.0
    %1470 = vmatprep.subr.mxu0 0.0
    %1471 = vmatpush1.msra.mxu0 0.0
    %1472 = vmatprep.subr.mxu0 0.0
    %1473 = vmatpush1.msra.mxu0 0.0
    %1474 = vmatprep.subr.mxu0 0.0
    %1475 = vmatpush1.msra.mxu0 0.0
    %1476 = vmatprep.subr.mxu0 0.0
    %1477 = vmatpush1.msra.mxu0 0.0
    %1478 = vmatprep.subr.mxu0 0.0
    %1479 = vmatpush1.msra.mxu0 0.0
    %1480 = vmatprep.subr.mxu0 0.0
    %1481 = vmatpush1.msra.mxu0 0.0
    %1482 = vmatprep.subr.mxu0 0.0
    %1483 = vmatpush1.msra.mxu0 0.0
    %1484 = vmatprep.subr.mxu0 0.0
    %1485 = vmatpush1.msra.mxu0 0.0
    %1486 = vmatprep.subr.mxu0 0.0
    %1487 = vmatpush1.msra.mxu0 0.0
    %1488 = vmatprep.mubr.f32.mxu0 0.0
    %1489 = vmatmul.mubr.f32.gmra.mrb[0].mxu0 %v1422
    %v1490 = vpop.f32.mrb[0].mxu0
    %v1491 = vadd.f32 %v1346, %v1490
    %v1492 = vpop.f32.mrb[0].mxu0
    %v1493 = vadd.f32 %v1348, %v1492
    %1494 = vdwg.mxu0
    %1495 = vmatprep.subr.mxu0 %v214
    %1496 = vmatpush1.msra.mxu0 %v213
    %1497 = vmatprep.subr.mxu0 %v218
    %1498 = vmatpush1.msra.mxu0 %v217
    %1499 = vmatprep.subr.mxu0 %v222
    %1500 = vmatpush1.msra.mxu0 %v221
    %1501 = vmatprep.subr.mxu0 %v226
    %1502 = vmatpush1.msra.mxu0 %v225
    %1503 = vmatprep.subr.mxu0 %v230
    %1504 = vmatpush1.msra.mxu0 %v229
    %1505 = vmatprep.subr.mxu0 %v234
    %1506 = vmatpush1.msra.mxu0 %v233
    %1507 = vmatprep.subr.mxu0 %v238
    %1508 = vmatpush1.msra.mxu0 %v237
    %1509 = vmatprep.subr.mxu0 %v242
    %1510 = vmatpush1.msra.mxu0 %v241
    %1511 = vmatprep.subr.mxu0 %v246
    %1512 = vmatpush1.msra.mxu0 %v245
    %1513 = vmatprep.subr.mxu0 %v250
    %1514 = vmatpush1.msra.mxu0 %v249
    %1515 = vmatprep.subr.mxu0 %v254
    %1516 = vmatpush1.msra.mxu0 %v253
    %1517 = vmatprep.subr.mxu0 %v258
    %1518 = vmatpush1.msra.mxu0 %v257
    %1519 = vmatprep.subr.mxu0 %v262
    %1520 = vmatpush1.msra.mxu0 %v261
    %1521 = vmatprep.subr.mxu0 %v266
    %1522 = vmatpush1.msra.mxu0 %v265
    %1523 = vmatprep.subr.mxu0 %v270
    %1524 = vmatpush1.msra.mxu0 %v269
    %1525 = vmatprep.subr.mxu0 %v274
    %1526 = vmatpush1.msra.mxu0 %v273
    %1527 = vmatprep.subr.mxu0 0.0
    %1528 = vmatpush1.msra.mxu0 0.0
    %1529 = vmatprep.subr.mxu0 0.0
    %1530 = vmatpush1.msra.mxu0 0.0
    %1531 = vmatprep.subr.mxu0 0.0
    %1532 = vmatpush1.msra.mxu0 0.0
    %1533 = vmatprep.subr.mxu0 0.0
    %1534 = vmatpush1.msra.mxu0 0.0
    %1535 = vmatprep.subr.mxu0 0.0
    %1536 = vmatpush1.msra.mxu0 0.0
    %1537 = vmatprep.subr.mxu0 0.0
    %1538 = vmatpush1.msra.mxu0 0.0
    %1539 = vmatprep.subr.mxu0 0.0
    %1540 = vmatpush1.msra.mxu0 0.0
    %1541 = vmatprep.subr.mxu0 0.0
    %1542 = vmatpush1.msra.mxu0 0.0
    %1543 = vmatprep.subr.mxu0 0.0
    %1544 = vmatpush1.msra.mxu0 0.0
    %1545 = vmatprep.subr.mxu0 0.0
    %1546 = vmatpush1.msra.mxu0 0.0
    %1547 = vmatprep.subr.mxu0 0.0
    %1548 = vmatpush1.msra.mxu0 0.0
    %1549 = vmatprep.subr.mxu0 0.0
    %1550 = vmatpush1.msra.mxu0 0.0
    %1551 = vmatprep.subr.mxu0 0.0
    %1552 = vmatpush1.msra.mxu0 0.0
    %1553 = vmatprep.subr.mxu0 0.0
    %1554 = vmatpush1.msra.mxu0 0.0
    %1555 = vmatprep.subr.mxu0 0.0
    %1556 = vmatpush1.msra.mxu0 0.0
    %1557 = vmatprep.subr.mxu0 0.0
    %1558 = vmatpush1.msra.mxu0 0.0
    %1559 = vmatprep.mubr.f32.mxu0 0.0
    %1560 = vmatmul.mubr.f32.gmra.mrb[0].mxu0 %v1422
    %v1561 = vpop.f32.mrb[0].mxu0
    %v1562 = vadd.f32 %v1417, %v1561
    %v1563 = vpop.f32.mrb[0].mxu0
    %v1564 = vadd.f32 %v1419, %v1563
    %1565 = vdwg.mxu0
    %v1566 = vadd.f32 %v1491, %v1049
    %v1567 = vadd.f32 %v1493, %v1053
    %v1568 = vadd.f32 %v1562, %v1057
    %v1569 = vadd.f32 %v1564, %v1061
    %v1570 = vxor.u32 %v1566, 2147483648
    %v1571 = vxor.u32 %v1567, 2147483648
    %v1572 = vxor.u32 %v1568, 2147483648
    %v1573 = vmul.f32 %v1570, 1.442695
    %v1574 = vpow.pop %v1573
    %v1575 = vmul.f32 %v1571, 1.442695
    %v1576 = vpow.pop %v1575
    %v1577 = vmul.f32 %v1572, 1.442695
    %v1578 = vpow.pop %v1577
    %v1579 = vadd.f32 %v1574, 1.0
    %v1580 = vadd.f32 %v1576, 1.0
    %v1581 = vadd.f32 %v1578, 1.0
    %v1582 = vrcp.pop %v1579
    %v1583 = vmul.f32 1.0, %v1582
    %v1584 = vrcp.pop %v1580
    %v1585 = vmul.f32 1.0, %v1584
    %v1586 = vrcp.pop %v1581
    %v1587 = vmul.f32 1.0, %v1586
    %v1588 = vtanh.pop %v1569
    %v1589 = vmul.f32 %v1585, %v1091
    %v1590 = vmul.f32 %v1583, %v1588
    %v1591 = vadd.f32 %v1589, %v1590
    %v1592 = vtanh.pop %v1591
    %v1593 = vmul.f32 %v1587, %v1592
    %1594 = vmatprep.subr.mxu0 %v148
    %1595 = vmatpush1.msra.mxu0 %v147
    %1596 = vmatprep.subr.mxu0 %v152
    %1597 = vmatpush1.msra.mxu0 %v151
    %1598 = vmatprep.subr.mxu0 %v156
    %1599 = vmatpush1.msra.mxu0 %v155
    %1600 = vmatprep.subr.mxu0 %v160
    %1601 = vmatpush1.msra.mxu0 %v159
    %1602 = vmatprep.subr.mxu0 %v164
    %1603 = vmatpush1.msra.mxu0 %v163
    %1604 = vmatprep.subr.mxu0 %v168
    %1605 = vmatpush1.msra.mxu0 %v167
    %1606 = vmatprep.subr.mxu0 %v172
    %1607 = vmatpush1.msra.mxu0 %v171
    %1608 = vmatprep.subr.mxu0 %v176
    %1609 = vmatpush1.msra.mxu0 %v175
    %1610 = vmatprep.subr.mxu0 %v180
    %1611 = vmatpush1.msra.mxu0 %v179
    %1612 = vmatprep.subr.mxu0 %v184
    %1613 = vmatpush1.msra.mxu0 %v183
    %1614 = vmatprep.subr.mxu0 %v188
    %1615 = vmatpush1.msra.mxu0 %v187
    %1616 = vmatprep.subr.mxu0 %v192
    %1617 = vmatpush1.msra.mxu0 %v191
    %1618 = vmatprep.subr.mxu0 %v196
    %1619 = vmatpush1.msra.mxu0 %v195
    %1620 = vmatprep.subr.mxu0 %v200
    %1621 = vmatpush1.msra.mxu0 %v199
    %1622 = vmatprep.subr.mxu0 %v204
    %1623 = vmatpush1.msra.mxu0 %v203
    %1624 = vmatprep.subr.mxu0 %v208
    %1625 = vmatpush1.msra.mxu0 %v207
    %1626 = vmatprep.subr.mxu0 0.0
    %1627 = vmatpush1.msra.mxu0 0.0
    %1628 = vmatprep.subr.mxu0 0.0
    %1629 = vmatpush1.msra.mxu0 0.0
    %1630 = vmatprep.subr.mxu0 0.0
    %1631 = vmatpush1.msra.mxu0 0.0
    %1632 = vmatprep.subr.mxu0 0.0
    %1633 = vmatpush1.msra.mxu0 0.0
    %1634 = vmatprep.subr.mxu0 0.0
    %1635 = vmatpush1.msra.mxu0 0.0
    %1636 = vmatprep.subr.mxu0 0.0
    %1637 = vmatpush1.msra.mxu0 0.0
    %1638 = vmatprep.subr.mxu0 0.0
    %1639 = vmatpush1.msra.mxu0 0.0
    %1640 = vmatprep.subr.mxu0 0.0
    %1641 = vmatpush1.msra.mxu0 0.0
    %1642 = vmatprep.subr.mxu0 0.0
    %1643 = vmatpush1.msra.mxu0 0.0
    %1644 = vmatprep.subr.mxu0 0.0
    %1645 = vmatpush1.msra.mxu0 0.0
    %1646 = vmatprep.subr.mxu0 0.0
    %1647 = vmatpush1.msra.mxu0 0.0
    %1648 = vmatprep.subr.mxu0 0.0
    %1649 = vmatpush1.msra.mxu0 0.0
    %1650 = vmatprep.subr.mxu0 0.0
    %1651 = vmatpush1.msra.mxu0 0.0
    %1652 = vmatprep.subr.mxu0 0.0
    %1653 = vmatpush1.msra.mxu0 0.0
    %1654 = vmatprep.subr.mxu0 0.0
    %1655 = vmatpush1.msra.mxu0 0.0
    %1656 = vmatprep.subr.mxu0 0.0
    %1657 = vmatpush1.msra.mxu0 0.0
    %1658 = vmatprep.mubr.f32.mxu0 0.0
    %1659 = vmatmul.mubr.f32.gmra.mrb[0].mxu0 %v1422
    %v1660 = vpop.f32.mrb[0].mxu0
    %v1661 = vadd.f32 0.0, %v1660
    %v1662 = vpop.f32.mrb[0].mxu0
    %v1663 = vadd.f32 0.0, %v1662
    %1664 = vdwg.mxu0
    %1665 = vmatprep.subr.mxu0 %v150
    %1666 = vmatpush1.msra.mxu0 %v149
    %1667 = vmatprep.subr.mxu0 %v154
    %1668 = vmatpush1.msra.mxu0 %v153
    %1669 = vmatprep.subr.mxu0 %v158
    %1670 = vmatpush1.msra.mxu0 %v157
    %1671 = vmatprep.subr.mxu0 %v162
    %1672 = vmatpush1.msra.mxu0 %v161
    %1673 = vmatprep.subr.mxu0 %v166
    %1674 = vmatpush1.msra.mxu0 %v165
    %1675 = vmatprep.subr.mxu0 %v170
    %1676 = vmatpush1.msra.mxu0 %v169
    %1677 = vmatprep.subr.mxu0 %v174
    %1678 = vmatpush1.msra.mxu0 %v173
    %1679 = vmatprep.subr.mxu0 %v178
    %1680 = vmatpush1.msra.mxu0 %v177
    %1681 = vmatprep.subr.mxu0 %v182
    %1682 = vmatpush1.msra.mxu0 %v181
    %1683 = vmatprep.subr.mxu0 %v186
    %1684 = vmatpush1.msra.mxu0 %v185
    %1685 = vmatprep.subr.mxu0 %v190
    %1686 = vmatpush1.msra.mxu0 %v189
    %1687 = vmatprep.subr.mxu0 %v194
    %1688 = vmatpush1.msra.mxu0 %v193
    %1689 = vmatprep.subr.mxu0 %v198
    %1690 = vmatpush1.msra.mxu0 %v197
    %1691 = vmatprep.subr.mxu0 %v202
    %1692 = vmatpush1.msra.mxu0 %v201
    %1693 = vmatprep.subr.mxu0 %v206
    %1694 = vmatpush1.msra.mxu0 %v205
    %1695 = vmatprep.subr.mxu0 %v210
    %1696 = vmatpush1.msra.mxu0 %v209
    %1697 = vmatprep.subr.mxu0 0.0
    %1698 = vmatpush1.msra.mxu0 0.0
    %1699 = vmatprep.subr.mxu0 0.0
    %1700 = vmatpush1.msra.mxu0 0.0
    %1701 = vmatprep.subr.mxu0 0.0
    %1702 = vmatpush1.msra.mxu0 0.0
    %1703 = vmatprep.subr.mxu0 0.0
    %1704 = vmatpush1.msra.mxu0 0.0
    %1705 = vmatprep.subr.mxu0 0.0
    %1706 = vmatpush1.msra.mxu0 0.0
    %1707 = vmatprep.subr.mxu0 0.0
    %1708 = vmatpush1.msra.mxu0 0.0
    %1709 = vmatprep.subr.mxu0 0.0
    %1710 = vmatpush1.msra.mxu0 0.0
    %1711 = vmatprep.subr.mxu0 0.0
    %1712 = vmatpush1.msra.mxu0 0.0
    %1713 = vmatprep.subr.mxu0 0.0
    %1714 = vmatpush1.msra.mxu0 0.0
    %1715 = vmatprep.subr.mxu0 0.0
    %1716 = vmatpush1.msra.mxu0 0.0
    %1717 = vmatprep.subr.mxu0 0.0
    %1718 = vmatpush1.msra.mxu0 0.0
    %1719 = vmatprep.subr.mxu0 0.0
    %1720 = vmatpush1.msra.mxu0 0.0
    %1721 = vmatprep.subr.mxu0 0.0
    %1722 = vmatpush1.msra.mxu0 0.0
    %1723 = vmatprep.subr.mxu0 0.0
    %1724 = vmatpush1.msra.mxu0 0.0
    %1725 = vmatprep.subr.mxu0 0.0
    %1726 = vmatpush1.msra.mxu0 0.0
    %1727 = vmatprep.subr.mxu0 0.0
    %1728 = vmatpush1.msra.mxu0 0.0
    %1729 = vmatprep.mubr.f32.mxu0 0.0
    %1730 = vmatmul.mubr.f32.gmra.mrb[0].mxu0 %v1422
    %v1731 = vpop.f32.mrb[0].mxu0
    %v1732 = vadd.f32 0.0, %v1731
    %v1733 = vpop.f32.mrb[0].mxu0
    %v1734 = vadd.f32 0.0, %v1733
    %1735 = vdwg.mxu0
    %v1740 = vrot.slane %v1661, 6
    %v1741 = vrot.slane %v1663, 6
    %v1742 = vrot.slane %v1732, 6
    %v1743 = vrot.slane %v1734, 6
    %v1748 = vadd.f32 %v587, %v1740
    %v1749 = vadd.f32 %v588, %v1741
    %v1750 = vadd.f32 %v589, %v1742
    %v1751 = vadd.f32 %v590, %v1743
    %v1752 = vxor.u32 %v1748, 2147483648
    %v1753 = vxor.u32 %v1749, 2147483648
    %v1754 = vxor.u32 %v1750, 2147483648
    %v1755 = vmul.f32 %v1752, 1.442695
    %v1756 = vpow.pop %v1755
    %v1757 = vmul.f32 %v1753, 1.442695
    %v1758 = vpow.pop %v1757
    %v1759 = vmul.f32 %v1754, 1.442695
    %v1760 = vpow.pop %v1759
    %v1761 = vadd.f32 %v1756, 1.0
    %v1762 = vadd.f32 %v1758, 1.0
    %v1763 = vadd.f32 %v1760, 1.0
    %v1764 = vrcp.pop %v1761
    %v1765 = vmul.f32 1.0, %v1764
    %v1766 = vrcp.pop %v1762
    %v1767 = vmul.f32 1.0, %v1766
    %v1768 = vrcp.pop %v1763
    %v1769 = vmul.f32 1.0, %v1768
    %v1770 = vtanh.pop %v1751
    %v1772 = vrot.slane %v1276, 7
    %v1774 = vmul.f32 %v1767, %v1772
    %v1775 = vmul.f32 %v1765, %v1770
    %v1776 = vadd.f32 %v1774, %v1775
    %v1777 = vtanh.pop %v1776
    %v1778 = vmul.f32 %v1769, %v1777
    %1779 = vmatprep.subr.mxu0 %v276
    %1780 = vmatpush1.msra.mxu0 %v275
    %1781 = vmatprep.subr.mxu0 %v280
    %1782 = vmatpush1.msra.mxu0 %v279
    %1783 = vmatprep.subr.mxu0 %v284
    %1784 = vmatpush1.msra.mxu0 %v283
    %1785 = vmatprep.subr.mxu0 %v288
    %1786 = vmatpush1.msra.mxu0 %v287
    %1787 = vmatprep.subr.mxu0 %v292
    %1788 = vmatpush1.msra.mxu0 %v291
    %1789 = vmatprep.subr.mxu0 %v296
    %1790 = vmatpush1.msra.mxu0 %v295
    %1791 = vmatprep.subr.mxu0 %v300
    %1792 = vmatpush1.msra.mxu0 %v299
    %1793 = vmatprep.subr.mxu0 %v304
    %1794 = vmatpush1.msra.mxu0 %v303
    %1795 = vmatprep.subr.mxu0 %v308
    %1796 = vmatpush1.msra.mxu0 %v307
    %1797 = vmatprep.subr.mxu0 %v312
    %1798 = vmatpush1.msra.mxu0 %v311
    %1799 = vmatprep.subr.mxu0 %v316
    %1800 = vmatpush1.msra.mxu0 %v315
    %1801 = vmatprep.subr.mxu0 %v320
    %1802 = vmatpush1.msra.mxu0 %v319
    %1803 = vmatprep.subr.mxu0 %v324
    %1804 = vmatpush1.msra.mxu0 %v323
    %1805 = vmatprep.subr.mxu0 %v328
    %1806 = vmatpush1.msra.mxu0 %v327
    %1807 = vmatprep.subr.mxu0 %v332
    %1808 = vmatpush1.msra.mxu0 %v331
    %1809 = vmatprep.subr.mxu0 %v336
    %1810 = vmatpush1.msra.mxu0 %v335
    %1811 = vmatprep.subr.mxu0 0.0
    %1812 = vmatpush1.msra.mxu0 0.0
    %1813 = vmatprep.subr.mxu0 0.0
    %1814 = vmatpush1.msra.mxu0 0.0
    %1815 = vmatprep.subr.mxu0 0.0
    %1816 = vmatpush1.msra.mxu0 0.0
    %1817 = vmatprep.subr.mxu0 0.0
    %1818 = vmatpush1.msra.mxu0 0.0
    %1819 = vmatprep.subr.mxu0 0.0
    %1820 = vmatpush1.msra.mxu0 0.0
    %1821 = vmatprep.subr.mxu0 0.0
    %1822 = vmatpush1.msra.mxu0 0.0
    %1823 = vmatprep.subr.mxu0 0.0
    %1824 = vmatpush1.msra.mxu0 0.0
    %1825 = vmatprep.subr.mxu0 0.0
    %1826 = vmatpush1.msra.mxu0 0.0
    %1827 = vmatprep.subr.mxu0 0.0
    %1828 = vmatpush1.msra.mxu0 0.0
    %1829 = vmatprep.subr.mxu0 0.0
    %1830 = vmatpush1.msra.mxu0 0.0
    %1831 = vmatprep.subr.mxu0 0.0
    %1832 = vmatpush1.msra.mxu0 0.0
    %1833 = vmatprep.subr.mxu0 0.0
    %1834 = vmatpush1.msra.mxu0 0.0
    %1835 = vmatprep.subr.mxu0 0.0
    %1836 = vmatpush1.msra.mxu0 0.0
    %1837 = vmatprep.subr.mxu0 0.0
    %1838 = vmatpush1.msra.mxu0 0.0
    %1839 = vmatprep.subr.mxu0 0.0
    %1840 = vmatpush1.msra.mxu0 0.0
    %1841 = vmatprep.subr.mxu0 0.0
    %1842 = vmatpush1.msra.mxu0 0.0
    %1843 = vmatprep.mubr.f32.mxu0 0.0
    %1844 = vmatmul.mubr.f32.gmra.mrb[0].mxu0 %v1593
    %v1845 = vpop.f32.mrb[0].mxu0
    %v1846 = vadd.f32 0.0, %v1845
    %v1847 = vpop.f32.mrb[0].mxu0
    %v1848 = vadd.f32 0.0, %v1847
    %1849 = vdwg.mxu0
    %1850 = vmatprep.subr.mxu0 %v278
    %1851 = vmatpush1.msra.mxu0 %v277
    %1852 = vmatprep.subr.mxu0 %v282
    %1853 = vmatpush1.msra.mxu0 %v281
    %1854 = vmatprep.subr.mxu0 %v286
    %1855 = vmatpush1.msra.mxu0 %v285
    %1856 = vmatprep.subr.mxu0 %v290
    %1857 = vmatpush1.msra.mxu0 %v289
    %1858 = vmatprep.subr.mxu0 %v294
    %1859 = vmatpush1.msra.mxu0 %v293
    %1860 = vmatprep.subr.mxu0 %v298
    %1861 = vmatpush1.msra.mxu0 %v297
    %1862 = vmatprep.subr.mxu0 %v302
    %1863 = vmatpush1.msra.mxu0 %v301
    %1864 = vmatprep.subr.mxu0 %v306
    %1865 = vmatpush1.msra.mxu0 %v305
    %1866 = vmatprep.subr.mxu0 %v310
    %1867 = vmatpush1.msra.mxu0 %v309
    %1868 = vmatprep.subr.mxu0 %v314
    %1869 = vmatpush1.msra.mxu0 %v313
    %1870 = vmatprep.subr.mxu0 %v318
    %1871 = vmatpush1.msra.mxu0 %v317
    %1872 = vmatprep.subr.mxu0 %v322
    %1873 = vmatpush1.msra.mxu0 %v321
    %1874 = vmatprep.subr.mxu0 %v326
    %1875 = vmatpush1.msra.mxu0 %v325
    %1876 = vmatprep.subr.mxu0 %v330
    %1877 = vmatpush1.msra.mxu0 %v329
    %1878 = vmatprep.subr.mxu0 %v334
    %1879 = vmatpush1.msra.mxu0 %v333
    %1880 = vmatprep.subr.mxu0 %v338
    %1881 = vmatpush1.msra.mxu0 %v337
    %1882 = vmatprep.subr.mxu0 0.0
    %1883 = vmatpush1.msra.mxu0 0.0
    %1884 = vmatprep.subr.mxu0 0.0
    %1885 = vmatpush1.msra.mxu0 0.0
    %1886 = vmatprep.subr.mxu0 0.0
    %1887 = vmatpush1.msra.mxu0 0.0
    %1888 = vmatprep.subr.mxu0 0.0
    %1889 = vmatpush1.msra.mxu0 0.0
    %1890 = vmatprep.subr.mxu0 0.0
    %1891 = vmatpush1.msra.mxu0 0.0
    %1892 = vmatprep.subr.mxu0 0.0
    %1893 = vmatpush1.msra.mxu0 0.0
    %1894 = vmatprep.subr.mxu0 0.0
    %1895 = vmatpush1.msra.mxu0 0.0
    %1896 = vmatprep.subr.mxu0 0.0
    %1897 = vmatpush1.msra.mxu0 0.0
    %1898 = vmatprep.subr.mxu0 0.0
    %1899 = vmatpush1.msra.mxu0 0.0
    %1900 = vmatprep.subr.mxu0 0.0
    %1901 = vmatpush1.msra.mxu0 0.0
    %1902 = vmatprep.subr.mxu0 0.0
    %1903 = vmatpush1.msra.mxu0 0.0
    %1904 = vmatprep.subr.mxu0 0.0
    %1905 = vmatpush1.msra.mxu0 0.0
    %1906 = vmatprep.subr.mxu0 0.0
    %1907 = vmatpush1.msra.mxu0 0.0
    %1908 = vmatprep.subr.mxu0 0.0
    %1909 = vmatpush1.msra.mxu0 0.0
    %1910 = vmatprep.subr.mxu0 0.0
    %1911 = vmatpush1.msra.mxu0 0.0
    %1912 = vmatprep.subr.mxu0 0.0
    %1913 = vmatpush1.msra.mxu0 0.0
    %1914 = vmatprep.mubr.f32.mxu0 0.0
    %1915 = vmatmul.mubr.f32.gmra.mrb[0].mxu0 %v1593
    %v1916 = vpop.f32.mrb[0].mxu0
    %v1917 = vadd.f32 0.0, %v1916
    %v1918 = vpop.f32.mrb[0].mxu0
    %v1919 = vadd.f32 0.0, %v1918
    %1920 = vdwg.mxu0
    %v1922 = vrot.slane %v1778, 2
    %1924 = vmatprep.subr.mxu0 %v212
    %1925 = vmatpush1.msra.mxu0 %v211
    %1926 = vmatprep.subr.mxu0 %v216
    %1927 = vmatpush1.msra.mxu0 %v215
    %1928 = vmatprep.subr.mxu0 %v220
    %1929 = vmatpush1.msra.mxu0 %v219
    %1930 = vmatprep.subr.mxu0 %v224
    %1931 = vmatpush1.msra.mxu0 %v223
    %1932 = vmatprep.subr.mxu0 %v228
    %1933 = vmatpush1.msra.mxu0 %v227
    %1934 = vmatprep.subr.mxu0 %v232
    %1935 = vmatpush1.msra.mxu0 %v231
    %1936 = vmatprep.subr.mxu0 %v236
    %1937 = vmatpush1.msra.mxu0 %v235
    %1938 = vmatprep.subr.mxu0 %v240
    %1939 = vmatpush1.msra.mxu0 %v239
    %1940 = vmatprep.subr.mxu0 %v244
    %1941 = vmatpush1.msra.mxu0 %v243
    %1942 = vmatprep.subr.mxu0 %v248
    %1943 = vmatpush1.msra.mxu0 %v247
    %1944 = vmatprep.subr.mxu0 %v252
    %1945 = vmatpush1.msra.mxu0 %v251
    %1946 = vmatprep.subr.mxu0 %v256
    %1947 = vmatpush1.msra.mxu0 %v255
    %1948 = vmatprep.subr.mxu0 %v260
    %1949 = vmatpush1.msra.mxu0 %v259
    %1950 = vmatprep.subr.mxu0 %v264
    %1951 = vmatpush1.msra.mxu0 %v263
    %1952 = vmatprep.subr.mxu0 %v268
    %1953 = vmatpush1.msra.mxu0 %v267
    %1954 = vmatprep.subr.mxu0 %v272
    %1955 = vmatpush1.msra.mxu0 %v271
    %1956 = vmatprep.subr.mxu0 0.0
    %1957 = vmatpush1.msra.mxu0 0.0
    %1958 = vmatprep.subr.mxu0 0.0
    %1959 = vmatpush1.msra.mxu0 0.0
    %1960 = vmatprep.subr.mxu0 0.0
    %1961 = vmatpush1.msra.mxu0 0.0
    %1962 = vmatprep.subr.mxu0 0.0
    %1963 = vmatpush1.msra.mxu0 0.0
    %1964 = vmatprep.subr.mxu0 0.0
    %1965 = vmatpush1.msra.mxu0 0.0
    %1966 = vmatprep.subr.mxu0 0.0
    %1967 = vmatpush1.msra.mxu0 0.0
    %1968 = vmatprep.subr.mxu0 0.0
    %1969 = vmatpush1.msra.mxu0 0.0
    %1970 = vmatprep.subr.mxu0 0.0
    %1971 = vmatpush1.msra.mxu0 0.0
    %1972 = vmatprep.subr.mxu0 0.0
    %1973 = vmatpush1.msra.mxu0 0.0
    %1974 = vmatprep.subr.mxu0 0.0
    %1975 = vmatpush1.msra.mxu0 0.0
    %1976 = vmatprep.subr.mxu0 0.0
    %1977 = vmatpush1.msra.mxu0 0.0
    %1978 = vmatprep.subr.mxu0 0.0
    %1979 = vmatpush1.msra.mxu0 0.0
    %1980 = vmatprep.subr.mxu0 0.0
    %1981 = vmatpush1.msra.mxu0 0.0
    %1982 = vmatprep.subr.mxu0 0.0
    %1983 = vmatpush1.msra.mxu0 0.0
    %1984 = vmatprep.subr.mxu0 0.0
    %1985 = vmatpush1.msra.mxu0 0.0
    %1986 = vmatprep.subr.mxu0 0.0
    %1987 = vmatpush1.msra.mxu0 0.0
    %1988 = vmatprep.mubr.f32.mxu0 0.0
    %1989 = vmatmul.mubr.f32.gmra.mrb[0].mxu0 %v1922
    %v1990 = vpop.f32.mrb[0].mxu0
    %v1991 = vadd.f32 %v1846, %v1990
    %v1992 = vpop.f32.mrb[0].mxu0
    %v1993 = vadd.f32 %v1848, %v1992
    %1994 = vdwg.mxu0
    %1995 = vmatprep.subr.mxu0 %v214
    %1996 = vmatpush1.msra.mxu0 %v213
    %1997 = vmatprep.subr.mxu0 %v218
    %1998 = vmatpush1.msra.mxu0 %v217
    %1999 = vmatprep.subr.mxu0 %v222
    %2000 = vmatpush1.msra.mxu0 %v221
    %2001 = vmatprep.subr.mxu0 %v226
    %2002 = vmatpush1.msra.mxu0 %v225
    %2003 = vmatprep.subr.mxu0 %v230
    %2004 = vmatpush1.msra.mxu0 %v229
    %2005 = vmatprep.subr.mxu0 %v234
    %2006 = vmatpush1.msra.mxu0 %v233
    %2007 = vmatprep.subr.mxu0 %v238
    %2008 = vmatpush1.msra.mxu0 %v237
    %2009 = vmatprep.subr.mxu0 %v242
    %2010 = vmatpush1.msra.mxu0 %v241
    %2011 = vmatprep.subr.mxu0 %v246
    %2012 = vmatpush1.msra.mxu0 %v245
    %2013 = vmatprep.subr.mxu0 %v250
    %2014 = vmatpush1.msra.mxu0 %v249
    %2015 = vmatprep.subr.mxu0 %v254
    %2016 = vmatpush1.msra.mxu0 %v253
    %2017 = vmatprep.subr.mxu0 %v258
    %2018 = vmatpush1.msra.mxu0 %v257
    %2019 = vmatprep.subr.mxu0 %v262
    %2020 = vmatpush1.msra.mxu0 %v261
    %2021 = vmatprep.subr.mxu0 %v266
    %2022 = vmatpush1.msra.mxu0 %v265
    %2023 = vmatprep.subr.mxu0 %v270
    %2024 = vmatpush1.msra.mxu0 %v269
    %2025 = vmatprep.subr.mxu0 %v274
    %2026 = vmatpush1.msra.mxu0 %v273
    %2027 = vmatprep.subr.mxu0 0.0
    %2028 = vmatpush1.msra.mxu0 0.0
    %2029 = vmatprep.subr.mxu0 0.0
    %2030 = vmatpush1.msra.mxu0 0.0
    %2031 = vmatprep.subr.mxu0 0.0
    %2032 = vmatpush1.msra.mxu0 0.0
    %2033 = vmatprep.subr.mxu0 0.0
    %2034 = vmatpush1.msra.mxu0 0.0
    %2035 = vmatprep.subr.mxu0 0.0
    %2036 = vmatpush1.msra.mxu0 0.0
    %2037 = vmatprep.subr.mxu0 0.0
    %2038 = vmatpush1.msra.mxu0 0.0
    %2039 = vmatprep.subr.mxu0 0.0
    %2040 = vmatpush1.msra.mxu0 0.0
    %2041 = vmatprep.subr.mxu0 0.0
    %2042 = vmatpush1.msra.mxu0 0.0
    %2043 = vmatprep.subr.mxu0 0.0
    %2044 = vmatpush1.msra.mxu0 0.0
    %2045 = vmatprep.subr.mxu0 0.0
    %2046 = vmatpush1.msra.mxu0 0.0
    %2047 = vmatprep.subr.mxu0 0.0
    %2048 = vmatpush1.msra.mxu0 0.0
    %2049 = vmatprep.subr.mxu0 0.0
    %2050 = vmatpush1.msra.mxu0 0.0
    %2051 = vmatprep.subr.mxu0 0.0
    %2052 = vmatpush1.msra.mxu0 0.0
    %2053 = vmatprep.subr.mxu0 0.0
    %2054 = vmatpush1.msra.mxu0 0.0
    %2055 = vmatprep.subr.mxu0 0.0
    %2056 = vmatpush1.msra.mxu0 0.0
    %2057 = vmatprep.subr.mxu0 0.0
    %2058 = vmatpush1.msra.mxu0 0.0
    %2059 = vmatprep.mubr.f32.mxu0 0.0
    %2060 = vmatmul.mubr.f32.gmra.mrb[0].mxu0 %v1922
    %v2061 = vpop.f32.mrb[0].mxu0
    %v2062 = vadd.f32 %v1917, %v2061
    %v2063 = vpop.f32.mrb[0].mxu0
    %v2064 = vadd.f32 %v1919, %v2063
    %2065 = vdwg.mxu0
    %v2066 = vadd.f32 %v1991, %v1049
    %v2067 = vadd.f32 %v1993, %v1053
    %v2068 = vadd.f32 %v2062, %v1057
    %v2069 = vadd.f32 %v2064, %v1061
    %v2070 = vxor.u32 %v2066, 2147483648
    %v2071 = vxor.u32 %v2067, 2147483648
    %v2072 = vxor.u32 %v2068, 2147483648
    %v2073 = vmul.f32 %v2070, 1.442695
    %v2074 = vpow.pop %v2073
    %v2075 = vmul.f32 %v2071, 1.442695
    %v2076 = vpow.pop %v2075
    %v2077 = vmul.f32 %v2072, 1.442695
    %v2078 = vpow.pop %v2077
    %v2079 = vadd.f32 %v2074, 1.0
    %v2080 = vadd.f32 %v2076, 1.0
    %v2081 = vadd.f32 %v2078, 1.0
    %v2082 = vrcp.pop %v2079
    %v2083 = vmul.f32 1.0, %v2082
    %v2084 = vrcp.pop %v2080
    %v2085 = vmul.f32 1.0, %v2084
    %v2086 = vrcp.pop %v2081
    %v2087 = vmul.f32 1.0, %v2086
    %v2088 = vtanh.pop %v2069
    %v2089 = vmul.f32 %v2085, %v1591
    %v2090 = vmul.f32 %v2083, %v2088
    %v2091 = vadd.f32 %v2089, %v2090
    %v2092 = vtanh.pop %v2091
    %v2093 = vmul.f32 %v2087, %v2092
    %2094 = vmatprep.subr.mxu0 %v148
    %2095 = vmatpush1.msra.mxu0 %v147
    %2096 = vmatprep.subr.mxu0 %v152
    %2097 = vmatpush1.msra.mxu0 %v151
    %2098 = vmatprep.subr.mxu0 %v156
    %2099 = vmatpush1.msra.mxu0 %v155
    %2100 = vmatprep.subr.mxu0 %v160
    %2101 = vmatpush1.msra.mxu0 %v159
    %2102 = vmatprep.subr.mxu0 %v164
    %2103 = vmatpush1.msra.mxu0 %v163
    %2104 = vmatprep.subr.mxu0 %v168
    %2105 = vmatpush1.msra.mxu0 %v167
    %2106 = vmatprep.subr.mxu0 %v172
    %2107 = vmatpush1.msra.mxu0 %v171
    %2108 = vmatprep.subr.mxu0 %v176
    %2109 = vmatpush1.msra.mxu0 %v175
    %2110 = vmatprep.subr.mxu0 %v180
    %2111 = vmatpush1.msra.mxu0 %v179
    %2112 = vmatprep.subr.mxu0 %v184
    %2113 = vmatpush1.msra.mxu0 %v183
    %2114 = vmatprep.subr.mxu0 %v188
    %2115 = vmatpush1.msra.mxu0 %v187
    %2116 = vmatprep.subr.mxu0 %v192
    %2117 = vmatpush1.msra.mxu0 %v191
    %2118 = vmatprep.subr.mxu0 %v196
    %2119 = vmatpush1.msra.mxu0 %v195
    %2120 = vmatprep.subr.mxu0 %v200
    %2121 = vmatpush1.msra.mxu0 %v199
    %2122 = vmatprep.subr.mxu0 %v204
    %2123 = vmatpush1.msra.mxu0 %v203
    %2124 = vmatprep.subr.mxu0 %v208
    %2125 = vmatpush1.msra.mxu0 %v207
    %2126 = vmatprep.subr.mxu0 0.0
    %2127 = vmatpush1.msra.mxu0 0.0
    %2128 = vmatprep.subr.mxu0 0.0
    %2129 = vmatpush1.msra.mxu0 0.0
    %2130 = vmatprep.subr.mxu0 0.0
    %2131 = vmatpush1.msra.mxu0 0.0
    %2132 = vmatprep.subr.mxu0 0.0
    %2133 = vmatpush1.msra.mxu0 0.0
    %2134 = vmatprep.subr.mxu0 0.0
    %2135 = vmatpush1.msra.mxu0 0.0
    %2136 = vmatprep.subr.mxu0 0.0
    %2137 = vmatpush1.msra.mxu0 0.0
    %2138 = vmatprep.subr.mxu0 0.0
    %2139 = vmatpush1.msra.mxu0 0.0
    %2140 = vmatprep.subr.mxu0 0.0
    %2141 = vmatpush1.msra.mxu0 0.0
    %2142 = vmatprep.subr.mxu0 0.0
    %2143 = vmatpush1.msra.mxu0 0.0
    %2144 = vmatprep.subr.mxu0 0.0
    %2145 = vmatpush1.msra.mxu0 0.0
    %2146 = vmatprep.subr.mxu0 0.0
    %2147 = vmatpush1.msra.mxu0 0.0
    %2148 = vmatprep.subr.mxu0 0.0
    %2149 = vmatpush1.msra.mxu0 0.0
    %2150 = vmatprep.subr.mxu0 0.0
    %2151 = vmatpush1.msra.mxu0 0.0
    %2152 = vmatprep.subr.mxu0 0.0
    %2153 = vmatpush1.msra.mxu0 0.0
    %2154 = vmatprep.subr.mxu0 0.0
    %2155 = vmatpush1.msra.mxu0 0.0
    %2156 = vmatprep.subr.mxu0 0.0
    %2157 = vmatpush1.msra.mxu0 0.0
    %2158 = vmatprep.mubr.f32.mxu0 0.0
    %2159 = vmatmul.mubr.f32.gmra.mrb[0].mxu0 %v1922
    %v2160 = vpop.f32.mrb[0].mxu0
    %v2161 = vadd.f32 0.0, %v2160
    %v2162 = vpop.f32.mrb[0].mxu0
    %v2163 = vadd.f32 0.0, %v2162
    %2164 = vdwg.mxu0
    %2165 = vmatprep.subr.mxu0 %v150
    %2166 = vmatpush1.msra.mxu0 %v149
    %2167 = vmatprep.subr.mxu0 %v154
    %2168 = vmatpush1.msra.mxu0 %v153
    %2169 = vmatprep.subr.mxu0 %v158
    %2170 = vmatpush1.msra.mxu0 %v157
    %2171 = vmatprep.subr.mxu0 %v162
    %2172 = vmatpush1.msra.mxu0 %v161
    %2173 = vmatprep.subr.mxu0 %v166
    %2174 = vmatpush1.msra.mxu0 %v165
    %2175 = vmatprep.subr.mxu0 %v170
    %2176 = vmatpush1.msra.mxu0 %v169
    %2177 = vmatprep.subr.mxu0 %v174
    %2178 = vmatpush1.msra.mxu0 %v173
    %2179 = vmatprep.subr.mxu0 %v178
    %2180 = vmatpush1.msra.mxu0 %v177
    %2181 = vmatprep.subr.mxu0 %v182
    %2182 = vmatpush1.msra.mxu0 %v181
    %2183 = vmatprep.subr.mxu0 %v186
    %2184 = vmatpush1.msra.mxu0 %v185
    %2185 = vmatprep.subr.mxu0 %v190
    %2186 = vmatpush1.msra.mxu0 %v189
    %2187 = vmatprep.subr.mxu0 %v194
    %2188 = vmatpush1.msra.mxu0 %v193
    %2189 = vmatprep.subr.mxu0 %v198
    %2190 = vmatpush1.msra.mxu0 %v197
    %2191 = vmatprep.subr.mxu0 %v202
    %2192 = vmatpush1.msra.mxu0 %v201
    %2193 = vmatprep.subr.mxu0 %v206
    %2194 = vmatpush1.msra.mxu0 %v205
    %2195 = vmatprep.subr.mxu0 %v210
    %2196 = vmatpush1.msra.mxu0 %v209
    %2197 = vmatprep.subr.mxu0 0.0
    %2198 = vmatpush1.msra.mxu0 0.0
    %2199 = vmatprep.subr.mxu0 0.0
    %2200 = vmatpush1.msra.mxu0 0.0
    %2201 = vmatprep.subr.mxu0 0.0
    %2202 = vmatpush1.msra.mxu0 0.0
    %2203 = vmatprep.subr.mxu0 0.0
    %2204 = vmatpush1.msra.mxu0 0.0
    %2205 = vmatprep.subr.mxu0 0.0
    %2206 = vmatpush1.msra.mxu0 0.0
    %2207 = vmatprep.subr.mxu0 0.0
    %2208 = vmatpush1.msra.mxu0 0.0
    %2209 = vmatprep.subr.mxu0 0.0
    %2210 = vmatpush1.msra.mxu0 0.0
    %2211 = vmatprep.subr.mxu0 0.0
    %2212 = vmatpush1.msra.mxu0 0.0
    %2213 = vmatprep.subr.mxu0 0.0
    %2214 = vmatpush1.msra.mxu0 0.0
    %2215 = vmatprep.subr.mxu0 0.0
    %2216 = vmatpush1.msra.mxu0 0.0
    %2217 = vmatprep.subr.mxu0 0.0
    %2218 = vmatpush1.msra.mxu0 0.0
    %2219 = vmatprep.subr.mxu0 0.0
    %2220 = vmatpush1.msra.mxu0 0.0
    %2221 = vmatprep.subr.mxu0 0.0
    %2222 = vmatpush1.msra.mxu0 0.0
    %2223 = vmatprep.subr.mxu0 0.0
    %2224 = vmatpush1.msra.mxu0 0.0
    %2225 = vmatprep.subr.mxu0 0.0
    %2226 = vmatpush1.msra.mxu0 0.0
    %2227 = vmatprep.subr.mxu0 0.0
    %2228 = vmatpush1.msra.mxu0 0.0
    %2229 = vmatprep.mubr.f32.mxu0 0.0
    %2230 = vmatmul.mubr.f32.gmra.mrb[0].mxu0 %v1922
    %v2231 = vpop.f32.mrb[0].mxu0
    %v2232 = vadd.f32 0.0, %v2231
    %v2233 = vpop.f32.mrb[0].mxu0
    %v2234 = vadd.f32 0.0, %v2233
    %2235 = vdwg.mxu0
    %v2240 = vrot.slane %v2161, 5
    %v2241 = vrot.slane %v2163, 5
    %v2242 = vrot.slane %v2232, 5
    %v2243 = vrot.slane %v2234, 5
    %v2248 = vadd.f32 %v587, %v2240
    %v2249 = vadd.f32 %v588, %v2241
    %v2250 = vadd.f32 %v589, %v2242
    %v2251 = vadd.f32 %v590, %v2243
    %v2252 = vxor.u32 %v2248, 2147483648
    %v2253 = vxor.u32 %v2249, 2147483648
    %v2254 = vxor.u32 %v2250, 2147483648
    %v2255 = vmul.f32 %v2252, 1.442695
    %v2256 = vpow.pop %v2255
    %v2257 = vmul.f32 %v2253, 1.442695
    %v2258 = vpow.pop %v2257
    %v2259 = vmul.f32 %v2254, 1.442695
    %v2260 = vpow.pop %v2259
    %v2261 = vadd.f32 %v2256, 1.0
    %v2262 = vadd.f32 %v2258, 1.0
    %v2263 = vadd.f32 %v2260, 1.0
    %v2264 = vrcp.pop %v2261
    %v2265 = vmul.f32 1.0, %v2264
    %v2266 = vrcp.pop %v2262
    %v2267 = vmul.f32 1.0, %v2266
    %v2268 = vrcp.pop %v2263
    %v2269 = vmul.f32 1.0, %v2268
    %v2270 = vtanh.pop %v2251
    %v2272 = vrot.slane %v1776, 7
    %v2274 = vmul.f32 %v2267, %v2272
    %v2275 = vmul.f32 %v2265, %v2270
    %v2276 = vadd.f32 %v2274, %v2275
    %v2277 = vtanh.pop %v2276
    %v2278 = vmul.f32 %v2269, %v2277
    %2279 = vmatprep.subr.mxu0 %v276
    %2280 = vmatpush1.msra.mxu0 %v275
    %2281 = vmatprep.subr.mxu0 %v280
    %2282 = vmatpush1.msra.mxu0 %v279
    %2283 = vmatprep.subr.mxu0 %v284
    %2284 = vmatpush1.msra.mxu0 %v283
    %2285 = vmatprep.subr.mxu0 %v288
    %2286 = vmatpush1.msra.mxu0 %v287
    %2287 = vmatprep.subr.mxu0 %v292
    %2288 = vmatpush1.msra.mxu0 %v291
    %2289 = vmatprep.subr.mxu0 %v296
    %2290 = vmatpush1.msra.mxu0 %v295
    %2291 = vmatprep.subr.mxu0 %v300
    %2292 = vmatpush1.msra.mxu0 %v299
    %2293 = vmatprep.subr.mxu0 %v304
    %2294 = vmatpush1.msra.mxu0 %v303
    %2295 = vmatprep.subr.mxu0 %v308
    %2296 = vmatpush1.msra.mxu0 %v307
    %2297 = vmatprep.subr.mxu0 %v312
    %2298 = vmatpush1.msra.mxu0 %v311
    %2299 = vmatprep.subr.mxu0 %v316
    %2300 = vmatpush1.msra.mxu0 %v315
    %2301 = vmatprep.subr.mxu0 %v320
    %2302 = vmatpush1.msra.mxu0 %v319
    %2303 = vmatprep.subr.mxu0 %v324
    %2304 = vmatpush1.msra.mxu0 %v323
    %2305 = vmatprep.subr.mxu0 %v328
    %2306 = vmatpush1.msra.mxu0 %v327
    %2307 = vmatprep.subr.mxu0 %v332
    %2308 = vmatpush1.msra.mxu0 %v331
    %2309 = vmatprep.subr.mxu0 %v336
    %2310 = vmatpush1.msra.mxu0 %v335
    %2311 = vmatprep.subr.mxu0 0.0
    %2312 = vmatpush1.msra.mxu0 0.0
    %2313 = vmatprep.subr.mxu0 0.0
    %2314 = vmatpush1.msra.mxu0 0.0
    %2315 = vmatprep.subr.mxu0 0.0
    %2316 = vmatpush1.msra.mxu0 0.0
    %2317 = vmatprep.subr.mxu0 0.0
    %2318 = vmatpush1.msra.mxu0 0.0
    %2319 = vmatprep.subr.mxu0 0.0
    %2320 = vmatpush1.msra.mxu0 0.0
    %2321 = vmatprep.subr.mxu0 0.0
    %2322 = vmatpush1.msra.mxu0 0.0
    %2323 = vmatprep.subr.mxu0 0.0
    %2324 = vmatpush1.msra.mxu0 0.0
    %2325 = vmatprep.subr.mxu0 0.0
    %2326 = vmatpush1.msra.mxu0 0.0
    %2327 = vmatprep.subr.mxu0 0.0
    %2328 = vmatpush1.msra.mxu0 0.0
    %2329 = vmatprep.subr.mxu0 0.0
    %2330 = vmatpush1.msra.mxu0 0.0
    %2331 = vmatprep.subr.mxu0 0.0
    %2332 = vmatpush1.msra.mxu0 0.0
    %2333 = vmatprep.subr.mxu0 0.0
    %2334 = vmatpush1.msra.mxu0 0.0
    %2335 = vmatprep.subr.mxu0 0.0
    %2336 = vmatpush1.msra.mxu0 0.0
    %2337 = vmatprep.subr.mxu0 0.0
    %2338 = vmatpush1.msra.mxu0 0.0
    %2339 = vmatprep.subr.mxu0 0.0
    %2340 = vmatpush1.msra.mxu0 0.0
    %2341 = vmatprep.subr.mxu0 0.0
    %2342 = vmatpush1.msra.mxu0 0.0
    %2343 = vmatprep.mubr.f32.mxu0 0.0
    %2344 = vmatmul.mubr.f32.gmra.mrb[0].mxu0 %v2093
    %v2345 = vpop.f32.mrb[0].mxu0
    %v2346 = vadd.f32 0.0, %v2345
    %v2347 = vpop.f32.mrb[0].mxu0
    %v2348 = vadd.f32 0.0, %v2347
    %2349 = vdwg.mxu0
    %2350 = vmatprep.subr.mxu0 %v278
    %2351 = vmatpush1.msra.mxu0 %v277
    %2352 = vmatprep.subr.mxu0 %v282
    %2353 = vmatpush1.msra.mxu0 %v281
    %2354 = vmatprep.subr.mxu0 %v286
    %2355 = vmatpush1.msra.mxu0 %v285
    %2356 = vmatprep.subr.mxu0 %v290
    %2357 = vmatpush1.msra.mxu0 %v289
    %2358 = vmatprep.subr.mxu0 %v294
    %2359 = vmatpush1.msra.mxu0 %v293
    %2360 = vmatprep.subr.mxu0 %v298
    %2361 = vmatpush1.msra.mxu0 %v297
    %2362 = vmatprep.subr.mxu0 %v302
    %2363 = vmatpush1.msra.mxu0 %v301
    %2364 = vmatprep.subr.mxu0 %v306
    %2365 = vmatpush1.msra.mxu0 %v305
    %2366 = vmatprep.subr.mxu0 %v310
    %2367 = vmatpush1.msra.mxu0 %v309
    %2368 = vmatprep.subr.mxu0 %v314
    %2369 = vmatpush1.msra.mxu0 %v313
    %2370 = vmatprep.subr.mxu0 %v318
    %2371 = vmatpush1.msra.mxu0 %v317
    %2372 = vmatprep.subr.mxu0 %v322
    %2373 = vmatpush1.msra.mxu0 %v321
    %2374 = vmatprep.subr.mxu0 %v326
    %2375 = vmatpush1.msra.mxu0 %v325
    %2376 = vmatprep.subr.mxu0 %v330
    %2377 = vmatpush1.msra.mxu0 %v329
    %2378 = vmatprep.subr.mxu0 %v334
    %2379 = vmatpush1.msra.mxu0 %v333
    %2380 = vmatprep.subr.mxu0 %v338
    %2381 = vmatpush1.msra.mxu0 %v337
    %2382 = vmatprep.subr.mxu0 0.0
    %2383 = vmatpush1.msra.mxu0 0.0
    %2384 = vmatprep.subr.mxu0 0.0
    %2385 = vmatpush1.msra.mxu0 0.0
    %2386 = vmatprep.subr.mxu0 0.0
    %2387 = vmatpush1.msra.mxu0 0.0
    %2388 = vmatprep.subr.mxu0 0.0
    %2389 = vmatpush1.msra.mxu0 0.0
    %2390 = vmatprep.subr.mxu0 0.0
    %2391 = vmatpush1.msra.mxu0 0.0
    %2392 = vmatprep.subr.mxu0 0.0
    %2393 = vmatpush1.msra.mxu0 0.0
    %2394 = vmatprep.subr.mxu0 0.0
    %2395 = vmatpush1.msra.mxu0 0.0
    %2396 = vmatprep.subr.mxu0 0.0
    %2397 = vmatpush1.msra.mxu0 0.0
    %2398 = vmatprep.subr.mxu0 0.0
    %2399 = vmatpush1.msra.mxu0 0.0
    %2400 = vmatprep.subr.mxu0 0.0
    %2401 = vmatpush1.msra.mxu0 0.0
    %2402 = vmatprep.subr.mxu0 0.0
    %2403 = vmatpush1.msra.mxu0 0.0
    %2404 = vmatprep.subr.mxu0 0.0
    %2405 = vmatpush1.msra.mxu0 0.0
    %2406 = vmatprep.subr.mxu0 0.0
    %2407 = vmatpush1.msra.mxu0 0.0
    %2408 = vmatprep.subr.mxu0 0.0
    %2409 = vmatpush1.msra.mxu0 0.0
    %2410 = vmatprep.subr.mxu0 0.0
    %2411 = vmatpush1.msra.mxu0 0.0
    %2412 = vmatprep.subr.mxu0 0.0
    %2413 = vmatpush1.msra.mxu0 0.0
    %2414 = vmatprep.mubr.f32.mxu0 0.0
    %2415 = vmatmul.mubr.f32.gmra.mrb[0].mxu0 %v2093
    %v2416 = vpop.f32.mrb[0].mxu0
    %v2417 = vadd.f32 0.0, %v2416
    %v2418 = vpop.f32.mrb[0].mxu0
    %v2419 = vadd.f32 0.0, %v2418
    %2420 = vdwg.mxu0
    %v2422 = vrot.slane %v2278, 3
    %2424 = vmatprep.subr.mxu0 %v212
    %2425 = vmatpush1.msra.mxu0 %v211
    %2426 = vmatprep.subr.mxu0 %v216
    %2427 = vmatpush1.msra.mxu0 %v215
    %2428 = vmatprep.subr.mxu0 %v220
    %2429 = vmatpush1.msra.mxu0 %v219
    %2430 = vmatprep.subr.mxu0 %v224
    %2431 = vmatpush1.msra.mxu0 %v223
    %2432 = vmatprep.subr.mxu0 %v228
    %2433 = vmatpush1.msra.mxu0 %v227
    %2434 = vmatprep.subr.mxu0 %v232
    %2435 = vmatpush1.msra.mxu0 %v231
    %2436 = vmatprep.subr.mxu0 %v236
    %2437 = vmatpush1.msra.mxu0 %v235
    %2438 = vmatprep.subr.mxu0 %v240
    %2439 = vmatpush1.msra.mxu0 %v239
    %2440 = vmatprep.subr.mxu0 %v244
    %2441 = vmatpush1.msra.mxu0 %v243
    %2442 = vmatprep.subr.mxu0 %v248
    %2443 = vmatpush1.msra.mxu0 %v247
    %2444 = vmatprep.subr.mxu0 %v252
    %2445 = vmatpush1.msra.mxu0 %v251
    %2446 = vmatprep.subr.mxu0 %v256
    %2447 = vmatpush1.msra.mxu0 %v255
    %2448 = vmatprep.subr.mxu0 %v260
    %2449 = vmatpush1.msra.mxu0 %v259
    %2450 = vmatprep.subr.mxu0 %v264
    %2451 = vmatpush1.msra.mxu0 %v263
    %2452 = vmatprep.subr.mxu0 %v268
    %2453 = vmatpush1.msra.mxu0 %v267
    %2454 = vmatprep.subr.mxu0 %v272
    %2455 = vmatpush1.msra.mxu0 %v271
    %2456 = vmatprep.subr.mxu0 0.0
    %2457 = vmatpush1.msra.mxu0 0.0
    %2458 = vmatprep.subr.mxu0 0.0
    %2459 = vmatpush1.msra.mxu0 0.0
    %2460 = vmatprep.subr.mxu0 0.0
    %2461 = vmatpush1.msra.mxu0 0.0
    %2462 = vmatprep.subr.mxu0 0.0
    %2463 = vmatpush1.msra.mxu0 0.0
    %2464 = vmatprep.subr.mxu0 0.0
    %2465 = vmatpush1.msra.mxu0 0.0
    %2466 = vmatprep.subr.mxu0 0.0
    %2467 = vmatpush1.msra.mxu0 0.0
    %2468 = vmatprep.subr.mxu0 0.0
    %2469 = vmatpush1.msra.mxu0 0.0
    %2470 = vmatprep.subr.mxu0 0.0
    %2471 = vmatpush1.msra.mxu0 0.0
    %2472 = vmatprep.subr.mxu0 0.0
    %2473 = vmatpush1.msra.mxu0 0.0
    %2474 = vmatprep.subr.mxu0 0.0
    %2475 = vmatpush1.msra.mxu0 0.0
    %2476 = vmatprep.subr.mxu0 0.0
    %2477 = vmatpush1.msra.mxu0 0.0
    %2478 = vmatprep.subr.mxu0 0.0
    %2479 = vmatpush1.msra.mxu0 0.0
    %2480 = vmatprep.subr.mxu0 0.0
    %2481 = vmatpush1.msra.mxu0 0.0
    %2482 = vmatprep.subr.mxu0 0.0
    %2483 = vmatpush1.msra.mxu0 0.0
    %2484 = vmatprep.subr.mxu0 0.0
    %2485 = vmatpush1.msra.mxu0 0.0
    %2486 = vmatprep.subr.mxu0 0.0
    %2487 = vmatpush1.msra.mxu0 0.0
    %2488 = vmatprep.mubr.f32.mxu0 0.0
    %2489 = vmatmul.mubr.f32.gmra.mrb[0].mxu0 %v2422
    %v2490 = vpop.f32.mrb[0].mxu0
    %v2491 = vadd.f32 %v2346, %v2490
    %v2492 = vpop.f32.mrb[0].mxu0
    %v2493 = vadd.f32 %v2348, %v2492
    %2494 = vdwg.mxu0
    %2495 = vmatprep.subr.mxu0 %v214
    %2496 = vmatpush1.msra.mxu0 %v213
    %2497 = vmatprep.subr.mxu0 %v218
    %2498 = vmatpush1.msra.mxu0 %v217
    %2499 = vmatprep.subr.mxu0 %v222
    %2500 = vmatpush1.msra.mxu0 %v221
    %2501 = vmatprep.subr.mxu0 %v226
    %2502 = vmatpush1.msra.mxu0 %v225
    %2503 = vmatprep.subr.mxu0 %v230
    %2504 = vmatpush1.msra.mxu0 %v229
    %2505 = vmatprep.subr.mxu0 %v234
    %2506 = vmatpush1.msra.mxu0 %v233
    %2507 = vmatprep.subr.mxu0 %v238
    %2508 = vmatpush1.msra.mxu0 %v237
    %2509 = vmatprep.subr.mxu0 %v242
    %2510 = vmatpush1.msra.mxu0 %v241
    %2511 = vmatprep.subr.mxu0 %v246
    %2512 = vmatpush1.msra.mxu0 %v245
    %2513 = vmatprep.subr.mxu0 %v250
    %2514 = vmatpush1.msra.mxu0 %v249
    %2515 = vmatprep.subr.mxu0 %v254
    %2516 = vmatpush1.msra.mxu0 %v253
    %2517 = vmatprep.subr.mxu0 %v258
    %2518 = vmatpush1.msra.mxu0 %v257
    %2519 = vmatprep.subr.mxu0 %v262
    %2520 = vmatpush1.msra.mxu0 %v261
    %2521 = vmatprep.subr.mxu0 %v266
    %2522 = vmatpush1.msra.mxu0 %v265
    %2523 = vmatprep.subr.mxu0 %v270
    %2524 = vmatpush1.msra.mxu0 %v269
    %2525 = vmatprep.subr.mxu0 %v274
    %2526 = vmatpush1.msra.mxu0 %v273
    %2527 = vmatprep.subr.mxu0 0.0
    %2528 = vmatpush1.msra.mxu0 0.0
    %2529 = vmatprep.subr.mxu0 0.0
    %2530 = vmatpush1.msra.mxu0 0.0
    %2531 = vmatprep.subr.mxu0 0.0
    %2532 = vmatpush1.msra.mxu0 0.0
    %2533 = vmatprep.subr.mxu0 0.0
    %2534 = vmatpush1.msra.mxu0 0.0
    %2535 = vmatprep.subr.mxu0 0.0
    %2536 = vmatpush1.msra.mxu0 0.0
    %2537 = vmatprep.subr.mxu0 0.0
    %2538 = vmatpush1.msra.mxu0 0.0
    %2539 = vmatprep.subr.mxu0 0.0
    %2540 = vmatpush1.msra.mxu0 0.0
    %2541 = vmatprep.subr.mxu0 0.0
    %2542 = vmatpush1.msra.mxu0 0.0
    %2543 = vmatprep.subr.mxu0 0.0
    %2544 = vmatpush1.msra.mxu0 0.0
    %2545 = vmatprep.subr.mxu0 0.0
    %2546 = vmatpush1.msra.mxu0 0.0
    %2547 = vmatprep.subr.mxu0 0.0
    %2548 = vmatpush1.msra.mxu0 0.0
    %2549 = vmatprep.subr.mxu0 0.0
    %2550 = vmatpush1.msra.mxu0 0.0
    %2551 = vmatprep.subr.mxu0 0.0
    %2552 = vmatpush1.msra.mxu0 0.0
    %2553 = vmatprep.subr.mxu0 0.0
    %2554 = vmatpush1.msra.mxu0 0.0
    %2555 = vmatprep.subr.mxu0 0.0
    %2556 = vmatpush1.msra.mxu0 0.0
    %2557 = vmatprep.subr.mxu0 0.0
    %2558 = vmatpush1.msra.mxu0 0.0
    %2559 = vmatprep.mubr.f32.mxu0 0.0
    %2560 = vmatmul.mubr.f32.gmra.mrb[0].mxu0 %v2422
    %v2561 = vpop.f32.mrb[0].mxu0
    %v2562 = vadd.f32 %v2417, %v2561
    %v2563 = vpop.f32.mrb[0].mxu0
    %v2564 = vadd.f32 %v2419, %v2563
    %2565 = vdwg.mxu0
    %v2566 = vadd.f32 %v2491, %v1049
    %v2567 = vadd.f32 %v2493, %v1053
    %v2568 = vadd.f32 %v2562, %v1057
    %v2569 = vadd.f32 %v2564, %v1061
    %v2570 = vxor.u32 %v2566, 2147483648
    %v2571 = vxor.u32 %v2567, 2147483648
    %v2572 = vxor.u32 %v2568, 2147483648
    %v2573 = vmul.f32 %v2570, 1.442695
    %v2574 = vpow.pop %v2573
    %v2575 = vmul.f32 %v2571, 1.442695
    %v2576 = vpow.pop %v2575
    %v2577 = vmul.f32 %v2572, 1.442695
    %v2578 = vpow.pop %v2577
    %v2579 = vadd.f32 %v2574, 1.0
    %v2580 = vadd.f32 %v2576, 1.0
    %v2581 = vadd.f32 %v2578, 1.0
    %v2582 = vrcp.pop %v2579
    %v2583 = vmul.f32 1.0, %v2582
    %v2584 = vrcp.pop %v2580
    %v2585 = vmul.f32 1.0, %v2584
    %v2586 = vrcp.pop %v2581
    %v2587 = vmul.f32 1.0, %v2586
    %v2588 = vtanh.pop %v2569
    %v2589 = vmul.f32 %v2585, %v2091
    %v2590 = vmul.f32 %v2583, %v2588
    %v2591 = vadd.f32 %v2589, %v2590
    %v2592 = vtanh.pop %v2591
    %v2593 = vmul.f32 %v2587, %v2592
    %2594 = vmatprep.subr.mxu0 %v148
    %2595 = vmatpush1.msra.mxu0 %v147
    %2596 = vmatprep.subr.mxu0 %v152
    %2597 = vmatpush1.msra.mxu0 %v151
    %2598 = vmatprep.subr.mxu0 %v156
    %2599 = vmatpush1.msra.mxu0 %v155
    %2600 = vmatprep.subr.mxu0 %v160
    %2601 = vmatpush1.msra.mxu0 %v159
    %2602 = vmatprep.subr.mxu0 %v164
    %2603 = vmatpush1.msra.mxu0 %v163
    %2604 = vmatprep.subr.mxu0 %v168
    %2605 = vmatpush1.msra.mxu0 %v167
    %2606 = vmatprep.subr.mxu0 %v172
    %2607 = vmatpush1.msra.mxu0 %v171
    %2608 = vmatprep.subr.mxu0 %v176
    %2609 = vmatpush1.msra.mxu0 %v175
    %2610 = vmatprep.subr.mxu0 %v180
    %2611 = vmatpush1.msra.mxu0 %v179
    %2612 = vmatprep.subr.mxu0 %v184
    %2613 = vmatpush1.msra.mxu0 %v183
    %2614 = vmatprep.subr.mxu0 %v188
    %2615 = vmatpush1.msra.mxu0 %v187
    %2616 = vmatprep.subr.mxu0 %v192
    %2617 = vmatpush1.msra.mxu0 %v191
    %2618 = vmatprep.subr.mxu0 %v196
    %2619 = vmatpush1.msra.mxu0 %v195
    %2620 = vmatprep.subr.mxu0 %v200
    %2621 = vmatpush1.msra.mxu0 %v199
    %2622 = vmatprep.subr.mxu0 %v204
    %2623 = vmatpush1.msra.mxu0 %v203
    %2624 = vmatprep.subr.mxu0 %v208
    %2625 = vmatpush1.msra.mxu0 %v207
    %2626 = vmatprep.subr.mxu0 0.0
    %2627 = vmatpush1.msra.mxu0 0.0
    %2628 = vmatprep.subr.mxu0 0.0
    %2629 = vmatpush1.msra.mxu0 0.0
    %2630 = vmatprep.subr.mxu0 0.0
    %2631 = vmatpush1.msra.mxu0 0.0
    %2632 = vmatprep.subr.mxu0 0.0
    %2633 = vmatpush1.msra.mxu0 0.0
    %2634 = vmatprep.subr.mxu0 0.0
    %2635 = vmatpush1.msra.mxu0 0.0
    %2636 = vmatprep.subr.mxu0 0.0
    %2637 = vmatpush1.msra.mxu0 0.0
    %2638 = vmatprep.subr.mxu0 0.0
    %2639 = vmatpush1.msra.mxu0 0.0
    %2640 = vmatprep.subr.mxu0 0.0
    %2641 = vmatpush1.msra.mxu0 0.0
    %2642 = vmatprep.subr.mxu0 0.0
    %2643 = vmatpush1.msra.mxu0 0.0
    %2644 = vmatprep.subr.mxu0 0.0
    %2645 = vmatpush1.msra.mxu0 0.0
    %2646 = vmatprep.subr.mxu0 0.0
    %2647 = vmatpush1.msra.mxu0 0.0
    %2648 = vmatprep.subr.mxu0 0.0
    %2649 = vmatpush1.msra.mxu0 0.0
    %2650 = vmatprep.subr.mxu0 0.0
    %2651 = vmatpush1.msra.mxu0 0.0
    %2652 = vmatprep.subr.mxu0 0.0
    %2653 = vmatpush1.msra.mxu0 0.0
    %2654 = vmatprep.subr.mxu0 0.0
    %2655 = vmatpush1.msra.mxu0 0.0
    %2656 = vmatprep.subr.mxu0 0.0
    %2657 = vmatpush1.msra.mxu0 0.0
    %2658 = vmatprep.mubr.f32.mxu0 0.0
    %2659 = vmatmul.mubr.f32.gmra.mrb[0].mxu0 %v2422
    %v2660 = vpop.f32.mrb[0].mxu0
    %v2661 = vadd.f32 0.0, %v2660
    %v2662 = vpop.f32.mrb[0].mxu0
    %v2663 = vadd.f32 0.0, %v2662
    %2664 = vdwg.mxu0
    %2665 = vmatprep.subr.mxu0 %v150
    %2666 = vmatpush1.msra.mxu0 %v149
    %2667 = vmatprep.subr.mxu0 %v154
    %2668 = vmatpush1.msra.mxu0 %v153
    %2669 = vmatprep.subr.mxu0 %v158
    %2670 = vmatpush1.msra.mxu0 %v157
    %2671 = vmatprep.subr.mxu0 %v162
    %2672 = vmatpush1.msra.mxu0 %v161
    %2673 = vmatprep.subr.mxu0 %v166
    %2674 = vmatpush1.msra.mxu0 %v165
    %2675 = vmatprep.subr.mxu0 %v170
    %2676 = vmatpush1.msra.mxu0 %v169
    %2677 = vmatprep.subr.mxu0 %v174
    %2678 = vmatpush1.msra.mxu0 %v173
    %2679 = vmatprep.subr.mxu0 %v178
    %2680 = vmatpush1.msra.mxu0 %v177
    %2681 = vmatprep.subr.mxu0 %v182
    %2682 = vmatpush1.msra.mxu0 %v181
    %2683 = vmatprep.subr.mxu0 %v186
    %2684 = vmatpush1.msra.mxu0 %v185
    %2685 = vmatprep.subr.mxu0 %v190
    %2686 = vmatpush1.msra.mxu0 %v189
    %2687 = vmatprep.subr.mxu0 %v194
    %2688 = vmatpush1.msra.mxu0 %v193
    %2689 = vmatprep.subr.mxu0 %v198
    %2690 = vmatpush1.msra.mxu0 %v197
    %2691 = vmatprep.subr.mxu0 %v202
    %2692 = vmatpush1.msra.mxu0 %v201
    %2693 = vmatprep.subr.mxu0 %v206
    %2694 = vmatpush1.msra.mxu0 %v205
    %2695 = vmatprep.subr.mxu0 %v210
    %2696 = vmatpush1.msra.mxu0 %v209
    %2697 = vmatprep.subr.mxu0 0.0
    %2698 = vmatpush1.msra.mxu0 0.0
    %2699 = vmatprep.subr.mxu0 0.0
    %2700 = vmatpush1.msra.mxu0 0.0
    %2701 = vmatprep.subr.mxu0 0.0
    %2702 = vmatpush1.msra.mxu0 0.0
    %2703 = vmatprep.subr.mxu0 0.0
    %2704 = vmatpush1.msra.mxu0 0.0
    %2705 = vmatprep.subr.mxu0 0.0
    %2706 = vmatpush1.msra.mxu0 0.0
    %2707 = vmatprep.subr.mxu0 0.0
    %2708 = vmatpush1.msra.mxu0 0.0
    %2709 = vmatprep.subr.mxu0 0.0
    %2710 = vmatpush1.msra.mxu0 0.0
    %2711 = vmatprep.subr.mxu0 0.0
    %2712 = vmatpush1.msra.mxu0 0.0
    %2713 = vmatprep.subr.mxu0 0.0
    %2714 = vmatpush1.msra.mxu0 0.0
    %2715 = vmatprep.subr.mxu0 0.0
    %2716 = vmatpush1.msra.mxu0 0.0
    %2717 = vmatprep.subr.mxu0 0.0
    %2718 = vmatpush1.msra.mxu0 0.0
    %2719 = vmatprep.subr.mxu0 0.0
    %2720 = vmatpush1.msra.mxu0 0.0
    %2721 = vmatprep.subr.mxu0 0.0
    %2722 = vmatpush1.msra.mxu0 0.0
    %2723 = vmatprep.subr.mxu0 0.0
    %2724 = vmatpush1.msra.mxu0 0.0
    %2725 = vmatprep.subr.mxu0 0.0
    %2726 = vmatpush1.msra.mxu0 0.0
    %2727 = vmatprep.subr.mxu0 0.0
    %2728 = vmatpush1.msra.mxu0 0.0
    %2729 = vmatprep.mubr.f32.mxu0 0.0
    %2730 = vmatmul.mubr.f32.gmra.mrb[0].mxu0 %v2422
    %v2731 = vpop.f32.mrb[0].mxu0
    %v2732 = vadd.f32 0.0, %v2731
    %v2733 = vpop.f32.mrb[0].mxu0
    %v2734 = vadd.f32 0.0, %v2733
    %2735 = vdwg.mxu0
    %v2740 = vrot.slane %v2661, 4
    %v2741 = vrot.slane %v2663, 4
    %v2742 = vrot.slane %v2732, 4
    %v2743 = vrot.slane %v2734, 4
    %v2748 = vadd.f32 %v587, %v2740
    %v2749 = vadd.f32 %v588, %v2741
    %v2750 = vadd.f32 %v589, %v2742
    %v2751 = vadd.f32 %v590, %v2743
    %v2752 = vxor.u32 %v2748, 2147483648
    %v2753 = vxor.u32 %v2749, 2147483648
    %v2754 = vxor.u32 %v2750, 2147483648
    %v2755 = vmul.f32 %v2752, 1.442695
    %v2756 = vpow.pop %v2755
    %v2757 = vmul.f32 %v2753, 1.442695
    %v2758 = vpow.pop %v2757
    %v2759 = vmul.f32 %v2754, 1.442695
    %v2760 = vpow.pop %v2759
    %v2761 = vadd.f32 %v2756, 1.0
    %v2762 = vadd.f32 %v2758, 1.0
    %v2763 = vadd.f32 %v2760, 1.0
    %v2764 = vrcp.pop %v2761
    %v2765 = vmul.f32 1.0, %v2764
    %v2766 = vrcp.pop %v2762
    %v2767 = vmul.f32 1.0, %v2766
    %v2768 = vrcp.pop %v2763
    %v2769 = vmul.f32 1.0, %v2768
    %v2770 = vtanh.pop %v2751
    %v2772 = vrot.slane %v2276, 7
    %v2774 = vmul.f32 %v2767, %v2772
    %v2775 = vmul.f32 %v2765, %v2770
    %v2776 = vadd.f32 %v2774, %v2775
    %v2777 = vtanh.pop %v2776
    %v2778 = vmul.f32 %v2769, %v2777
    %2779 = vmatprep.subr.mxu0 %v276
    %2780 = vmatpush1.msra.mxu0 %v275
    %2781 = vmatprep.subr.mxu0 %v280
    %2782 = vmatpush1.msra.mxu0 %v279
    %2783 = vmatprep.subr.mxu0 %v284
    %2784 = vmatpush1.msra.mxu0 %v283
    %2785 = vmatprep.subr.mxu0 %v288
    %2786 = vmatpush1.msra.mxu0 %v287
    %2787 = vmatprep.subr.mxu0 %v292
    %2788 = vmatpush1.msra.mxu0 %v291
    %2789 = vmatprep.subr.mxu0 %v296
    %2790 = vmatpush1.msra.mxu0 %v295
    %2791 = vmatprep.subr.mxu0 %v300
    %2792 = vmatpush1.msra.mxu0 %v299
    %2793 = vmatprep.subr.mxu0 %v304
    %2794 = vmatpush1.msra.mxu0 %v303
    %2795 = vmatprep.subr.mxu0 %v308
    %2796 = vmatpush1.msra.mxu0 %v307
    %2797 = vmatprep.subr.mxu0 %v312
    %2798 = vmatpush1.msra.mxu0 %v311
    %2799 = vmatprep.subr.mxu0 %v316
    %2800 = vmatpush1.msra.mxu0 %v315
    %2801 = vmatprep.subr.mxu0 %v320
    %2802 = vmatpush1.msra.mxu0 %v319
    %2803 = vmatprep.subr.mxu0 %v324
    %2804 = vmatpush1.msra.mxu0 %v323
    %2805 = vmatprep.subr.mxu0 %v328
    %2806 = vmatpush1.msra.mxu0 %v327
    %2807 = vmatprep.subr.mxu0 %v332
    %2808 = vmatpush1.msra.mxu0 %v331
    %2809 = vmatprep.subr.mxu0 %v336
    %2810 = vmatpush1.msra.mxu0 %v335
    %2811 = vmatprep.subr.mxu0 0.0
    %2812 = vmatpush1.msra.mxu0 0.0
    %2813 = vmatprep.subr.mxu0 0.0
    %2814 = vmatpush1.msra.mxu0 0.0
    %2815 = vmatprep.subr.mxu0 0.0
    %2816 = vmatpush1.msra.mxu0 0.0
    %2817 = vmatprep.subr.mxu0 0.0
    %2818 = vmatpush1.msra.mxu0 0.0
    %2819 = vmatprep.subr.mxu0 0.0
    %2820 = vmatpush1.msra.mxu0 0.0
    %2821 = vmatprep.subr.mxu0 0.0
    %2822 = vmatpush1.msra.mxu0 0.0
    %2823 = vmatprep.subr.mxu0 0.0
    %2824 = vmatpush1.msra.mxu0 0.0
    %2825 = vmatprep.subr.mxu0 0.0
    %2826 = vmatpush1.msra.mxu0 0.0
    %2827 = vmatprep.subr.mxu0 0.0
    %2828 = vmatpush1.msra.mxu0 0.0
    %2829 = vmatprep.subr.mxu0 0.0
    %2830 = vmatpush1.msra.mxu0 0.0
    %2831 = vmatprep.subr.mxu0 0.0
    %2832 = vmatpush1.msra.mxu0 0.0
    %2833 = vmatprep.subr.mxu0 0.0
    %2834 = vmatpush1.msra.mxu0 0.0
    %2835 = vmatprep.subr.mxu0 0.0
    %2836 = vmatpush1.msra.mxu0 0.0
    %2837 = vmatprep.subr.mxu0 0.0
    %2838 = vmatpush1.msra.mxu0 0.0
    %2839 = vmatprep.subr.mxu0 0.0
    %2840 = vmatpush1.msra.mxu0 0.0
    %2841 = vmatprep.subr.mxu0 0.0
    %2842 = vmatpush1.msra.mxu0 0.0
    %2843 = vmatprep.mubr.f32.mxu0 0.0
    %2844 = vmatmul.mubr.f32.gmra.mrb[0].mxu0 %v2593
    %v2845 = vpop.f32.mrb[0].mxu0
    %v2846 = vadd.f32 0.0, %v2845
    %v2847 = vpop.f32.mrb[0].mxu0
    %v2848 = vadd.f32 0.0, %v2847
    %2849 = vdwg.mxu0
    %2850 = vmatprep.subr.mxu0 %v278
    %2851 = vmatpush1.msra.mxu0 %v277
    %2852 = vmatprep.subr.mxu0 %v282
    %2853 = vmatpush1.msra.mxu0 %v281
    %2854 = vmatprep.subr.mxu0 %v286
    %2855 = vmatpush1.msra.mxu0 %v285
    %2856 = vmatprep.subr.mxu0 %v290
    %2857 = vmatpush1.msra.mxu0 %v289
    %2858 = vmatprep.subr.mxu0 %v294
    %2859 = vmatpush1.msra.mxu0 %v293
    %2860 = vmatprep.subr.mxu0 %v298
    %2861 = vmatpush1.msra.mxu0 %v297
    %2862 = vmatprep.subr.mxu0 %v302
    %2863 = vmatpush1.msra.mxu0 %v301
    %2864 = vmatprep.subr.mxu0 %v306
    %2865 = vmatpush1.msra.mxu0 %v305
    %2866 = vmatprep.subr.mxu0 %v310
    %2867 = vmatpush1.msra.mxu0 %v309
    %2868 = vmatprep.subr.mxu0 %v314
    %2869 = vmatpush1.msra.mxu0 %v313
    %2870 = vmatprep.subr.mxu0 %v318
    %2871 = vmatpush1.msra.mxu0 %v317
    %2872 = vmatprep.subr.mxu0 %v322
    %2873 = vmatpush1.msra.mxu0 %v321
    %2874 = vmatprep.subr.mxu0 %v326
    %2875 = vmatpush1.msra.mxu0 %v325
    %2876 = vmatprep.subr.mxu0 %v330
    %2877 = vmatpush1.msra.mxu0 %v329
    %2878 = vmatprep.subr.mxu0 %v334
    %2879 = vmatpush1.msra.mxu0 %v333
    %2880 = vmatprep.subr.mxu0 %v338
    %2881 = vmatpush1.msra.mxu0 %v337
    %2882 = vmatprep.subr.mxu0 0.0
    %2883 = vmatpush1.msra.mxu0 0.0
    %2884 = vmatprep.subr.mxu0 0.0
    %2885 = vmatpush1.msra.mxu0 0.0
    %2886 = vmatprep.subr.mxu0 0.0
    %2887 = vmatpush1.msra.mxu0 0.0
    %2888 = vmatprep.subr.mxu0 0.0
    %2889 = vmatpush1.msra.mxu0 0.0
    %2890 = vmatprep.subr.mxu0 0.0
    %2891 = vmatpush1.msra.mxu0 0.0
    %2892 = vmatprep.subr.mxu0 0.0
    %2893 = vmatpush1.msra.mxu0 0.0
    %2894 = vmatprep.subr.mxu0 0.0
    %2895 = vmatpush1.msra.mxu0 0.0
    %2896 = vmatprep.subr.mxu0 0.0
    %2897 = vmatpush1.msra.mxu0 0.0
    %2898 = vmatprep.subr.mxu0 0.0
    %2899 = vmatpush1.msra.mxu0 0.0
    %2900 = vmatprep.subr.mxu0 0.0
    %2901 = vmatpush1.msra.mxu0 0.0
    %2902 = vmatprep.subr.mxu0 0.0
    %2903 = vmatpush1.msra.mxu0 0.0
    %2904 = vmatprep.subr.mxu0 0.0
    %2905 = vmatpush1.msra.mxu0 0.0
    %2906 = vmatprep.subr.mxu0 0.0
    %2907 = vmatpush1.msra.mxu0 0.0
    %2908 = vmatprep.subr.mxu0 0.0
    %2909 = vmatpush1.msra.mxu0 0.0
    %2910 = vmatprep.subr.mxu0 0.0
    %2911 = vmatpush1.msra.mxu0 0.0
    %2912 = vmatprep.subr.mxu0 0.0
    %2913 = vmatpush1.msra.mxu0 0.0
    %2914 = vmatprep.mubr.f32.mxu0 0.0
    %2915 = vmatmul.mubr.f32.gmra.mrb[0].mxu0 %v2593
    %v2916 = vpop.f32.mrb[0].mxu0
    %v2917 = vadd.f32 0.0, %v2916
    %v2918 = vpop.f32.mrb[0].mxu0
    %v2919 = vadd.f32 0.0, %v2918
    %2920 = vdwg.mxu0
    %v2922 = vrot.slane %v2778, 4
    %2924 = vmatprep.subr.mxu0 %v212
    %2925 = vmatpush1.msra.mxu0 %v211
    %2926 = vmatprep.subr.mxu0 %v216
    %2927 = vmatpush1.msra.mxu0 %v215
    %2928 = vmatprep.subr.mxu0 %v220
    %2929 = vmatpush1.msra.mxu0 %v219
    %2930 = vmatprep.subr.mxu0 %v224
    %2931 = vmatpush1.msra.mxu0 %v223
    %2932 = vmatprep.subr.mxu0 %v228
    %2933 = vmatpush1.msra.mxu0 %v227
    %2934 = vmatprep.subr.mxu0 %v232
    %2935 = vmatpush1.msra.mxu0 %v231
    %2936 = vmatprep.subr.mxu0 %v236
    %2937 = vmatpush1.msra.mxu0 %v235
    %2938 = vmatprep.subr.mxu0 %v240
    %2939 = vmatpush1.msra.mxu0 %v239
    %2940 = vmatprep.subr.mxu0 %v244
    %2941 = vmatpush1.msra.mxu0 %v243
    %2942 = vmatprep.subr.mxu0 %v248
    %2943 = vmatpush1.msra.mxu0 %v247
    %2944 = vmatprep.subr.mxu0 %v252
    %2945 = vmatpush1.msra.mxu0 %v251
    %2946 = vmatprep.subr.mxu0 %v256
    %2947 = vmatpush1.msra.mxu0 %v255
    %2948 = vmatprep.subr.mxu0 %v260
    %2949 = vmatpush1.msra.mxu0 %v259
    %2950 = vmatprep.subr.mxu0 %v264
    %2951 = vmatpush1.msra.mxu0 %v263
    %2952 = vmatprep.subr.mxu0 %v268
    %2953 = vmatpush1.msra.mxu0 %v267
    %2954 = vmatprep.subr.mxu0 %v272
    %2955 = vmatpush1.msra.mxu0 %v271
    %2956 = vmatprep.subr.mxu0 0.0
    %2957 = vmatpush1.msra.mxu0 0.0
    %2958 = vmatprep.subr.mxu0 0.0
    %2959 = vmatpush1.msra.mxu0 0.0
    %2960 = vmatprep.subr.mxu0 0.0
    %2961 = vmatpush1.msra.mxu0 0.0
    %2962 = vmatprep.subr.mxu0 0.0
    %2963 = vmatpush1.msra.mxu0 0.0
    %2964 = vmatprep.subr.mxu0 0.0
    %2965 = vmatpush1.msra.mxu0 0.0
    %2966 = vmatprep.subr.mxu0 0.0
    %2967 = vmatpush1.msra.mxu0 0.0
    %2968 = vmatprep.subr.mxu0 0.0
    %2969 = vmatpush1.msra.mxu0 0.0
    %2970 = vmatprep.subr.mxu0 0.0
    %2971 = vmatpush1.msra.mxu0 0.0
    %2972 = vmatprep.subr.mxu0 0.0
    %2973 = vmatpush1.msra.mxu0 0.0
    %2974 = vmatprep.subr.mxu0 0.0
    %2975 = vmatpush1.msra.mxu0 0.0
    %2976 = vmatprep.subr.mxu0 0.0
    %2977 = vmatpush1.msra.mxu0 0.0
    %2978 = vmatprep.subr.mxu0 0.0
    %2979 = vmatpush1.msra.mxu0 0.0
    %2980 = vmatprep.subr.mxu0 0.0
    %2981 = vmatpush1.msra.mxu0 0.0
    %2982 = vmatprep.subr.mxu0 0.0
    %2983 = vmatpush1.msra.mxu0 0.0
    %2984 = vmatprep.subr.mxu0 0.0
    %2985 = vmatpush1.msra.mxu0 0.0
    %2986 = vmatprep.subr.mxu0 0.0
    %2987 = vmatpush1.msra.mxu0 0.0
    %2988 = vmatprep.mubr.f32.mxu0 0.0
    %2989 = vmatmul.mubr.f32.gmra.mrb[0].mxu0 %v2922
    %v2990 = vpop.f32.mrb[0].mxu0
    %v2991 = vadd.f32 %v2846, %v2990
    %v2992 = vpop.f32.mrb[0].mxu0
    %v2993 = vadd.f32 %v2848, %v2992
    %2994 = vdwg.mxu0
    %2995 = vmatprep.subr.mxu0 %v214
    %2996 = vmatpush1.msra.mxu0 %v213
    %2997 = vmatprep.subr.mxu0 %v218
    %2998 = vmatpush1.msra.mxu0 %v217
    %2999 = vmatprep.subr.mxu0 %v222
    %3000 = vmatpush1.msra.mxu0 %v221
    %3001 = vmatprep.subr.mxu0 %v226
    %3002 = vmatpush1.msra.mxu0 %v225
    %3003 = vmatprep.subr.mxu0 %v230
    %3004 = vmatpush1.msra.mxu0 %v229
    %3005 = vmatprep.subr.mxu0 %v234
    %3006 = vmatpush1.msra.mxu0 %v233
    %3007 = vmatprep.subr.mxu0 %v238
    %3008 = vmatpush1.msra.mxu0 %v237
    %3009 = vmatprep.subr.mxu0 %v242
    %3010 = vmatpush1.msra.mxu0 %v241
    %3011 = vmatprep.subr.mxu0 %v246
    %3012 = vmatpush1.msra.mxu0 %v245
    %3013 = vmatprep.subr.mxu0 %v250
    %3014 = vmatpush1.msra.mxu0 %v249
    %3015 = vmatprep.subr.mxu0 %v254
    %3016 = vmatpush1.msra.mxu0 %v253
    %3017 = vmatprep.subr.mxu0 %v258
    %3018 = vmatpush1.msra.mxu0 %v257
    %3019 = vmatprep.subr.mxu0 %v262
    %3020 = vmatpush1.msra.mxu0 %v261
    %3021 = vmatprep.subr.mxu0 %v266
    %3022 = vmatpush1.msra.mxu0 %v265
    %3023 = vmatprep.subr.mxu0 %v270
    %3024 = vmatpush1.msra.mxu0 %v269
    %3025 = vmatprep.subr.mxu0 %v274
    %3026 = vmatpush1.msra.mxu0 %v273
    %3027 = vmatprep.subr.mxu0 0.0
    %3028 = vmatpush1.msra.mxu0 0.0
    %3029 = vmatprep.subr.mxu0 0.0
    %3030 = vmatpush1.msra.mxu0 0.0
    %3031 = vmatprep.subr.mxu0 0.0
    %3032 = vmatpush1.msra.mxu0 0.0
    %3033 = vmatprep.subr.mxu0 0.0
    %3034 = vmatpush1.msra.mxu0 0.0
    %3035 = vmatprep.subr.mxu0 0.0
    %3036 = vmatpush1.msra.mxu0 0.0
    %3037 = vmatprep.subr.mxu0 0.0
    %3038 = vmatpush1.msra.mxu0 0.0
    %3039 = vmatprep.subr.mxu0 0.0
    %3040 = vmatpush1.msra.mxu0 0.0
    %3041 = vmatprep.subr.mxu0 0.0
    %3042 = vmatpush1.msra.mxu0 0.0
    %3043 = vmatprep.subr.mxu0 0.0
    %3044 = vmatpush1.msra.mxu0 0.0
    %3045 = vmatprep.subr.mxu0 0.0
    %3046 = vmatpush1.msra.mxu0 0.0
    %3047 = vmatprep.subr.mxu0 0.0
    %3048 = vmatpush1.msra.mxu0 0.0
    %3049 = vmatprep.subr.mxu0 0.0
    %3050 = vmatpush1.msra.mxu0 0.0
    %3051 = vmatprep.subr.mxu0 0.0
    %3052 = vmatpush1.msra.mxu0 0.0
    %3053 = vmatprep.subr.mxu0 0.0
    %3054 = vmatpush1.msra.mxu0 0.0
    %3055 = vmatprep.subr.mxu0 0.0
    %3056 = vmatpush1.msra.mxu0 0.0
    %3057 = vmatprep.subr.mxu0 0.0
    %3058 = vmatpush1.msra.mxu0 0.0
    %3059 = vmatprep.mubr.f32.mxu0 0.0
    %3060 = vmatmul.mubr.f32.gmra.mrb[0].mxu0 %v2922
    %v3061 = vpop.f32.mrb[0].mxu0
    %v3062 = vadd.f32 %v2917, %v3061
    %v3063 = vpop.f32.mrb[0].mxu0
    %v3064 = vadd.f32 %v2919, %v3063
    %3065 = vdwg.mxu0
    %v3066 = vadd.f32 %v2991, %v1049
    %v3067 = vadd.f32 %v2993, %v1053
    %v3068 = vadd.f32 %v3062, %v1057
    %v3069 = vadd.f32 %v3064, %v1061
    %v3070 = vxor.u32 %v3066, 2147483648
    %v3071 = vxor.u32 %v3067, 2147483648
    %v3072 = vxor.u32 %v3068, 2147483648
    %v3073 = vmul.f32 %v3070, 1.442695
    %v3074 = vpow.pop %v3073
    %v3075 = vmul.f32 %v3071, 1.442695
    %v3076 = vpow.pop %v3075
    %v3077 = vmul.f32 %v3072, 1.442695
    %v3078 = vpow.pop %v3077
    %v3079 = vadd.f32 %v3074, 1.0
    %v3080 = vadd.f32 %v3076, 1.0
    %v3081 = vadd.f32 %v3078, 1.0
    %v3082 = vrcp.pop %v3079
    %v3083 = vmul.f32 1.0, %v3082
    %v3084 = vrcp.pop %v3080
    %v3085 = vmul.f32 1.0, %v3084
    %v3086 = vrcp.pop %v3081
    %v3087 = vmul.f32 1.0, %v3086
    %v3088 = vtanh.pop %v3069
    %v3089 = vmul.f32 %v3085, %v2591
    %v3090 = vmul.f32 %v3083, %v3088
    %v3091 = vadd.f32 %v3089, %v3090
    %v3092 = vtanh.pop %v3091
    %v3093 = vmul.f32 %v3087, %v3092
    %3094 = vmatprep.subr.mxu0 %v148
    %3095 = vmatpush1.msra.mxu0 %v147
    %3096 = vmatprep.subr.mxu0 %v152
    %3097 = vmatpush1.msra.mxu0 %v151
    %3098 = vmatprep.subr.mxu0 %v156
    %3099 = vmatpush1.msra.mxu0 %v155
    %3100 = vmatprep.subr.mxu0 %v160
    %3101 = vmatpush1.msra.mxu0 %v159
    %3102 = vmatprep.subr.mxu0 %v164
    %3103 = vmatpush1.msra.mxu0 %v163
    %3104 = vmatprep.subr.mxu0 %v168
    %3105 = vmatpush1.msra.mxu0 %v167
    %3106 = vmatprep.subr.mxu0 %v172
    %3107 = vmatpush1.msra.mxu0 %v171
    %3108 = vmatprep.subr.mxu0 %v176
    %3109 = vmatpush1.msra.mxu0 %v175
    %3110 = vmatprep.subr.mxu0 %v180
    %3111 = vmatpush1.msra.mxu0 %v179
    %3112 = vmatprep.subr.mxu0 %v184
    %3113 = vmatpush1.msra.mxu0 %v183
    %3114 = vmatprep.subr.mxu0 %v188
    %3115 = vmatpush1.msra.mxu0 %v187
    %3116 = vmatprep.subr.mxu0 %v192
    %3117 = vmatpush1.msra.mxu0 %v191
    %3118 = vmatprep.subr.mxu0 %v196
    %3119 = vmatpush1.msra.mxu0 %v195
    %3120 = vmatprep.subr.mxu0 %v200
    %3121 = vmatpush1.msra.mxu0 %v199
    %3122 = vmatprep.subr.mxu0 %v204
    %3123 = vmatpush1.msra.mxu0 %v203
    %3124 = vmatprep.subr.mxu0 %v208
    %3125 = vmatpush1.msra.mxu0 %v207
    %3126 = vmatprep.subr.mxu0 0.0
    %3127 = vmatpush1.msra.mxu0 0.0
    %3128 = vmatprep.subr.mxu0 0.0
    %3129 = vmatpush1.msra.mxu0 0.0
    %3130 = vmatprep.subr.mxu0 0.0
    %3131 = vmatpush1.msra.mxu0 0.0
    %3132 = vmatprep.subr.mxu0 0.0
    %3133 = vmatpush1.msra.mxu0 0.0
    %3134 = vmatprep.subr.mxu0 0.0
    %3135 = vmatpush1.msra.mxu0 0.0
    %3136 = vmatprep.subr.mxu0 0.0
    %3137 = vmatpush1.msra.mxu0 0.0
    %3138 = vmatprep.subr.mxu0 0.0
    %3139 = vmatpush1.msra.mxu0 0.0
    %3140 = vmatprep.subr.mxu0 0.0
    %3141 = vmatpush1.msra.mxu0 0.0
    %3142 = vmatprep.subr.mxu0 0.0
    %3143 = vmatpush1.msra.mxu0 0.0
    %3144 = vmatprep.subr.mxu0 0.0
    %3145 = vmatpush1.msra.mxu0 0.0
    %3146 = vmatprep.subr.mxu0 0.0
    %3147 = vmatpush1.msra.mxu0 0.0
    %3148 = vmatprep.subr.mxu0 0.0
    %3149 = vmatpush1.msra.mxu0 0.0
    %3150 = vmatprep.subr.mxu0 0.0
    %3151 = vmatpush1.msra.mxu0 0.0
    %3152 = vmatprep.subr.mxu0 0.0
    %3153 = vmatpush1.msra.mxu0 0.0
    %3154 = vmatprep.subr.mxu0 0.0
    %3155 = vmatpush1.msra.mxu0 0.0
    %3156 = vmatprep.subr.mxu0 0.0
    %3157 = vmatpush1.msra.mxu0 0.0
    %3158 = vmatprep.mubr.f32.mxu0 0.0
    %3159 = vmatmul.mubr.f32.gmra.mrb[0].mxu0 %v2922
    %v3160 = vpop.f32.mrb[0].mxu0
    %v3161 = vadd.f32 0.0, %v3160
    %v3162 = vpop.f32.mrb[0].mxu0
    %v3163 = vadd.f32 0.0, %v3162
    %3164 = vdwg.mxu0
    %3165 = vmatprep.subr.mxu0 %v150
    %3166 = vmatpush1.msra.mxu0 %v149
    %3167 = vmatprep.subr.mxu0 %v154
    %3168 = vmatpush1.msra.mxu0 %v153
    %3169 = vmatprep.subr.mxu0 %v158
    %3170 = vmatpush1.msra.mxu0 %v157
    %3171 = vmatprep.subr.mxu0 %v162
    %3172 = vmatpush1.msra.mxu0 %v161
    %3173 = vmatprep.subr.mxu0 %v166
    %3174 = vmatpush1.msra.mxu0 %v165
    %3175 = vmatprep.subr.mxu0 %v170
    %3176 = vmatpush1.msra.mxu0 %v169
    %3177 = vmatprep.subr.mxu0 %v174
    %3178 = vmatpush1.msra.mxu0 %v173
    %3179 = vmatprep.subr.mxu0 %v178
    %3180 = vmatpush1.msra.mxu0 %v177
    %3181 = vmatprep.subr.mxu0 %v182
    %3182 = vmatpush1.msra.mxu0 %v181
    %3183 = vmatprep.subr.mxu0 %v186
    %3184 = vmatpush1.msra.mxu0 %v185
    %3185 = vmatprep.subr.mxu0 %v190
    %3186 = vmatpush1.msra.mxu0 %v189
    %3187 = vmatprep.subr.mxu0 %v194
    %3188 = vmatpush1.msra.mxu0 %v193
    %3189 = vmatprep.subr.mxu0 %v198
    %3190 = vmatpush1.msra.mxu0 %v197
    %3191 = vmatprep.subr.mxu0 %v202
    %3192 = vmatpush1.msra.mxu0 %v201
    %3193 = vmatprep.subr.mxu0 %v206
    %3194 = vmatpush1.msra.mxu0 %v205
    %3195 = vmatprep.subr.mxu0 %v210
    %3196 = vmatpush1.msra.mxu0 %v209
    %3197 = vmatprep.subr.mxu0 0.0
    %3198 = vmatpush1.msra.mxu0 0.0
    %3199 = vmatprep.subr.mxu0 0.0
    %3200 = vmatpush1.msra.mxu0 0.0
    %3201 = vmatprep.subr.mxu0 0.0
    %3202 = vmatpush1.msra.mxu0 0.0
    %3203 = vmatprep.subr.mxu0 0.0
    %3204 = vmatpush1.msra.mxu0 0.0
    %3205 = vmatprep.subr.mxu0 0.0
    %3206 = vmatpush1.msra.mxu0 0.0
    %3207 = vmatprep.subr.mxu0 0.0
    %3208 = vmatpush1.msra.mxu0 0.0
    %3209 = vmatprep.subr.mxu0 0.0
    %3210 = vmatpush1.msra.mxu0 0.0
    %3211 = vmatprep.subr.mxu0 0.0
    %3212 = vmatpush1.msra.mxu0 0.0
    %3213 = vmatprep.subr.mxu0 0.0
    %3214 = vmatpush1.msra.mxu0 0.0
    %3215 = vmatprep.subr.mxu0 0.0
    %3216 = vmatpush1.msra.mxu0 0.0
    %3217 = vmatprep.subr.mxu0 0.0
    %3218 = vmatpush1.msra.mxu0 0.0
    %3219 = vmatprep.subr.mxu0 0.0
    %3220 = vmatpush1.msra.mxu0 0.0
    %3221 = vmatprep.subr.mxu0 0.0
    %3222 = vmatpush1.msra.mxu0 0.0
    %3223 = vmatprep.subr.mxu0 0.0
    %3224 = vmatpush1.msra.mxu0 0.0
    %3225 = vmatprep.subr.mxu0 0.0
    %3226 = vmatpush1.msra.mxu0 0.0
    %3227 = vmatprep.subr.mxu0 0.0
    %3228 = vmatpush1.msra.mxu0 0.0
    %3229 = vmatprep.mubr.f32.mxu0 0.0
    %3230 = vmatmul.mubr.f32.gmra.mrb[0].mxu0 %v2922
    %v3231 = vpop.f32.mrb[0].mxu0
    %v3232 = vadd.f32 0.0, %v3231
    %v3233 = vpop.f32.mrb[0].mxu0
    %v3234 = vadd.f32 0.0, %v3233
    %3235 = vdwg.mxu0
    %v3240 = vrot.slane %v3161, 3
    %v3241 = vrot.slane %v3163, 3
    %v3242 = vrot.slane %v3232, 3
    %v3243 = vrot.slane %v3234, 3
    %v3248 = vadd.f32 %v587, %v3240
    %v3249 = vadd.f32 %v588, %v3241
    %v3250 = vadd.f32 %v589, %v3242
    %v3251 = vadd.f32 %v590, %v3243
    %v3252 = vxor.u32 %v3248, 2147483648
    %v3253 = vxor.u32 %v3249, 2147483648
    %v3254 = vxor.u32 %v3250, 2147483648
    %v3255 = vmul.f32 %v3252, 1.442695
    %v3256 = vpow.pop %v3255
    %v3257 = vmul.f32 %v3253, 1.442695
    %v3258 = vpow.pop %v3257
    %v3259 = vmul.f32 %v3254, 1.442695
    %v3260 = vpow.pop %v3259
    %v3261 = vadd.f32 %v3256, 1.0
    %v3262 = vadd.f32 %v3258, 1.0
    %v3263 = vadd.f32 %v3260, 1.0
    %v3264 = vrcp.pop %v3261
    %v3265 = vmul.f32 1.0, %v3264
    %v3266 = vrcp.pop %v3262
    %v3267 = vmul.f32 1.0, %v3266
    %v3268 = vrcp.pop %v3263
    %v3269 = vmul.f32 1.0, %v3268
    %v3270 = vtanh.pop %v3251
    %v3272 = vrot.slane %v2776, 7
    %v3274 = vmul.f32 %v3267, %v3272
    %v3275 = vmul.f32 %v3265, %v3270
    %v3276 = vadd.f32 %v3274, %v3275
    %v3277 = vtanh.pop %v3276
    %v3278 = vmul.f32 %v3269, %v3277
    %3279 = vmatprep.subr.mxu0 %v276
    %3280 = vmatpush1.msra.mxu0 %v275
    %3281 = vmatprep.subr.mxu0 %v280
    %3282 = vmatpush1.msra.mxu0 %v279
    %3283 = vmatprep.subr.mxu0 %v284
    %3284 = vmatpush1.msra.mxu0 %v283
    %3285 = vmatprep.subr.mxu0 %v288
    %3286 = vmatpush1.msra.mxu0 %v287
    %3287 = vmatprep.subr.mxu0 %v292
    %3288 = vmatpush1.msra.mxu0 %v291
    %3289 = vmatprep.subr.mxu0 %v296
    %3290 = vmatpush1.msra.mxu0 %v295
    %3291 = vmatprep.subr.mxu0 %v300
    %3292 = vmatpush1.msra.mxu0 %v299
    %3293 = vmatprep.subr.mxu0 %v304
    %3294 = vmatpush1.msra.mxu0 %v303
    %3295 = vmatprep.subr.mxu0 %v308
    %3296 = vmatpush1.msra.mxu0 %v307
    %3297 = vmatprep.subr.mxu0 %v312
    %3298 = vmatpush1.msra.mxu0 %v311
    %3299 = vmatprep.subr.mxu0 %v316
    %3300 = vmatpush1.msra.mxu0 %v315
    %3301 = vmatprep.subr.mxu0 %v320
    %3302 = vmatpush1.msra.mxu0 %v319
    %3303 = vmatprep.subr.mxu0 %v324
    %3304 = vmatpush1.msra.mxu0 %v323
    %3305 = vmatprep.subr.mxu0 %v328
    %3306 = vmatpush1.msra.mxu0 %v327
    %3307 = vmatprep.subr.mxu0 %v332
    %3308 = vmatpush1.msra.mxu0 %v331
    %3309 = vmatprep.subr.mxu0 %v336
    %3310 = vmatpush1.msra.mxu0 %v335
    %3311 = vmatprep.subr.mxu0 0.0
    %3312 = vmatpush1.msra.mxu0 0.0
    %3313 = vmatprep.subr.mxu0 0.0
    %3314 = vmatpush1.msra.mxu0 0.0
    %3315 = vmatprep.subr.mxu0 0.0
    %3316 = vmatpush1.msra.mxu0 0.0
    %3317 = vmatprep.subr.mxu0 0.0
    %3318 = vmatpush1.msra.mxu0 0.0
    %3319 = vmatprep.subr.mxu0 0.0
    %3320 = vmatpush1.msra.mxu0 0.0
    %3321 = vmatprep.subr.mxu0 0.0
    %3322 = vmatpush1.msra.mxu0 0.0
    %3323 = vmatprep.subr.mxu0 0.0
    %3324 = vmatpush1.msra.mxu0 0.0
    %3325 = vmatprep.subr.mxu0 0.0
    %3326 = vmatpush1.msra.mxu0 0.0
    %3327 = vmatprep.subr.mxu0 0.0
    %3328 = vmatpush1.msra.mxu0 0.0
    %3329 = vmatprep.subr.mxu0 0.0
    %3330 = vmatpush1.msra.mxu0 0.0
    %3331 = vmatprep.subr.mxu0 0.0
    %3332 = vmatpush1.msra.mxu0 0.0
    %3333 = vmatprep.subr.mxu0 0.0
    %3334 = vmatpush1.msra.mxu0 0.0
    %3335 = vmatprep.subr.mxu0 0.0
    %3336 = vmatpush1.msra.mxu0 0.0
    %3337 = vmatprep.subr.mxu0 0.0
    %3338 = vmatpush1.msra.mxu0 0.0
    %3339 = vmatprep.subr.mxu0 0.0
    %3340 = vmatpush1.msra.mxu0 0.0
    %3341 = vmatprep.subr.mxu0 0.0
    %3342 = vmatpush1.msra.mxu0 0.0
    %3343 = vmatprep.mubr.f32.mxu0 0.0
    %3344 = vmatmul.mubr.f32.gmra.mrb[0].mxu0 %v3093
    %v3345 = vpop.f32.mrb[0].mxu0
    %v3346 = vadd.f32 0.0, %v3345
    %v3347 = vpop.f32.mrb[0].mxu0
    %v3348 = vadd.f32 0.0, %v3347
    %3349 = vdwg.mxu0
    %3350 = vmatprep.subr.mxu0 %v278
    %3351 = vmatpush1.msra.mxu0 %v277
    %3352 = vmatprep.subr.mxu0 %v282
    %3353 = vmatpush1.msra.mxu0 %v281
    %3354 = vmatprep.subr.mxu0 %v286
    %3355 = vmatpush1.msra.mxu0 %v285
    %3356 = vmatprep.subr.mxu0 %v290
    %3357 = vmatpush1.msra.mxu0 %v289
    %3358 = vmatprep.subr.mxu0 %v294
    %3359 = vmatpush1.msra.mxu0 %v293
    %3360 = vmatprep.subr.mxu0 %v298
    %3361 = vmatpush1.msra.mxu0 %v297
    %3362 = vmatprep.subr.mxu0 %v302
    %3363 = vmatpush1.msra.mxu0 %v301
    %3364 = vmatprep.subr.mxu0 %v306
    %3365 = vmatpush1.msra.mxu0 %v305
    %3366 = vmatprep.subr.mxu0 %v310
    %3367 = vmatpush1.msra.mxu0 %v309
    %3368 = vmatprep.subr.mxu0 %v314
    %3369 = vmatpush1.msra.mxu0 %v313
    %3370 = vmatprep.subr.mxu0 %v318
    %3371 = vmatpush1.msra.mxu0 %v317
    %3372 = vmatprep.subr.mxu0 %v322
    %3373 = vmatpush1.msra.mxu0 %v321
    %3374 = vmatprep.subr.mxu0 %v326
    %3375 = vmatpush1.msra.mxu0 %v325
    %3376 = vmatprep.subr.mxu0 %v330
    %3377 = vmatpush1.msra.mxu0 %v329
    %3378 = vmatprep.subr.mxu0 %v334
    %3379 = vmatpush1.msra.mxu0 %v333
    %3380 = vmatprep.subr.mxu0 %v338
    %3381 = vmatpush1.msra.mxu0 %v337
    %3382 = vmatprep.subr.mxu0 0.0
    %3383 = vmatpush1.msra.mxu0 0.0
    %3384 = vmatprep.subr.mxu0 0.0
    %3385 = vmatpush1.msra.mxu0 0.0
    %3386 = vmatprep.subr.mxu0 0.0
    %3387 = vmatpush1.msra.mxu0 0.0
    %3388 = vmatprep.subr.mxu0 0.0
    %3389 = vmatpush1.msra.mxu0 0.0
    %3390 = vmatprep.subr.mxu0 0.0
    %3391 = vmatpush1.msra.mxu0 0.0
    %3392 = vmatprep.subr.mxu0 0.0
    %3393 = vmatpush1.msra.mxu0 0.0
    %3394 = vmatprep.subr.mxu0 0.0
    %3395 = vmatpush1.msra.mxu0 0.0
    %3396 = vmatprep.subr.mxu0 0.0
    %3397 = vmatpush1.msra.mxu0 0.0
    %3398 = vmatprep.subr.mxu0 0.0
    %3399 = vmatpush1.msra.mxu0 0.0
    %3400 = vmatprep.subr.mxu0 0.0
    %3401 = vmatpush1.msra.mxu0 0.0
    %3402 = vmatprep.subr.mxu0 0.0
    %3403 = vmatpush1.msra.mxu0 0.0
    %3404 = vmatprep.subr.mxu0 0.0
    %3405 = vmatpush1.msra.mxu0 0.0
    %3406 = vmatprep.subr.mxu0 0.0
    %3407 = vmatpush1.msra.mxu0 0.0
    %3408 = vmatprep.subr.mxu0 0.0
    %3409 = vmatpush1.msra.mxu0 0.0
    %3410 = vmatprep.subr.mxu0 0.0
    %3411 = vmatpush1.msra.mxu0 0.0
    %3412 = vmatprep.subr.mxu0 0.0
    %3413 = vmatpush1.msra.mxu0 0.0
    %3414 = vmatprep.mubr.f32.mxu0 0.0
    %3415 = vmatmul.mubr.f32.gmra.mrb[0].mxu0 %v3093
    %v3416 = vpop.f32.mrb[0].mxu0
    %v3417 = vadd.f32 0.0, %v3416
    %v3418 = vpop.f32.mrb[0].mxu0
    %v3419 = vadd.f32 0.0, %v3418
    %3420 = vdwg.mxu0
    %v3422 = vrot.slane %v3278, 5
    %3424 = vmatprep.subr.mxu0 %v212
    %3425 = vmatpush1.msra.mxu0 %v211
    %3426 = vmatprep.subr.mxu0 %v216
    %3427 = vmatpush1.msra.mxu0 %v215
    %3428 = vmatprep.subr.mxu0 %v220
    %3429 = vmatpush1.msra.mxu0 %v219
    %3430 = vmatprep.subr.mxu0 %v224
    %3431 = vmatpush1.msra.mxu0 %v223
    %3432 = vmatprep.subr.mxu0 %v228
    %3433 = vmatpush1.msra.mxu0 %v227
    %3434 = vmatprep.subr.mxu0 %v232
    %3435 = vmatpush1.msra.mxu0 %v231
    %3436 = vmatprep.subr.mxu0 %v236
    %3437 = vmatpush1.msra.mxu0 %v235
    %3438 = vmatprep.subr.mxu0 %v240
    %3439 = vmatpush1.msra.mxu0 %v239
    %3440 = vmatprep.subr.mxu0 %v244
    %3441 = vmatpush1.msra.mxu0 %v243
    %3442 = vmatprep.subr.mxu0 %v248
    %3443 = vmatpush1.msra.mxu0 %v247
    %3444 = vmatprep.subr.mxu0 %v252
    %3445 = vmatpush1.msra.mxu0 %v251
    %3446 = vmatprep.subr.mxu0 %v256
    %3447 = vmatpush1.msra.mxu0 %v255
    %3448 = vmatprep.subr.mxu0 %v260
    %3449 = vmatpush1.msra.mxu0 %v259
    %3450 = vmatprep.subr.mxu0 %v264
    %3451 = vmatpush1.msra.mxu0 %v263
    %3452 = vmatprep.subr.mxu0 %v268
    %3453 = vmatpush1.msra.mxu0 %v267
    %3454 = vmatprep.subr.mxu0 %v272
    %3455 = vmatpush1.msra.mxu0 %v271
    %3456 = vmatprep.subr.mxu0 0.0
    %3457 = vmatpush1.msra.mxu0 0.0
    %3458 = vmatprep.subr.mxu0 0.0
    %3459 = vmatpush1.msra.mxu0 0.0
    %3460 = vmatprep.subr.mxu0 0.0
    %3461 = vmatpush1.msra.mxu0 0.0
    %3462 = vmatprep.subr.mxu0 0.0
    %3463 = vmatpush1.msra.mxu0 0.0
    %3464 = vmatprep.subr.mxu0 0.0
    %3465 = vmatpush1.msra.mxu0 0.0
    %3466 = vmatprep.subr.mxu0 0.0
    %3467 = vmatpush1.msra.mxu0 0.0
    %3468 = vmatprep.subr.mxu0 0.0
    %3469 = vmatpush1.msra.mxu0 0.0
    %3470 = vmatprep.subr.mxu0 0.0
    %3471 = vmatpush1.msra.mxu0 0.0
    %3472 = vmatprep.subr.mxu0 0.0
    %3473 = vmatpush1.msra.mxu0 0.0
    %3474 = vmatprep.subr.mxu0 0.0
    %3475 = vmatpush1.msra.mxu0 0.0
    %3476 = vmatprep.subr.mxu0 0.0
    %3477 = vmatpush1.msra.mxu0 0.0
    %3478 = vmatprep.subr.mxu0 0.0
    %3479 = vmatpush1.msra.mxu0 0.0
    %3480 = vmatprep.subr.mxu0 0.0
    %3481 = vmatpush1.msra.mxu0 0.0
    %3482 = vmatprep.subr.mxu0 0.0
    %3483 = vmatpush1.msra.mxu0 0.0
    %3484 = vmatprep.subr.mxu0 0.0
    %3485 = vmatpush1.msra.mxu0 0.0
    %3486 = vmatprep.subr.mxu0 0.0
    %3487 = vmatpush1.msra.mxu0 0.0
    %3488 = vmatprep.mubr.f32.mxu0 0.0
    %3489 = vmatmul.mubr.f32.gmra.mrb[0].mxu0 %v3422
    %v3490 = vpop.f32.mrb[0].mxu0
    %v3491 = vadd.f32 %v3346, %v3490
    %v3492 = vpop.f32.mrb[0].mxu0
    %v3493 = vadd.f32 %v3348, %v3492
    %3494 = vdwg.mxu0
    %3495 = vmatprep.subr.mxu0 %v214
    %3496 = vmatpush1.msra.mxu0 %v213
    %3497 = vmatprep.subr.mxu0 %v218
    %3498 = vmatpush1.msra.mxu0 %v217
    %3499 = vmatprep.subr.mxu0 %v222
    %3500 = vmatpush1.msra.mxu0 %v221
    %3501 = vmatprep.subr.mxu0 %v226
    %3502 = vmatpush1.msra.mxu0 %v225
    %3503 = vmatprep.subr.mxu0 %v230
    %3504 = vmatpush1.msra.mxu0 %v229
    %3505 = vmatprep.subr.mxu0 %v234
    %3506 = vmatpush1.msra.mxu0 %v233
    %3507 = vmatprep.subr.mxu0 %v238
    %3508 = vmatpush1.msra.mxu0 %v237
    %3509 = vmatprep.subr.mxu0 %v242
    %3510 = vmatpush1.msra.mxu0 %v241
    %3511 = vmatprep.subr.mxu0 %v246
    %3512 = vmatpush1.msra.mxu0 %v245
    %3513 = vmatprep.subr.mxu0 %v250
    %3514 = vmatpush1.msra.mxu0 %v249
    %3515 = vmatprep.subr.mxu0 %v254
    %3516 = vmatpush1.msra.mxu0 %v253
    %3517 = vmatprep.subr.mxu0 %v258
    %3518 = vmatpush1.msra.mxu0 %v257
    %3519 = vmatprep.subr.mxu0 %v262
    %3520 = vmatpush1.msra.mxu0 %v261
    %3521 = vmatprep.subr.mxu0 %v266
    %3522 = vmatpush1.msra.mxu0 %v265
    %3523 = vmatprep.subr.mxu0 %v270
    %3524 = vmatpush1.msra.mxu0 %v269
    %3525 = vmatprep.subr.mxu0 %v274
    %3526 = vmatpush1.msra.mxu0 %v273
    %3527 = vmatprep.subr.mxu0 0.0
    %3528 = vmatpush1.msra.mxu0 0.0
    %3529 = vmatprep.subr.mxu0 0.0
    %3530 = vmatpush1.msra.mxu0 0.0
    %3531 = vmatprep.subr.mxu0 0.0
    %3532 = vmatpush1.msra.mxu0 0.0
    %3533 = vmatprep.subr.mxu0 0.0
    %3534 = vmatpush1.msra.mxu0 0.0
    %3535 = vmatprep.subr.mxu0 0.0
    %3536 = vmatpush1.msra.mxu0 0.0
    %3537 = vmatprep.subr.mxu0 0.0
    %3538 = vmatpush1.msra.mxu0 0.0
    %3539 = vmatprep.subr.mxu0 0.0
    %3540 = vmatpush1.msra.mxu0 0.0
    %3541 = vmatprep.subr.mxu0 0.0
    %3542 = vmatpush1.msra.mxu0 0.0
    %3543 = vmatprep.subr.mxu0 0.0
    %3544 = vmatpush1.msra.mxu0 0.0
    %3545 = vmatprep.subr.mxu0 0.0
    %3546 = vmatpush1.msra.mxu0 0.0
    %3547 = vmatprep.subr.mxu0 0.0
    %3548 = vmatpush1.msra.mxu0 0.0
    %3549 = vmatprep.subr.mxu0 0.0
    %3550 = vmatpush1.msra.mxu0 0.0
    %3551 = vmatprep.subr.mxu0 0.0
    %3552 = vmatpush1.msra.mxu0 0.0
    %3553 = vmatprep.subr.mxu0 0.0
    %3554 = vmatpush1.msra.mxu0 0.0
    %3555 = vmatprep.subr.mxu0 0.0
    %3556 = vmatpush1.msra.mxu0 0.0
    %3557 = vmatprep.subr.mxu0 0.0
    %3558 = vmatpush1.msra.mxu0 0.0
    %3559 = vmatprep.mubr.f32.mxu0 0.0
    %3560 = vmatmul.mubr.f32.gmra.mrb[0].mxu0 %v3422
    %v3561 = vpop.f32.mrb[0].mxu0
    %v3562 = vadd.f32 %v3417, %v3561
    %v3563 = vpop.f32.mrb[0].mxu0
    %v3564 = vadd.f32 %v3419, %v3563
    %3565 = vdwg.mxu0
    %v3566 = vadd.f32 %v3491, %v1049
    %v3567 = vadd.f32 %v3493, %v1053
    %v3568 = vadd.f32 %v3562, %v1057
    %v3569 = vadd.f32 %v3564, %v1061
    %v3570 = vxor.u32 %v3566, 2147483648
    %v3571 = vxor.u32 %v3567, 2147483648
    %v3572 = vxor.u32 %v3568, 2147483648
    %v3573 = vmul.f32 %v3570, 1.442695
    %v3574 = vpow.pop %v3573
    %v3575 = vmul.f32 %v3571, 1.442695
    %v3576 = vpow.pop %v3575
    %v3577 = vmul.f32 %v3572, 1.442695
    %v3578 = vpow.pop %v3577
    %v3579 = vadd.f32 %v3574, 1.0
    %v3580 = vadd.f32 %v3576, 1.0
    %v3581 = vadd.f32 %v3578, 1.0
    %v3582 = vrcp.pop %v3579
    %v3583 = vmul.f32 1.0, %v3582
    %v3584 = vrcp.pop %v3580
    %v3585 = vmul.f32 1.0, %v3584
    %v3586 = vrcp.pop %v3581
    %v3587 = vmul.f32 1.0, %v3586
    %v3588 = vtanh.pop %v3569
    %v3589 = vmul.f32 %v3585, %v3091
    %v3590 = vmul.f32 %v3583, %v3588
    %v3591 = vadd.f32 %v3589, %v3590
    %v3592 = vtanh.pop %v3591
    %v3593 = vmul.f32 %v3587, %v3592
    %3594 = vmatprep.subr.mxu0 %v148
    %3595 = vmatpush1.msra.mxu0 %v147
    %3596 = vmatprep.subr.mxu0 %v152
    %3597 = vmatpush1.msra.mxu0 %v151
    %3598 = vmatprep.subr.mxu0 %v156
    %3599 = vmatpush1.msra.mxu0 %v155
    %3600 = vmatprep.subr.mxu0 %v160
    %3601 = vmatpush1.msra.mxu0 %v159
    %3602 = vmatprep.subr.mxu0 %v164
    %3603 = vmatpush1.msra.mxu0 %v163
    %3604 = vmatprep.subr.mxu0 %v168
    %3605 = vmatpush1.msra.mxu0 %v167
    %3606 = vmatprep.subr.mxu0 %v172
    %3607 = vmatpush1.msra.mxu0 %v171
    %3608 = vmatprep.subr.mxu0 %v176
    %3609 = vmatpush1.msra.mxu0 %v175
    %3610 = vmatprep.subr.mxu0 %v180
    %3611 = vmatpush1.msra.mxu0 %v179
    %3612 = vmatprep.subr.mxu0 %v184
    %3613 = vmatpush1.msra.mxu0 %v183
    %3614 = vmatprep.subr.mxu0 %v188
    %3615 = vmatpush1.msra.mxu0 %v187
    %3616 = vmatprep.subr.mxu0 %v192
    %3617 = vmatpush1.msra.mxu0 %v191
    %3618 = vmatprep.subr.mxu0 %v196
    %3619 = vmatpush1.msra.mxu0 %v195
    %3620 = vmatprep.subr.mxu0 %v200
    %3621 = vmatpush1.msra.mxu0 %v199
    %3622 = vmatprep.subr.mxu0 %v204
    %3623 = vmatpush1.msra.mxu0 %v203
    %3624 = vmatprep.subr.mxu0 %v208
    %3625 = vmatpush1.msra.mxu0 %v207
    %3626 = vmatprep.subr.mxu0 0.0
    %3627 = vmatpush1.msra.mxu0 0.0
    %3628 = vmatprep.subr.mxu0 0.0
    %3629 = vmatpush1.msra.mxu0 0.0
    %3630 = vmatprep.subr.mxu0 0.0
    %3631 = vmatpush1.msra.mxu0 0.0
    %3632 = vmatprep.subr.mxu0 0.0
    %3633 = vmatpush1.msra.mxu0 0.0
    %3634 = vmatprep.subr.mxu0 0.0
    %3635 = vmatpush1.msra.mxu0 0.0
    %3636 = vmatprep.subr.mxu0 0.0
    %3637 = vmatpush1.msra.mxu0 0.0
    %3638 = vmatprep.subr.mxu0 0.0
    %3639 = vmatpush1.msra.mxu0 0.0
    %3640 = vmatprep.subr.mxu0 0.0
    %3641 = vmatpush1.msra.mxu0 0.0
    %3642 = vmatprep.subr.mxu0 0.0
    %3643 = vmatpush1.msra.mxu0 0.0
    %3644 = vmatprep.subr.mxu0 0.0
    %3645 = vmatpush1.msra.mxu0 0.0
    %3646 = vmatprep.subr.mxu0 0.0
    %3647 = vmatpush1.msra.mxu0 0.0
    %3648 = vmatprep.subr.mxu0 0.0
    %3649 = vmatpush1.msra.mxu0 0.0
    %3650 = vmatprep.subr.mxu0 0.0
    %3651 = vmatpush1.msra.mxu0 0.0
    %3652 = vmatprep.subr.mxu0 0.0
    %3653 = vmatpush1.msra.mxu0 0.0
    %3654 = vmatprep.subr.mxu0 0.0
    %3655 = vmatpush1.msra.mxu0 0.0
    %3656 = vmatprep.subr.mxu0 0.0
    %3657 = vmatpush1.msra.mxu0 0.0
    %3658 = vmatprep.mubr.f32.mxu0 0.0
    %3659 = vmatmul.mubr.f32.gmra.mrb[0].mxu0 %v3422
    %v3660 = vpop.f32.mrb[0].mxu0
    %v3661 = vadd.f32 0.0, %v3660
    %v3662 = vpop.f32.mrb[0].mxu0
    %v3663 = vadd.f32 0.0, %v3662
    %3664 = vdwg.mxu0
    %3665 = vmatprep.subr.mxu0 %v150
    %3666 = vmatpush1.msra.mxu0 %v149
    %3667 = vmatprep.subr.mxu0 %v154
    %3668 = vmatpush1.msra.mxu0 %v153
    %3669 = vmatprep.subr.mxu0 %v158
    %3670 = vmatpush1.msra.mxu0 %v157
    %3671 = vmatprep.subr.mxu0 %v162
    %3672 = vmatpush1.msra.mxu0 %v161
    %3673 = vmatprep.subr.mxu0 %v166
    %3674 = vmatpush1.msra.mxu0 %v165
    %3675 = vmatprep.subr.mxu0 %v170
    %3676 = vmatpush1.msra.mxu0 %v169
    %3677 = vmatprep.subr.mxu0 %v174
    %3678 = vmatpush1.msra.mxu0 %v173
    %3679 = vmatprep.subr.mxu0 %v178
    %3680 = vmatpush1.msra.mxu0 %v177
    %3681 = vmatprep.subr.mxu0 %v182
    %3682 = vmatpush1.msra.mxu0 %v181
    %3683 = vmatprep.subr.mxu0 %v186
    %3684 = vmatpush1.msra.mxu0 %v185
    %3685 = vmatprep.subr.mxu0 %v190
    %3686 = vmatpush1.msra.mxu0 %v189
    %3687 = vmatprep.subr.mxu0 %v194
    %3688 = vmatpush1.msra.mxu0 %v193
    %3689 = vmatprep.subr.mxu0 %v198
    %3690 = vmatpush1.msra.mxu0 %v197
    %3691 = vmatprep.subr.mxu0 %v202
    %3692 = vmatpush1.msra.mxu0 %v201
    %3693 = vmatprep.subr.mxu0 %v206
    %3694 = vmatpush1.msra.mxu0 %v205
    %3695 = vmatprep.subr.mxu0 %v210
    %3696 = vmatpush1.msra.mxu0 %v209
    %3697 = vmatprep.subr.mxu0 0.0
    %3698 = vmatpush1.msra.mxu0 0.0
    %3699 = vmatprep.subr.mxu0 0.0
    %3700 = vmatpush1.msra.mxu0 0.0
    %3701 = vmatprep.subr.mxu0 0.0
    %3702 = vmatpush1.msra.mxu0 0.0
    %3703 = vmatprep.subr.mxu0 0.0
    %3704 = vmatpush1.msra.mxu0 0.0
    %3705 = vmatprep.subr.mxu0 0.0
    %3706 = vmatpush1.msra.mxu0 0.0
    %3707 = vmatprep.subr.mxu0 0.0
    %3708 = vmatpush1.msra.mxu0 0.0
    %3709 = vmatprep.subr.mxu0 0.0
    %3710 = vmatpush1.msra.mxu0 0.0
    %3711 = vmatprep.subr.mxu0 0.0
    %3712 = vmatpush1.msra.mxu0 0.0
    %3713 = vmatprep.subr.mxu0 0.0
    %3714 = vmatpush1.msra.mxu0 0.0
    %3715 = vmatprep.subr.mxu0 0.0
    %3716 = vmatpush1.msra.mxu0 0.0
    %3717 = vmatprep.subr.mxu0 0.0
    %3718 = vmatpush1.msra.mxu0 0.0
    %3719 = vmatprep.subr.mxu0 0.0
    %3720 = vmatpush1.msra.mxu0 0.0
    %3721 = vmatprep.subr.mxu0 0.0
    %3722 = vmatpush1.msra.mxu0 0.0
    %3723 = vmatprep.subr.mxu0 0.0
    %3724 = vmatpush1.msra.mxu0 0.0
    %3725 = vmatprep.subr.mxu0 0.0
    %3726 = vmatpush1.msra.mxu0 0.0
    %3727 = vmatprep.subr.mxu0 0.0
    %3728 = vmatpush1.msra.mxu0 0.0
    %3729 = vmatprep.mubr.f32.mxu0 0.0
    %3730 = vmatmul.mubr.f32.gmra.mrb[0].mxu0 %v3422
    %v3731 = vpop.f32.mrb[0].mxu0
    %v3732 = vadd.f32 0.0, %v3731
    %v3733 = vpop.f32.mrb[0].mxu0
    %v3734 = vadd.f32 0.0, %v3733
    %3735 = vdwg.mxu0
    %v3740 = vrot.slane %v3661, 2
    %v3741 = vrot.slane %v3663, 2
    %v3742 = vrot.slane %v3732, 2
    %v3743 = vrot.slane %v3734, 2
    %v3748 = vadd.f32 %v587, %v3740
    %v3749 = vadd.f32 %v588, %v3741
    %v3750 = vadd.f32 %v589, %v3742
    %v3751 = vadd.f32 %v590, %v3743
    %v3752 = vxor.u32 %v3748, 2147483648
    %v3753 = vxor.u32 %v3749, 2147483648
    %v3754 = vxor.u32 %v3750, 2147483648
    %v3755 = vmul.f32 %v3752, 1.442695
    %v3756 = vpow.pop %v3755
    %v3757 = vmul.f32 %v3753, 1.442695
    %v3758 = vpow.pop %v3757
    %v3759 = vmul.f32 %v3754, 1.442695
    %v3760 = vpow.pop %v3759
    %v3761 = vadd.f32 %v3756, 1.0
    %v3762 = vadd.f32 %v3758, 1.0
    %v3763 = vadd.f32 %v3760, 1.0
    %v3764 = vrcp.pop %v3761
    %v3765 = vmul.f32 1.0, %v3764
    %v3766 = vrcp.pop %v3762
    %v3767 = vmul.f32 1.0, %v3766
    %v3768 = vrcp.pop %v3763
    %v3769 = vmul.f32 1.0, %v3768
    %v3770 = vtanh.pop %v3751
    %v3772 = vrot.slane %v3276, 7
    %v3774 = vmul.f32 %v3767, %v3772
    %v3775 = vmul.f32 %v3765, %v3770
    %v3776 = vadd.f32 %v3774, %v3775
    %v3777 = vtanh.pop %v3776
    %v3778 = vmul.f32 %v3769, %v3777
    %3779 = vmatprep.subr.mxu0 %v276
    %3780 = vmatpush1.msra.mxu0 %v275
    %3781 = vmatprep.subr.mxu0 %v280
    %3782 = vmatpush1.msra.mxu0 %v279
    %3783 = vmatprep.subr.mxu0 %v284
    %3784 = vmatpush1.msra.mxu0 %v283
    %3785 = vmatprep.subr.mxu0 %v288
    %3786 = vmatpush1.msra.mxu0 %v287
    %3787 = vmatprep.subr.mxu0 %v292
    %3788 = vmatpush1.msra.mxu0 %v291
    %3789 = vmatprep.subr.mxu0 %v296
    %3790 = vmatpush1.msra.mxu0 %v295
    %3791 = vmatprep.subr.mxu0 %v300
    %3792 = vmatpush1.msra.mxu0 %v299
    %3793 = vmatprep.subr.mxu0 %v304
    %3794 = vmatpush1.msra.mxu0 %v303
    %3795 = vmatprep.subr.mxu0 %v308
    %3796 = vmatpush1.msra.mxu0 %v307
    %3797 = vmatprep.subr.mxu0 %v312
    %3798 = vmatpush1.msra.mxu0 %v311
    %3799 = vmatprep.subr.mxu0 %v316
    %3800 = vmatpush1.msra.mxu0 %v315
    %3801 = vmatprep.subr.mxu0 %v320
    %3802 = vmatpush1.msra.mxu0 %v319
    %3803 = vmatprep.subr.mxu0 %v324
    %3804 = vmatpush1.msra.mxu0 %v323
    %3805 = vmatprep.subr.mxu0 %v328
    %3806 = vmatpush1.msra.mxu0 %v327
    %3807 = vmatprep.subr.mxu0 %v332
    %3808 = vmatpush1.msra.mxu0 %v331
    %3809 = vmatprep.subr.mxu0 %v336
    %3810 = vmatpush1.msra.mxu0 %v335
    %3811 = vmatprep.subr.mxu0 0.0
    %3812 = vmatpush1.msra.mxu0 0.0
    %3813 = vmatprep.subr.mxu0 0.0
    %3814 = vmatpush1.msra.mxu0 0.0
    %3815 = vmatprep.subr.mxu0 0.0
    %3816 = vmatpush1.msra.mxu0 0.0
    %3817 = vmatprep.subr.mxu0 0.0
    %3818 = vmatpush1.msra.mxu0 0.0
    %3819 = vmatprep.subr.mxu0 0.0
    %3820 = vmatpush1.msra.mxu0 0.0
    %3821 = vmatprep.subr.mxu0 0.0
    %3822 = vmatpush1.msra.mxu0 0.0
    %3823 = vmatprep.subr.mxu0 0.0
    %3824 = vmatpush1.msra.mxu0 0.0
    %3825 = vmatprep.subr.mxu0 0.0
    %3826 = vmatpush1.msra.mxu0 0.0
    %3827 = vmatprep.subr.mxu0 0.0
    %3828 = vmatpush1.msra.mxu0 0.0
    %3829 = vmatprep.subr.mxu0 0.0
    %3830 = vmatpush1.msra.mxu0 0.0
    %3831 = vmatprep.subr.mxu0 0.0
    %3832 = vmatpush1.msra.mxu0 0.0
    %3833 = vmatprep.subr.mxu0 0.0
    %3834 = vmatpush1.msra.mxu0 0.0
    %3835 = vmatprep.subr.mxu0 0.0
    %3836 = vmatpush1.msra.mxu0 0.0
    %3837 = vmatprep.subr.mxu0 0.0
    %3838 = vmatpush1.msra.mxu0 0.0
    %3839 = vmatprep.subr.mxu0 0.0
    %3840 = vmatpush1.msra.mxu0 0.0
    %3841 = vmatprep.subr.mxu0 0.0
    %3842 = vmatpush1.msra.mxu0 0.0
    %3843 = vmatprep.mubr.f32.mxu0 0.0
    %3844 = vmatmul.mubr.f32.gmra.mrb[0].mxu0 %v3593
    %v3845 = vpop.f32.mrb[0].mxu0
    %v3846 = vadd.f32 0.0, %v3845
    %v3847 = vpop.f32.mrb[0].mxu0
    %v3848 = vadd.f32 0.0, %v3847
    %3849 = vdwg.mxu0
    %3850 = vmatprep.subr.mxu0 %v278
    %3851 = vmatpush1.msra.mxu0 %v277
    %3852 = vmatprep.subr.mxu0 %v282
    %3853 = vmatpush1.msra.mxu0 %v281
    %3854 = vmatprep.subr.mxu0 %v286
    %3855 = vmatpush1.msra.mxu0 %v285
    %3856 = vmatprep.subr.mxu0 %v290
    %3857 = vmatpush1.msra.mxu0 %v289
    %3858 = vmatprep.subr.mxu0 %v294
    %3859 = vmatpush1.msra.mxu0 %v293
    %3860 = vmatprep.subr.mxu0 %v298
    %3861 = vmatpush1.msra.mxu0 %v297
    %3862 = vmatprep.subr.mxu0 %v302
    %3863 = vmatpush1.msra.mxu0 %v301
    %3864 = vmatprep.subr.mxu0 %v306
    %3865 = vmatpush1.msra.mxu0 %v305
    %3866 = vmatprep.subr.mxu0 %v310
    %3867 = vmatpush1.msra.mxu0 %v309
    %3868 = vmatprep.subr.mxu0 %v314
    %3869 = vmatpush1.msra.mxu0 %v313
    %3870 = vmatprep.subr.mxu0 %v318
    %3871 = vmatpush1.msra.mxu0 %v317
    %3872 = vmatprep.subr.mxu0 %v322
    %3873 = vmatpush1.msra.mxu0 %v321
    %3874 = vmatprep.subr.mxu0 %v326
    %3875 = vmatpush1.msra.mxu0 %v325
    %3876 = vmatprep.subr.mxu0 %v330
    %3877 = vmatpush1.msra.mxu0 %v329
    %3878 = vmatprep.subr.mxu0 %v334
    %3879 = vmatpush1.msra.mxu0 %v333
    %3880 = vmatprep.subr.mxu0 %v338
    %3881 = vmatpush1.msra.mxu0 %v337
    %3882 = vmatprep.subr.mxu0 0.0
    %3883 = vmatpush1.msra.mxu0 0.0
    %3884 = vmatprep.subr.mxu0 0.0
    %3885 = vmatpush1.msra.mxu0 0.0
    %3886 = vmatprep.subr.mxu0 0.0
    %3887 = vmatpush1.msra.mxu0 0.0
    %3888 = vmatprep.subr.mxu0 0.0
    %3889 = vmatpush1.msra.mxu0 0.0
    %3890 = vmatprep.subr.mxu0 0.0
    %3891 = vmatpush1.msra.mxu0 0.0
    %3892 = vmatprep.subr.mxu0 0.0
    %3893 = vmatpush1.msra.mxu0 0.0
    %3894 = vmatprep.subr.mxu0 0.0
    %3895 = vmatpush1.msra.mxu0 0.0
    %3896 = vmatprep.subr.mxu0 0.0
    %3897 = vmatpush1.msra.mxu0 0.0
    %3898 = vmatprep.subr.mxu0 0.0
    %3899 = vmatpush1.msra.mxu0 0.0
    %3900 = vmatprep.subr.mxu0 0.0
    %3901 = vmatpush1.msra.mxu0 0.0
    %3902 = vmatprep.subr.mxu0 0.0
    %3903 = vmatpush1.msra.mxu0 0.0
    %3904 = vmatprep.subr.mxu0 0.0
    %3905 = vmatpush1.msra.mxu0 0.0
    %3906 = vmatprep.subr.mxu0 0.0
    %3907 = vmatpush1.msra.mxu0 0.0
    %3908 = vmatprep.subr.mxu0 0.0
    %3909 = vmatpush1.msra.mxu0 0.0
    %3910 = vmatprep.subr.mxu0 0.0
    %3911 = vmatpush1.msra.mxu0 0.0
    %3912 = vmatprep.subr.mxu0 0.0
    %3913 = vmatpush1.msra.mxu0 0.0
    %3914 = vmatprep.mubr.f32.mxu0 0.0
    %3915 = vmatmul.mubr.f32.gmra.mrb[0].mxu0 %v3593
    %v3916 = vpop.f32.mrb[0].mxu0
    %v3917 = vadd.f32 0.0, %v3916
    %v3918 = vpop.f32.mrb[0].mxu0
    %v3919 = vadd.f32 0.0, %v3918
    %3920 = vdwg.mxu0
    %v3922 = vrot.slane %v3778, 6
    %3924 = vmatprep.subr.mxu0 %v212
    %3925 = vmatpush1.msra.mxu0 %v211
    %3926 = vmatprep.subr.mxu0 %v216
    %3927 = vmatpush1.msra.mxu0 %v215
    %3928 = vmatprep.subr.mxu0 %v220
    %3929 = vmatpush1.msra.mxu0 %v219
    %3930 = vmatprep.subr.mxu0 %v224
    %3931 = vmatpush1.msra.mxu0 %v223
    %3932 = vmatprep.subr.mxu0 %v228
    %3933 = vmatpush1.msra.mxu0 %v227
    %3934 = vmatprep.subr.mxu0 %v232
    %3935 = vmatpush1.msra.mxu0 %v231
    %3936 = vmatprep.subr.mxu0 %v236
    %3937 = vmatpush1.msra.mxu0 %v235
    %3938 = vmatprep.subr.mxu0 %v240
    %3939 = vmatpush1.msra.mxu0 %v239
    %3940 = vmatprep.subr.mxu0 %v244
    %3941 = vmatpush1.msra.mxu0 %v243
    %3942 = vmatprep.subr.mxu0 %v248
    %3943 = vmatpush1.msra.mxu0 %v247
    %3944 = vmatprep.subr.mxu0 %v252
    %3945 = vmatpush1.msra.mxu0 %v251
    %3946 = vmatprep.subr.mxu0 %v256
    %3947 = vmatpush1.msra.mxu0 %v255
    %3948 = vmatprep.subr.mxu0 %v260
    %3949 = vmatpush1.msra.mxu0 %v259
    %3950 = vmatprep.subr.mxu0 %v264
    %3951 = vmatpush1.msra.mxu0 %v263
    %3952 = vmatprep.subr.mxu0 %v268
    %3953 = vmatpush1.msra.mxu0 %v267
    %3954 = vmatprep.subr.mxu0 %v272
    %3955 = vmatpush1.msra.mxu0 %v271
    %3956 = vmatprep.subr.mxu0 0.0
    %3957 = vmatpush1.msra.mxu0 0.0
    %3958 = vmatprep.subr.mxu0 0.0
    %3959 = vmatpush1.msra.mxu0 0.0
    %3960 = vmatprep.subr.mxu0 0.0
    %3961 = vmatpush1.msra.mxu0 0.0
    %3962 = vmatprep.subr.mxu0 0.0
    %3963 = vmatpush1.msra.mxu0 0.0
    %3964 = vmatprep.subr.mxu0 0.0
    %3965 = vmatpush1.msra.mxu0 0.0
    %3966 = vmatprep.subr.mxu0 0.0
    %3967 = vmatpush1.msra.mxu0 0.0
    %3968 = vmatprep.subr.mxu0 0.0
    %3969 = vmatpush1.msra.mxu0 0.0
    %3970 = vmatprep.subr.mxu0 0.0
    %3971 = vmatpush1.msra.mxu0 0.0
    %3972 = vmatprep.subr.mxu0 0.0
    %3973 = vmatpush1.msra.mxu0 0.0
    %3974 = vmatprep.subr.mxu0 0.0
    %3975 = vmatpush1.msra.mxu0 0.0
    %3976 = vmatprep.subr.mxu0 0.0
    %3977 = vmatpush1.msra.mxu0 0.0
    %3978 = vmatprep.subr.mxu0 0.0
    %3979 = vmatpush1.msra.mxu0 0.0
    %3980 = vmatprep.subr.mxu0 0.0
    %3981 = vmatpush1.msra.mxu0 0.0
    %3982 = vmatprep.subr.mxu0 0.0
    %3983 = vmatpush1.msra.mxu0 0.0
    %3984 = vmatprep.subr.mxu0 0.0
    %3985 = vmatpush1.msra.mxu0 0.0
    %3986 = vmatprep.subr.mxu0 0.0
    %3987 = vmatpush1.msra.mxu0 0.0
    %3988 = vmatprep.mubr.f32.mxu0 0.0
    %3989 = vmatmul.mubr.f32.gmra.mrb[0].mxu0 %v3922
    %v3990 = vpop.f32.mrb[0].mxu0
    %v3991 = vadd.f32 %v3846, %v3990
    %v3992 = vpop.f32.mrb[0].mxu0
    %v3993 = vadd.f32 %v3848, %v3992
    %3994 = vdwg.mxu0
    %3995 = vmatprep.subr.mxu0 %v214
    %3996 = vmatpush1.msra.mxu0 %v213
    %3997 = vmatprep.subr.mxu0 %v218
    %3998 = vmatpush1.msra.mxu0 %v217
    %3999 = vmatprep.subr.mxu0 %v222
    %4000 = vmatpush1.msra.mxu0 %v221
    %4001 = vmatprep.subr.mxu0 %v226
    %4002 = vmatpush1.msra.mxu0 %v225
    %4003 = vmatprep.subr.mxu0 %v230
    %4004 = vmatpush1.msra.mxu0 %v229
    %4005 = vmatprep.subr.mxu0 %v234
    %4006 = vmatpush1.msra.mxu0 %v233
    %4007 = vmatprep.subr.mxu0 %v238
    %4008 = vmatpush1.msra.mxu0 %v237
    %4009 = vmatprep.subr.mxu0 %v242
    %4010 = vmatpush1.msra.mxu0 %v241
    %4011 = vmatprep.subr.mxu0 %v246
    %4012 = vmatpush1.msra.mxu0 %v245
    %4013 = vmatprep.subr.mxu0 %v250
    %4014 = vmatpush1.msra.mxu0 %v249
    %4015 = vmatprep.subr.mxu0 %v254
    %4016 = vmatpush1.msra.mxu0 %v253
    %4017 = vmatprep.subr.mxu0 %v258
    %4018 = vmatpush1.msra.mxu0 %v257
    %4019 = vmatprep.subr.mxu0 %v262
    %4020 = vmatpush1.msra.mxu0 %v261
    %4021 = vmatprep.subr.mxu0 %v266
    %4022 = vmatpush1.msra.mxu0 %v265
    %4023 = vmatprep.subr.mxu0 %v270
    %4024 = vmatpush1.msra.mxu0 %v269
    %4025 = vmatprep.subr.mxu0 %v274
    %4026 = vmatpush1.msra.mxu0 %v273
    %4027 = vmatprep.subr.mxu0 0.0
    %4028 = vmatpush1.msra.mxu0 0.0
    %4029 = vmatprep.subr.mxu0 0.0
    %4030 = vmatpush1.msra.mxu0 0.0
    %4031 = vmatprep.subr.mxu0 0.0
    %4032 = vmatpush1.msra.mxu0 0.0
    %4033 = vmatprep.subr.mxu0 0.0
    %4034 = vmatpush1.msra.mxu0 0.0
    %4035 = vmatprep.subr.mxu0 0.0
    %4036 = vmatpush1.msra.mxu0 0.0
    %4037 = vmatprep.subr.mxu0 0.0
    %4038 = vmatpush1.msra.mxu0 0.0
    %4039 = vmatprep.subr.mxu0 0.0
    %4040 = vmatpush1.msra.mxu0 0.0
    %4041 = vmatprep.subr.mxu0 0.0
    %4042 = vmatpush1.msra.mxu0 0.0
    %4043 = vmatprep.subr.mxu0 0.0
    %4044 = vmatpush1.msra.mxu0 0.0
    %4045 = vmatprep.subr.mxu0 0.0
    %4046 = vmatpush1.msra.mxu0 0.0
    %4047 = vmatprep.subr.mxu0 0.0
    %4048 = vmatpush1.msra.mxu0 0.0
    %4049 = vmatprep.subr.mxu0 0.0
    %4050 = vmatpush1.msra.mxu0 0.0
    %4051 = vmatprep.subr.mxu0 0.0
    %4052 = vmatpush1.msra.mxu0 0.0
    %4053 = vmatprep.subr.mxu0 0.0
    %4054 = vmatpush1.msra.mxu0 0.0
    %4055 = vmatprep.subr.mxu0 0.0
    %4056 = vmatpush1.msra.mxu0 0.0
    %4057 = vmatprep.subr.mxu0 0.0
    %4058 = vmatpush1.msra.mxu0 0.0
    %4059 = vmatprep.mubr.f32.mxu0 0.0
    %4060 = vmatmul.mubr.f32.gmra.mrb[0].mxu0 %v3922
    %v4061 = vpop.f32.mrb[0].mxu0
    %v4062 = vadd.f32 %v3917, %v4061
    %v4063 = vpop.f32.mrb[0].mxu0
    %v4064 = vadd.f32 %v3919, %v4063
    %4065 = vdwg.mxu0
    %v4066 = vadd.f32 %v3991, %v1049
    %v4067 = vadd.f32 %v3993, %v1053
    %v4068 = vadd.f32 %v4062, %v1057
    %v4069 = vadd.f32 %v4064, %v1061
    %v4070 = vxor.u32 %v4066, 2147483648
    %v4071 = vxor.u32 %v4067, 2147483648
    %v4072 = vxor.u32 %v4068, 2147483648
    %v4073 = vmul.f32 %v4070, 1.442695
    %v4074 = vpow.pop %v4073
    %v4075 = vmul.f32 %v4071, 1.442695
    %v4076 = vpow.pop %v4075
    %v4077 = vmul.f32 %v4072, 1.442695
    %v4078 = vpow.pop %v4077
    %v4079 = vadd.f32 %v4074, 1.0
    %v4080 = vadd.f32 %v4076, 1.0
    %v4081 = vadd.f32 %v4078, 1.0
    %v4082 = vrcp.pop %v4079
    %v4083 = vmul.f32 1.0, %v4082
    %v4084 = vrcp.pop %v4080
    %v4085 = vmul.f32 1.0, %v4084
    %v4086 = vrcp.pop %v4081
    %v4087 = vmul.f32 1.0, %v4086
    %v4088 = vtanh.pop %v4069
    %v4089 = vmul.f32 %v4085, %v3591
    %v4090 = vmul.f32 %v4083, %v4088
    %v4091 = vadd.f32 %v4089, %v4090
    %v4092 = vtanh.pop %v4091
    %v4093 = vmul.f32 %v4087, %v4092
    %4094 = vmatprep.subr.mxu0 %v148
    %4095 = vmatpush1.msra.mxu0 %v147
    %4096 = vmatprep.subr.mxu0 %v152
    %4097 = vmatpush1.msra.mxu0 %v151
    %4098 = vmatprep.subr.mxu0 %v156
    %4099 = vmatpush1.msra.mxu0 %v155
    %4100 = vmatprep.subr.mxu0 %v160
    %4101 = vmatpush1.msra.mxu0 %v159
    %4102 = vmatprep.subr.mxu0 %v164
    %4103 = vmatpush1.msra.mxu0 %v163
    %4104 = vmatprep.subr.mxu0 %v168
    %4105 = vmatpush1.msra.mxu0 %v167
    %4106 = vmatprep.subr.mxu0 %v172
    %4107 = vmatpush1.msra.mxu0 %v171
    %4108 = vmatprep.subr.mxu0 %v176
    %4109 = vmatpush1.msra.mxu0 %v175
    %4110 = vmatprep.subr.mxu0 %v180
    %4111 = vmatpush1.msra.mxu0 %v179
    %4112 = vmatprep.subr.mxu0 %v184
    %4113 = vmatpush1.msra.mxu0 %v183
    %4114 = vmatprep.subr.mxu0 %v188
    %4115 = vmatpush1.msra.mxu0 %v187
    %4116 = vmatprep.subr.mxu0 %v192
    %4117 = vmatpush1.msra.mxu0 %v191
    %4118 = vmatprep.subr.mxu0 %v196
    %4119 = vmatpush1.msra.mxu0 %v195
    %4120 = vmatprep.subr.mxu0 %v200
    %4121 = vmatpush1.msra.mxu0 %v199
    %4122 = vmatprep.subr.mxu0 %v204
    %4123 = vmatpush1.msra.mxu0 %v203
    %4124 = vmatprep.subr.mxu0 %v208
    %4125 = vmatpush1.msra.mxu0 %v207
    %4126 = vmatprep.subr.mxu0 0.0
    %4127 = vmatpush1.msra.mxu0 0.0
    %4128 = vmatprep.subr.mxu0 0.0
    %4129 = vmatpush1.msra.mxu0 0.0
    %4130 = vmatprep.subr.mxu0 0.0
    %4131 = vmatpush1.msra.mxu0 0.0
    %4132 = vmatprep.subr.mxu0 0.0
    %4133 = vmatpush1.msra.mxu0 0.0
    %4134 = vmatprep.subr.mxu0 0.0
    %4135 = vmatpush1.msra.mxu0 0.0
    %4136 = vmatprep.subr.mxu0 0.0
    %4137 = vmatpush1.msra.mxu0 0.0
    %4138 = vmatprep.subr.mxu0 0.0
    %4139 = vmatpush1.msra.mxu0 0.0
    %4140 = vmatprep.subr.mxu0 0.0
    %4141 = vmatpush1.msra.mxu0 0.0
    %4142 = vmatprep.subr.mxu0 0.0
    %4143 = vmatpush1.msra.mxu0 0.0
    %4144 = vmatprep.subr.mxu0 0.0
    %4145 = vmatpush1.msra.mxu0 0.0
    %4146 = vmatprep.subr.mxu0 0.0
    %4147 = vmatpush1.msra.mxu0 0.0
    %4148 = vmatprep.subr.mxu0 0.0
    %4149 = vmatpush1.msra.mxu0 0.0
    %4150 = vmatprep.subr.mxu0 0.0
    %4151 = vmatpush1.msra.mxu0 0.0
    %4152 = vmatprep.subr.mxu0 0.0
    %4153 = vmatpush1.msra.mxu0 0.0
    %4154 = vmatprep.subr.mxu0 0.0
    %4155 = vmatpush1.msra.mxu0 0.0
    %4156 = vmatprep.subr.mxu0 0.0
    %4157 = vmatpush1.msra.mxu0 0.0
    %4158 = vmatprep.mubr.f32.mxu0 0.0
    %4159 = vmatmul.mubr.f32.gmra.mrb[0].mxu0 %v3922
    %v4160 = vpop.f32.mrb[0].mxu0
    %v4161 = vadd.f32 0.0, %v4160
    %v4162 = vpop.f32.mrb[0].mxu0
    %v4163 = vadd.f32 0.0, %v4162
    %4164 = vdwg.mxu0
    %4165 = vmatprep.subr.mxu0 %v150
    %4166 = vmatpush1.msra.mxu0 %v149
    %4167 = vmatprep.subr.mxu0 %v154
    %4168 = vmatpush1.msra.mxu0 %v153
    %4169 = vmatprep.subr.mxu0 %v158
    %4170 = vmatpush1.msra.mxu0 %v157
    %4171 = vmatprep.subr.mxu0 %v162
    %4172 = vmatpush1.msra.mxu0 %v161
    %4173 = vmatprep.subr.mxu0 %v166
    %4174 = vmatpush1.msra.mxu0 %v165
    %4175 = vmatprep.subr.mxu0 %v170
    %4176 = vmatpush1.msra.mxu0 %v169
    %4177 = vmatprep.subr.mxu0 %v174
    %4178 = vmatpush1.msra.mxu0 %v173
    %4179 = vmatprep.subr.mxu0 %v178
    %4180 = vmatpush1.msra.mxu0 %v177
    %4181 = vmatprep.subr.mxu0 %v182
    %4182 = vmatpush1.msra.mxu0 %v181
    %4183 = vmatprep.subr.mxu0 %v186
    %4184 = vmatpush1.msra.mxu0 %v185
    %4185 = vmatprep.subr.mxu0 %v190
    %4186 = vmatpush1.msra.mxu0 %v189
    %4187 = vmatprep.subr.mxu0 %v194
    %4188 = vmatpush1.msra.mxu0 %v193
    %4189 = vmatprep.subr.mxu0 %v198
    %4190 = vmatpush1.msra.mxu0 %v197
    %4191 = vmatprep.subr.mxu0 %v202
    %4192 = vmatpush1.msra.mxu0 %v201
    %4193 = vmatprep.subr.mxu0 %v206
    %4194 = vmatpush1.msra.mxu0 %v205
    %4195 = vmatprep.subr.mxu0 %v210
    %4196 = vmatpush1.msra.mxu0 %v209
    %4197 = vmatprep.subr.mxu0 0.0
    %4198 = vmatpush1.msra.mxu0 0.0
    %4199 = vmatprep.subr.mxu0 0.0
    %4200 = vmatpush1.msra.mxu0 0.0
    %4201 = vmatprep.subr.mxu0 0.0
    %4202 = vmatpush1.msra.mxu0 0.0
    %4203 = vmatprep.subr.mxu0 0.0
    %4204 = vmatpush1.msra.mxu0 0.0
    %4205 = vmatprep.subr.mxu0 0.0
    %4206 = vmatpush1.msra.mxu0 0.0
    %4207 = vmatprep.subr.mxu0 0.0
    %4208 = vmatpush1.msra.mxu0 0.0
    %4209 = vmatprep.subr.mxu0 0.0
    %4210 = vmatpush1.msra.mxu0 0.0
    %4211 = vmatprep.subr.mxu0 0.0
    %4212 = vmatpush1.msra.mxu0 0.0
    %4213 = vmatprep.subr.mxu0 0.0
    %4214 = vmatpush1.msra.mxu0 0.0
    %4215 = vmatprep.subr.mxu0 0.0
    %4216 = vmatpush1.msra.mxu0 0.0
    %4217 = vmatprep.subr.mxu0 0.0
    %4218 = vmatpush1.msra.mxu0 0.0
    %4219 = vmatprep.subr.mxu0 0.0
    %4220 = vmatpush1.msra.mxu0 0.0
    %4221 = vmatprep.subr.mxu0 0.0
    %4222 = vmatpush1.msra.mxu0 0.0
    %4223 = vmatprep.subr.mxu0 0.0
    %4224 = vmatpush1.msra.mxu0 0.0
    %4225 = vmatprep.subr.mxu0 0.0
    %4226 = vmatpush1.msra.mxu0 0.0
    %4227 = vmatprep.subr.mxu0 0.0
    %4228 = vmatpush1.msra.mxu0 0.0
    %4229 = vmatprep.mubr.f32.mxu0 0.0
    %4230 = vmatmul.mubr.f32.gmra.mrb[0].mxu0 %v3922
    %v4231 = vpop.f32.mrb[0].mxu0
    %v4232 = vadd.f32 0.0, %v4231
    %v4233 = vpop.f32.mrb[0].mxu0
    %v4234 = vadd.f32 0.0, %v4233
    %4235 = vdwg.mxu0
    %v4240 = vrot.slane %v4161, 1
    %v4241 = vrot.slane %v4163, 1
    %v4242 = vrot.slane %v4232, 1
    %v4243 = vrot.slane %v4234, 1
    %v4248 = vadd.f32 %v587, %v4240
    %v4249 = vadd.f32 %v588, %v4241
    %v4250 = vadd.f32 %v589, %v4242
    %v4251 = vadd.f32 %v590, %v4243
    %v4252 = vxor.u32 %v4248, 2147483648
    %v4253 = vxor.u32 %v4249, 2147483648
    %v4254 = vxor.u32 %v4250, 2147483648
    %v4255 = vmul.f32 %v4252, 1.442695
    %v4256 = vpow.pop %v4255
    %v4257 = vmul.f32 %v4253, 1.442695
    %v4258 = vpow.pop %v4257
    %v4259 = vmul.f32 %v4254, 1.442695
    %v4260 = vpow.pop %v4259
    %v4261 = vadd.f32 %v4256, 1.0
    %v4262 = vadd.f32 %v4258, 1.0
    %v4263 = vadd.f32 %v4260, 1.0
    %v4264 = vrcp.pop %v4261
    %v4265 = vmul.f32 1.0, %v4264
    %v4266 = vrcp.pop %v4262
    %v4267 = vmul.f32 1.0, %v4266
    %v4268 = vrcp.pop %v4263
    %v4269 = vmul.f32 1.0, %v4268
    %v4270 = vtanh.pop %v4251
    %v4272 = vrot.slane %v3776, 7
    %v4274 = vmul.f32 %v4267, %v4272
    %v4275 = vmul.f32 %v4265, %v4270
    %v4276 = vadd.f32 %v4274, %v4275
    %v4277 = vtanh.pop %v4276
    %v4278 = vmul.f32 %v4269, %v4277
    %4279 = vmatprep.subr.mxu0 %v276
    %4280 = vmatpush1.msra.mxu0 %v275
    %4281 = vmatprep.subr.mxu0 %v280
    %4282 = vmatpush1.msra.mxu0 %v279
    %4283 = vmatprep.subr.mxu0 %v284
    %4284 = vmatpush1.msra.mxu0 %v283
    %4285 = vmatprep.subr.mxu0 %v288
    %4286 = vmatpush1.msra.mxu0 %v287
    %4287 = vmatprep.subr.mxu0 %v292
    %4288 = vmatpush1.msra.mxu0 %v291
    %4289 = vmatprep.subr.mxu0 %v296
    %4290 = vmatpush1.msra.mxu0 %v295
    %4291 = vmatprep.subr.mxu0 %v300
    %4292 = vmatpush1.msra.mxu0 %v299
    %4293 = vmatprep.subr.mxu0 %v304
    %4294 = vmatpush1.msra.mxu0 %v303
    %4295 = vmatprep.subr.mxu0 %v308
    %4296 = vmatpush1.msra.mxu0 %v307
    %4297 = vmatprep.subr.mxu0 %v312
    %4298 = vmatpush1.msra.mxu0 %v311
    %4299 = vmatprep.subr.mxu0 %v316
    %4300 = vmatpush1.msra.mxu0 %v315
    %4301 = vmatprep.subr.mxu0 %v320
    %4302 = vmatpush1.msra.mxu0 %v319
    %4303 = vmatprep.subr.mxu0 %v324
    %4304 = vmatpush1.msra.mxu0 %v323
    %4305 = vmatprep.subr.mxu0 %v328
    %4306 = vmatpush1.msra.mxu0 %v327
    %4307 = vmatprep.subr.mxu0 %v332
    %4308 = vmatpush1.msra.mxu0 %v331
    %4309 = vmatprep.subr.mxu0 %v336
    %4310 = vmatpush1.msra.mxu0 %v335
    %4311 = vmatprep.subr.mxu0 0.0
    %4312 = vmatpush1.msra.mxu0 0.0
    %4313 = vmatprep.subr.mxu0 0.0
    %4314 = vmatpush1.msra.mxu0 0.0
    %4315 = vmatprep.subr.mxu0 0.0
    %4316 = vmatpush1.msra.mxu0 0.0
    %4317 = vmatprep.subr.mxu0 0.0
    %4318 = vmatpush1.msra.mxu0 0.0
    %4319 = vmatprep.subr.mxu0 0.0
    %4320 = vmatpush1.msra.mxu0 0.0
    %4321 = vmatprep.subr.mxu0 0.0
    %4322 = vmatpush1.msra.mxu0 0.0
    %4323 = vmatprep.subr.mxu0 0.0
    %4324 = vmatpush1.msra.mxu0 0.0
    %4325 = vmatprep.subr.mxu0 0.0
    %4326 = vmatpush1.msra.mxu0 0.0
    %4327 = vmatprep.subr.mxu0 0.0
    %4328 = vmatpush1.msra.mxu0 0.0
    %4329 = vmatprep.subr.mxu0 0.0
    %4330 = vmatpush1.msra.mxu0 0.0
    %4331 = vmatprep.subr.mxu0 0.0
    %4332 = vmatpush1.msra.mxu0 0.0
    %4333 = vmatprep.subr.mxu0 0.0
    %4334 = vmatpush1.msra.mxu0 0.0
    %4335 = vmatprep.subr.mxu0 0.0
    %4336 = vmatpush1.msra.mxu0 0.0
    %4337 = vmatprep.subr.mxu0 0.0
    %4338 = vmatpush1.msra.mxu0 0.0
    %4339 = vmatprep.subr.mxu0 0.0
    %4340 = vmatpush1.msra.mxu0 0.0
    %4341 = vmatprep.subr.mxu0 0.0
    %4342 = vmatpush1.msra.mxu0 0.0
    %4343 = vmatprep.mubr.f32.mxu0 0.0
    %4344 = vmatmul.mubr.f32.gmra.mrb[0].mxu0 %v4093
    %v4345 = vpop.f32.mrb[0].mxu0
    %v4346 = vadd.f32 0.0, %v4345
    %v4347 = vpop.f32.mrb[0].mxu0
    %v4348 = vadd.f32 0.0, %v4347
    %4349 = vdwg.mxu0
    %4350 = vmatprep.subr.mxu0 %v278
    %4351 = vmatpush1.msra.mxu0 %v277
    %4352 = vmatprep.subr.mxu0 %v282
    %4353 = vmatpush1.msra.mxu0 %v281
    %4354 = vmatprep.subr.mxu0 %v286
    %4355 = vmatpush1.msra.mxu0 %v285
    %4356 = vmatprep.subr.mxu0 %v290
    %4357 = vmatpush1.msra.mxu0 %v289
    %4358 = vmatprep.subr.mxu0 %v294
    %4359 = vmatpush1.msra.mxu0 %v293
    %4360 = vmatprep.subr.mxu0 %v298
    %4361 = vmatpush1.msra.mxu0 %v297
    %4362 = vmatprep.subr.mxu0 %v302
    %4363 = vmatpush1.msra.mxu0 %v301
    %4364 = vmatprep.subr.mxu0 %v306
    %4365 = vmatpush1.msra.mxu0 %v305
    %4366 = vmatprep.subr.mxu0 %v310
    %4367 = vmatpush1.msra.mxu0 %v309
    %4368 = vmatprep.subr.mxu0 %v314
    %4369 = vmatpush1.msra.mxu0 %v313
    %4370 = vmatprep.subr.mxu0 %v318
    %4371 = vmatpush1.msra.mxu0 %v317
    %4372 = vmatprep.subr.mxu0 %v322
    %4373 = vmatpush1.msra.mxu0 %v321
    %4374 = vmatprep.subr.mxu0 %v326
    %4375 = vmatpush1.msra.mxu0 %v325
    %4376 = vmatprep.subr.mxu0 %v330
    %4377 = vmatpush1.msra.mxu0 %v329
    %4378 = vmatprep.subr.mxu0 %v334
    %4379 = vmatpush1.msra.mxu0 %v333
    %4380 = vmatprep.subr.mxu0 %v338
    %4381 = vmatpush1.msra.mxu0 %v337
    %4382 = vmatprep.subr.mxu0 0.0
    %4383 = vmatpush1.msra.mxu0 0.0
    %4384 = vmatprep.subr.mxu0 0.0
    %4385 = vmatpush1.msra.mxu0 0.0
    %4386 = vmatprep.subr.mxu0 0.0
    %4387 = vmatpush1.msra.mxu0 0.0
    %4388 = vmatprep.subr.mxu0 0.0
    %4389 = vmatpush1.msra.mxu0 0.0
    %4390 = vmatprep.subr.mxu0 0.0
    %4391 = vmatpush1.msra.mxu0 0.0
    %4392 = vmatprep.subr.mxu0 0.0
    %4393 = vmatpush1.msra.mxu0 0.0
    %4394 = vmatprep.subr.mxu0 0.0
    %4395 = vmatpush1.msra.mxu0 0.0
    %4396 = vmatprep.subr.mxu0 0.0
    %4397 = vmatpush1.msra.mxu0 0.0
    %4398 = vmatprep.subr.mxu0 0.0
    %4399 = vmatpush1.msra.mxu0 0.0
    %4400 = vmatprep.subr.mxu0 0.0
    %4401 = vmatpush1.msra.mxu0 0.0
    %4402 = vmatprep.subr.mxu0 0.0
    %4403 = vmatpush1.msra.mxu0 0.0
    %4404 = vmatprep.subr.mxu0 0.0
    %4405 = vmatpush1.msra.mxu0 0.0
    %4406 = vmatprep.subr.mxu0 0.0
    %4407 = vmatpush1.msra.mxu0 0.0
    %4408 = vmatprep.subr.mxu0 0.0
    %4409 = vmatpush1.msra.mxu0 0.0
    %4410 = vmatprep.subr.mxu0 0.0
    %4411 = vmatpush1.msra.mxu0 0.0
    %4412 = vmatprep.subr.mxu0 0.0
    %4413 = vmatpush1.msra.mxu0 0.0
    %4414 = vmatprep.mubr.f32.mxu0 0.0
    %4415 = vmatmul.mubr.f32.gmra.mrb[0].mxu0 %v4093
    %v4416 = vpop.f32.mrb[0].mxu0
    %v4417 = vadd.f32 0.0, %v4416
    %v4418 = vpop.f32.mrb[0].mxu0
    %v4419 = vadd.f32 0.0, %v4418
    %4420 = vdwg.mxu0
    %v4422 = vrot.slane %v4278, 7
    %4424 = vmatprep.subr.mxu0 %v212
    %4425 = vmatpush1.msra.mxu0 %v211
    %4426 = vmatprep.subr.mxu0 %v216
    %4427 = vmatpush1.msra.mxu0 %v215
    %4428 = vmatprep.subr.mxu0 %v220
    %4429 = vmatpush1.msra.mxu0 %v219
    %4430 = vmatprep.subr.mxu0 %v224
    %4431 = vmatpush1.msra.mxu0 %v223
    %4432 = vmatprep.subr.mxu0 %v228
    %4433 = vmatpush1.msra.mxu0 %v227
    %4434 = vmatprep.subr.mxu0 %v232
    %4435 = vmatpush1.msra.mxu0 %v231
    %4436 = vmatprep.subr.mxu0 %v236
    %4437 = vmatpush1.msra.mxu0 %v235
    %4438 = vmatprep.subr.mxu0 %v240
    %4439 = vmatpush1.msra.mxu0 %v239
    %4440 = vmatprep.subr.mxu0 %v244
    %4441 = vmatpush1.msra.mxu0 %v243
    %4442 = vmatprep.subr.mxu0 %v248
    %4443 = vmatpush1.msra.mxu0 %v247
    %4444 = vmatprep.subr.mxu0 %v252
    %4445 = vmatpush1.msra.mxu0 %v251
    %4446 = vmatprep.subr.mxu0 %v256
    %4447 = vmatpush1.msra.mxu0 %v255
    %4448 = vmatprep.subr.mxu0 %v260
    %4449 = vmatpush1.msra.mxu0 %v259
    %4450 = vmatprep.subr.mxu0 %v264
    %4451 = vmatpush1.msra.mxu0 %v263
    %4452 = vmatprep.subr.mxu0 %v268
    %4453 = vmatpush1.msra.mxu0 %v267
    %4454 = vmatprep.subr.mxu0 %v272
    %4455 = vmatpush1.msra.mxu0 %v271
    %4456 = vmatprep.subr.mxu0 0.0
    %4457 = vmatpush1.msra.mxu0 0.0
    %4458 = vmatprep.subr.mxu0 0.0
    %4459 = vmatpush1.msra.mxu0 0.0
    %4460 = vmatprep.subr.mxu0 0.0
    %4461 = vmatpush1.msra.mxu0 0.0
    %4462 = vmatprep.subr.mxu0 0.0
    %4463 = vmatpush1.msra.mxu0 0.0
    %4464 = vmatprep.subr.mxu0 0.0
    %4465 = vmatpush1.msra.mxu0 0.0
    %4466 = vmatprep.subr.mxu0 0.0
    %4467 = vmatpush1.msra.mxu0 0.0
    %4468 = vmatprep.subr.mxu0 0.0
    %4469 = vmatpush1.msra.mxu0 0.0
    %4470 = vmatprep.subr.mxu0 0.0
    %4471 = vmatpush1.msra.mxu0 0.0
    %4472 = vmatprep.subr.mxu0 0.0
    %4473 = vmatpush1.msra.mxu0 0.0
    %4474 = vmatprep.subr.mxu0 0.0
    %4475 = vmatpush1.msra.mxu0 0.0
    %4476 = vmatprep.subr.mxu0 0.0
    %4477 = vmatpush1.msra.mxu0 0.0
    %4478 = vmatprep.subr.mxu0 0.0
    %4479 = vmatpush1.msra.mxu0 0.0
    %4480 = vmatprep.subr.mxu0 0.0
    %4481 = vmatpush1.msra.mxu0 0.0
    %4482 = vmatprep.subr.mxu0 0.0
    %4483 = vmatpush1.msra.mxu0 0.0
    %4484 = vmatprep.subr.mxu0 0.0
    %4485 = vmatpush1.msra.mxu0 0.0
    %4486 = vmatprep.subr.mxu0 0.0
    %4487 = vmatpush1.msra.mxu0 0.0
    %4488 = vmatprep.mubr.f32.mxu0 0.0
    %4489 = vmatmul.mubr.f32.gmra.mrb[0].mxu0 %v4422
    %v4490 = vpop.f32.mrb[0].mxu0
    %v4491 = vadd.f32 %v4346, %v4490
    %v4492 = vpop.f32.mrb[0].mxu0
    %v4493 = vadd.f32 %v4348, %v4492
    %4494 = vdwg.mxu0
    %4495 = vmatprep.subr.mxu0 %v214
    %4496 = vmatpush1.msra.mxu0 %v213
    %4497 = vmatprep.subr.mxu0 %v218
    %4498 = vmatpush1.msra.mxu0 %v217
    %4499 = vmatprep.subr.mxu0 %v222
    %4500 = vmatpush1.msra.mxu0 %v221
    %4501 = vmatprep.subr.mxu0 %v226
    %4502 = vmatpush1.msra.mxu0 %v225
    %4503 = vmatprep.subr.mxu0 %v230
    %4504 = vmatpush1.msra.mxu0 %v229
    %4505 = vmatprep.subr.mxu0 %v234
    %4506 = vmatpush1.msra.mxu0 %v233
    %4507 = vmatprep.subr.mxu0 %v238
    %4508 = vmatpush1.msra.mxu0 %v237
    %4509 = vmatprep.subr.mxu0 %v242
    %4510 = vmatpush1.msra.mxu0 %v241
    %4511 = vmatprep.subr.mxu0 %v246
    %4512 = vmatpush1.msra.mxu0 %v245
    %4513 = vmatprep.subr.mxu0 %v250
    %4514 = vmatpush1.msra.mxu0 %v249
    %4515 = vmatprep.subr.mxu0 %v254
    %4516 = vmatpush1.msra.mxu0 %v253
    %4517 = vmatprep.subr.mxu0 %v258
    %4518 = vmatpush1.msra.mxu0 %v257
    %4519 = vmatprep.subr.mxu0 %v262
    %4520 = vmatpush1.msra.mxu0 %v261
    %4521 = vmatprep.subr.mxu0 %v266
    %4522 = vmatpush1.msra.mxu0 %v265
    %4523 = vmatprep.subr.mxu0 %v270
    %4524 = vmatpush1.msra.mxu0 %v269
    %4525 = vmatprep.subr.mxu0 %v274
    %4526 = vmatpush1.msra.mxu0 %v273
    %4527 = vmatprep.subr.mxu0 0.0
    %4528 = vmatpush1.msra.mxu0 0.0
    %4529 = vmatprep.subr.mxu0 0.0
    %4530 = vmatpush1.msra.mxu0 0.0
    %4531 = vmatprep.subr.mxu0 0.0
    %4532 = vmatpush1.msra.mxu0 0.0
    %4533 = vmatprep.subr.mxu0 0.0
    %4534 = vmatpush1.msra.mxu0 0.0
    %4535 = vmatprep.subr.mxu0 0.0
    %4536 = vmatpush1.msra.mxu0 0.0
    %4537 = vmatprep.subr.mxu0 0.0
    %4538 = vmatpush1.msra.mxu0 0.0
    %4539 = vmatprep.subr.mxu0 0.0
    %4540 = vmatpush1.msra.mxu0 0.0
    %4541 = vmatprep.subr.mxu0 0.0
    %4542 = vmatpush1.msra.mxu0 0.0
    %4543 = vmatprep.subr.mxu0 0.0
    %4544 = vmatpush1.msra.mxu0 0.0
    %4545 = vmatprep.subr.mxu0 0.0
    %4546 = vmatpush1.msra.mxu0 0.0
    %4547 = vmatprep.subr.mxu0 0.0
    %4548 = vmatpush1.msra.mxu0 0.0
    %4549 = vmatprep.subr.mxu0 0.0
    %4550 = vmatpush1.msra.mxu0 0.0
    %4551 = vmatprep.subr.mxu0 0.0
    %4552 = vmatpush1.msra.mxu0 0.0
    %4553 = vmatprep.subr.mxu0 0.0
    %4554 = vmatpush1.msra.mxu0 0.0
    %4555 = vmatprep.subr.mxu0 0.0
    %4556 = vmatpush1.msra.mxu0 0.0
    %4557 = vmatprep.subr.mxu0 0.0
    %4558 = vmatpush1.msra.mxu0 0.0
    %4559 = vmatprep.mubr.f32.mxu0 0.0
    %4560 = vmatmul.mubr.f32.gmra.mrb[0].mxu0 %v4422
    %v4561 = vpop.f32.mrb[0].mxu0
    %v4562 = vadd.f32 %v4417, %v4561
    %v4563 = vpop.f32.mrb[0].mxu0
    %v4564 = vadd.f32 %v4419, %v4563
    %4565 = vdwg.mxu0
    %v4566 = vadd.f32 %v4491, %v1049
    %v4567 = vadd.f32 %v4493, %v1053
    %v4568 = vadd.f32 %v4562, %v1057
    %v4569 = vadd.f32 %v4564, %v1061
    %v4570 = vxor.u32 %v4566, 2147483648
    %v4571 = vxor.u32 %v4567, 2147483648
    %v4572 = vxor.u32 %v4568, 2147483648
    %v4573 = vmul.f32 %v4570, 1.442695
    %v4574 = vpow.pop %v4573
    %v4575 = vmul.f32 %v4571, 1.442695
    %v4576 = vpow.pop %v4575
    %v4577 = vmul.f32 %v4572, 1.442695
    %v4578 = vpow.pop %v4577
    %v4579 = vadd.f32 %v4574, 1.0
    %v4580 = vadd.f32 %v4576, 1.0
    %v4581 = vadd.f32 %v4578, 1.0
    %v4582 = vrcp.pop %v4579
    %v4583 = vmul.f32 1.0, %v4582
    %v4584 = vrcp.pop %v4580
    %v4585 = vmul.f32 1.0, %v4584
    %v4586 = vrcp.pop %v4581
    %v4587 = vmul.f32 1.0, %v4586
    %v4588 = vtanh.pop %v4569
    %v4589 = vmul.f32 %v4585, %v4091
    %v4590 = vmul.f32 %v4583, %v4588
    %v4591 = vadd.f32 %v4589, %v4590
    %v4592 = vtanh.pop %v4591
    %v4593 = vmul.f32 %v4587, %v4592
    %v4594 = vld [vmem:[#allocation9] sm:$0xff]
    %v4595 = vld [vmem:[#allocation9 + $0x8] sm:$0xff]
    %v4596 = vld [vmem:[#allocation9 + $0x10] sm:$0xff]
    %v4597 = vld [vmem:[#allocation9 + $0x18] sm:$0xff]
    %v4598 = vld [vmem:[#allocation9 + $0x20] sm:$0xff]
    %v4599 = vld [vmem:[#allocation9 + $0x28] sm:$0xff]
    %v4600 = vld [vmem:[#allocation9 + $0x30] sm:$0xff]
    %v4601 = vld [vmem:[#allocation9 + $0x38] sm:$0xff]
    %v4602 = vld [vmem:[#allocation9 + $0x40] sm:$0xff]
    %v4603 = vld [vmem:[#allocation9 + $0x48] sm:$0xff]
    %v4604 = vld [vmem:[#allocation9 + $0x50] sm:$0xff]
    %v4605 = vld [vmem:[#allocation9 + $0x58] sm:$0xff]
    %v4606 = vld [vmem:[#allocation9 + $0x60] sm:$0xff]
    %v4607 = vld [vmem:[#allocation9 + $0x68] sm:$0xff]
    %v4608 = vld [vmem:[#allocation9 + $0x70] sm:$0xff]
    %v4609 = vld [vmem:[#allocation9 + $0x78] sm:$0xff]
    %v4610 = vld [vmem:[#allocation9 + $0x80] sm:$0xff]
    %v4611 = vld [vmem:[#allocation9 + $0x88] sm:$0xff]
    %v4612 = vld [vmem:[#allocation9 + $0x90] sm:$0xff]
    %v4613 = vld [vmem:[#allocation9 + $0x98] sm:$0xff]
    %v4614 = vld [vmem:[#allocation9 + $0xa0] sm:$0xff]
    %v4615 = vld [vmem:[#allocation9 + $0xa8] sm:$0xff]
    %v4616 = vld [vmem:[#allocation9 + $0xb0] sm:$0xff]
    %v4617 = vld [vmem:[#allocation9 + $0xb8] sm:$0xff]
    %v4618 = vld [vmem:[#allocation9 + $0xc0] sm:$0xff]
    %v4619 = vld [vmem:[#allocation9 + $0xc8] sm:$0xff]
    %v4620 = vld [vmem:[#allocation9 + $0xd0] sm:$0xff]
    %v4621 = vld [vmem:[#allocation9 + $0xd8] sm:$0xff]
    %v4622 = vld [vmem:[#allocation9 + $0xe0] sm:$0xff]
    %v4623 = vld [vmem:[#allocation9 + $0xe8] sm:$0xff]
    %v4624 = vld [vmem:[#allocation9 + $0xf0] sm:$0xff]
    %v4625 = vld [vmem:[#allocation9 + $0xf8] sm:$0xff]
    %v4626 = vld [vmem:[#allocation9 + $0x100] sm:$0xff]
    %v4627 = vld [vmem:[#allocation9 + $0x108] sm:$0xff]
    %v4628 = vld [vmem:[#allocation9 + $0x110] sm:$0xff]
    %v4629 = vld [vmem:[#allocation9 + $0x118] sm:$0xff]
    %v4630 = vld [vmem:[#allocation9 + $0x120] sm:$0xff]
    %v4631 = vld [vmem:[#allocation9 + $0x128] sm:$0xff]
    %v4632 = vld [vmem:[#allocation9 + $0x130] sm:$0xff]
    %v4633 = vld [vmem:[#allocation9 + $0x138] sm:$0xff]
    %v4634 = vld [vmem:[#allocation9 + $0x140] sm:$0xff]
    %v4635 = vld [vmem:[#allocation9 + $0x148] sm:$0xff]
    %v4636 = vld [vmem:[#allocation9 + $0x150] sm:$0xff]
    %v4637 = vld [vmem:[#allocation9 + $0x158] sm:$0xff]
    %v4638 = vld [vmem:[#allocation9 + $0x160] sm:$0xff]
    %v4639 = vld [vmem:[#allocation9 + $0x168] sm:$0xff]
    %v4640 = vld [vmem:[#allocation9 + $0x170] sm:$0xff]
    %v4641 = vld [vmem:[#allocation9 + $0x178] sm:$0xff]
    %v4642 = vld [vmem:[#allocation9 + $0x180] sm:$0xff]
    %v4643 = vld [vmem:[#allocation9 + $0x188] sm:$0xff]
    %v4644 = vld [vmem:[#allocation9 + $0x190] sm:$0xff]
    %v4645 = vld [vmem:[#allocation9 + $0x198] sm:$0xff]
    %v4646 = vld [vmem:[#allocation9 + $0x1a0] sm:$0xff]
    %v4647 = vld [vmem:[#allocation9 + $0x1a8] sm:$0xff]
    %v4648 = vld [vmem:[#allocation9 + $0x1b0] sm:$0xff]
    %v4649 = vld [vmem:[#allocation9 + $0x1b8] sm:$0xff]
    %v4650 = vld [vmem:[#allocation9 + $0x1c0] sm:$0xff]
    %v4651 = vld [vmem:[#allocation9 + $0x1c8] sm:$0xff]
    %v4652 = vld [vmem:[#allocation9 + $0x1d0] sm:$0xff]
    %v4653 = vld [vmem:[#allocation9 + $0x1d8] sm:$0xff]
    %v4654 = vld [vmem:[#allocation9 + $0x1e0] sm:$0xff]
    %v4655 = vld [vmem:[#allocation9 + $0x1e8] sm:$0xff]
    %v4656 = vld [vmem:[#allocation9 + $0x1f0] sm:$0xff]
    %v4657 = vld [vmem:[#allocation9 + $0x1f8] sm:$0xff]
    %v4658 = vld [vmem:[%s9] sm:$0xf]
    %v4660 = vlaneseq
    %v4661 = vshrl.u32 %v4660, 7
    %v4662 = vsub.s32 0, %v4661
    %v4663 = vrot.slane %v4658, %v4662
    %v4664 = vlaneseq
    %v4665 = vshrl.u32 %v4664, 7
    %v4666 = vsub.s32 1, %v4665
    %v4667 = vrot.slane %v4658, %v4666
    %v4668 = vlaneseq
    %v4669 = vshrl.u32 %v4668, 7
    %v4670 = vsub.s32 2, %v4669
    %v4671 = vrot.slane %v4658, %v4670
    %v4672 = vlaneseq
    %v4673 = vshrl.u32 %v4672, 7
    %v4674 = vsub.s32 3, %v4673
    %v4675 = vrot.slane %v4658, %v4674
    %4680 = vmatprep.subr.mxu0 %v4595
    %4681 = vmatpush1.msra.mxu0 %v4594
    %4682 = vmatprep.subr.mxu0 %v4599
    %4683 = vmatpush1.msra.mxu0 %v4598
    %4684 = vmatprep.subr.mxu0 %v4603
    %4685 = vmatpush1.msra.mxu0 %v4602
    %4686 = vmatprep.subr.mxu0 %v4607
    %4687 = vmatpush1.msra.mxu0 %v4606
    %4688 = vmatprep.subr.mxu0 %v4611
    %4689 = vmatpush1.msra.mxu0 %v4610
    %4690 = vmatprep.subr.mxu0 %v4615
    %4691 = vmatpush1.msra.mxu0 %v4614
    %4692 = vmatprep.subr.mxu0 %v4619
    %4693 = vmatpush1.msra.mxu0 %v4618
    %4694 = vmatprep.subr.mxu0 %v4623
    %4695 = vmatpush1.msra.mxu0 %v4622
    %4696 = vmatprep.subr.mxu0 %v4627
    %4697 = vmatpush1.msra.mxu0 %v4626
    %4698 = vmatprep.subr.mxu0 %v4631
    %4699 = vmatpush1.msra.mxu0 %v4630
    %4700 = vmatprep.subr.mxu0 %v4635
    %4701 = vmatpush1.msra.mxu0 %v4634
    %4702 = vmatprep.subr.mxu0 %v4639
    %4703 = vmatpush1.msra.mxu0 %v4638
    %4704 = vmatprep.subr.mxu0 %v4643
    %4705 = vmatpush1.msra.mxu0 %v4642
    %4706 = vmatprep.subr.mxu0 %v4647
    %4707 = vmatpush1.msra.mxu0 %v4646
    %4708 = vmatprep.subr.mxu0 %v4651
    %4709 = vmatpush1.msra.mxu0 %v4650
    %4710 = vmatprep.subr.mxu0 %v4655
    %4711 = vmatpush1.msra.mxu0 %v4654
    %4712 = vmatprep.subr.mxu0 0.0
    %4713 = vmatpush1.msra.mxu0 0.0
    %4714 = vmatprep.subr.mxu0 0.0
    %4715 = vmatpush1.msra.mxu0 0.0
    %4716 = vmatprep.subr.mxu0 0.0
    %4717 = vmatpush1.msra.mxu0 0.0
    %4718 = vmatprep.subr.mxu0 0.0
    %4719 = vmatpush1.msra.mxu0 0.0
    %4720 = vmatprep.subr.mxu0 0.0
    %4721 = vmatpush1.msra.mxu0 0.0
    %4722 = vmatprep.subr.mxu0 0.0
    %4723 = vmatpush1.msra.mxu0 0.0
    %4724 = vmatprep.subr.mxu0 0.0
    %4725 = vmatpush1.msra.mxu0 0.0
    %4726 = vmatprep.subr.mxu0 0.0
    %4727 = vmatpush1.msra.mxu0 0.0
    %4728 = vmatprep.subr.mxu0 0.0
    %4729 = vmatpush1.msra.mxu0 0.0
    %4730 = vmatprep.subr.mxu0 0.0
    %4731 = vmatpush1.msra.mxu0 0.0
    %4732 = vmatprep.subr.mxu0 0.0
    %4733 = vmatpush1.msra.mxu0 0.0
    %4734 = vmatprep.subr.mxu0 0.0
    %4735 = vmatpush1.msra.mxu0 0.0
    %4736 = vmatprep.subr.mxu0 0.0
    %4737 = vmatpush1.msra.mxu0 0.0
    %4738 = vmatprep.subr.mxu0 0.0
    %4739 = vmatpush1.msra.mxu0 0.0
    %4740 = vmatprep.subr.mxu0 0.0
    %4741 = vmatpush1.msra.mxu0 0.0
    %4742 = vmatprep.subr.mxu0 0.0
    %4743 = vmatpush1.msra.mxu0 0.0
    %4744 = vmatprep.mubr.f32.mxu0 0.0
    %4745 = vmatmul.mubr.f32.gmra.mrb[0].mxu0 %v4593
    %v4746 = vpop.f32.mrb[0].mxu0
    %v4747 = vadd.f32 %v4663, %v4746
    %v4748 = vpop.f32.mrb[0].mxu0
    %v4749 = vadd.f32 %v4667, %v4748
    %4750 = vdwg.mxu0
    %4751 = vmatprep.subr.mxu0 %v4597
    %4752 = vmatpush1.msra.mxu0 %v4596
    %4753 = vmatprep.subr.mxu0 %v4601
    %4754 = vmatpush1.msra.mxu0 %v4600
    %4755 = vmatprep.subr.mxu0 %v4605
    %4756 = vmatpush1.msra.mxu0 %v4604
    %4757 = vmatprep.subr.mxu0 %v4609
    %4758 = vmatpush1.msra.mxu0 %v4608
    %4759 = vmatprep.subr.mxu0 %v4613
    %4760 = vmatpush1.msra.mxu0 %v4612
    %4761 = vmatprep.subr.mxu0 %v4617
    %4762 = vmatpush1.msra.mxu0 %v4616
    %4763 = vmatprep.subr.mxu0 %v4621
    %4764 = vmatpush1.msra.mxu0 %v4620
    %4765 = vmatprep.subr.mxu0 %v4625
    %4766 = vmatpush1.msra.mxu0 %v4624
    %4767 = vmatprep.subr.mxu0 %v4629
    %4768 = vmatpush1.msra.mxu0 %v4628
    %4769 = vmatprep.subr.mxu0 %v4633
    %4770 = vmatpush1.msra.mxu0 %v4632
    %4771 = vmatprep.subr.mxu0 %v4637
    %4772 = vmatpush1.msra.mxu0 %v4636
    %4773 = vmatprep.subr.mxu0 %v4641
    %4774 = vmatpush1.msra.mxu0 %v4640
    %4775 = vmatprep.subr.mxu0 %v4645
    %4776 = vmatpush1.msra.mxu0 %v4644
    %4777 = vmatprep.subr.mxu0 %v4649
    %4778 = vmatpush1.msra.mxu0 %v4648
    %4779 = vmatprep.subr.mxu0 %v4653
    %4780 = vmatpush1.msra.mxu0 %v4652
    %4781 = vmatprep.subr.mxu0 %v4657
    %4782 = vmatpush1.msra.mxu0 %v4656
    %4783 = vmatprep.subr.mxu0 0.0
    %4784 = vmatpush1.msra.mxu0 0.0
    %4785 = vmatprep.subr.mxu0 0.0
    %4786 = vmatpush1.msra.mxu0 0.0
    %4787 = vmatprep.subr.mxu0 0.0
    %4788 = vmatpush1.msra.mxu0 0.0
    %4789 = vmatprep.subr.mxu0 0.0
    %4790 = vmatpush1.msra.mxu0 0.0
    %4791 = vmatprep.subr.mxu0 0.0
    %4792 = vmatpush1.msra.mxu0 0.0
    %4793 = vmatprep.subr.mxu0 0.0
    %4794 = vmatpush1.msra.mxu0 0.0
    %4795 = vmatprep.subr.mxu0 0.0
    %4796 = vmatpush1.msra.mxu0 0.0
    %4797 = vmatprep.subr.mxu0 0.0
    %4798 = vmatpush1.msra.mxu0 0.0
    %4799 = vmatprep.subr.mxu0 0.0
    %4800 = vmatpush1.msra.mxu0 0.0
    %4801 = vmatprep.subr.mxu0 0.0
    %4802 = vmatpush1.msra.mxu0 0.0
    %4803 = vmatprep.subr.mxu0 0.0
    %4804 = vmatpush1.msra.mxu0 0.0
    %4805 = vmatprep.subr.mxu0 0.0
    %4806 = vmatpush1.msra.mxu0 0.0
    %4807 = vmatprep.subr.mxu0 0.0
    %4808 = vmatpush1.msra.mxu0 0.0
    %4809 = vmatprep.subr.mxu0 0.0
    %4810 = vmatpush1.msra.mxu0 0.0
    %4811 = vmatprep.subr.mxu0 0.0
    %4812 = vmatpush1.msra.mxu0 0.0
    %4813 = vmatprep.subr.mxu0 0.0
    %4814 = vmatpush1.msra.mxu0 0.0
    %4815 = vmatprep.mubr.f32.mxu0 0.0
    %4816 = vmatmul.mubr.f32.gmra.mrb[0].mxu0 %v4593
    %v4817 = vpop.f32.mrb[0].mxu0
    %v4818 = vadd.f32 %v4671, %v4817
    %v4819 = vpop.f32.mrb[0].mxu0
    %v4820 = vadd.f32 %v4675, %v4819
    %4821 = vdwg.mxu0
    %4822 = vmatprep.subr.mxu0 %v341
    %4823 = vmatpush1.msra.mxu0 %v340
    %4824 = vmatprep.subr.mxu0 %v345
    %4825 = vmatpush1.msra.mxu0 %v344
    %4826 = vmatprep.subr.mxu0 %v349
    %4827 = vmatpush1.msra.mxu0 %v348
    %4828 = vmatprep.subr.mxu0 %v353
    %4829 = vmatpush1.msra.mxu0 %v352
    %4830 = vmatprep.subr.mxu0 %v357
    %4831 = vmatpush1.msra.mxu0 %v356
    %4832 = vmatprep.subr.mxu0 %v361
    %4833 = vmatpush1.msra.mxu0 %v360
    %4834 = vmatprep.subr.mxu0 %v365
    %4835 = vmatpush1.msra.mxu0 %v364
    %4836 = vmatprep.subr.mxu0 %v369
    %4837 = vmatpush1.msra.mxu0 %v368
    %4838 = vmatprep.subr.mxu0 %v373
    %4839 = vmatpush1.msra.mxu0 %v372
    %4840 = vmatprep.subr.mxu0 %v377
    %4841 = vmatpush1.msra.mxu0 %v376
    %4842 = vmatprep.subr.mxu0 %v381
    %4843 = vmatpush1.msra.mxu0 %v380
    %4844 = vmatprep.subr.mxu0 %v385
    %4845 = vmatpush1.msra.mxu0 %v384
    %4846 = vmatprep.subr.mxu0 %v389
    %4847 = vmatpush1.msra.mxu0 %v388
    %4848 = vmatprep.subr.mxu0 %v393
    %4849 = vmatpush1.msra.mxu0 %v392
    %4850 = vmatprep.subr.mxu0 %v397
    %4851 = vmatpush1.msra.mxu0 %v396
    %4852 = vmatprep.subr.mxu0 %v401
    %4853 = vmatpush1.msra.mxu0 %v400
    %4854 = vmatprep.subr.mxu0 0.0
    %4855 = vmatpush1.msra.mxu0 0.0
    %4856 = vmatprep.subr.mxu0 0.0
    %4857 = vmatpush1.msra.mxu0 0.0
    %4858 = vmatprep.subr.mxu0 0.0
    %4859 = vmatpush1.msra.mxu0 0.0
    %4860 = vmatprep.subr.mxu0 0.0
    %4861 = vmatpush1.msra.mxu0 0.0
    %4862 = vmatprep.subr.mxu0 0.0
    %4863 = vmatpush1.msra.mxu0 0.0
    %4864 = vmatprep.subr.mxu0 0.0
    %4865 = vmatpush1.msra.mxu0 0.0
    %4866 = vmatprep.subr.mxu0 0.0
    %4867 = vmatpush1.msra.mxu0 0.0
    %4868 = vmatprep.subr.mxu0 0.0
    %4869 = vmatpush1.msra.mxu0 0.0
    %4870 = vmatprep.subr.mxu0 0.0
    %4871 = vmatpush1.msra.mxu0 0.0
    %4872 = vmatprep.subr.mxu0 0.0
    %4873 = vmatpush1.msra.mxu0 0.0
    %4874 = vmatprep.subr.mxu0 0.0
    %4875 = vmatpush1.msra.mxu0 0.0
    %4876 = vmatprep.subr.mxu0 0.0
    %4877 = vmatpush1.msra.mxu0 0.0
    %4878 = vmatprep.subr.mxu0 0.0
    %4879 = vmatpush1.msra.mxu0 0.0
    %4880 = vmatprep.subr.mxu0 0.0
    %4881 = vmatpush1.msra.mxu0 0.0
    %4882 = vmatprep.subr.mxu0 0.0
    %4883 = vmatpush1.msra.mxu0 0.0
    %4884 = vmatprep.subr.mxu0 0.0
    %4885 = vmatpush1.msra.mxu0 0.0
    %4886 = vmatprep.mubr.f32.mxu0 0.0
    %4887 = vmatmul.mubr.f32.gmra.mrb[0].mxu0 0.0
    %v4888 = vpop.f32.mrb[0].mxu0
    %v4889 = vadd.f32 0.0, %v4888
    %v4890 = vpop.f32.mrb[0].mxu0
    %v4891 = vadd.f32 0.0, %v4890
    %4892 = vdwg.mxu0
    %4893 = vmatprep.subr.mxu0 %v343
    %4894 = vmatpush1.msra.mxu0 %v342
    %4895 = vmatprep.subr.mxu0 %v347
    %4896 = vmatpush1.msra.mxu0 %v346
    %4897 = vmatprep.subr.mxu0 %v351
    %4898 = vmatpush1.msra.mxu0 %v350
    %4899 = vmatprep.subr.mxu0 %v355
    %4900 = vmatpush1.msra.mxu0 %v354
    %4901 = vmatprep.subr.mxu0 %v359
    %4902 = vmatpush1.msra.mxu0 %v358
    %4903 = vmatprep.subr.mxu0 %v363
    %4904 = vmatpush1.msra.mxu0 %v362
    %4905 = vmatprep.subr.mxu0 %v367
    %4906 = vmatpush1.msra.mxu0 %v366
    %4907 = vmatprep.subr.mxu0 %v371
    %4908 = vmatpush1.msra.mxu0 %v370
    %4909 = vmatprep.subr.mxu0 %v375
    %4910 = vmatpush1.msra.mxu0 %v374
    %4911 = vmatprep.subr.mxu0 %v379
    %4912 = vmatpush1.msra.mxu0 %v378
    %4913 = vmatprep.subr.mxu0 %v383
    %4914 = vmatpush1.msra.mxu0 %v382
    %4915 = vmatprep.subr.mxu0 %v387
    %4916 = vmatpush1.msra.mxu0 %v386
    %4917 = vmatprep.subr.mxu0 %v391
    %4918 = vmatpush1.msra.mxu0 %v390
    %4919 = vmatprep.subr.mxu0 %v395
    %4920 = vmatpush1.msra.mxu0 %v394
    %4921 = vmatprep.subr.mxu0 %v399
    %4922 = vmatpush1.msra.mxu0 %v398
    %4923 = vmatprep.subr.mxu0 %v403
    %4924 = vmatpush1.msra.mxu0 %v402
    %4925 = vmatprep.subr.mxu0 0.0
    %4926 = vmatpush1.msra.mxu0 0.0
    %4927 = vmatprep.subr.mxu0 0.0
    %4928 = vmatpush1.msra.mxu0 0.0
    %4929 = vmatprep.subr.mxu0 0.0
    %4930 = vmatpush1.msra.mxu0 0.0
    %4931 = vmatprep.subr.mxu0 0.0
    %4932 = vmatpush1.msra.mxu0 0.0
    %4933 = vmatprep.subr.mxu0 0.0
    %4934 = vmatpush1.msra.mxu0 0.0
    %4935 = vmatprep.subr.mxu0 0.0
    %4936 = vmatpush1.msra.mxu0 0.0
    %4937 = vmatprep.subr.mxu0 0.0
    %4938 = vmatpush1.msra.mxu0 0.0
    %4939 = vmatprep.subr.mxu0 0.0
    %4940 = vmatpush1.msra.mxu0 0.0
    %4941 = vmatprep.subr.mxu0 0.0
    %4942 = vmatpush1.msra.mxu0 0.0
    %4943 = vmatprep.subr.mxu0 0.0
    %4944 = vmatpush1.msra.mxu0 0.0
    %4945 = vmatprep.subr.mxu0 0.0
    %4946 = vmatpush1.msra.mxu0 0.0
    %4947 = vmatprep.subr.mxu0 0.0
    %4948 = vmatpush1.msra.mxu0 0.0
    %4949 = vmatprep.subr.mxu0 0.0
    %4950 = vmatpush1.msra.mxu0 0.0
    %4951 = vmatprep.subr.mxu0 0.0
    %4952 = vmatpush1.msra.mxu0 0.0
    %4953 = vmatprep.subr.mxu0 0.0
    %4954 = vmatpush1.msra.mxu0 0.0
    %4955 = vmatprep.subr.mxu0 0.0
    %4956 = vmatpush1.msra.mxu0 0.0
    %4957 = vmatprep.mubr.f32.mxu0 0.0
    %4958 = vmatmul.mubr.f32.gmra.mrb[0].mxu0 0.0
    %v4959 = vpop.f32.mrb[0].mxu0
    %v4960 = vadd.f32 0.0, %v4959
    %v4961 = vpop.f32.mrb[0].mxu0
    %v4962 = vadd.f32 0.0, %v4961
    %4963 = vdwg.mxu0
    %v4964 = vadd.f32 %v4747, %v4889
    %v4965 = vadd.f32 %v4749, %v4891
    %v4966 = vadd.f32 %v4818, %v4960
    %v4967 = vadd.f32 %v4820, %v4962
    %v4968 = vxor.u32 %v4964, 2147483648
    %v4969 = vxor.u32 %v4965, 2147483648
    %v4970 = vxor.u32 %v4966, 2147483648
    %v4971 = vmul.f32 %v4968, 1.442695
    %v4972 = vpow.pop %v4971
    %v4973 = vmul.f32 %v4969, 1.442695
    %v4974 = vpow.pop %v4973
    %v4975 = vmul.f32 %v4970, 1.442695
    %v4976 = vpow.pop %v4975
    %v4977 = vadd.f32 %v4972, 1.0
    %v4978 = vadd.f32 %v4974, 1.0
    %v4979 = vadd.f32 %v4976, 1.0
    %v4980 = vrcp.pop %v4977
    %v4981 = vmul.f32 1.0, %v4980
    %v4982 = vrcp.pop %v4978
    %v4983 = vmul.f32 1.0, %v4982
    %v4984 = vrcp.pop %v4979
    %v4985 = vmul.f32 1.0, %v4984
    %v4986 = vtanh.pop %v4967
    %v4987 = vmul.f32 %v4983, 0.0
    %v4988 = vmul.f32 %v4981, %v4986
    %v4989 = vadd.f32 %v4987, %v4988
    %v4990 = vtanh.pop %v4989
    %v4991 = vmul.f32 %v4985, %v4990
    %4992 = vmatprep.subr.mxu0 %v469
    %4993 = vmatpush1.msra.mxu0 %v468
    %4994 = vmatprep.subr.mxu0 %v473
    %4995 = vmatpush1.msra.mxu0 %v472
    %4996 = vmatprep.subr.mxu0 %v477
    %4997 = vmatpush1.msra.mxu0 %v476
    %4998 = vmatprep.subr.mxu0 %v481
    %4999 = vmatpush1.msra.mxu0 %v480
    %5000 = vmatprep.subr.mxu0 %v485
    %5001 = vmatpush1.msra.mxu0 %v484
    %5002 = vmatprep.subr.mxu0 %v489
    %5003 = vmatpush1.msra.mxu0 %v488
    %5004 = vmatprep.subr.mxu0 %v493
    %5005 = vmatpush1.msra.mxu0 %v492
    %5006 = vmatprep.subr.mxu0 %v497
    %5007 = vmatpush1.msra.mxu0 %v496
    %5008 = vmatprep.subr.mxu0 %v501
    %5009 = vmatpush1.msra.mxu0 %v500
    %5010 = vmatprep.subr.mxu0 %v505
    %5011 = vmatpush1.msra.mxu0 %v504
    %5012 = vmatprep.subr.mxu0 %v509
    %5013 = vmatpush1.msra.mxu0 %v508
    %5014 = vmatprep.subr.mxu0 %v513
    %5015 = vmatpush1.msra.mxu0 %v512
    %5016 = vmatprep.subr.mxu0 %v517
    %5017 = vmatpush1.msra.mxu0 %v516
    %5018 = vmatprep.subr.mxu0 %v521
    %5019 = vmatpush1.msra.mxu0 %v520
    %5020 = vmatprep.subr.mxu0 %v525
    %5021 = vmatpush1.msra.mxu0 %v524
    %5022 = vmatprep.subr.mxu0 %v529
    %5023 = vmatpush1.msra.mxu0 %v528
    %5024 = vmatprep.subr.mxu0 0.0
    %5025 = vmatpush1.msra.mxu0 0.0
    %5026 = vmatprep.subr.mxu0 0.0
    %5027 = vmatpush1.msra.mxu0 0.0
    %5028 = vmatprep.subr.mxu0 0.0
    %5029 = vmatpush1.msra.mxu0 0.0
    %5030 = vmatprep.subr.mxu0 0.0
    %5031 = vmatpush1.msra.mxu0 0.0
    %5032 = vmatprep.subr.mxu0 0.0
    %5033 = vmatpush1.msra.mxu0 0.0
    %5034 = vmatprep.subr.mxu0 0.0
    %5035 = vmatpush1.msra.mxu0 0.0
    %5036 = vmatprep.subr.mxu0 0.0
    %5037 = vmatpush1.msra.mxu0 0.0
    %5038 = vmatprep.subr.mxu0 0.0
    %5039 = vmatpush1.msra.mxu0 0.0
    %5040 = vmatprep.subr.mxu0 0.0
    %5041 = vmatpush1.msra.mxu0 0.0
    %5042 = vmatprep.subr.mxu0 0.0
    %5043 = vmatpush1.msra.mxu0 0.0
    %5044 = vmatprep.subr.mxu0 0.0
    %5045 = vmatpush1.msra.mxu0 0.0
    %5046 = vmatprep.subr.mxu0 0.0
    %5047 = vmatpush1.msra.mxu0 0.0
    %5048 = vmatprep.subr.mxu0 0.0
    %5049 = vmatpush1.msra.mxu0 0.0
    %5050 = vmatprep.subr.mxu0 0.0
    %5051 = vmatpush1.msra.mxu0 0.0
    %5052 = vmatprep.subr.mxu0 0.0
    %5053 = vmatpush1.msra.mxu0 0.0
    %5054 = vmatprep.subr.mxu0 0.0
    %5055 = vmatpush1.msra.mxu0 0.0
    %5056 = vmatprep.mubr.f32.mxu0 0.0
    %5057 = vmatmul.mubr.f32.gmra.mrb[0].mxu0 0.0
    %v5058 = vpop.f32.mrb[0].mxu0
    %v5059 = vadd.f32 0.0, %v5058
    %v5060 = vpop.f32.mrb[0].mxu0
    %v5061 = vadd.f32 0.0, %v5060
    %5062 = vdwg.mxu0
    %5063 = vmatprep.subr.mxu0 %v471
    %5064 = vmatpush1.msra.mxu0 %v470
    %5065 = vmatprep.subr.mxu0 %v475
    %5066 = vmatpush1.msra.mxu0 %v474
    %5067 = vmatprep.subr.mxu0 %v479
    %5068 = vmatpush1.msra.mxu0 %v478
    %5069 = vmatprep.subr.mxu0 %v483
    %5070 = vmatpush1.msra.mxu0 %v482
    %5071 = vmatprep.subr.mxu0 %v487
    %5072 = vmatpush1.msra.mxu0 %v486
    %5073 = vmatprep.subr.mxu0 %v491
    %5074 = vmatpush1.msra.mxu0 %v490
    %5075 = vmatprep.subr.mxu0 %v495
    %5076 = vmatpush1.msra.mxu0 %v494
    %5077 = vmatprep.subr.mxu0 %v499
    %5078 = vmatpush1.msra.mxu0 %v498
    %5079 = vmatprep.subr.mxu0 %v503
    %5080 = vmatpush1.msra.mxu0 %v502
    %5081 = vmatprep.subr.mxu0 %v507
    %5082 = vmatpush1.msra.mxu0 %v506
    %5083 = vmatprep.subr.mxu0 %v511
    %5084 = vmatpush1.msra.mxu0 %v510
    %5085 = vmatprep.subr.mxu0 %v515
    %5086 = vmatpush1.msra.mxu0 %v514
    %5087 = vmatprep.subr.mxu0 %v519
    %5088 = vmatpush1.msra.mxu0 %v518
    %5089 = vmatprep.subr.mxu0 %v523
    %5090 = vmatpush1.msra.mxu0 %v522
    %5091 = vmatprep.subr.mxu0 %v527
    %5092 = vmatpush1.msra.mxu0 %v526
    %5093 = vmatprep.subr.mxu0 %v531
    %5094 = vmatpush1.msra.mxu0 %v530
    %5095 = vmatprep.subr.mxu0 0.0
    %5096 = vmatpush1.msra.mxu0 0.0
    %5097 = vmatprep.subr.mxu0 0.0
    %5098 = vmatpush1.msra.mxu0 0.0
    %5099 = vmatprep.subr.mxu0 0.0
    %5100 = vmatpush1.msra.mxu0 0.0
    %5101 = vmatprep.subr.mxu0 0.0
    %5102 = vmatpush1.msra.mxu0 0.0
    %5103 = vmatprep.subr.mxu0 0.0
    %5104 = vmatpush1.msra.mxu0 0.0
    %5105 = vmatprep.subr.mxu0 0.0
    %5106 = vmatpush1.msra.mxu0 0.0
    %5107 = vmatprep.subr.mxu0 0.0
    %5108 = vmatpush1.msra.mxu0 0.0
    %5109 = vmatprep.subr.mxu0 0.0
    %5110 = vmatpush1.msra.mxu0 0.0
    %5111 = vmatprep.subr.mxu0 0.0
    %5112 = vmatpush1.msra.mxu0 0.0
    %5113 = vmatprep.subr.mxu0 0.0
    %5114 = vmatpush1.msra.mxu0 0.0
    %5115 = vmatprep.subr.mxu0 0.0
    %5116 = vmatpush1.msra.mxu0 0.0
    %5117 = vmatprep.subr.mxu0 0.0
    %5118 = vmatpush1.msra.mxu0 0.0
    %5119 = vmatprep.subr.mxu0 0.0
    %5120 = vmatpush1.msra.mxu0 0.0
    %5121 = vmatprep.subr.mxu0 0.0
    %5122 = vmatpush1.msra.mxu0 0.0
    %5123 = vmatprep.subr.mxu0 0.0
    %5124 = vmatpush1.msra.mxu0 0.0
    %5125 = vmatprep.subr.mxu0 0.0
    %5126 = vmatpush1.msra.mxu0 0.0
    %5127 = vmatprep.mubr.f32.mxu0 0.0
    %5128 = vmatmul.mubr.f32.gmra.mrb[0].mxu0 0.0
    %v5129 = vpop.f32.mrb[0].mxu0
    %v5130 = vadd.f32 0.0, %v5129
    %v5131 = vpop.f32.mrb[0].mxu0
    %v5132 = vadd.f32 0.0, %v5131
    %5133 = vdwg.mxu0
    %5134 = vmatprep.subr.mxu0 %v405
    %5135 = vmatpush1.msra.mxu0 %v404
    %5136 = vmatprep.subr.mxu0 %v409
    %5137 = vmatpush1.msra.mxu0 %v408
    %5138 = vmatprep.subr.mxu0 %v413
    %5139 = vmatpush1.msra.mxu0 %v412
    %5140 = vmatprep.subr.mxu0 %v417
    %5141 = vmatpush1.msra.mxu0 %v416
    %5142 = vmatprep.subr.mxu0 %v421
    %5143 = vmatpush1.msra.mxu0 %v420
    %5144 = vmatprep.subr.mxu0 %v425
    %5145 = vmatpush1.msra.mxu0 %v424
    %5146 = vmatprep.subr.mxu0 %v429
    %5147 = vmatpush1.msra.mxu0 %v428
    %5148 = vmatprep.subr.mxu0 %v433
    %5149 = vmatpush1.msra.mxu0 %v432
    %5150 = vmatprep.subr.mxu0 %v437
    %5151 = vmatpush1.msra.mxu0 %v436
    %5152 = vmatprep.subr.mxu0 %v441
    %5153 = vmatpush1.msra.mxu0 %v440
    %5154 = vmatprep.subr.mxu0 %v445
    %5155 = vmatpush1.msra.mxu0 %v444
    %5156 = vmatprep.subr.mxu0 %v449
    %5157 = vmatpush1.msra.mxu0 %v448
    %5158 = vmatprep.subr.mxu0 %v453
    %5159 = vmatpush1.msra.mxu0 %v452
    %5160 = vmatprep.subr.mxu0 %v457
    %5161 = vmatpush1.msra.mxu0 %v456
    %5162 = vmatprep.subr.mxu0 %v461
    %5163 = vmatpush1.msra.mxu0 %v460
    %5164 = vmatprep.subr.mxu0 %v465
    %5165 = vmatpush1.msra.mxu0 %v464
    %5166 = vmatprep.subr.mxu0 0.0
    %5167 = vmatpush1.msra.mxu0 0.0
    %5168 = vmatprep.subr.mxu0 0.0
    %5169 = vmatpush1.msra.mxu0 0.0
    %5170 = vmatprep.subr.mxu0 0.0
    %5171 = vmatpush1.msra.mxu0 0.0
    %5172 = vmatprep.subr.mxu0 0.0
    %5173 = vmatpush1.msra.mxu0 0.0
    %5174 = vmatprep.subr.mxu0 0.0
    %5175 = vmatpush1.msra.mxu0 0.0
    %5176 = vmatprep.subr.mxu0 0.0
    %5177 = vmatpush1.msra.mxu0 0.0
    %5178 = vmatprep.subr.mxu0 0.0
    %5179 = vmatpush1.msra.mxu0 0.0
    %5180 = vmatprep.subr.mxu0 0.0
    %5181 = vmatpush1.msra.mxu0 0.0
    %5182 = vmatprep.subr.mxu0 0.0
    %5183 = vmatpush1.msra.mxu0 0.0
    %5184 = vmatprep.subr.mxu0 0.0
    %5185 = vmatpush1.msra.mxu0 0.0
    %5186 = vmatprep.subr.mxu0 0.0
    %5187 = vmatpush1.msra.mxu0 0.0
    %5188 = vmatprep.subr.mxu0 0.0
    %5189 = vmatpush1.msra.mxu0 0.0
    %5190 = vmatprep.subr.mxu0 0.0
    %5191 = vmatpush1.msra.mxu0 0.0
    %5192 = vmatprep.subr.mxu0 0.0
    %5193 = vmatpush1.msra.mxu0 0.0
    %5194 = vmatprep.subr.mxu0 0.0
    %5195 = vmatpush1.msra.mxu0 0.0
    %5196 = vmatprep.subr.mxu0 0.0
    %5197 = vmatpush1.msra.mxu0 0.0
    %5198 = vmatprep.mubr.f32.mxu0 0.0
    %5199 = vmatmul.mubr.f32.gmra.mrb[0].mxu0 %v4991
    %v5200 = vpop.f32.mrb[0].mxu0
    %v5201 = vadd.f32 %v5059, %v5200
    %v5202 = vpop.f32.mrb[0].mxu0
    %v5203 = vadd.f32 %v5061, %v5202
    %5204 = vdwg.mxu0
    %5205 = vmatprep.subr.mxu0 %v407
    %5206 = vmatpush1.msra.mxu0 %v406
    %5207 = vmatprep.subr.mxu0 %v411
    %5208 = vmatpush1.msra.mxu0 %v410
    %5209 = vmatprep.subr.mxu0 %v415
    %5210 = vmatpush1.msra.mxu0 %v414
    %5211 = vmatprep.subr.mxu0 %v419
    %5212 = vmatpush1.msra.mxu0 %v418
    %5213 = vmatprep.subr.mxu0 %v423
    %5214 = vmatpush1.msra.mxu0 %v422
    %5215 = vmatprep.subr.mxu0 %v427
    %5216 = vmatpush1.msra.mxu0 %v426
    %5217 = vmatprep.subr.mxu0 %v431
    %5218 = vmatpush1.msra.mxu0 %v430
    %5219 = vmatprep.subr.mxu0 %v435
    %5220 = vmatpush1.msra.mxu0 %v434
    %5221 = vmatprep.subr.mxu0 %v439
    %5222 = vmatpush1.msra.mxu0 %v438
    %5223 = vmatprep.subr.mxu0 %v443
    %5224 = vmatpush1.msra.mxu0 %v442
    %5225 = vmatprep.subr.mxu0 %v447
    %5226 = vmatpush1.msra.mxu0 %v446
    %5227 = vmatprep.subr.mxu0 %v451
    %5228 = vmatpush1.msra.mxu0 %v450
    %5229 = vmatprep.subr.mxu0 %v455
    %5230 = vmatpush1.msra.mxu0 %v454
    %5231 = vmatprep.subr.mxu0 %v459
    %5232 = vmatpush1.msra.mxu0 %v458
    %5233 = vmatprep.subr.mxu0 %v463
    %5234 = vmatpush1.msra.mxu0 %v462
    %5235 = vmatprep.subr.mxu0 %v467
    %5236 = vmatpush1.msra.mxu0 %v466
    %5237 = vmatprep.subr.mxu0 0.0
    %5238 = vmatpush1.msra.mxu0 0.0
    %5239 = vmatprep.subr.mxu0 0.0
    %5240 = vmatpush1.msra.mxu0 0.0
    %5241 = vmatprep.subr.mxu0 0.0
    %5242 = vmatpush1.msra.mxu0 0.0
    %5243 = vmatprep.subr.mxu0 0.0
    %5244 = vmatpush1.msra.mxu0 0.0
    %5245 = vmatprep.subr.mxu0 0.0
    %5246 = vmatpush1.msra.mxu0 0.0
    %5247 = vmatprep.subr.mxu0 0.0
    %5248 = vmatpush1.msra.mxu0 0.0
    %5249 = vmatprep.subr.mxu0 0.0
    %5250 = vmatpush1.msra.mxu0 0.0
    %5251 = vmatprep.subr.mxu0 0.0
    %5252 = vmatpush1.msra.mxu0 0.0
    %5253 = vmatprep.subr.mxu0 0.0
    %5254 = vmatpush1.msra.mxu0 0.0
    %5255 = vmatprep.subr.mxu0 0.0
    %5256 = vmatpush1.msra.mxu0 0.0
    %5257 = vmatprep.subr.mxu0 0.0
    %5258 = vmatpush1.msra.mxu0 0.0
    %5259 = vmatprep.subr.mxu0 0.0
    %5260 = vmatpush1.msra.mxu0 0.0
    %5261 = vmatprep.subr.mxu0 0.0
    %5262 = vmatpush1.msra.mxu0 0.0
    %5263 = vmatprep.subr.mxu0 0.0
    %5264 = vmatpush1.msra.mxu0 0.0
    %5265 = vmatprep.subr.mxu0 0.0
    %5266 = vmatpush1.msra.mxu0 0.0
    %5267 = vmatprep.subr.mxu0 0.0
    %5268 = vmatpush1.msra.mxu0 0.0
    %5269 = vmatprep.mubr.f32.mxu0 0.0
    %5270 = vmatmul.mubr.f32.gmra.mrb[0].mxu0 %v4991
    %v5271 = vpop.f32.mrb[0].mxu0
    %v5272 = vadd.f32 %v5130, %v5271
    %v5273 = vpop.f32.mrb[0].mxu0
    %v5274 = vadd.f32 %v5132, %v5273
    %5275 = vdwg.mxu0
    %v5277 = vlaneseq
    %v5278 = vshrl.u32 %v5277, 7
    %v5279 = vsub.s32 0, %v5278
    %v5280 = vrot.slane %v532, %v5279
    %v5281 = vlaneseq
    %v5282 = vshrl.u32 %v5281, 7
    %v5283 = vsub.s32 1, %v5282
    %v5284 = vrot.slane %v532, %v5283
    %v5285 = vlaneseq
    %v5286 = vshrl.u32 %v5285, 7
    %v5287 = vsub.s32 2, %v5286
    %v5288 = vrot.slane %v532, %v5287
    %v5289 = vlaneseq
    %v5290 = vshrl.u32 %v5289, 7
    %v5291 = vsub.s32 3, %v5290
    %v5292 = vrot.slane %v532, %v5291
    %v5297 = vadd.f32 %v5201, %v5280
    %v5298 = vadd.f32 %v5203, %v5284
    %v5299 = vadd.f32 %v5272, %v5288
    %v5300 = vadd.f32 %v5274, %v5292
    %v5301 = vxor.u32 %v5297, 2147483648
    %v5302 = vxor.u32 %v5298, 2147483648
    %v5303 = vxor.u32 %v5299, 2147483648
    %v5304 = vmul.f32 %v5301, 1.442695
    %v5305 = vpow.pop %v5304
    %v5306 = vmul.f32 %v5302, 1.442695
    %v5307 = vpow.pop %v5306
    %v5308 = vmul.f32 %v5303, 1.442695
    %v5309 = vpow.pop %v5308
    %v5310 = vadd.f32 %v5305, 1.0
    %v5311 = vadd.f32 %v5307, 1.0
    %v5312 = vadd.f32 %v5309, 1.0
    %v5313 = vrcp.pop %v5310
    %v5314 = vmul.f32 1.0, %v5313
    %v5315 = vrcp.pop %v5311
    %v5316 = vmul.f32 1.0, %v5315
    %v5317 = vrcp.pop %v5312
    %v5318 = vmul.f32 1.0, %v5317
    %v5319 = vtanh.pop %v5300
    %v5320 = vmul.f32 %v5316, 0.0
    %v5321 = vmul.f32 %v5314, %v5319
    %v5322 = vadd.f32 %v5320, %v5321
    %v5323 = vtanh.pop %v5322
    %v5324 = vmul.f32 %v5318, %v5323
    %5325 = vst [vmem:[#allocation2] sm:$0x1] %v5324
    %5326 = vmatprep.subr.mxu0 %v341
    %5327 = vmatpush1.msra.mxu0 %v340
    %5328 = vmatprep.subr.mxu0 %v345
    %5329 = vmatpush1.msra.mxu0 %v344
    %5330 = vmatprep.subr.mxu0 %v349
    %5331 = vmatpush1.msra.mxu0 %v348
    %5332 = vmatprep.subr.mxu0 %v353
    %5333 = vmatpush1.msra.mxu0 %v352
    %5334 = vmatprep.subr.mxu0 %v357
    %5335 = vmatpush1.msra.mxu0 %v356
    %5336 = vmatprep.subr.mxu0 %v361
    %5337 = vmatpush1.msra.mxu0 %v360
    %5338 = vmatprep.subr.mxu0 %v365
    %5339 = vmatpush1.msra.mxu0 %v364
    %5340 = vmatprep.subr.mxu0 %v369
    %5341 = vmatpush1.msra.mxu0 %v368
    %5342 = vmatprep.subr.mxu0 %v373
    %5343 = vmatpush1.msra.mxu0 %v372
    %5344 = vmatprep.subr.mxu0 %v377
    %5345 = vmatpush1.msra.mxu0 %v376
    %5346 = vmatprep.subr.mxu0 %v381
    %5347 = vmatpush1.msra.mxu0 %v380
    %5348 = vmatprep.subr.mxu0 %v385
    %5349 = vmatpush1.msra.mxu0 %v384
    %5350 = vmatprep.subr.mxu0 %v389
    %5351 = vmatpush1.msra.mxu0 %v388
    %5352 = vmatprep.subr.mxu0 %v393
    %5353 = vmatpush1.msra.mxu0 %v392
    %5354 = vmatprep.subr.mxu0 %v397
    %5355 = vmatpush1.msra.mxu0 %v396
    %5356 = vmatprep.subr.mxu0 %v401
    %5357 = vmatpush1.msra.mxu0 %v400
    %5358 = vmatprep.subr.mxu0 0.0
    %5359 = vmatpush1.msra.mxu0 0.0
    %5360 = vmatprep.subr.mxu0 0.0
    %5361 = vmatpush1.msra.mxu0 0.0
    %5362 = vmatprep.subr.mxu0 0.0
    %5363 = vmatpush1.msra.mxu0 0.0
    %5364 = vmatprep.subr.mxu0 0.0
    %5365 = vmatpush1.msra.mxu0 0.0
    %5366 = vmatprep.subr.mxu0 0.0
    %5367 = vmatpush1.msra.mxu0 0.0
    %5368 = vmatprep.subr.mxu0 0.0
    %5369 = vmatpush1.msra.mxu0 0.0
    %5370 = vmatprep.subr.mxu0 0.0
    %5371 = vmatpush1.msra.mxu0 0.0
    %5372 = vmatprep.subr.mxu0 0.0
    %5373 = vmatpush1.msra.mxu0 0.0
    %5374 = vmatprep.subr.mxu0 0.0
    %5375 = vmatpush1.msra.mxu0 0.0
    %5376 = vmatprep.subr.mxu0 0.0
    %5377 = vmatpush1.msra.mxu0 0.0
    %5378 = vmatprep.subr.mxu0 0.0
    %5379 = vmatpush1.msra.mxu0 0.0
    %5380 = vmatprep.subr.mxu0 0.0
    %5381 = vmatpush1.msra.mxu0 0.0
    %5382 = vmatprep.subr.mxu0 0.0
    %5383 = vmatpush1.msra.mxu0 0.0
    %5384 = vmatprep.subr.mxu0 0.0
    %5385 = vmatpush1.msra.mxu0 0.0
    %5386 = vmatprep.subr.mxu0 0.0
    %5387 = vmatpush1.msra.mxu0 0.0
    %5388 = vmatprep.subr.mxu0 0.0
    %5389 = vmatpush1.msra.mxu0 0.0
    %5390 = vmatprep.mubr.f32.mxu0 0.0
    %5391 = vmatmul.mubr.f32.gmra.mrb[0].mxu0 %v4991
    %v5392 = vpop.f32.mrb[0].mxu0
    %v5393 = vadd.f32 0.0, %v5392
    %v5394 = vpop.f32.mrb[0].mxu0
    %v5395 = vadd.f32 0.0, %v5394
    %5396 = vdwg.mxu0
    %5397 = vmatprep.subr.mxu0 %v343
    %5398 = vmatpush1.msra.mxu0 %v342
    %5399 = vmatprep.subr.mxu0 %v347
    %5400 = vmatpush1.msra.mxu0 %v346
    %5401 = vmatprep.subr.mxu0 %v351
    %5402 = vmatpush1.msra.mxu0 %v350
    %5403 = vmatprep.subr.mxu0 %v355
    %5404 = vmatpush1.msra.mxu0 %v354
    %5405 = vmatprep.subr.mxu0 %v359
    %5406 = vmatpush1.msra.mxu0 %v358
    %5407 = vmatprep.subr.mxu0 %v363
    %5408 = vmatpush1.msra.mxu0 %v362
    %5409 = vmatprep.subr.mxu0 %v367
    %5410 = vmatpush1.msra.mxu0 %v366
    %5411 = vmatprep.subr.mxu0 %v371
    %5412 = vmatpush1.msra.mxu0 %v370
    %5413 = vmatprep.subr.mxu0 %v375
    %5414 = vmatpush1.msra.mxu0 %v374
    %5415 = vmatprep.subr.mxu0 %v379
    %5416 = vmatpush1.msra.mxu0 %v378
    %5417 = vmatprep.subr.mxu0 %v383
    %5418 = vmatpush1.msra.mxu0 %v382
    %5419 = vmatprep.subr.mxu0 %v387
    %5420 = vmatpush1.msra.mxu0 %v386
    %5421 = vmatprep.subr.mxu0 %v391
    %5422 = vmatpush1.msra.mxu0 %v390
    %5423 = vmatprep.subr.mxu0 %v395
    %5424 = vmatpush1.msra.mxu0 %v394
    %5425 = vmatprep.subr.mxu0 %v399
    %5426 = vmatpush1.msra.mxu0 %v398
    %5427 = vmatprep.subr.mxu0 %v403
    %5428 = vmatpush1.msra.mxu0 %v402
    %5429 = vmatprep.subr.mxu0 0.0
    %5430 = vmatpush1.msra.mxu0 0.0
    %5431 = vmatprep.subr.mxu0 0.0
    %5432 = vmatpush1.msra.mxu0 0.0
    %5433 = vmatprep.subr.mxu0 0.0
    %5434 = vmatpush1.msra.mxu0 0.0
    %5435 = vmatprep.subr.mxu0 0.0
    %5436 = vmatpush1.msra.mxu0 0.0
    %5437 = vmatprep.subr.mxu0 0.0
    %5438 = vmatpush1.msra.mxu0 0.0
    %5439 = vmatprep.subr.mxu0 0.0
    %5440 = vmatpush1.msra.mxu0 0.0
    %5441 = vmatprep.subr.mxu0 0.0
    %5442 = vmatpush1.msra.mxu0 0.0
    %5443 = vmatprep.subr.mxu0 0.0
    %5444 = vmatpush1.msra.mxu0 0.0
    %5445 = vmatprep.subr.mxu0 0.0
    %5446 = vmatpush1.msra.mxu0 0.0
    %5447 = vmatprep.subr.mxu0 0.0
    %5448 = vmatpush1.msra.mxu0 0.0
    %5449 = vmatprep.subr.mxu0 0.0
    %5450 = vmatpush1.msra.mxu0 0.0
    %5451 = vmatprep.subr.mxu0 0.0
    %5452 = vmatpush1.msra.mxu0 0.0
    %5453 = vmatprep.subr.mxu0 0.0
    %5454 = vmatpush1.msra.mxu0 0.0
    %5455 = vmatprep.subr.mxu0 0.0
    %5456 = vmatpush1.msra.mxu0 0.0
    %5457 = vmatprep.subr.mxu0 0.0
    %5458 = vmatpush1.msra.mxu0 0.0
    %5459 = vmatprep.subr.mxu0 0.0
    %5460 = vmatpush1.msra.mxu0 0.0
    %5461 = vmatprep.mubr.f32.mxu0 0.0
    %5462 = vmatmul.mubr.f32.gmra.mrb[0].mxu0 %v4991
    %v5463 = vpop.f32.mrb[0].mxu0
    %v5464 = vadd.f32 0.0, %v5463
    %v5465 = vpop.f32.mrb[0].mxu0
    %v5466 = vadd.f32 0.0, %v5465
    %5467 = vdwg.mxu0
    %v5468 = vadd.f32 %v4747, %v5393
    %v5469 = vadd.f32 %v4749, %v5395
    %v5470 = vadd.f32 %v4818, %v5464
    %v5471 = vadd.f32 %v4820, %v5466
    %v5472 = vxor.u32 %v5468, 2147483648
    %v5473 = vxor.u32 %v5469, 2147483648
    %v5474 = vxor.u32 %v5470, 2147483648
    %v5475 = vmul.f32 %v5472, 1.442695
    %v5476 = vpow.pop %v5475
    %v5477 = vmul.f32 %v5473, 1.442695
    %v5478 = vpow.pop %v5477
    %v5479 = vmul.f32 %v5474, 1.442695
    %v5480 = vpow.pop %v5479
    %v5481 = vadd.f32 %v5476, 1.0
    %v5482 = vadd.f32 %v5478, 1.0
    %v5483 = vadd.f32 %v5480, 1.0
    %v5484 = vrcp.pop %v5481
    %v5485 = vmul.f32 1.0, %v5484
    %v5486 = vrcp.pop %v5482
    %v5487 = vmul.f32 1.0, %v5486
    %v5488 = vrcp.pop %v5483
    %v5489 = vmul.f32 1.0, %v5488
    %v5490 = vtanh.pop %v5471
    %v5491 = vmul.f32 %v5487, %v4989
    %v5492 = vmul.f32 %v5485, %v5490
    %v5493 = vadd.f32 %v5491, %v5492
    %v5494 = vtanh.pop %v5493
    %v5495 = vmul.f32 %v5489, %v5494
    %5496 = vmatprep.subr.mxu0 %v469
    %5497 = vmatpush1.msra.mxu0 %v468
    %5498 = vmatprep.subr.mxu0 %v473
    %5499 = vmatpush1.msra.mxu0 %v472
    %5500 = vmatprep.subr.mxu0 %v477
    %5501 = vmatpush1.msra.mxu0 %v476
    %5502 = vmatprep.subr.mxu0 %v481
    %5503 = vmatpush1.msra.mxu0 %v480
    %5504 = vmatprep.subr.mxu0 %v485
    %5505 = vmatpush1.msra.mxu0 %v484
    %5506 = vmatprep.subr.mxu0 %v489
    %5507 = vmatpush1.msra.mxu0 %v488
    %5508 = vmatprep.subr.mxu0 %v493
    %5509 = vmatpush1.msra.mxu0 %v492
    %5510 = vmatprep.subr.mxu0 %v497
    %5511 = vmatpush1.msra.mxu0 %v496
    %5512 = vmatprep.subr.mxu0 %v501
    %5513 = vmatpush1.msra.mxu0 %v500
    %5514 = vmatprep.subr.mxu0 %v505
    %5515 = vmatpush1.msra.mxu0 %v504
    %5516 = vmatprep.subr.mxu0 %v509
    %5517 = vmatpush1.msra.mxu0 %v508
    %5518 = vmatprep.subr.mxu0 %v513
    %5519 = vmatpush1.msra.mxu0 %v512
    %5520 = vmatprep.subr.mxu0 %v517
    %5521 = vmatpush1.msra.mxu0 %v516
    %5522 = vmatprep.subr.mxu0 %v521
    %5523 = vmatpush1.msra.mxu0 %v520
    %5524 = vmatprep.subr.mxu0 %v525
    %5525 = vmatpush1.msra.mxu0 %v524
    %5526 = vmatprep.subr.mxu0 %v529
    %5527 = vmatpush1.msra.mxu0 %v528
    %5528 = vmatprep.subr.mxu0 0.0
    %5529 = vmatpush1.msra.mxu0 0.0
    %5530 = vmatprep.subr.mxu0 0.0
    %5531 = vmatpush1.msra.mxu0 0.0
    %5532 = vmatprep.subr.mxu0 0.0
    %5533 = vmatpush1.msra.mxu0 0.0
    %5534 = vmatprep.subr.mxu0 0.0
    %5535 = vmatpush1.msra.mxu0 0.0
    %5536 = vmatprep.subr.mxu0 0.0
    %5537 = vmatpush1.msra.mxu0 0.0
    %5538 = vmatprep.subr.mxu0 0.0
    %5539 = vmatpush1.msra.mxu0 0.0
    %5540 = vmatprep.subr.mxu0 0.0
    %5541 = vmatpush1.msra.mxu0 0.0
    %5542 = vmatprep.subr.mxu0 0.0
    %5543 = vmatpush1.msra.mxu0 0.0
    %5544 = vmatprep.subr.mxu0 0.0
    %5545 = vmatpush1.msra.mxu0 0.0
    %5546 = vmatprep.subr.mxu0 0.0
    %5547 = vmatpush1.msra.mxu0 0.0
    %5548 = vmatprep.subr.mxu0 0.0
    %5549 = vmatpush1.msra.mxu0 0.0
    %5550 = vmatprep.subr.mxu0 0.0
    %5551 = vmatpush1.msra.mxu0 0.0
    %5552 = vmatprep.subr.mxu0 0.0
    %5553 = vmatpush1.msra.mxu0 0.0
    %5554 = vmatprep.subr.mxu0 0.0
    %5555 = vmatpush1.msra.mxu0 0.0
    %5556 = vmatprep.subr.mxu0 0.0
    %5557 = vmatpush1.msra.mxu0 0.0
    %5558 = vmatprep.subr.mxu0 0.0
    %5559 = vmatpush1.msra.mxu0 0.0
    %5560 = vmatprep.mubr.f32.mxu0 0.0
    %5561 = vmatmul.mubr.f32.gmra.mrb[0].mxu0 %v5324
    %v5562 = vpop.f32.mrb[0].mxu0
    %v5563 = vadd.f32 0.0, %v5562
    %v5564 = vpop.f32.mrb[0].mxu0
    %v5565 = vadd.f32 0.0, %v5564
    %5566 = vdwg.mxu0
    %5567 = vmatprep.subr.mxu0 %v471
    %5568 = vmatpush1.msra.mxu0 %v470
    %5569 = vmatprep.subr.mxu0 %v475
    %5570 = vmatpush1.msra.mxu0 %v474
    %5571 = vmatprep.subr.mxu0 %v479
    %5572 = vmatpush1.msra.mxu0 %v478
    %5573 = vmatprep.subr.mxu0 %v483
    %5574 = vmatpush1.msra.mxu0 %v482
    %5575 = vmatprep.subr.mxu0 %v487
    %5576 = vmatpush1.msra.mxu0 %v486
    %5577 = vmatprep.subr.mxu0 %v491
    %5578 = vmatpush1.msra.mxu0 %v490
    %5579 = vmatprep.subr.mxu0 %v495
    %5580 = vmatpush1.msra.mxu0 %v494
    %5581 = vmatprep.subr.mxu0 %v499
    %5582 = vmatpush1.msra.mxu0 %v498
    %5583 = vmatprep.subr.mxu0 %v503
    %5584 = vmatpush1.msra.mxu0 %v502
    %5585 = vmatprep.subr.mxu0 %v507
    %5586 = vmatpush1.msra.mxu0 %v506
    %5587 = vmatprep.subr.mxu0 %v511
    %5588 = vmatpush1.msra.mxu0 %v510
    %5589 = vmatprep.subr.mxu0 %v515
    %5590 = vmatpush1.msra.mxu0 %v514
    %5591 = vmatprep.subr.mxu0 %v519
    %5592 = vmatpush1.msra.mxu0 %v518
    %5593 = vmatprep.subr.mxu0 %v523
    %5594 = vmatpush1.msra.mxu0 %v522
    %5595 = vmatprep.subr.mxu0 %v527
    %5596 = vmatpush1.msra.mxu0 %v526
    %5597 = vmatprep.subr.mxu0 %v531
    %5598 = vmatpush1.msra.mxu0 %v530
    %5599 = vmatprep.subr.mxu0 0.0
    %5600 = vmatpush1.msra.mxu0 0.0
    %5601 = vmatprep.subr.mxu0 0.0
    %5602 = vmatpush1.msra.mxu0 0.0
    %5603 = vmatprep.subr.mxu0 0.0
    %5604 = vmatpush1.msra.mxu0 0.0
    %5605 = vmatprep.subr.mxu0 0.0
    %5606 = vmatpush1.msra.mxu0 0.0
    %5607 = vmatprep.subr.mxu0 0.0
    %5608 = vmatpush1.msra.mxu0 0.0
    %5609 = vmatprep.subr.mxu0 0.0
    %5610 = vmatpush1.msra.mxu0 0.0
    %5611 = vmatprep.subr.mxu0 0.0
    %5612 = vmatpush1.msra.mxu0 0.0
    %5613 = vmatprep.subr.mxu0 0.0
    %5614 = vmatpush1.msra.mxu0 0.0
    %5615 = vmatprep.subr.mxu0 0.0
    %5616 = vmatpush1.msra.mxu0 0.0
    %5617 = vmatprep.subr.mxu0 0.0
    %5618 = vmatpush1.msra.mxu0 0.0
    %5619 = vmatprep.subr.mxu0 0.0
    %5620 = vmatpush1.msra.mxu0 0.0
    %5621 = vmatprep.subr.mxu0 0.0
    %5622 = vmatpush1.msra.mxu0 0.0
    %5623 = vmatprep.subr.mxu0 0.0
    %5624 = vmatpush1.msra.mxu0 0.0
    %5625 = vmatprep.subr.mxu0 0.0
    %5626 = vmatpush1.msra.mxu0 0.0
    %5627 = vmatprep.subr.mxu0 0.0
    %5628 = vmatpush1.msra.mxu0 0.0
    %5629 = vmatprep.subr.mxu0 0.0
    %5630 = vmatpush1.msra.mxu0 0.0
    %5631 = vmatprep.mubr.f32.mxu0 0.0
    %5632 = vmatmul.mubr.f32.gmra.mrb[0].mxu0 %v5324
    %v5633 = vpop.f32.mrb[0].mxu0
    %v5634 = vadd.f32 0.0, %v5633
    %v5635 = vpop.f32.mrb[0].mxu0
    %v5636 = vadd.f32 0.0, %v5635
    %5637 = vdwg.mxu0
    %5638 = vmatprep.subr.mxu0 %v405
    %5639 = vmatpush1.msra.mxu0 %v404
    %5640 = vmatprep.subr.mxu0 %v409
    %5641 = vmatpush1.msra.mxu0 %v408
    %5642 = vmatprep.subr.mxu0 %v413
    %5643 = vmatpush1.msra.mxu0 %v412
    %5644 = vmatprep.subr.mxu0 %v417
    %5645 = vmatpush1.msra.mxu0 %v416
    %5646 = vmatprep.subr.mxu0 %v421
    %5647 = vmatpush1.msra.mxu0 %v420
    %5648 = vmatprep.subr.mxu0 %v425
    %5649 = vmatpush1.msra.mxu0 %v424
    %5650 = vmatprep.subr.mxu0 %v429
    %5651 = vmatpush1.msra.mxu0 %v428
    %5652 = vmatprep.subr.mxu0 %v433
    %5653 = vmatpush1.msra.mxu0 %v432
    %5654 = vmatprep.subr.mxu0 %v437
    %5655 = vmatpush1.msra.mxu0 %v436
    %5656 = vmatprep.subr.mxu0 %v441
    %5657 = vmatpush1.msra.mxu0 %v440
    %5658 = vmatprep.subr.mxu0 %v445
    %5659 = vmatpush1.msra.mxu0 %v444
    %5660 = vmatprep.subr.mxu0 %v449
    %5661 = vmatpush1.msra.mxu0 %v448
    %5662 = vmatprep.subr.mxu0 %v453
    %5663 = vmatpush1.msra.mxu0 %v452
    %5664 = vmatprep.subr.mxu0 %v457
    %5665 = vmatpush1.msra.mxu0 %v456
    %5666 = vmatprep.subr.mxu0 %v461
    %5667 = vmatpush1.msra.mxu0 %v460
    %5668 = vmatprep.subr.mxu0 %v465
    %5669 = vmatpush1.msra.mxu0 %v464
    %5670 = vmatprep.subr.mxu0 0.0
    %5671 = vmatpush1.msra.mxu0 0.0
    %5672 = vmatprep.subr.mxu0 0.0
    %5673 = vmatpush1.msra.mxu0 0.0
    %5674 = vmatprep.subr.mxu0 0.0
    %5675 = vmatpush1.msra.mxu0 0.0
    %5676 = vmatprep.subr.mxu0 0.0
    %5677 = vmatpush1.msra.mxu0 0.0
    %5678 = vmatprep.subr.mxu0 0.0
    %5679 = vmatpush1.msra.mxu0 0.0
    %5680 = vmatprep.subr.mxu0 0.0
    %5681 = vmatpush1.msra.mxu0 0.0
    %5682 = vmatprep.subr.mxu0 0.0
    %5683 = vmatpush1.msra.mxu0 0.0
    %5684 = vmatprep.subr.mxu0 0.0
    %5685 = vmatpush1.msra.mxu0 0.0
    %5686 = vmatprep.subr.mxu0 0.0
    %5687 = vmatpush1.msra.mxu0 0.0
    %5688 = vmatprep.subr.mxu0 0.0
    %5689 = vmatpush1.msra.mxu0 0.0
    %5690 = vmatprep.subr.mxu0 0.0
    %5691 = vmatpush1.msra.mxu0 0.0
    %5692 = vmatprep.subr.mxu0 0.0
    %5693 = vmatpush1.msra.mxu0 0.0
    %5694 = vmatprep.subr.mxu0 0.0
    %5695 = vmatpush1.msra.mxu0 0.0
    %5696 = vmatprep.subr.mxu0 0.0
    %5697 = vmatpush1.msra.mxu0 0.0
    %5698 = vmatprep.subr.mxu0 0.0
    %5699 = vmatpush1.msra.mxu0 0.0
    %5700 = vmatprep.subr.mxu0 0.0
    %5701 = vmatpush1.msra.mxu0 0.0
    %5702 = vmatprep.mubr.f32.mxu0 0.0
    %5703 = vmatmul.mubr.f32.gmra.mrb[0].mxu0 %v5495
    %v5704 = vpop.f32.mrb[0].mxu0
    %v5705 = vadd.f32 %v5563, %v5704
    %v5706 = vpop.f32.mrb[0].mxu0
    %v5707 = vadd.f32 %v5565, %v5706
    %5708 = vdwg.mxu0
    %5709 = vmatprep.subr.mxu0 %v407
    %5710 = vmatpush1.msra.mxu0 %v406
    %5711 = vmatprep.subr.mxu0 %v411
    %5712 = vmatpush1.msra.mxu0 %v410
    %5713 = vmatprep.subr.mxu0 %v415
    %5714 = vmatpush1.msra.mxu0 %v414
    %5715 = vmatprep.subr.mxu0 %v419
    %5716 = vmatpush1.msra.mxu0 %v418
    %5717 = vmatprep.subr.mxu0 %v423
    %5718 = vmatpush1.msra.mxu0 %v422
    %5719 = vmatprep.subr.mxu0 %v427
    %5720 = vmatpush1.msra.mxu0 %v426
    %5721 = vmatprep.subr.mxu0 %v431
    %5722 = vmatpush1.msra.mxu0 %v430
    %5723 = vmatprep.subr.mxu0 %v435
    %5724 = vmatpush1.msra.mxu0 %v434
    %5725 = vmatprep.subr.mxu0 %v439
    %5726 = vmatpush1.msra.mxu0 %v438
    %5727 = vmatprep.subr.mxu0 %v443
    %5728 = vmatpush1.msra.mxu0 %v442
    %5729 = vmatprep.subr.mxu0 %v447
    %5730 = vmatpush1.msra.mxu0 %v446
    %5731 = vmatprep.subr.mxu0 %v451
    %5732 = vmatpush1.msra.mxu0 %v450
    %5733 = vmatprep.subr.mxu0 %v455
    %5734 = vmatpush1.msra.mxu0 %v454
    %5735 = vmatprep.subr.mxu0 %v459
    %5736 = vmatpush1.msra.mxu0 %v458
    %5737 = vmatprep.subr.mxu0 %v463
    %5738 = vmatpush1.msra.mxu0 %v462
    %5739 = vmatprep.subr.mxu0 %v467
    %5740 = vmatpush1.msra.mxu0 %v466
    %5741 = vmatprep.subr.mxu0 0.0
    %5742 = vmatpush1.msra.mxu0 0.0
    %5743 = vmatprep.subr.mxu0 0.0
    %5744 = vmatpush1.msra.mxu0 0.0
    %5745 = vmatprep.subr.mxu0 0.0
    %5746 = vmatpush1.msra.mxu0 0.0
    %5747 = vmatprep.subr.mxu0 0.0
    %5748 = vmatpush1.msra.mxu0 0.0
    %5749 = vmatprep.subr.mxu0 0.0
    %5750 = vmatpush1.msra.mxu0 0.0
    %5751 = vmatprep.subr.mxu0 0.0
    %5752 = vmatpush1.msra.mxu0 0.0
    %5753 = vmatprep.subr.mxu0 0.0
    %5754 = vmatpush1.msra.mxu0 0.0
    %5755 = vmatprep.subr.mxu0 0.0
    %5756 = vmatpush1.msra.mxu0 0.0
    %5757 = vmatprep.subr.mxu0 0.0
    %5758 = vmatpush1.msra.mxu0 0.0
    %5759 = vmatprep.subr.mxu0 0.0
    %5760 = vmatpush1.msra.mxu0 0.0
    %5761 = vmatprep.subr.mxu0 0.0
    %5762 = vmatpush1.msra.mxu0 0.0
    %5763 = vmatprep.subr.mxu0 0.0
    %5764 = vmatpush1.msra.mxu0 0.0
    %5765 = vmatprep.subr.mxu0 0.0
    %5766 = vmatpush1.msra.mxu0 0.0
    %5767 = vmatprep.subr.mxu0 0.0
    %5768 = vmatpush1.msra.mxu0 0.0
    %5769 = vmatprep.subr.mxu0 0.0
    %5770 = vmatpush1.msra.mxu0 0.0
    %5771 = vmatprep.subr.mxu0 0.0
    %5772 = vmatpush1.msra.mxu0 0.0
    %5773 = vmatprep.mubr.f32.mxu0 0.0
    %5774 = vmatmul.mubr.f32.gmra.mrb[0].mxu0 %v5495
    %v5775 = vpop.f32.mrb[0].mxu0
    %v5776 = vadd.f32 %v5634, %v5775
    %v5777 = vpop.f32.mrb[0].mxu0
    %v5778 = vadd.f32 %v5636, %v5777
    %5779 = vdwg.mxu0
    %v5780 = vadd.f32 %v5705, %v5280
    %v5781 = vadd.f32 %v5707, %v5284
    %v5782 = vadd.f32 %v5776, %v5288
    %v5783 = vadd.f32 %v5778, %v5292
    %v5784 = vxor.u32 %v5780, 2147483648
    %v5785 = vxor.u32 %v5781, 2147483648
    %v5786 = vxor.u32 %v5782, 2147483648
    %v5787 = vmul.f32 %v5784, 1.442695
    %v5788 = vpow.pop %v5787
    %v5789 = vmul.f32 %v5785, 1.442695
    %v5790 = vpow.pop %v5789
    %v5791 = vmul.f32 %v5786, 1.442695
    %v5792 = vpow.pop %v5791
    %v5793 = vadd.f32 %v5788, 1.0
    %v5794 = vadd.f32 %v5790, 1.0
    %v5795 = vadd.f32 %v5792, 1.0
    %v5796 = vrcp.pop %v5793
    %v5797 = vmul.f32 1.0, %v5796
    %v5798 = vrcp.pop %v5794
    %v5799 = vmul.f32 1.0, %v5798
    %v5800 = vrcp.pop %v5795
    %v5801 = vmul.f32 1.0, %v5800
    %v5802 = vtanh.pop %v5783
    %v5803 = vmul.f32 %v5799, %v5322
    %v5804 = vmul.f32 %v5797, %v5802
    %v5805 = vadd.f32 %v5803, %v5804
    %v5806 = vtanh.pop %v5805
    %v5807 = vmul.f32 %v5801, %v5806
    %5808 = vst [vmem:[#allocation2 + $0x1] sm:$0x1] %v5807
    %5809 = vmatprep.subr.mxu0 %v341
    %5810 = vmatpush1.msra.mxu0 %v340
    %5811 = vmatprep.subr.mxu0 %v345
    %5812 = vmatpush1.msra.mxu0 %v344
    %5813 = vmatprep.subr.mxu0 %v349
    %5814 = vmatpush1.msra.mxu0 %v348
    %5815 = vmatprep.subr.mxu0 %v353
    %5816 = vmatpush1.msra.mxu0 %v352
    %5817 = vmatprep.subr.mxu0 %v357
    %5818 = vmatpush1.msra.mxu0 %v356
    %5819 = vmatprep.subr.mxu0 %v361
    %5820 = vmatpush1.msra.mxu0 %v360
    %5821 = vmatprep.subr.mxu0 %v365
    %5822 = vmatpush1.msra.mxu0 %v364
    %5823 = vmatprep.subr.mxu0 %v369
    %5824 = vmatpush1.msra.mxu0 %v368
    %5825 = vmatprep.subr.mxu0 %v373
    %5826 = vmatpush1.msra.mxu0 %v372
    %5827 = vmatprep.subr.mxu0 %v377
    %5828 = vmatpush1.msra.mxu0 %v376
    %5829 = vmatprep.subr.mxu0 %v381
    %5830 = vmatpush1.msra.mxu0 %v380
    %5831 = vmatprep.subr.mxu0 %v385
    %5832 = vmatpush1.msra.mxu0 %v384
    %5833 = vmatprep.subr.mxu0 %v389
    %5834 = vmatpush1.msra.mxu0 %v388
    %5835 = vmatprep.subr.mxu0 %v393
    %5836 = vmatpush1.msra.mxu0 %v392
    %5837 = vmatprep.subr.mxu0 %v397
    %5838 = vmatpush1.msra.mxu0 %v396
    %5839 = vmatprep.subr.mxu0 %v401
    %5840 = vmatpush1.msra.mxu0 %v400
    %5841 = vmatprep.subr.mxu0 0.0
    %5842 = vmatpush1.msra.mxu0 0.0
    %5843 = vmatprep.subr.mxu0 0.0
    %5844 = vmatpush1.msra.mxu0 0.0
    %5845 = vmatprep.subr.mxu0 0.0
    %5846 = vmatpush1.msra.mxu0 0.0
    %5847 = vmatprep.subr.mxu0 0.0
    %5848 = vmatpush1.msra.mxu0 0.0
    %5849 = vmatprep.subr.mxu0 0.0
    %5850 = vmatpush1.msra.mxu0 0.0
    %5851 = vmatprep.subr.mxu0 0.0
    %5852 = vmatpush1.msra.mxu0 0.0
    %5853 = vmatprep.subr.mxu0 0.0
    %5854 = vmatpush1.msra.mxu0 0.0
    %5855 = vmatprep.subr.mxu0 0.0
    %5856 = vmatpush1.msra.mxu0 0.0
    %5857 = vmatprep.subr.mxu0 0.0
    %5858 = vmatpush1.msra.mxu0 0.0
    %5859 = vmatprep.subr.mxu0 0.0
    %5860 = vmatpush1.msra.mxu0 0.0
    %5861 = vmatprep.subr.mxu0 0.0
    %5862 = vmatpush1.msra.mxu0 0.0
    %5863 = vmatprep.subr.mxu0 0.0
    %5864 = vmatpush1.msra.mxu0 0.0
    %5865 = vmatprep.subr.mxu0 0.0
    %5866 = vmatpush1.msra.mxu0 0.0
    %5867 = vmatprep.subr.mxu0 0.0
    %5868 = vmatpush1.msra.mxu0 0.0
    %5869 = vmatprep.subr.mxu0 0.0
    %5870 = vmatpush1.msra.mxu0 0.0
    %5871 = vmatprep.subr.mxu0 0.0
    %5872 = vmatpush1.msra.mxu0 0.0
    %5873 = vmatprep.mubr.f32.mxu0 0.0
    %5874 = vmatmul.mubr.f32.gmra.mrb[0].mxu0 %v5495
    %v5875 = vpop.f32.mrb[0].mxu0
    %v5876 = vadd.f32 0.0, %v5875
    %v5877 = vpop.f32.mrb[0].mxu0
    %v5878 = vadd.f32 0.0, %v5877
    %5879 = vdwg.mxu0
    %5880 = vmatprep.subr.mxu0 %v343
    %5881 = vmatpush1.msra.mxu0 %v342
    %5882 = vmatprep.subr.mxu0 %v347
    %5883 = vmatpush1.msra.mxu0 %v346
    %5884 = vmatprep.subr.mxu0 %v351
    %5885 = vmatpush1.msra.mxu0 %v350
    %5886 = vmatprep.subr.mxu0 %v355
    %5887 = vmatpush1.msra.mxu0 %v354
    %5888 = vmatprep.subr.mxu0 %v359
    %5889 = vmatpush1.msra.mxu0 %v358
    %5890 = vmatprep.subr.mxu0 %v363
    %5891 = vmatpush1.msra.mxu0 %v362
    %5892 = vmatprep.subr.mxu0 %v367
    %5893 = vmatpush1.msra.mxu0 %v366
    %5894 = vmatprep.subr.mxu0 %v371
    %5895 = vmatpush1.msra.mxu0 %v370
    %5896 = vmatprep.subr.mxu0 %v375
    %5897 = vmatpush1.msra.mxu0 %v374
    %5898 = vmatprep.subr.mxu0 %v379
    %5899 = vmatpush1.msra.mxu0 %v378
    %5900 = vmatprep.subr.mxu0 %v383
    %5901 = vmatpush1.msra.mxu0 %v382
    %5902 = vmatprep.subr.mxu0 %v387
    %5903 = vmatpush1.msra.mxu0 %v386
    %5904 = vmatprep.subr.mxu0 %v391
    %5905 = vmatpush1.msra.mxu0 %v390
    %5906 = vmatprep.subr.mxu0 %v395
    %5907 = vmatpush1.msra.mxu0 %v394
    %5908 = vmatprep.subr.mxu0 %v399
    %5909 = vmatpush1.msra.mxu0 %v398
    %5910 = vmatprep.subr.mxu0 %v403
    %5911 = vmatpush1.msra.mxu0 %v402
    %5912 = vmatprep.subr.mxu0 0.0
    %5913 = vmatpush1.msra.mxu0 0.0
    %5914 = vmatprep.subr.mxu0 0.0
    %5915 = vmatpush1.msra.mxu0 0.0
    %5916 = vmatprep.subr.mxu0 0.0
    %5917 = vmatpush1.msra.mxu0 0.0
    %5918 = vmatprep.subr.mxu0 0.0
    %5919 = vmatpush1.msra.mxu0 0.0
    %5920 = vmatprep.subr.mxu0 0.0
    %5921 = vmatpush1.msra.mxu0 0.0
    %5922 = vmatprep.subr.mxu0 0.0
    %5923 = vmatpush1.msra.mxu0 0.0
    %5924 = vmatprep.subr.mxu0 0.0
    %5925 = vmatpush1.msra.mxu0 0.0
    %5926 = vmatprep.subr.mxu0 0.0
    %5927 = vmatpush1.msra.mxu0 0.0
    %5928 = vmatprep.subr.mxu0 0.0
    %5929 = vmatpush1.msra.mxu0 0.0
    %5930 = vmatprep.subr.mxu0 0.0
    %5931 = vmatpush1.msra.mxu0 0.0
    %5932 = vmatprep.subr.mxu0 0.0
    %5933 = vmatpush1.msra.mxu0 0.0
    %5934 = vmatprep.subr.mxu0 0.0
    %5935 = vmatpush1.msra.mxu0 0.0
    %5936 = vmatprep.subr.mxu0 0.0
    %5937 = vmatpush1.msra.mxu0 0.0
    %5938 = vmatprep.subr.mxu0 0.0
    %5939 = vmatpush1.msra.mxu0 0.0
    %5940 = vmatprep.subr.mxu0 0.0
    %5941 = vmatpush1.msra.mxu0 0.0
    %5942 = vmatprep.subr.mxu0 0.0
    %5943 = vmatpush1.msra.mxu0 0.0
    %5944 = vmatprep.mubr.f32.mxu0 0.0
    %5945 = vmatmul.mubr.f32.gmra.mrb[0].mxu0 %v5495
    %v5946 = vpop.f32.mrb[0].mxu0
    %v5947 = vadd.f32 0.0, %v5946
    %v5948 = vpop.f32.mrb[0].mxu0
    %v5949 = vadd.f32 0.0, %v5948
    %5950 = vdwg.mxu0
    %v5951 = vadd.f32 %v4747, %v5876
    %v5952 = vadd.f32 %v4749, %v5878
    %v5953 = vadd.f32 %v4818, %v5947
    %v5954 = vadd.f32 %v4820, %v5949
    %v5955 = vxor.u32 %v5951, 2147483648
    %v5956 = vxor.u32 %v5952, 2147483648
    %v5957 = vxor.u32 %v5953, 2147483648
    %v5958 = vmul.f32 %v5955, 1.442695
    %v5959 = vpow.pop %v5958
    %v5960 = vmul.f32 %v5956, 1.442695
    %v5961 = vpow.pop %v5960
    %v5962 = vmul.f32 %v5957, 1.442695
    %v5963 = vpow.pop %v5962
    %v5964 = vadd.f32 %v5959, 1.0
    %v5965 = vadd.f32 %v5961, 1.0
    %v5966 = vadd.f32 %v5963, 1.0
    %v5967 = vrcp.pop %v5964
    %v5968 = vmul.f32 1.0, %v5967
    %v5969 = vrcp.pop %v5965
    %v5970 = vmul.f32 1.0, %v5969
    %v5971 = vrcp.pop %v5966
    %v5972 = vmul.f32 1.0, %v5971
    %v5973 = vtanh.pop %v5954
    %v5974 = vmul.f32 %v5970, %v5493
    %v5975 = vmul.f32 %v5968, %v5973
    %v5976 = vadd.f32 %v5974, %v5975
    %v5977 = vtanh.pop %v5976
    %v5978 = vmul.f32 %v5972, %v5977
    %5979 = vmatprep.subr.mxu0 %v469
    %5980 = vmatpush1.msra.mxu0 %v468
    %5981 = vmatprep.subr.mxu0 %v473
    %5982 = vmatpush1.msra.mxu0 %v472
    %5983 = vmatprep.subr.mxu0 %v477
    %5984 = vmatpush1.msra.mxu0 %v476
    %5985 = vmatprep.subr.mxu0 %v481
    %5986 = vmatpush1.msra.mxu0 %v480
    %5987 = vmatprep.subr.mxu0 %v485
    %5988 = vmatpush1.msra.mxu0 %v484
    %5989 = vmatprep.subr.mxu0 %v489
    %5990 = vmatpush1.msra.mxu0 %v488
    %5991 = vmatprep.subr.mxu0 %v493
    %5992 = vmatpush1.msra.mxu0 %v492
    %5993 = vmatprep.subr.mxu0 %v497
    %5994 = vmatpush1.msra.mxu0 %v496
    %5995 = vmatprep.subr.mxu0 %v501
    %5996 = vmatpush1.msra.mxu0 %v500
    %5997 = vmatprep.subr.mxu0 %v505
    %5998 = vmatpush1.msra.mxu0 %v504
    %5999 = vmatprep.subr.mxu0 %v509
    %6000 = vmatpush1.msra.mxu0 %v508
    %6001 = vmatprep.subr.mxu0 %v513
    %6002 = vmatpush1.msra.mxu0 %v512
    %6003 = vmatprep.subr.mxu0 %v517
    %6004 = vmatpush1.msra.mxu0 %v516
    %6005 = vmatprep.subr.mxu0 %v521
    %6006 = vmatpush1.msra.mxu0 %v520
    %6007 = vmatprep.subr.mxu0 %v525
    %6008 = vmatpush1.msra.mxu0 %v524
    %6009 = vmatprep.subr.mxu0 %v529
    %6010 = vmatpush1.msra.mxu0 %v528
    %6011 = vmatprep.subr.mxu0 0.0
    %6012 = vmatpush1.msra.mxu0 0.0
    %6013 = vmatprep.subr.mxu0 0.0
    %6014 = vmatpush1.msra.mxu0 0.0
    %6015 = vmatprep.subr.mxu0 0.0
    %6016 = vmatpush1.msra.mxu0 0.0
    %6017 = vmatprep.subr.mxu0 0.0
    %6018 = vmatpush1.msra.mxu0 0.0
    %6019 = vmatprep.subr.mxu0 0.0
    %6020 = vmatpush1.msra.mxu0 0.0
    %6021 = vmatprep.subr.mxu0 0.0
    %6022 = vmatpush1.msra.mxu0 0.0
    %6023 = vmatprep.subr.mxu0 0.0
    %6024 = vmatpush1.msra.mxu0 0.0
    %6025 = vmatprep.subr.mxu0 0.0
    %6026 = vmatpush1.msra.mxu0 0.0
    %6027 = vmatprep.subr.mxu0 0.0
    %6028 = vmatpush1.msra.mxu0 0.0
    %6029 = vmatprep.subr.mxu0 0.0
    %6030 = vmatpush1.msra.mxu0 0.0
    %6031 = vmatprep.subr.mxu0 0.0
    %6032 = vmatpush1.msra.mxu0 0.0
    %6033 = vmatprep.subr.mxu0 0.0
    %6034 = vmatpush1.msra.mxu0 0.0
    %6035 = vmatprep.subr.mxu0 0.0
    %6036 = vmatpush1.msra.mxu0 0.0
    %6037 = vmatprep.subr.mxu0 0.0
    %6038 = vmatpush1.msra.mxu0 0.0
    %6039 = vmatprep.subr.mxu0 0.0
    %6040 = vmatpush1.msra.mxu0 0.0
    %6041 = vmatprep.subr.mxu0 0.0
    %6042 = vmatpush1.msra.mxu0 0.0
    %6043 = vmatprep.mubr.f32.mxu0 0.0
    %6044 = vmatmul.mubr.f32.gmra.mrb[0].mxu0 %v5807
    %v6045 = vpop.f32.mrb[0].mxu0
    %v6046 = vadd.f32 0.0, %v6045
    %v6047 = vpop.f32.mrb[0].mxu0
    %v6048 = vadd.f32 0.0, %v6047
    %6049 = vdwg.mxu0
    %6050 = vmatprep.subr.mxu0 %v471
    %6051 = vmatpush1.msra.mxu0 %v470
    %6052 = vmatprep.subr.mxu0 %v475
    %6053 = vmatpush1.msra.mxu0 %v474
    %6054 = vmatprep.subr.mxu0 %v479
    %6055 = vmatpush1.msra.mxu0 %v478
    %6056 = vmatprep.subr.mxu0 %v483
    %6057 = vmatpush1.msra.mxu0 %v482
    %6058 = vmatprep.subr.mxu0 %v487
    %6059 = vmatpush1.msra.mxu0 %v486
    %6060 = vmatprep.subr.mxu0 %v491
    %6061 = vmatpush1.msra.mxu0 %v490
    %6062 = vmatprep.subr.mxu0 %v495
    %6063 = vmatpush1.msra.mxu0 %v494
    %6064 = vmatprep.subr.mxu0 %v499
    %6065 = vmatpush1.msra.mxu0 %v498
    %6066 = vmatprep.subr.mxu0 %v503
    %6067 = vmatpush1.msra.mxu0 %v502
    %6068 = vmatprep.subr.mxu0 %v507
    %6069 = vmatpush1.msra.mxu0 %v506
    %6070 = vmatprep.subr.mxu0 %v511
    %6071 = vmatpush1.msra.mxu0 %v510
    %6072 = vmatprep.subr.mxu0 %v515
    %6073 = vmatpush1.msra.mxu0 %v514
    %6074 = vmatprep.subr.mxu0 %v519
    %6075 = vmatpush1.msra.mxu0 %v518
    %6076 = vmatprep.subr.mxu0 %v523
    %6077 = vmatpush1.msra.mxu0 %v522
    %6078 = vmatprep.subr.mxu0 %v527
    %6079 = vmatpush1.msra.mxu0 %v526
    %6080 = vmatprep.subr.mxu0 %v531
    %6081 = vmatpush1.msra.mxu0 %v530
    %6082 = vmatprep.subr.mxu0 0.0
    %6083 = vmatpush1.msra.mxu0 0.0
    %6084 = vmatprep.subr.mxu0 0.0
    %6085 = vmatpush1.msra.mxu0 0.0
    %6086 = vmatprep.subr.mxu0 0.0
    %6087 = vmatpush1.msra.mxu0 0.0
    %6088 = vmatprep.subr.mxu0 0.0
    %6089 = vmatpush1.msra.mxu0 0.0
    %6090 = vmatprep.subr.mxu0 0.0
    %6091 = vmatpush1.msra.mxu0 0.0
    %6092 = vmatprep.subr.mxu0 0.0
    %6093 = vmatpush1.msra.mxu0 0.0
    %6094 = vmatprep.subr.mxu0 0.0
    %6095 = vmatpush1.msra.mxu0 0.0
    %6096 = vmatprep.subr.mxu0 0.0
    %6097 = vmatpush1.msra.mxu0 0.0
    %6098 = vmatprep.subr.mxu0 0.0
    %6099 = vmatpush1.msra.mxu0 0.0
    %6100 = vmatprep.subr.mxu0 0.0
    %6101 = vmatpush1.msra.mxu0 0.0
    %6102 = vmatprep.subr.mxu0 0.0
    %6103 = vmatpush1.msra.mxu0 0.0
    %6104 = vmatprep.subr.mxu0 0.0
    %6105 = vmatpush1.msra.mxu0 0.0
    %6106 = vmatprep.subr.mxu0 0.0
    %6107 = vmatpush1.msra.mxu0 0.0
    %6108 = vmatprep.subr.mxu0 0.0
    %6109 = vmatpush1.msra.mxu0 0.0
    %6110 = vmatprep.subr.mxu0 0.0
    %6111 = vmatpush1.msra.mxu0 0.0
    %6112 = vmatprep.subr.mxu0 0.0
    %6113 = vmatpush1.msra.mxu0 0.0
    %6114 = vmatprep.mubr.f32.mxu0 0.0
    %6115 = vmatmul.mubr.f32.gmra.mrb[0].mxu0 %v5807
    %v6116 = vpop.f32.mrb[0].mxu0
    %v6117 = vadd.f32 0.0, %v6116
    %v6118 = vpop.f32.mrb[0].mxu0
    %v6119 = vadd.f32 0.0, %v6118
    %6120 = vdwg.mxu0
    %6121 = vmatprep.subr.mxu0 %v405
    %6122 = vmatpush1.msra.mxu0 %v404
    %6123 = vmatprep.subr.mxu0 %v409
    %6124 = vmatpush1.msra.mxu0 %v408
    %6125 = vmatprep.subr.mxu0 %v413
    %6126 = vmatpush1.msra.mxu0 %v412
    %6127 = vmatprep.subr.mxu0 %v417
    %6128 = vmatpush1.msra.mxu0 %v416
    %6129 = vmatprep.subr.mxu0 %v421
    %6130 = vmatpush1.msra.mxu0 %v420
    %6131 = vmatprep.subr.mxu0 %v425
    %6132 = vmatpush1.msra.mxu0 %v424
    %6133 = vmatprep.subr.mxu0 %v429
    %6134 = vmatpush1.msra.mxu0 %v428
    %6135 = vmatprep.subr.mxu0 %v433
    %6136 = vmatpush1.msra.mxu0 %v432
    %6137 = vmatprep.subr.mxu0 %v437
    %6138 = vmatpush1.msra.mxu0 %v436
    %6139 = vmatprep.subr.mxu0 %v441
    %6140 = vmatpush1.msra.mxu0 %v440
    %6141 = vmatprep.subr.mxu0 %v445
    %6142 = vmatpush1.msra.mxu0 %v444
    %6143 = vmatprep.subr.mxu0 %v449
    %6144 = vmatpush1.msra.mxu0 %v448
    %6145 = vmatprep.subr.mxu0 %v453
    %6146 = vmatpush1.msra.mxu0 %v452
    %6147 = vmatprep.subr.mxu0 %v457
    %6148 = vmatpush1.msra.mxu0 %v456
    %6149 = vmatprep.subr.mxu0 %v461
    %6150 = vmatpush1.msra.mxu0 %v460
    %6151 = vmatprep.subr.mxu0 %v465
    %6152 = vmatpush1.msra.mxu0 %v464
    %6153 = vmatprep.subr.mxu0 0.0
    %6154 = vmatpush1.msra.mxu0 0.0
    %6155 = vmatprep.subr.mxu0 0.0
    %6156 = vmatpush1.msra.mxu0 0.0
    %6157 = vmatprep.subr.mxu0 0.0
    %6158 = vmatpush1.msra.mxu0 0.0
    %6159 = vmatprep.subr.mxu0 0.0
    %6160 = vmatpush1.msra.mxu0 0.0
    %6161 = vmatprep.subr.mxu0 0.0
    %6162 = vmatpush1.msra.mxu0 0.0
    %6163 = vmatprep.subr.mxu0 0.0
    %6164 = vmatpush1.msra.mxu0 0.0
    %6165 = vmatprep.subr.mxu0 0.0
    %6166 = vmatpush1.msra.mxu0 0.0
    %6167 = vmatprep.subr.mxu0 0.0
    %6168 = vmatpush1.msra.mxu0 0.0
    %6169 = vmatprep.subr.mxu0 0.0
    %6170 = vmatpush1.msra.mxu0 0.0
    %6171 = vmatprep.subr.mxu0 0.0
    %6172 = vmatpush1.msra.mxu0 0.0
    %6173 = vmatprep.subr.mxu0 0.0
    %6174 = vmatpush1.msra.mxu0 0.0
    %6175 = vmatprep.subr.mxu0 0.0
    %6176 = vmatpush1.msra.mxu0 0.0
    %6177 = vmatprep.subr.mxu0 0.0
    %6178 = vmatpush1.msra.mxu0 0.0
    %6179 = vmatprep.subr.mxu0 0.0
    %6180 = vmatpush1.msra.mxu0 0.0
    %6181 = vmatprep.subr.mxu0 0.0
    %6182 = vmatpush1.msra.mxu0 0.0
    %6183 = vmatprep.subr.mxu0 0.0
    %6184 = vmatpush1.msra.mxu0 0.0
    %6185 = vmatprep.mubr.f32.mxu0 0.0
    %6186 = vmatmul.mubr.f32.gmra.mrb[0].mxu0 %v5978
    %v6187 = vpop.f32.mrb[0].mxu0
    %v6188 = vadd.f32 %v6046, %v6187
    %v6189 = vpop.f32.mrb[0].mxu0
    %v6190 = vadd.f32 %v6048, %v6189
    %6191 = vdwg.mxu0
    %6192 = vmatprep.subr.mxu0 %v407
    %6193 = vmatpush1.msra.mxu0 %v406
    %6194 = vmatprep.subr.mxu0 %v411
    %6195 = vmatpush1.msra.mxu0 %v410
    %6196 = vmatprep.subr.mxu0 %v415
    %6197 = vmatpush1.msra.mxu0 %v414
    %6198 = vmatprep.subr.mxu0 %v419
    %6199 = vmatpush1.msra.mxu0 %v418
    %6200 = vmatprep.subr.mxu0 %v423
    %6201 = vmatpush1.msra.mxu0 %v422
    %6202 = vmatprep.subr.mxu0 %v427
    %6203 = vmatpush1.msra.mxu0 %v426
    %6204 = vmatprep.subr.mxu0 %v431
    %6205 = vmatpush1.msra.mxu0 %v430
    %6206 = vmatprep.subr.mxu0 %v435
    %6207 = vmatpush1.msra.mxu0 %v434
    %6208 = vmatprep.subr.mxu0 %v439
    %6209 = vmatpush1.msra.mxu0 %v438
    %6210 = vmatprep.subr.mxu0 %v443
    %6211 = vmatpush1.msra.mxu0 %v442
    %6212 = vmatprep.subr.mxu0 %v447
    %6213 = vmatpush1.msra.mxu0 %v446
    %6214 = vmatprep.subr.mxu0 %v451
    %6215 = vmatpush1.msra.mxu0 %v450
    %6216 = vmatprep.subr.mxu0 %v455
    %6217 = vmatpush1.msra.mxu0 %v454
    %6218 = vmatprep.subr.mxu0 %v459
    %6219 = vmatpush1.msra.mxu0 %v458
    %6220 = vmatprep.subr.mxu0 %v463
    %6221 = vmatpush1.msra.mxu0 %v462
    %6222 = vmatprep.subr.mxu0 %v467
    %6223 = vmatpush1.msra.mxu0 %v466
    %6224 = vmatprep.subr.mxu0 0.0
    %6225 = vmatpush1.msra.mxu0 0.0
    %6226 = vmatprep.subr.mxu0 0.0
    %6227 = vmatpush1.msra.mxu0 0.0
    %6228 = vmatprep.subr.mxu0 0.0
    %6229 = vmatpush1.msra.mxu0 0.0
    %6230 = vmatprep.subr.mxu0 0.0
    %6231 = vmatpush1.msra.mxu0 0.0
    %6232 = vmatprep.subr.mxu0 0.0
    %6233 = vmatpush1.msra.mxu0 0.0
    %6234 = vmatprep.subr.mxu0 0.0
    %6235 = vmatpush1.msra.mxu0 0.0
    %6236 = vmatprep.subr.mxu0 0.0
    %6237 = vmatpush1.msra.mxu0 0.0
    %6238 = vmatprep.subr.mxu0 0.0
    %6239 = vmatpush1.msra.mxu0 0.0
    %6240 = vmatprep.subr.mxu0 0.0
    %6241 = vmatpush1.msra.mxu0 0.0
    %6242 = vmatprep.subr.mxu0 0.0
    %6243 = vmatpush1.msra.mxu0 0.0
    %6244 = vmatprep.subr.mxu0 0.0
    %6245 = vmatpush1.msra.mxu0 0.0
    %6246 = vmatprep.subr.mxu0 0.0
    %6247 = vmatpush1.msra.mxu0 0.0
    %6248 = vmatprep.subr.mxu0 0.0
    %6249 = vmatpush1.msra.mxu0 0.0
    %6250 = vmatprep.subr.mxu0 0.0
    %6251 = vmatpush1.msra.mxu0 0.0
    %6252 = vmatprep.subr.mxu0 0.0
    %6253 = vmatpush1.msra.mxu0 0.0
    %6254 = vmatprep.subr.mxu0 0.0
    %6255 = vmatpush1.msra.mxu0 0.0
    %6256 = vmatprep.mubr.f32.mxu0 0.0
    %6257 = vmatmul.mubr.f32.gmra.mrb[0].mxu0 %v5978
    %v6258 = vpop.f32.mrb[0].mxu0
    %v6259 = vadd.f32 %v6117, %v6258
    %v6260 = vpop.f32.mrb[0].mxu0
    %v6261 = vadd.f32 %v6119, %v6260
    %6262 = vdwg.mxu0
    %v6263 = vadd.f32 %v6188, %v5280
    %v6264 = vadd.f32 %v6190, %v5284
    %v6265 = vadd.f32 %v6259, %v5288
    %v6266 = vadd.f32 %v6261, %v5292
    %v6267 = vxor.u32 %v6263, 2147483648
    %v6268 = vxor.u32 %v6264, 2147483648
    %v6269 = vxor.u32 %v6265, 2147483648
    %v6270 = vmul.f32 %v6267, 1.442695
    %v6271 = vpow.pop %v6270
    %v6272 = vmul.f32 %v6268, 1.442695
    %v6273 = vpow.pop %v6272
    %v6274 = vmul.f32 %v6269, 1.442695
    %v6275 = vpow.pop %v6274
    %v6276 = vadd.f32 %v6271, 1.0
    %v6277 = vadd.f32 %v6273, 1.0
    %v6278 = vadd.f32 %v6275, 1.0
    %v6279 = vrcp.pop %v6276
    %v6280 = vmul.f32 1.0, %v6279
    %v6281 = vrcp.pop %v6277
    %v6282 = vmul.f32 1.0, %v6281
    %v6283 = vrcp.pop %v6278
    %v6284 = vmul.f32 1.0, %v6283
    %v6285 = vtanh.pop %v6266
    %v6286 = vmul.f32 %v6282, %v5805
    %v6287 = vmul.f32 %v6280, %v6285
    %v6288 = vadd.f32 %v6286, %v6287
    %v6289 = vtanh.pop %v6288
    %v6290 = vmul.f32 %v6284, %v6289
    %6291 = vst [vmem:[#allocation2 + $0x2] sm:$0x1] %v6290
    %6292 = vmatprep.subr.mxu0 %v341
    %6293 = vmatpush1.msra.mxu0 %v340
    %6294 = vmatprep.subr.mxu0 %v345
    %6295 = vmatpush1.msra.mxu0 %v344
    %6296 = vmatprep.subr.mxu0 %v349
    %6297 = vmatpush1.msra.mxu0 %v348
    %6298 = vmatprep.subr.mxu0 %v353
    %6299 = vmatpush1.msra.mxu0 %v352
    %6300 = vmatprep.subr.mxu0 %v357
    %6301 = vmatpush1.msra.mxu0 %v356
    %6302 = vmatprep.subr.mxu0 %v361
    %6303 = vmatpush1.msra.mxu0 %v360
    %6304 = vmatprep.subr.mxu0 %v365
    %6305 = vmatpush1.msra.mxu0 %v364
    %6306 = vmatprep.subr.mxu0 %v369
    %6307 = vmatpush1.msra.mxu0 %v368
    %6308 = vmatprep.subr.mxu0 %v373
    %6309 = vmatpush1.msra.mxu0 %v372
    %6310 = vmatprep.subr.mxu0 %v377
    %6311 = vmatpush1.msra.mxu0 %v376
    %6312 = vmatprep.subr.mxu0 %v381
    %6313 = vmatpush1.msra.mxu0 %v380
    %6314 = vmatprep.subr.mxu0 %v385
    %6315 = vmatpush1.msra.mxu0 %v384
    %6316 = vmatprep.subr.mxu0 %v389
    %6317 = vmatpush1.msra.mxu0 %v388
    %6318 = vmatprep.subr.mxu0 %v393
    %6319 = vmatpush1.msra.mxu0 %v392
    %6320 = vmatprep.subr.mxu0 %v397
    %6321 = vmatpush1.msra.mxu0 %v396
    %6322 = vmatprep.subr.mxu0 %v401
    %6323 = vmatpush1.msra.mxu0 %v400
    %6324 = vmatprep.subr.mxu0 0.0
    %6325 = vmatpush1.msra.mxu0 0.0
    %6326 = vmatprep.subr.mxu0 0.0
    %6327 = vmatpush1.msra.mxu0 0.0
    %6328 = vmatprep.subr.mxu0 0.0
    %6329 = vmatpush1.msra.mxu0 0.0
    %6330 = vmatprep.subr.mxu0 0.0
    %6331 = vmatpush1.msra.mxu0 0.0
    %6332 = vmatprep.subr.mxu0 0.0
    %6333 = vmatpush1.msra.mxu0 0.0
    %6334 = vmatprep.subr.mxu0 0.0
    %6335 = vmatpush1.msra.mxu0 0.0
    %6336 = vmatprep.subr.mxu0 0.0
    %6337 = vmatpush1.msra.mxu0 0.0
    %6338 = vmatprep.subr.mxu0 0.0
    %6339 = vmatpush1.msra.mxu0 0.0
    %6340 = vmatprep.subr.mxu0 0.0
    %6341 = vmatpush1.msra.mxu0 0.0
    %6342 = vmatprep.subr.mxu0 0.0
    %6343 = vmatpush1.msra.mxu0 0.0
    %6344 = vmatprep.subr.mxu0 0.0
    %6345 = vmatpush1.msra.mxu0 0.0
    %6346 = vmatprep.subr.mxu0 0.0
    %6347 = vmatpush1.msra.mxu0 0.0
    %6348 = vmatprep.subr.mxu0 0.0
    %6349 = vmatpush1.msra.mxu0 0.0
    %6350 = vmatprep.subr.mxu0 0.0
    %6351 = vmatpush1.msra.mxu0 0.0
    %6352 = vmatprep.subr.mxu0 0.0
    %6353 = vmatpush1.msra.mxu0 0.0
    %6354 = vmatprep.subr.mxu0 0.0
    %6355 = vmatpush1.msra.mxu0 0.0
    %6356 = vmatprep.mubr.f32.mxu0 0.0
    %6357 = vmatmul.mubr.f32.gmra.mrb[0].mxu0 %v5978
    %v6358 = vpop.f32.mrb[0].mxu0
    %v6359 = vadd.f32 0.0, %v6358
    %v6360 = vpop.f32.mrb[0].mxu0
    %v6361 = vadd.f32 0.0, %v6360
    %6362 = vdwg.mxu0
    %6363 = vmatprep.subr.mxu0 %v343
    %6364 = vmatpush1.msra.mxu0 %v342
    %6365 = vmatprep.subr.mxu0 %v347
    %6366 = vmatpush1.msra.mxu0 %v346
    %6367 = vmatprep.subr.mxu0 %v351
    %6368 = vmatpush1.msra.mxu0 %v350
    %6369 = vmatprep.subr.mxu0 %v355
    %6370 = vmatpush1.msra.mxu0 %v354
    %6371 = vmatprep.subr.mxu0 %v359
    %6372 = vmatpush1.msra.mxu0 %v358
    %6373 = vmatprep.subr.mxu0 %v363
    %6374 = vmatpush1.msra.mxu0 %v362
    %6375 = vmatprep.subr.mxu0 %v367
    %6376 = vmatpush1.msra.mxu0 %v366
    %6377 = vmatprep.subr.mxu0 %v371
    %6378 = vmatpush1.msra.mxu0 %v370
    %6379 = vmatprep.subr.mxu0 %v375
    %6380 = vmatpush1.msra.mxu0 %v374
    %6381 = vmatprep.subr.mxu0 %v379
    %6382 = vmatpush1.msra.mxu0 %v378
    %6383 = vmatprep.subr.mxu0 %v383
    %6384 = vmatpush1.msra.mxu0 %v382
    %6385 = vmatprep.subr.mxu0 %v387
    %6386 = vmatpush1.msra.mxu0 %v386
    %6387 = vmatprep.subr.mxu0 %v391
    %6388 = vmatpush1.msra.mxu0 %v390
    %6389 = vmatprep.subr.mxu0 %v395
    %6390 = vmatpush1.msra.mxu0 %v394
    %6391 = vmatprep.subr.mxu0 %v399
    %6392 = vmatpush1.msra.mxu0 %v398
    %6393 = vmatprep.subr.mxu0 %v403
    %6394 = vmatpush1.msra.mxu0 %v402
    %6395 = vmatprep.subr.mxu0 0.0
    %6396 = vmatpush1.msra.mxu0 0.0
    %6397 = vmatprep.subr.mxu0 0.0
    %6398 = vmatpush1.msra.mxu0 0.0
    %6399 = vmatprep.subr.mxu0 0.0
    %6400 = vmatpush1.msra.mxu0 0.0
    %6401 = vmatprep.subr.mxu0 0.0
    %6402 = vmatpush1.msra.mxu0 0.0
    %6403 = vmatprep.subr.mxu0 0.0
    %6404 = vmatpush1.msra.mxu0 0.0
    %6405 = vmatprep.subr.mxu0 0.0
    %6406 = vmatpush1.msra.mxu0 0.0
    %6407 = vmatprep.subr.mxu0 0.0
    %6408 = vmatpush1.msra.mxu0 0.0
    %6409 = vmatprep.subr.mxu0 0.0
    %6410 = vmatpush1.msra.mxu0 0.0
    %6411 = vmatprep.subr.mxu0 0.0
    %6412 = vmatpush1.msra.mxu0 0.0
    %6413 = vmatprep.subr.mxu0 0.0
    %6414 = vmatpush1.msra.mxu0 0.0
    %6415 = vmatprep.subr.mxu0 0.0
    %6416 = vmatpush1.msra.mxu0 0.0
    %6417 = vmatprep.subr.mxu0 0.0
    %6418 = vmatpush1.msra.mxu0 0.0
    %6419 = vmatprep.subr.mxu0 0.0
    %6420 = vmatpush1.msra.mxu0 0.0
    %6421 = vmatprep.subr.mxu0 0.0
    %6422 = vmatpush1.msra.mxu0 0.0
    %6423 = vmatprep.subr.mxu0 0.0
    %6424 = vmatpush1.msra.mxu0 0.0
    %6425 = vmatprep.subr.mxu0 0.0
    %6426 = vmatpush1.msra.mxu0 0.0
    %6427 = vmatprep.mubr.f32.mxu0 0.0
    %6428 = vmatmul.mubr.f32.gmra.mrb[0].mxu0 %v5978
    %v6429 = vpop.f32.mrb[0].mxu0
    %v6430 = vadd.f32 0.0, %v6429
    %v6431 = vpop.f32.mrb[0].mxu0
    %v6432 = vadd.f32 0.0, %v6431
    %6433 = vdwg.mxu0
    %v6434 = vadd.f32 %v4747, %v6359
    %v6435 = vadd.f32 %v4749, %v6361
    %v6436 = vadd.f32 %v4818, %v6430
    %v6437 = vadd.f32 %v4820, %v6432
    %v6438 = vxor.u32 %v6434, 2147483648
    %v6439 = vxor.u32 %v6435, 2147483648
    %v6440 = vxor.u32 %v6436, 2147483648
    %v6441 = vmul.f32 %v6438, 1.442695
    %v6442 = vpow.pop %v6441
    %v6443 = vmul.f32 %v6439, 1.442695
    %v6444 = vpow.pop %v6443
    %v6445 = vmul.f32 %v6440, 1.442695
    %v6446 = vpow.pop %v6445
    %v6447 = vadd.f32 %v6442, 1.0
    %v6448 = vadd.f32 %v6444, 1.0
    %v6449 = vadd.f32 %v6446, 1.0
    %v6450 = vrcp.pop %v6447
    %v6451 = vmul.f32 1.0, %v6450
    %v6452 = vrcp.pop %v6448
    %v6453 = vmul.f32 1.0, %v6452
    %v6454 = vrcp.pop %v6449
    %v6455 = vmul.f32 1.0, %v6454
    %v6456 = vtanh.pop %v6437
    %v6457 = vmul.f32 %v6453, %v5976
    %v6458 = vmul.f32 %v6451, %v6456
    %v6459 = vadd.f32 %v6457, %v6458
    %v6460 = vtanh.pop %v6459
    %v6461 = vmul.f32 %v6455, %v6460
    %6462 = vmatprep.subr.mxu0 %v469
    %6463 = vmatpush1.msra.mxu0 %v468
    %6464 = vmatprep.subr.mxu0 %v473
    %6465 = vmatpush1.msra.mxu0 %v472
    %6466 = vmatprep.subr.mxu0 %v477
    %6467 = vmatpush1.msra.mxu0 %v476
    %6468 = vmatprep.subr.mxu0 %v481
    %6469 = vmatpush1.msra.mxu0 %v480
    %6470 = vmatprep.subr.mxu0 %v485
    %6471 = vmatpush1.msra.mxu0 %v484
    %6472 = vmatprep.subr.mxu0 %v489
    %6473 = vmatpush1.msra.mxu0 %v488
    %6474 = vmatprep.subr.mxu0 %v493
    %6475 = vmatpush1.msra.mxu0 %v492
    %6476 = vmatprep.subr.mxu0 %v497
    %6477 = vmatpush1.msra.mxu0 %v496
    %6478 = vmatprep.subr.mxu0 %v501
    %6479 = vmatpush1.msra.mxu0 %v500
    %6480 = vmatprep.subr.mxu0 %v505
    %6481 = vmatpush1.msra.mxu0 %v504
    %6482 = vmatprep.subr.mxu0 %v509
    %6483 = vmatpush1.msra.mxu0 %v508
    %6484 = vmatprep.subr.mxu0 %v513
    %6485 = vmatpush1.msra.mxu0 %v512
    %6486 = vmatprep.subr.mxu0 %v517
    %6487 = vmatpush1.msra.mxu0 %v516
    %6488 = vmatprep.subr.mxu0 %v521
    %6489 = vmatpush1.msra.mxu0 %v520
    %6490 = vmatprep.subr.mxu0 %v525
    %6491 = vmatpush1.msra.mxu0 %v524
    %6492 = vmatprep.subr.mxu0 %v529
    %6493 = vmatpush1.msra.mxu0 %v528
    %6494 = vmatprep.subr.mxu0 0.0
    %6495 = vmatpush1.msra.mxu0 0.0
    %6496 = vmatprep.subr.mxu0 0.0
    %6497 = vmatpush1.msra.mxu0 0.0
    %6498 = vmatprep.subr.mxu0 0.0
    %6499 = vmatpush1.msra.mxu0 0.0
    %6500 = vmatprep.subr.mxu0 0.0
    %6501 = vmatpush1.msra.mxu0 0.0
    %6502 = vmatprep.subr.mxu0 0.0
    %6503 = vmatpush1.msra.mxu0 0.0
    %6504 = vmatprep.subr.mxu0 0.0
    %6505 = vmatpush1.msra.mxu0 0.0
    %6506 = vmatprep.subr.mxu0 0.0
    %6507 = vmatpush1.msra.mxu0 0.0
    %6508 = vmatprep.subr.mxu0 0.0
    %6509 = vmatpush1.msra.mxu0 0.0
    %6510 = vmatprep.subr.mxu0 0.0
    %6511 = vmatpush1.msra.mxu0 0.0
    %6512 = vmatprep.subr.mxu0 0.0
    %6513 = vmatpush1.msra.mxu0 0.0
    %6514 = vmatprep.subr.mxu0 0.0
    %6515 = vmatpush1.msra.mxu0 0.0
    %6516 = vmatprep.subr.mxu0 0.0
    %6517 = vmatpush1.msra.mxu0 0.0
    %6518 = vmatprep.subr.mxu0 0.0
    %6519 = vmatpush1.msra.mxu0 0.0
    %6520 = vmatprep.subr.mxu0 0.0
    %6521 = vmatpush1.msra.mxu0 0.0
    %6522 = vmatprep.subr.mxu0 0.0
    %6523 = vmatpush1.msra.mxu0 0.0
    %6524 = vmatprep.subr.mxu0 0.0
    %6525 = vmatpush1.msra.mxu0 0.0
    %6526 = vmatprep.mubr.f32.mxu0 0.0
    %6527 = vmatmul.mubr.f32.gmra.mrb[0].mxu0 %v6290
    %v6528 = vpop.f32.mrb[0].mxu0
    %v6529 = vadd.f32 0.0, %v6528
    %v6530 = vpop.f32.mrb[0].mxu0
    %v6531 = vadd.f32 0.0, %v6530
    %6532 = vdwg.mxu0
    %6533 = vmatprep.subr.mxu0 %v471
    %6534 = vmatpush1.msra.mxu0 %v470
    %6535 = vmatprep.subr.mxu0 %v475
    %6536 = vmatpush1.msra.mxu0 %v474
    %6537 = vmatprep.subr.mxu0 %v479
    %6538 = vmatpush1.msra.mxu0 %v478
    %6539 = vmatprep.subr.mxu0 %v483
    %6540 = vmatpush1.msra.mxu0 %v482
    %6541 = vmatprep.subr.mxu0 %v487
    %6542 = vmatpush1.msra.mxu0 %v486
    %6543 = vmatprep.subr.mxu0 %v491
    %6544 = vmatpush1.msra.mxu0 %v490
    %6545 = vmatprep.subr.mxu0 %v495
    %6546 = vmatpush1.msra.mxu0 %v494
    %6547 = vmatprep.subr.mxu0 %v499
    %6548 = vmatpush1.msra.mxu0 %v498
    %6549 = vmatprep.subr.mxu0 %v503
    %6550 = vmatpush1.msra.mxu0 %v502
    %6551 = vmatprep.subr.mxu0 %v507
    %6552 = vmatpush1.msra.mxu0 %v506
    %6553 = vmatprep.subr.mxu0 %v511
    %6554 = vmatpush1.msra.mxu0 %v510
    %6555 = vmatprep.subr.mxu0 %v515
    %6556 = vmatpush1.msra.mxu0 %v514
    %6557 = vmatprep.subr.mxu0 %v519
    %6558 = vmatpush1.msra.mxu0 %v518
    %6559 = vmatprep.subr.mxu0 %v523
    %6560 = vmatpush1.msra.mxu0 %v522
    %6561 = vmatprep.subr.mxu0 %v527
    %6562 = vmatpush1.msra.mxu0 %v526
    %6563 = vmatprep.subr.mxu0 %v531
    %6564 = vmatpush1.msra.mxu0 %v530
    %6565 = vmatprep.subr.mxu0 0.0
    %6566 = vmatpush1.msra.mxu0 0.0
    %6567 = vmatprep.subr.mxu0 0.0
    %6568 = vmatpush1.msra.mxu0 0.0
    %6569 = vmatprep.subr.mxu0 0.0
    %6570 = vmatpush1.msra.mxu0 0.0
    %6571 = vmatprep.subr.mxu0 0.0
    %6572 = vmatpush1.msra.mxu0 0.0
    %6573 = vmatprep.subr.mxu0 0.0
    %6574 = vmatpush1.msra.mxu0 0.0
    %6575 = vmatprep.subr.mxu0 0.0
    %6576 = vmatpush1.msra.mxu0 0.0
    %6577 = vmatprep.subr.mxu0 0.0
    %6578 = vmatpush1.msra.mxu0 0.0
    %6579 = vmatprep.subr.mxu0 0.0
    %6580 = vmatpush1.msra.mxu0 0.0
    %6581 = vmatprep.subr.mxu0 0.0
    %6582 = vmatpush1.msra.mxu0 0.0
    %6583 = vmatprep.subr.mxu0 0.0
    %6584 = vmatpush1.msra.mxu0 0.0
    %6585 = vmatprep.subr.mxu0 0.0
    %6586 = vmatpush1.msra.mxu0 0.0
    %6587 = vmatprep.subr.mxu0 0.0
    %6588 = vmatpush1.msra.mxu0 0.0
    %6589 = vmatprep.subr.mxu0 0.0
    %6590 = vmatpush1.msra.mxu0 0.0
    %6591 = vmatprep.subr.mxu0 0.0
    %6592 = vmatpush1.msra.mxu0 0.0
    %6593 = vmatprep.subr.mxu0 0.0
    %6594 = vmatpush1.msra.mxu0 0.0
    %6595 = vmatprep.subr.mxu0 0.0
    %6596 = vmatpush1.msra.mxu0 0.0
    %6597 = vmatprep.mubr.f32.mxu0 0.0
    %6598 = vmatmul.mubr.f32.gmra.mrb[0].mxu0 %v6290
    %v6599 = vpop.f32.mrb[0].mxu0
    %v6600 = vadd.f32 0.0, %v6599
    %v6601 = vpop.f32.mrb[0].mxu0
    %v6602 = vadd.f32 0.0, %v6601
    %6603 = vdwg.mxu0
    %6604 = vmatprep.subr.mxu0 %v405
    %6605 = vmatpush1.msra.mxu0 %v404
    %6606 = vmatprep.subr.mxu0 %v409
    %6607 = vmatpush1.msra.mxu0 %v408
    %6608 = vmatprep.subr.mxu0 %v413
    %6609 = vmatpush1.msra.mxu0 %v412
    %6610 = vmatprep.subr.mxu0 %v417
    %6611 = vmatpush1.msra.mxu0 %v416
    %6612 = vmatprep.subr.mxu0 %v421
    %6613 = vmatpush1.msra.mxu0 %v420
    %6614 = vmatprep.subr.mxu0 %v425
    %6615 = vmatpush1.msra.mxu0 %v424
    %6616 = vmatprep.subr.mxu0 %v429
    %6617 = vmatpush1.msra.mxu0 %v428
    %6618 = vmatprep.subr.mxu0 %v433
    %6619 = vmatpush1.msra.mxu0 %v432
    %6620 = vmatprep.subr.mxu0 %v437
    %6621 = vmatpush1.msra.mxu0 %v436
    %6622 = vmatprep.subr.mxu0 %v441
    %6623 = vmatpush1.msra.mxu0 %v440
    %6624 = vmatprep.subr.mxu0 %v445
    %6625 = vmatpush1.msra.mxu0 %v444
    %6626 = vmatprep.subr.mxu0 %v449
    %6627 = vmatpush1.msra.mxu0 %v448
    %6628 = vmatprep.subr.mxu0 %v453
    %6629 = vmatpush1.msra.mxu0 %v452
    %6630 = vmatprep.subr.mxu0 %v457
    %6631 = vmatpush1.msra.mxu0 %v456
    %6632 = vmatprep.subr.mxu0 %v461
    %6633 = vmatpush1.msra.mxu0 %v460
    %6634 = vmatprep.subr.mxu0 %v465
    %6635 = vmatpush1.msra.mxu0 %v464
    %6636 = vmatprep.subr.mxu0 0.0
    %6637 = vmatpush1.msra.mxu0 0.0
    %6638 = vmatprep.subr.mxu0 0.0
    %6639 = vmatpush1.msra.mxu0 0.0
    %6640 = vmatprep.subr.mxu0 0.0
    %6641 = vmatpush1.msra.mxu0 0.0
    %6642 = vmatprep.subr.mxu0 0.0
    %6643 = vmatpush1.msra.mxu0 0.0
    %6644 = vmatprep.subr.mxu0 0.0
    %6645 = vmatpush1.msra.mxu0 0.0
    %6646 = vmatprep.subr.mxu0 0.0
    %6647 = vmatpush1.msra.mxu0 0.0
    %6648 = vmatprep.subr.mxu0 0.0
    %6649 = vmatpush1.msra.mxu0 0.0
    %6650 = vmatprep.subr.mxu0 0.0
    %6651 = vmatpush1.msra.mxu0 0.0
    %6652 = vmatprep.subr.mxu0 0.0
    %6653 = vmatpush1.msra.mxu0 0.0
    %6654 = vmatprep.subr.mxu0 0.0
    %6655 = vmatpush1.msra.mxu0 0.0
    %6656 = vmatprep.subr.mxu0 0.0
    %6657 = vmatpush1.msra.mxu0 0.0
    %6658 = vmatprep.subr.mxu0 0.0
    %6659 = vmatpush1.msra.mxu0 0.0
    %6660 = vmatprep.subr.mxu0 0.0
    %6661 = vmatpush1.msra.mxu0 0.0
    %6662 = vmatprep.subr.mxu0 0.0
    %6663 = vmatpush1.msra.mxu0 0.0
    %6664 = vmatprep.subr.mxu0 0.0
    %6665 = vmatpush1.msra.mxu0 0.0
    %6666 = vmatprep.subr.mxu0 0.0
    %6667 = vmatpush1.msra.mxu0 0.0
    %6668 = vmatprep.mubr.f32.mxu0 0.0
    %6669 = vmatmul.mubr.f32.gmra.mrb[0].mxu0 %v6461
    %v6670 = vpop.f32.mrb[0].mxu0
    %v6671 = vadd.f32 %v6529, %v6670
    %v6672 = vpop.f32.mrb[0].mxu0
    %v6673 = vadd.f32 %v6531, %v6672
    %6674 = vdwg.mxu0
    %6675 = vmatprep.subr.mxu0 %v407
    %6676 = vmatpush1.msra.mxu0 %v406
    %6677 = vmatprep.subr.mxu0 %v411
    %6678 = vmatpush1.msra.mxu0 %v410
    %6679 = vmatprep.subr.mxu0 %v415
    %6680 = vmatpush1.msra.mxu0 %v414
    %6681 = vmatprep.subr.mxu0 %v419
    %6682 = vmatpush1.msra.mxu0 %v418
    %6683 = vmatprep.subr.mxu0 %v423
    %6684 = vmatpush1.msra.mxu0 %v422
    %6685 = vmatprep.subr.mxu0 %v427
    %6686 = vmatpush1.msra.mxu0 %v426
    %6687 = vmatprep.subr.mxu0 %v431
    %6688 = vmatpush1.msra.mxu0 %v430
    %6689 = vmatprep.subr.mxu0 %v435
    %6690 = vmatpush1.msra.mxu0 %v434
    %6691 = vmatprep.subr.mxu0 %v439
    %6692 = vmatpush1.msra.mxu0 %v438
    %6693 = vmatprep.subr.mxu0 %v443
    %6694 = vmatpush1.msra.mxu0 %v442
    %6695 = vmatprep.subr.mxu0 %v447
    %6696 = vmatpush1.msra.mxu0 %v446
    %6697 = vmatprep.subr.mxu0 %v451
    %6698 = vmatpush1.msra.mxu0 %v450
    %6699 = vmatprep.subr.mxu0 %v455
    %6700 = vmatpush1.msra.mxu0 %v454
    %6701 = vmatprep.subr.mxu0 %v459
    %6702 = vmatpush1.msra.mxu0 %v458
    %6703 = vmatprep.subr.mxu0 %v463
    %6704 = vmatpush1.msra.mxu0 %v462
    %6705 = vmatprep.subr.mxu0 %v467
    %6706 = vmatpush1.msra.mxu0 %v466
    %6707 = vmatprep.subr.mxu0 0.0
    %6708 = vmatpush1.msra.mxu0 0.0
    %6709 = vmatprep.subr.mxu0 0.0
    %6710 = vmatpush1.msra.mxu0 0.0
    %6711 = vmatprep.subr.mxu0 0.0
    %6712 = vmatpush1.msra.mxu0 0.0
    %6713 = vmatprep.subr.mxu0 0.0
    %6714 = vmatpush1.msra.mxu0 0.0
    %6715 = vmatprep.subr.mxu0 0.0
    %6716 = vmatpush1.msra.mxu0 0.0
    %6717 = vmatprep.subr.mxu0 0.0
    %6718 = vmatpush1.msra.mxu0 0.0
    %6719 = vmatprep.subr.mxu0 0.0
    %6720 = vmatpush1.msra.mxu0 0.0
    %6721 = vmatprep.subr.mxu0 0.0
    %6722 = vmatpush1.msra.mxu0 0.0
    %6723 = vmatprep.subr.mxu0 0.0
    %6724 = vmatpush1.msra.mxu0 0.0
    %6725 = vmatprep.subr.mxu0 0.0
    %6726 = vmatpush1.msra.mxu0 0.0
    %6727 = vmatprep.subr.mxu0 0.0
    %6728 = vmatpush1.msra.mxu0 0.0
    %6729 = vmatprep.subr.mxu0 0.0
    %6730 = vmatpush1.msra.mxu0 0.0
    %6731 = vmatprep.subr.mxu0 0.0
    %6732 = vmatpush1.msra.mxu0 0.0
    %6733 = vmatprep.subr.mxu0 0.0
    %6734 = vmatpush1.msra.mxu0 0.0
    %6735 = vmatprep.subr.mxu0 0.0
    %6736 = vmatpush1.msra.mxu0 0.0
    %6737 = vmatprep.subr.mxu0 0.0
    %6738 = vmatpush1.msra.mxu0 0.0
    %6739 = vmatprep.mubr.f32.mxu0 0.0
    %6740 = vmatmul.mubr.f32.gmra.mrb[0].mxu0 %v6461
    %v6741 = vpop.f32.mrb[0].mxu0
    %v6742 = vadd.f32 %v6600, %v6741
    %v6743 = vpop.f32.mrb[0].mxu0
    %v6744 = vadd.f32 %v6602, %v6743
    %6745 = vdwg.mxu0
    %v6746 = vadd.f32 %v6671, %v5280
    %v6747 = vadd.f32 %v6673, %v5284
    %v6748 = vadd.f32 %v6742, %v5288
    %v6749 = vadd.f32 %v6744, %v5292
    %v6750 = vxor.u32 %v6746, 2147483648
    %v6751 = vxor.u32 %v6747, 2147483648
    %v6752 = vxor.u32 %v6748, 2147483648
    %v6753 = vmul.f32 %v6750, 1.442695
    %v6754 = vpow.pop %v6753
    %v6755 = vmul.f32 %v6751, 1.442695
    %v6756 = vpow.pop %v6755
    %v6757 = vmul.f32 %v6752, 1.442695
    %v6758 = vpow.pop %v6757
    %v6759 = vadd.f32 %v6754, 1.0
    %v6760 = vadd.f32 %v6756, 1.0
    %v6761 = vadd.f32 %v6758, 1.0
    %v6762 = vrcp.pop %v6759
    %v6763 = vmul.f32 1.0, %v6762
    %v6764 = vrcp.pop %v6760
    %v6765 = vmul.f32 1.0, %v6764
    %v6766 = vrcp.pop %v6761
    %v6767 = vmul.f32 1.0, %v6766
    %v6768 = vtanh.pop %v6749
    %v6769 = vmul.f32 %v6765, %v6288
    %v6770 = vmul.f32 %v6763, %v6768
    %v6771 = vadd.f32 %v6769, %v6770
    %v6772 = vtanh.pop %v6771
    %v6773 = vmul.f32 %v6767, %v6772
    %6774 = vst [vmem:[#allocation2 + $0x3] sm:$0x1] %v6773
    %6775 = vmatprep.subr.mxu0 %v341
    %6776 = vmatpush1.msra.mxu0 %v340
    %6777 = vmatprep.subr.mxu0 %v345
    %6778 = vmatpush1.msra.mxu0 %v344
    %6779 = vmatprep.subr.mxu0 %v349
    %6780 = vmatpush1.msra.mxu0 %v348
    %6781 = vmatprep.subr.mxu0 %v353
    %6782 = vmatpush1.msra.mxu0 %v352
    %6783 = vmatprep.subr.mxu0 %v357
    %6784 = vmatpush1.msra.mxu0 %v356
    %6785 = vmatprep.subr.mxu0 %v361
    %6786 = vmatpush1.msra.mxu0 %v360
    %6787 = vmatprep.subr.mxu0 %v365
    %6788 = vmatpush1.msra.mxu0 %v364
    %6789 = vmatprep.subr.mxu0 %v369
    %6790 = vmatpush1.msra.mxu0 %v368
    %6791 = vmatprep.subr.mxu0 %v373
    %6792 = vmatpush1.msra.mxu0 %v372
    %6793 = vmatprep.subr.mxu0 %v377
    %6794 = vmatpush1.msra.mxu0 %v376
    %6795 = vmatprep.subr.mxu0 %v381
    %6796 = vmatpush1.msra.mxu0 %v380
    %6797 = vmatprep.subr.mxu0 %v385
    %6798 = vmatpush1.msra.mxu0 %v384
    %6799 = vmatprep.subr.mxu0 %v389
    %6800 = vmatpush1.msra.mxu0 %v388
    %6801 = vmatprep.subr.mxu0 %v393
    %6802 = vmatpush1.msra.mxu0 %v392
    %6803 = vmatprep.subr.mxu0 %v397
    %6804 = vmatpush1.msra.mxu0 %v396
    %6805 = vmatprep.subr.mxu0 %v401
    %6806 = vmatpush1.msra.mxu0 %v400
    %6807 = vmatprep.subr.mxu0 0.0
    %6808 = vmatpush1.msra.mxu0 0.0
    %6809 = vmatprep.subr.mxu0 0.0
    %6810 = vmatpush1.msra.mxu0 0.0
    %6811 = vmatprep.subr.mxu0 0.0
    %6812 = vmatpush1.msra.mxu0 0.0
    %6813 = vmatprep.subr.mxu0 0.0
    %6814 = vmatpush1.msra.mxu0 0.0
    %6815 = vmatprep.subr.mxu0 0.0
    %6816 = vmatpush1.msra.mxu0 0.0
    %6817 = vmatprep.subr.mxu0 0.0
    %6818 = vmatpush1.msra.mxu0 0.0
    %6819 = vmatprep.subr.mxu0 0.0
    %6820 = vmatpush1.msra.mxu0 0.0
    %6821 = vmatprep.subr.mxu0 0.0
    %6822 = vmatpush1.msra.mxu0 0.0
    %6823 = vmatprep.subr.mxu0 0.0
    %6824 = vmatpush1.msra.mxu0 0.0
    %6825 = vmatprep.subr.mxu0 0.0
    %6826 = vmatpush1.msra.mxu0 0.0
    %6827 = vmatprep.subr.mxu0 0.0
    %6828 = vmatpush1.msra.mxu0 0.0
    %6829 = vmatprep.subr.mxu0 0.0
    %6830 = vmatpush1.msra.mxu0 0.0
    %6831 = vmatprep.subr.mxu0 0.0
    %6832 = vmatpush1.msra.mxu0 0.0
    %6833 = vmatprep.subr.mxu0 0.0
    %6834 = vmatpush1.msra.mxu0 0.0
    %6835 = vmatprep.subr.mxu0 0.0
    %6836 = vmatpush1.msra.mxu0 0.0
    %6837 = vmatprep.subr.mxu0 0.0
    %6838 = vmatpush1.msra.mxu0 0.0
    %6839 = vmatprep.mubr.f32.mxu0 0.0
    %6840 = vmatmul.mubr.f32.gmra.mrb[0].mxu0 %v6461
    %v6841 = vpop.f32.mrb[0].mxu0
    %v6842 = vadd.f32 0.0, %v6841
    %v6843 = vpop.f32.mrb[0].mxu0
    %v6844 = vadd.f32 0.0, %v6843
    %6845 = vdwg.mxu0
    %6846 = vmatprep.subr.mxu0 %v343
    %6847 = vmatpush1.msra.mxu0 %v342
    %6848 = vmatprep.subr.mxu0 %v347
    %6849 = vmatpush1.msra.mxu0 %v346
    %6850 = vmatprep.subr.mxu0 %v351
    %6851 = vmatpush1.msra.mxu0 %v350
    %6852 = vmatprep.subr.mxu0 %v355
    %6853 = vmatpush1.msra.mxu0 %v354
    %6854 = vmatprep.subr.mxu0 %v359
    %6855 = vmatpush1.msra.mxu0 %v358
    %6856 = vmatprep.subr.mxu0 %v363
    %6857 = vmatpush1.msra.mxu0 %v362
    %6858 = vmatprep.subr.mxu0 %v367
    %6859 = vmatpush1.msra.mxu0 %v366
    %6860 = vmatprep.subr.mxu0 %v371
    %6861 = vmatpush1.msra.mxu0 %v370
    %6862 = vmatprep.subr.mxu0 %v375
    %6863 = vmatpush1.msra.mxu0 %v374
    %6864 = vmatprep.subr.mxu0 %v379
    %6865 = vmatpush1.msra.mxu0 %v378
    %6866 = vmatprep.subr.mxu0 %v383
    %6867 = vmatpush1.msra.mxu0 %v382
    %6868 = vmatprep.subr.mxu0 %v387
    %6869 = vmatpush1.msra.mxu0 %v386
    %6870 = vmatprep.subr.mxu0 %v391
    %6871 = vmatpush1.msra.mxu0 %v390
    %6872 = vmatprep.subr.mxu0 %v395
    %6873 = vmatpush1.msra.mxu0 %v394
    %6874 = vmatprep.subr.mxu0 %v399
    %6875 = vmatpush1.msra.mxu0 %v398
    %6876 = vmatprep.subr.mxu0 %v403
    %6877 = vmatpush1.msra.mxu0 %v402
    %6878 = vmatprep.subr.mxu0 0.0
    %6879 = vmatpush1.msra.mxu0 0.0
    %6880 = vmatprep.subr.mxu0 0.0
    %6881 = vmatpush1.msra.mxu0 0.0
    %6882 = vmatprep.subr.mxu0 0.0
    %6883 = vmatpush1.msra.mxu0 0.0
    %6884 = vmatprep.subr.mxu0 0.0
    %6885 = vmatpush1.msra.mxu0 0.0
    %6886 = vmatprep.subr.mxu0 0.0
    %6887 = vmatpush1.msra.mxu0 0.0
    %6888 = vmatprep.subr.mxu0 0.0
    %6889 = vmatpush1.msra.mxu0 0.0
    %6890 = vmatprep.subr.mxu0 0.0
    %6891 = vmatpush1.msra.mxu0 0.0
    %6892 = vmatprep.subr.mxu0 0.0
    %6893 = vmatpush1.msra.mxu0 0.0
    %6894 = vmatprep.subr.mxu0 0.0
    %6895 = vmatpush1.msra.mxu0 0.0
    %6896 = vmatprep.subr.mxu0 0.0
    %6897 = vmatpush1.msra.mxu0 0.0
    %6898 = vmatprep.subr.mxu0 0.0
    %6899 = vmatpush1.msra.mxu0 0.0
    %6900 = vmatprep.subr.mxu0 0.0
    %6901 = vmatpush1.msra.mxu0 0.0
    %6902 = vmatprep.subr.mxu0 0.0
    %6903 = vmatpush1.msra.mxu0 0.0
    %6904 = vmatprep.subr.mxu0 0.0
    %6905 = vmatpush1.msra.mxu0 0.0
    %6906 = vmatprep.subr.mxu0 0.0
    %6907 = vmatpush1.msra.mxu0 0.0
    %6908 = vmatprep.subr.mxu0 0.0
    %6909 = vmatpush1.msra.mxu0 0.0
    %6910 = vmatprep.mubr.f32.mxu0 0.0
    %6911 = vmatmul.mubr.f32.gmra.mrb[0].mxu0 %v6461
    %v6912 = vpop.f32.mrb[0].mxu0
    %v6913 = vadd.f32 0.0, %v6912
    %v6914 = vpop.f32.mrb[0].mxu0
    %v6915 = vadd.f32 0.0, %v6914
    %6916 = vdwg.mxu0
    %v6917 = vadd.f32 %v4747, %v6842
    %v6918 = vadd.f32 %v4749, %v6844
    %v6919 = vadd.f32 %v4818, %v6913
    %v6920 = vadd.f32 %v4820, %v6915
    %v6921 = vxor.u32 %v6917, 2147483648
    %v6922 = vxor.u32 %v6918, 2147483648
    %v6923 = vxor.u32 %v6919, 2147483648
    %v6924 = vmul.f32 %v6921, 1.442695
    %v6925 = vpow.pop %v6924
    %v6926 = vmul.f32 %v6922, 1.442695
    %v6927 = vpow.pop %v6926
    %v6928 = vmul.f32 %v6923, 1.442695
    %v6929 = vpow.pop %v6928
    %v6930 = vadd.f32 %v6925, 1.0
    %v6931 = vadd.f32 %v6927, 1.0
    %v6932 = vadd.f32 %v6929, 1.0
    %v6933 = vrcp.pop %v6930
    %v6934 = vmul.f32 1.0, %v6933
    %v6935 = vrcp.pop %v6931
    %v6936 = vmul.f32 1.0, %v6935
    %v6937 = vrcp.pop %v6932
    %v6938 = vmul.f32 1.0, %v6937
    %v6939 = vtanh.pop %v6920
    %v6940 = vmul.f32 %v6936, %v6459
    %v6941 = vmul.f32 %v6934, %v6939
    %v6942 = vadd.f32 %v6940, %v6941
    %v6943 = vtanh.pop %v6942
    %v6944 = vmul.f32 %v6938, %v6943
    %6945 = vmatprep.subr.mxu0 %v469
    %6946 = vmatpush1.msra.mxu0 %v468
    %6947 = vmatprep.subr.mxu0 %v473
    %6948 = vmatpush1.msra.mxu0 %v472
    %6949 = vmatprep.subr.mxu0 %v477
    %6950 = vmatpush1.msra.mxu0 %v476
    %6951 = vmatprep.subr.mxu0 %v481
    %6952 = vmatpush1.msra.mxu0 %v480
    %6953 = vmatprep.subr.mxu0 %v485
    %6954 = vmatpush1.msra.mxu0 %v484
    %6955 = vmatprep.subr.mxu0 %v489
    %6956 = vmatpush1.msra.mxu0 %v488
    %6957 = vmatprep.subr.mxu0 %v493
    %6958 = vmatpush1.msra.mxu0 %v492
    %6959 = vmatprep.subr.mxu0 %v497
    %6960 = vmatpush1.msra.mxu0 %v496
    %6961 = vmatprep.subr.mxu0 %v501
    %6962 = vmatpush1.msra.mxu0 %v500
    %6963 = vmatprep.subr.mxu0 %v505
    %6964 = vmatpush1.msra.mxu0 %v504
    %6965 = vmatprep.subr.mxu0 %v509
    %6966 = vmatpush1.msra.mxu0 %v508
    %6967 = vmatprep.subr.mxu0 %v513
    %6968 = vmatpush1.msra.mxu0 %v512
    %6969 = vmatprep.subr.mxu0 %v517
    %6970 = vmatpush1.msra.mxu0 %v516
    %6971 = vmatprep.subr.mxu0 %v521
    %6972 = vmatpush1.msra.mxu0 %v520
    %6973 = vmatprep.subr.mxu0 %v525
    %6974 = vmatpush1.msra.mxu0 %v524
    %6975 = vmatprep.subr.mxu0 %v529
    %6976 = vmatpush1.msra.mxu0 %v528
    %6977 = vmatprep.subr.mxu0 0.0
    %6978 = vmatpush1.msra.mxu0 0.0
    %6979 = vmatprep.subr.mxu0 0.0
    %6980 = vmatpush1.msra.mxu0 0.0
    %6981 = vmatprep.subr.mxu0 0.0
    %6982 = vmatpush1.msra.mxu0 0.0
    %6983 = vmatprep.subr.mxu0 0.0
    %6984 = vmatpush1.msra.mxu0 0.0
    %6985 = vmatprep.subr.mxu0 0.0
    %6986 = vmatpush1.msra.mxu0 0.0
    %6987 = vmatprep.subr.mxu0 0.0
    %6988 = vmatpush1.msra.mxu0 0.0
    %6989 = vmatprep.subr.mxu0 0.0
    %6990 = vmatpush1.msra.mxu0 0.0
    %6991 = vmatprep.subr.mxu0 0.0
    %6992 = vmatpush1.msra.mxu0 0.0
    %6993 = vmatprep.subr.mxu0 0.0
    %6994 = vmatpush1.msra.mxu0 0.0
    %6995 = vmatprep.subr.mxu0 0.0
    %6996 = vmatpush1.msra.mxu0 0.0
    %6997 = vmatprep.subr.mxu0 0.0
    %6998 = vmatpush1.msra.mxu0 0.0
    %6999 = vmatprep.subr.mxu0 0.0
    %7000 = vmatpush1.msra.mxu0 0.0
    %7001 = vmatprep.subr.mxu0 0.0
    %7002 = vmatpush1.msra.mxu0 0.0
    %7003 = vmatprep.subr.mxu0 0.0
    %7004 = vmatpush1.msra.mxu0 0.0
    %7005 = vmatprep.subr.mxu0 0.0
    %7006 = vmatpush1.msra.mxu0 0.0
    %7007 = vmatprep.subr.mxu0 0.0
    %7008 = vmatpush1.msra.mxu0 0.0
    %7009 = vmatprep.mubr.f32.mxu0 0.0
    %7010 = vmatmul.mubr.f32.gmra.mrb[0].mxu0 %v6773
    %v7011 = vpop.f32.mrb[0].mxu0
    %v7012 = vadd.f32 0.0, %v7011
    %v7013 = vpop.f32.mrb[0].mxu0
    %v7014 = vadd.f32 0.0, %v7013
    %7015 = vdwg.mxu0
    %7016 = vmatprep.subr.mxu0 %v471
    %7017 = vmatpush1.msra.mxu0 %v470
    %7018 = vmatprep.subr.mxu0 %v475
    %7019 = vmatpush1.msra.mxu0 %v474
    %7020 = vmatprep.subr.mxu0 %v479
    %7021 = vmatpush1.msra.mxu0 %v478
    %7022 = vmatprep.subr.mxu0 %v483
    %7023 = vmatpush1.msra.mxu0 %v482
    %7024 = vmatprep.subr.mxu0 %v487
    %7025 = vmatpush1.msra.mxu0 %v486
    %7026 = vmatprep.subr.mxu0 %v491
    %7027 = vmatpush1.msra.mxu0 %v490
    %7028 = vmatprep.subr.mxu0 %v495
    %7029 = vmatpush1.msra.mxu0 %v494
    %7030 = vmatprep.subr.mxu0 %v499
    %7031 = vmatpush1.msra.mxu0 %v498
    %7032 = vmatprep.subr.mxu0 %v503
    %7033 = vmatpush1.msra.mxu0 %v502
    %7034 = vmatprep.subr.mxu0 %v507
    %7035 = vmatpush1.msra.mxu0 %v506
    %7036 = vmatprep.subr.mxu0 %v511
    %7037 = vmatpush1.msra.mxu0 %v510
    %7038 = vmatprep.subr.mxu0 %v515
    %7039 = vmatpush1.msra.mxu0 %v514
    %7040 = vmatprep.subr.mxu0 %v519
    %7041 = vmatpush1.msra.mxu0 %v518
    %7042 = vmatprep.subr.mxu0 %v523
    %7043 = vmatpush1.msra.mxu0 %v522
    %7044 = vmatprep.subr.mxu0 %v527
    %7045 = vmatpush1.msra.mxu0 %v526
    %7046 = vmatprep.subr.mxu0 %v531
    %7047 = vmatpush1.msra.mxu0 %v530
    %7048 = vmatprep.subr.mxu0 0.0
    %7049 = vmatpush1.msra.mxu0 0.0
    %7050 = vmatprep.subr.mxu0 0.0
    %7051 = vmatpush1.msra.mxu0 0.0
    %7052 = vmatprep.subr.mxu0 0.0
    %7053 = vmatpush1.msra.mxu0 0.0
    %7054 = vmatprep.subr.mxu0 0.0
    %7055 = vmatpush1.msra.mxu0 0.0
    %7056 = vmatprep.subr.mxu0 0.0
    %7057 = vmatpush1.msra.mxu0 0.0
    %7058 = vmatprep.subr.mxu0 0.0
    %7059 = vmatpush1.msra.mxu0 0.0
    %7060 = vmatprep.subr.mxu0 0.0
    %7061 = vmatpush1.msra.mxu0 0.0
    %7062 = vmatprep.subr.mxu0 0.0
    %7063 = vmatpush1.msra.mxu0 0.0
    %7064 = vmatprep.subr.mxu0 0.0
    %7065 = vmatpush1.msra.mxu0 0.0
    %7066 = vmatprep.subr.mxu0 0.0
    %7067 = vmatpush1.msra.mxu0 0.0
    %7068 = vmatprep.subr.mxu0 0.0
    %7069 = vmatpush1.msra.mxu0 0.0
    %7070 = vmatprep.subr.mxu0 0.0
    %7071 = vmatpush1.msra.mxu0 0.0
    %7072 = vmatprep.subr.mxu0 0.0
    %7073 = vmatpush1.msra.mxu0 0.0
    %7074 = vmatprep.subr.mxu0 0.0
    %7075 = vmatpush1.msra.mxu0 0.0
    %7076 = vmatprep.subr.mxu0 0.0
    %7077 = vmatpush1.msra.mxu0 0.0
    %7078 = vmatprep.subr.mxu0 0.0
    %7079 = vmatpush1.msra.mxu0 0.0
    %7080 = vmatprep.mubr.f32.mxu0 0.0
    %7081 = vmatmul.mubr.f32.gmra.mrb[0].mxu0 %v6773
    %v7082 = vpop.f32.mrb[0].mxu0
    %v7083 = vadd.f32 0.0, %v7082
    %v7084 = vpop.f32.mrb[0].mxu0
    %v7085 = vadd.f32 0.0, %v7084
    %7086 = vdwg.mxu0
    %7087 = vmatprep.subr.mxu0 %v405
    %7088 = vmatpush1.msra.mxu0 %v404
    %7089 = vmatprep.subr.mxu0 %v409
    %7090 = vmatpush1.msra.mxu0 %v408
    %7091 = vmatprep.subr.mxu0 %v413
    %7092 = vmatpush1.msra.mxu0 %v412
    %7093 = vmatprep.subr.mxu0 %v417
    %7094 = vmatpush1.msra.mxu0 %v416
    %7095 = vmatprep.subr.mxu0 %v421
    %7096 = vmatpush1.msra.mxu0 %v420
    %7097 = vmatprep.subr.mxu0 %v425
    %7098 = vmatpush1.msra.mxu0 %v424
    %7099 = vmatprep.subr.mxu0 %v429
    %7100 = vmatpush1.msra.mxu0 %v428
    %7101 = vmatprep.subr.mxu0 %v433
    %7102 = vmatpush1.msra.mxu0 %v432
    %7103 = vmatprep.subr.mxu0 %v437
    %7104 = vmatpush1.msra.mxu0 %v436
    %7105 = vmatprep.subr.mxu0 %v441
    %7106 = vmatpush1.msra.mxu0 %v440
    %7107 = vmatprep.subr.mxu0 %v445
    %7108 = vmatpush1.msra.mxu0 %v444
    %7109 = vmatprep.subr.mxu0 %v449
    %7110 = vmatpush1.msra.mxu0 %v448
    %7111 = vmatprep.subr.mxu0 %v453
    %7112 = vmatpush1.msra.mxu0 %v452
    %7113 = vmatprep.subr.mxu0 %v457
    %7114 = vmatpush1.msra.mxu0 %v456
    %7115 = vmatprep.subr.mxu0 %v461
    %7116 = vmatpush1.msra.mxu0 %v460
    %7117 = vmatprep.subr.mxu0 %v465
    %7118 = vmatpush1.msra.mxu0 %v464
    %7119 = vmatprep.subr.mxu0 0.0
    %7120 = vmatpush1.msra.mxu0 0.0
    %7121 = vmatprep.subr.mxu0 0.0
    %7122 = vmatpush1.msra.mxu0 0.0
    %7123 = vmatprep.subr.mxu0 0.0
    %7124 = vmatpush1.msra.mxu0 0.0
    %7125 = vmatprep.subr.mxu0 0.0
    %7126 = vmatpush1.msra.mxu0 0.0
    %7127 = vmatprep.subr.mxu0 0.0
    %7128 = vmatpush1.msra.mxu0 0.0
    %7129 = vmatprep.subr.mxu0 0.0
    %7130 = vmatpush1.msra.mxu0 0.0
    %7131 = vmatprep.subr.mxu0 0.0
    %7132 = vmatpush1.msra.mxu0 0.0
    %7133 = vmatprep.subr.mxu0 0.0
    %7134 = vmatpush1.msra.mxu0 0.0
    %7135 = vmatprep.subr.mxu0 0.0
    %7136 = vmatpush1.msra.mxu0 0.0
    %7137 = vmatprep.subr.mxu0 0.0
    %7138 = vmatpush1.msra.mxu0 0.0
    %7139 = vmatprep.subr.mxu0 0.0
    %7140 = vmatpush1.msra.mxu0 0.0
    %7141 = vmatprep.subr.mxu0 0.0
    %7142 = vmatpush1.msra.mxu0 0.0
    %7143 = vmatprep.subr.mxu0 0.0
    %7144 = vmatpush1.msra.mxu0 0.0
    %7145 = vmatprep.subr.mxu0 0.0
    %7146 = vmatpush1.msra.mxu0 0.0
    %7147 = vmatprep.subr.mxu0 0.0
    %7148 = vmatpush1.msra.mxu0 0.0
    %7149 = vmatprep.subr.mxu0 0.0
    %7150 = vmatpush1.msra.mxu0 0.0
    %7151 = vmatprep.mubr.f32.mxu0 0.0
    %7152 = vmatmul.mubr.f32.gmra.mrb[0].mxu0 %v6944
    %v7153 = vpop.f32.mrb[0].mxu0
    %v7154 = vadd.f32 %v7012, %v7153
    %v7155 = vpop.f32.mrb[0].mxu0
    %v7156 = vadd.f32 %v7014, %v7155
    %7157 = vdwg.mxu0
    %7158 = vmatprep.subr.mxu0 %v407
    %7159 = vmatpush1.msra.mxu0 %v406
    %7160 = vmatprep.subr.mxu0 %v411
    %7161 = vmatpush1.msra.mxu0 %v410
    %7162 = vmatprep.subr.mxu0 %v415
    %7163 = vmatpush1.msra.mxu0 %v414
    %7164 = vmatprep.subr.mxu0 %v419
    %7165 = vmatpush1.msra.mxu0 %v418
    %7166 = vmatprep.subr.mxu0 %v423
    %7167 = vmatpush1.msra.mxu0 %v422
    %7168 = vmatprep.subr.mxu0 %v427
    %7169 = vmatpush1.msra.mxu0 %v426
    %7170 = vmatprep.subr.mxu0 %v431
    %7171 = vmatpush1.msra.mxu0 %v430
    %7172 = vmatprep.subr.mxu0 %v435
    %7173 = vmatpush1.msra.mxu0 %v434
    %7174 = vmatprep.subr.mxu0 %v439
    %7175 = vmatpush1.msra.mxu0 %v438
    %7176 = vmatprep.subr.mxu0 %v443
    %7177 = vmatpush1.msra.mxu0 %v442
    %7178 = vmatprep.subr.mxu0 %v447
    %7179 = vmatpush1.msra.mxu0 %v446
    %7180 = vmatprep.subr.mxu0 %v451
    %7181 = vmatpush1.msra.mxu0 %v450
    %7182 = vmatprep.subr.mxu0 %v455
    %7183 = vmatpush1.msra.mxu0 %v454
    %7184 = vmatprep.subr.mxu0 %v459
    %7185 = vmatpush1.msra.mxu0 %v458
    %7186 = vmatprep.subr.mxu0 %v463
    %7187 = vmatpush1.msra.mxu0 %v462
    %7188 = vmatprep.subr.mxu0 %v467
    %7189 = vmatpush1.msra.mxu0 %v466
    %7190 = vmatprep.subr.mxu0 0.0
    %7191 = vmatpush1.msra.mxu0 0.0
    %7192 = vmatprep.subr.mxu0 0.0
    %7193 = vmatpush1.msra.mxu0 0.0
    %7194 = vmatprep.subr.mxu0 0.0
    %7195 = vmatpush1.msra.mxu0 0.0
    %7196 = vmatprep.subr.mxu0 0.0
    %7197 = vmatpush1.msra.mxu0 0.0
    %7198 = vmatprep.subr.mxu0 0.0
    %7199 = vmatpush1.msra.mxu0 0.0
    %7200 = vmatprep.subr.mxu0 0.0
    %7201 = vmatpush1.msra.mxu0 0.0
    %7202 = vmatprep.subr.mxu0 0.0
    %7203 = vmatpush1.msra.mxu0 0.0
    %7204 = vmatprep.subr.mxu0 0.0
    %7205 = vmatpush1.msra.mxu0 0.0
    %7206 = vmatprep.subr.mxu0 0.0
    %7207 = vmatpush1.msra.mxu0 0.0
    %7208 = vmatprep.subr.mxu0 0.0
    %7209 = vmatpush1.msra.mxu0 0.0
    %7210 = vmatprep.subr.mxu0 0.0
    %7211 = vmatpush1.msra.mxu0 0.0
    %7212 = vmatprep.subr.mxu0 0.0
    %7213 = vmatpush1.msra.mxu0 0.0
    %7214 = vmatprep.subr.mxu0 0.0
    %7215 = vmatpush1.msra.mxu0 0.0
    %7216 = vmatprep.subr.mxu0 0.0
    %7217 = vmatpush1.msra.mxu0 0.0
    %7218 = vmatprep.subr.mxu0 0.0
    %7219 = vmatpush1.msra.mxu0 0.0
    %7220 = vmatprep.subr.mxu0 0.0
    %7221 = vmatpush1.msra.mxu0 0.0
    %7222 = vmatprep.mubr.f32.mxu0 0.0
    %7223 = vmatmul.mubr.f32.gmra.mrb[0].mxu0 %v6944
    %v7224 = vpop.f32.mrb[0].mxu0
    %v7225 = vadd.f32 %v7083, %v7224
    %v7226 = vpop.f32.mrb[0].mxu0
    %v7227 = vadd.f32 %v7085, %v7226
    %7228 = vdwg.mxu0
    %v7229 = vadd.f32 %v7154, %v5280
    %v7230 = vadd.f32 %v7156, %v5284
    %v7231 = vadd.f32 %v7225, %v5288
    %v7232 = vadd.f32 %v7227, %v5292
    %v7233 = vxor.u32 %v7229, 2147483648
    %v7234 = vxor.u32 %v7230, 2147483648
    %v7235 = vxor.u32 %v7231, 2147483648
    %v7236 = vmul.f32 %v7233, 1.442695
    %v7237 = vpow.pop %v7236
    %v7238 = vmul.f32 %v7234, 1.442695
    %v7239 = vpow.pop %v7238
    %v7240 = vmul.f32 %v7235, 1.442695
    %v7241 = vpow.pop %v7240
    %v7242 = vadd.f32 %v7237, 1.0
    %v7243 = vadd.f32 %v7239, 1.0
    %v7244 = vadd.f32 %v7241, 1.0
    %v7245 = vrcp.pop %v7242
    %v7246 = vmul.f32 1.0, %v7245
    %v7247 = vrcp.pop %v7243
    %v7248 = vmul.f32 1.0, %v7247
    %v7249 = vrcp.pop %v7244
    %v7250 = vmul.f32 1.0, %v7249
    %v7251 = vtanh.pop %v7232
    %v7252 = vmul.f32 %v7248, %v6771
    %v7253 = vmul.f32 %v7246, %v7251
    %v7254 = vadd.f32 %v7252, %v7253
    %v7255 = vtanh.pop %v7254
    %v7256 = vmul.f32 %v7250, %v7255
    %7257 = vst [vmem:[#allocation2 + $0x4] sm:$0x1] %v7256
    %7258 = vmatprep.subr.mxu0 %v341
    %7259 = vmatpush1.msra.mxu0 %v340
    %7260 = vmatprep.subr.mxu0 %v345
    %7261 = vmatpush1.msra.mxu0 %v344
    %7262 = vmatprep.subr.mxu0 %v349
    %7263 = vmatpush1.msra.mxu0 %v348
    %7264 = vmatprep.subr.mxu0 %v353
    %7265 = vmatpush1.msra.mxu0 %v352
    %7266 = vmatprep.subr.mxu0 %v357
    %7267 = vmatpush1.msra.mxu0 %v356
    %7268 = vmatprep.subr.mxu0 %v361
    %7269 = vmatpush1.msra.mxu0 %v360
    %7270 = vmatprep.subr.mxu0 %v365
    %7271 = vmatpush1.msra.mxu0 %v364
    %7272 = vmatprep.subr.mxu0 %v369
    %7273 = vmatpush1.msra.mxu0 %v368
    %7274 = vmatprep.subr.mxu0 %v373
    %7275 = vmatpush1.msra.mxu0 %v372
    %7276 = vmatprep.subr.mxu0 %v377
    %7277 = vmatpush1.msra.mxu0 %v376
    %7278 = vmatprep.subr.mxu0 %v381
    %7279 = vmatpush1.msra.mxu0 %v380
    %7280 = vmatprep.subr.mxu0 %v385
    %7281 = vmatpush1.msra.mxu0 %v384
    %7282 = vmatprep.subr.mxu0 %v389
    %7283 = vmatpush1.msra.mxu0 %v388
    %7284 = vmatprep.subr.mxu0 %v393
    %7285 = vmatpush1.msra.mxu0 %v392
    %7286 = vmatprep.subr.mxu0 %v397
    %7287 = vmatpush1.msra.mxu0 %v396
    %7288 = vmatprep.subr.mxu0 %v401
    %7289 = vmatpush1.msra.mxu0 %v400
    %7290 = vmatprep.subr.mxu0 0.0
    %7291 = vmatpush1.msra.mxu0 0.0
    %7292 = vmatprep.subr.mxu0 0.0
    %7293 = vmatpush1.msra.mxu0 0.0
    %7294 = vmatprep.subr.mxu0 0.0
    %7295 = vmatpush1.msra.mxu0 0.0
    %7296 = vmatprep.subr.mxu0 0.0
    %7297 = vmatpush1.msra.mxu0 0.0
    %7298 = vmatprep.subr.mxu0 0.0
    %7299 = vmatpush1.msra.mxu0 0.0
    %7300 = vmatprep.subr.mxu0 0.0
    %7301 = vmatpush1.msra.mxu0 0.0
    %7302 = vmatprep.subr.mxu0 0.0
    %7303 = vmatpush1.msra.mxu0 0.0
    %7304 = vmatprep.subr.mxu0 0.0
    %7305 = vmatpush1.msra.mxu0 0.0
    %7306 = vmatprep.subr.mxu0 0.0
    %7307 = vmatpush1.msra.mxu0 0.0
    %7308 = vmatprep.subr.mxu0 0.0
    %7309 = vmatpush1.msra.mxu0 0.0
    %7310 = vmatprep.subr.mxu0 0.0
    %7311 = vmatpush1.msra.mxu0 0.0
    %7312 = vmatprep.subr.mxu0 0.0
    %7313 = vmatpush1.msra.mxu0 0.0
    %7314 = vmatprep.subr.mxu0 0.0
    %7315 = vmatpush1.msra.mxu0 0.0
    %7316 = vmatprep.subr.mxu0 0.0
    %7317 = vmatpush1.msra.mxu0 0.0
    %7318 = vmatprep.subr.mxu0 0.0
    %7319 = vmatpush1.msra.mxu0 0.0
    %7320 = vmatprep.subr.mxu0 0.0
    %7321 = vmatpush1.msra.mxu0 0.0
    %7322 = vmatprep.mubr.f32.mxu0 0.0
    %7323 = vmatmul.mubr.f32.gmra.mrb[0].mxu0 %v6944
    %v7324 = vpop.f32.mrb[0].mxu0
    %v7325 = vadd.f32 0.0, %v7324
    %v7326 = vpop.f32.mrb[0].mxu0
    %v7327 = vadd.f32 0.0, %v7326
    %7328 = vdwg.mxu0
    %7329 = vmatprep.subr.mxu0 %v343
    %7330 = vmatpush1.msra.mxu0 %v342
    %7331 = vmatprep.subr.mxu0 %v347
    %7332 = vmatpush1.msra.mxu0 %v346
    %7333 = vmatprep.subr.mxu0 %v351
    %7334 = vmatpush1.msra.mxu0 %v350
    %7335 = vmatprep.subr.mxu0 %v355
    %7336 = vmatpush1.msra.mxu0 %v354
    %7337 = vmatprep.subr.mxu0 %v359
    %7338 = vmatpush1.msra.mxu0 %v358
    %7339 = vmatprep.subr.mxu0 %v363
    %7340 = vmatpush1.msra.mxu0 %v362
    %7341 = vmatprep.subr.mxu0 %v367
    %7342 = vmatpush1.msra.mxu0 %v366
    %7343 = vmatprep.subr.mxu0 %v371
    %7344 = vmatpush1.msra.mxu0 %v370
    %7345 = vmatprep.subr.mxu0 %v375
    %7346 = vmatpush1.msra.mxu0 %v374
    %7347 = vmatprep.subr.mxu0 %v379
    %7348 = vmatpush1.msra.mxu0 %v378
    %7349 = vmatprep.subr.mxu0 %v383
    %7350 = vmatpush1.msra.mxu0 %v382
    %7351 = vmatprep.subr.mxu0 %v387
    %7352 = vmatpush1.msra.mxu0 %v386
    %7353 = vmatprep.subr.mxu0 %v391
    %7354 = vmatpush1.msra.mxu0 %v390
    %7355 = vmatprep.subr.mxu0 %v395
    %7356 = vmatpush1.msra.mxu0 %v394
    %7357 = vmatprep.subr.mxu0 %v399
    %7358 = vmatpush1.msra.mxu0 %v398
    %7359 = vmatprep.subr.mxu0 %v403
    %7360 = vmatpush1.msra.mxu0 %v402
    %7361 = vmatprep.subr.mxu0 0.0
    %7362 = vmatpush1.msra.mxu0 0.0
    %7363 = vmatprep.subr.mxu0 0.0
    %7364 = vmatpush1.msra.mxu0 0.0
    %7365 = vmatprep.subr.mxu0 0.0
    %7366 = vmatpush1.msra.mxu0 0.0
    %7367 = vmatprep.subr.mxu0 0.0
    %7368 = vmatpush1.msra.mxu0 0.0
    %7369 = vmatprep.subr.mxu0 0.0
    %7370 = vmatpush1.msra.mxu0 0.0
    %7371 = vmatprep.subr.mxu0 0.0
    %7372 = vmatpush1.msra.mxu0 0.0
    %7373 = vmatprep.subr.mxu0 0.0
    %7374 = vmatpush1.msra.mxu0 0.0
    %7375 = vmatprep.subr.mxu0 0.0
    %7376 = vmatpush1.msra.mxu0 0.0
    %7377 = vmatprep.subr.mxu0 0.0
    %7378 = vmatpush1.msra.mxu0 0.0
    %7379 = vmatprep.subr.mxu0 0.0
    %7380 = vmatpush1.msra.mxu0 0.0
    %7381 = vmatprep.subr.mxu0 0.0
    %7382 = vmatpush1.msra.mxu0 0.0
    %7383 = vmatprep.subr.mxu0 0.0
    %7384 = vmatpush1.msra.mxu0 0.0
    %7385 = vmatprep.subr.mxu0 0.0
    %7386 = vmatpush1.msra.mxu0 0.0
    %7387 = vmatprep.subr.mxu0 0.0
    %7388 = vmatpush1.msra.mxu0 0.0
    %7389 = vmatprep.subr.mxu0 0.0
    %7390 = vmatpush1.msra.mxu0 0.0
    %7391 = vmatprep.subr.mxu0 0.0
    %7392 = vmatpush1.msra.mxu0 0.0
    %7393 = vmatprep.mubr.f32.mxu0 0.0
    %7394 = vmatmul.mubr.f32.gmra.mrb[0].mxu0 %v6944
    %v7395 = vpop.f32.mrb[0].mxu0
    %v7396 = vadd.f32 0.0, %v7395
    %v7397 = vpop.f32.mrb[0].mxu0
    %v7398 = vadd.f32 0.0, %v7397
    %7399 = vdwg.mxu0
    %v7400 = vadd.f32 %v4747, %v7325
    %v7401 = vadd.f32 %v4749, %v7327
    %v7402 = vadd.f32 %v4818, %v7396
    %v7403 = vadd.f32 %v4820, %v7398
    %v7404 = vxor.u32 %v7400, 2147483648
    %v7405 = vxor.u32 %v7401, 2147483648
    %v7406 = vxor.u32 %v7402, 2147483648
    %v7407 = vmul.f32 %v7404, 1.442695
    %v7408 = vpow.pop %v7407
    %v7409 = vmul.f32 %v7405, 1.442695
    %v7410 = vpow.pop %v7409
    %v7411 = vmul.f32 %v7406, 1.442695
    %v7412 = vpow.pop %v7411
    %v7413 = vadd.f32 %v7408, 1.0
    %v7414 = vadd.f32 %v7410, 1.0
    %v7415 = vadd.f32 %v7412, 1.0
    %v7416 = vrcp.pop %v7413
    %v7417 = vmul.f32 1.0, %v7416
    %v7418 = vrcp.pop %v7414
    %v7419 = vmul.f32 1.0, %v7418
    %v7420 = vrcp.pop %v7415
    %v7421 = vmul.f32 1.0, %v7420
    %v7422 = vtanh.pop %v7403
    %v7423 = vmul.f32 %v7419, %v6942
    %v7424 = vmul.f32 %v7417, %v7422
    %v7425 = vadd.f32 %v7423, %v7424
    %v7426 = vtanh.pop %v7425
    %v7427 = vmul.f32 %v7421, %v7426
    %7428 = vmatprep.subr.mxu0 %v469
    %7429 = vmatpush1.msra.mxu0 %v468
    %7430 = vmatprep.subr.mxu0 %v473
    %7431 = vmatpush1.msra.mxu0 %v472
    %7432 = vmatprep.subr.mxu0 %v477
    %7433 = vmatpush1.msra.mxu0 %v476
    %7434 = vmatprep.subr.mxu0 %v481
    %7435 = vmatpush1.msra.mxu0 %v480
    %7436 = vmatprep.subr.mxu0 %v485
    %7437 = vmatpush1.msra.mxu0 %v484
    %7438 = vmatprep.subr.mxu0 %v489
    %7439 = vmatpush1.msra.mxu0 %v488
    %7440 = vmatprep.subr.mxu0 %v493
    %7441 = vmatpush1.msra.mxu0 %v492
    %7442 = vmatprep.subr.mxu0 %v497
    %7443 = vmatpush1.msra.mxu0 %v496
    %7444 = vmatprep.subr.mxu0 %v501
    %7445 = vmatpush1.msra.mxu0 %v500
    %7446 = vmatprep.subr.mxu0 %v505
    %7447 = vmatpush1.msra.mxu0 %v504
    %7448 = vmatprep.subr.mxu0 %v509
    %7449 = vmatpush1.msra.mxu0 %v508
    %7450 = vmatprep.subr.mxu0 %v513
    %7451 = vmatpush1.msra.mxu0 %v512
    %7452 = vmatprep.subr.mxu0 %v517
    %7453 = vmatpush1.msra.mxu0 %v516
    %7454 = vmatprep.subr.mxu0 %v521
    %7455 = vmatpush1.msra.mxu0 %v520
    %7456 = vmatprep.subr.mxu0 %v525
    %7457 = vmatpush1.msra.mxu0 %v524
    %7458 = vmatprep.subr.mxu0 %v529
    %7459 = vmatpush1.msra.mxu0 %v528
    %7460 = vmatprep.subr.mxu0 0.0
    %7461 = vmatpush1.msra.mxu0 0.0
    %7462 = vmatprep.subr.mxu0 0.0
    %7463 = vmatpush1.msra.mxu0 0.0
    %7464 = vmatprep.subr.mxu0 0.0
    %7465 = vmatpush1.msra.mxu0 0.0
    %7466 = vmatprep.subr.mxu0 0.0
    %7467 = vmatpush1.msra.mxu0 0.0
    %7468 = vmatprep.subr.mxu0 0.0
    %7469 = vmatpush1.msra.mxu0 0.0
    %7470 = vmatprep.subr.mxu0 0.0
    %7471 = vmatpush1.msra.mxu0 0.0
    %7472 = vmatprep.subr.mxu0 0.0
    %7473 = vmatpush1.msra.mxu0 0.0
    %7474 = vmatprep.subr.mxu0 0.0
    %7475 = vmatpush1.msra.mxu0 0.0
    %7476 = vmatprep.subr.mxu0 0.0
    %7477 = vmatpush1.msra.mxu0 0.0
    %7478 = vmatprep.subr.mxu0 0.0
    %7479 = vmatpush1.msra.mxu0 0.0
    %7480 = vmatprep.subr.mxu0 0.0
    %7481 = vmatpush1.msra.mxu0 0.0
    %7482 = vmatprep.subr.mxu0 0.0
    %7483 = vmatpush1.msra.mxu0 0.0
    %7484 = vmatprep.subr.mxu0 0.0
    %7485 = vmatpush1.msra.mxu0 0.0
    %7486 = vmatprep.subr.mxu0 0.0
    %7487 = vmatpush1.msra.mxu0 0.0
    %7488 = vmatprep.subr.mxu0 0.0
    %7489 = vmatpush1.msra.mxu0 0.0
    %7490 = vmatprep.subr.mxu0 0.0
    %7491 = vmatpush1.msra.mxu0 0.0
    %7492 = vmatprep.mubr.f32.mxu0 0.0
    %7493 = vmatmul.mubr.f32.gmra.mrb[0].mxu0 %v7256
    %v7494 = vpop.f32.mrb[0].mxu0
    %v7495 = vadd.f32 0.0, %v7494
    %v7496 = vpop.f32.mrb[0].mxu0
    %v7497 = vadd.f32 0.0, %v7496
    %7498 = vdwg.mxu0
    %7499 = vmatprep.subr.mxu0 %v471
    %7500 = vmatpush1.msra.mxu0 %v470
    %7501 = vmatprep.subr.mxu0 %v475
    %7502 = vmatpush1.msra.mxu0 %v474
    %7503 = vmatprep.subr.mxu0 %v479
    %7504 = vmatpush1.msra.mxu0 %v478
    %7505 = vmatprep.subr.mxu0 %v483
    %7506 = vmatpush1.msra.mxu0 %v482
    %7507 = vmatprep.subr.mxu0 %v487
    %7508 = vmatpush1.msra.mxu0 %v486
    %7509 = vmatprep.subr.mxu0 %v491
    %7510 = vmatpush1.msra.mxu0 %v490
    %7511 = vmatprep.subr.mxu0 %v495
    %7512 = vmatpush1.msra.mxu0 %v494
    %7513 = vmatprep.subr.mxu0 %v499
    %7514 = vmatpush1.msra.mxu0 %v498
    %7515 = vmatprep.subr.mxu0 %v503
    %7516 = vmatpush1.msra.mxu0 %v502
    %7517 = vmatprep.subr.mxu0 %v507
    %7518 = vmatpush1.msra.mxu0 %v506
    %7519 = vmatprep.subr.mxu0 %v511
    %7520 = vmatpush1.msra.mxu0 %v510
    %7521 = vmatprep.subr.mxu0 %v515
    %7522 = vmatpush1.msra.mxu0 %v514
    %7523 = vmatprep.subr.mxu0 %v519
    %7524 = vmatpush1.msra.mxu0 %v518
    %7525 = vmatprep.subr.mxu0 %v523
    %7526 = vmatpush1.msra.mxu0 %v522
    %7527 = vmatprep.subr.mxu0 %v527
    %7528 = vmatpush1.msra.mxu0 %v526
    %7529 = vmatprep.subr.mxu0 %v531
    %7530 = vmatpush1.msra.mxu0 %v530
    %7531 = vmatprep.subr.mxu0 0.0
    %7532 = vmatpush1.msra.mxu0 0.0
    %7533 = vmatprep.subr.mxu0 0.0
    %7534 = vmatpush1.msra.mxu0 0.0
    %7535 = vmatprep.subr.mxu0 0.0
    %7536 = vmatpush1.msra.mxu0 0.0
    %7537 = vmatprep.subr.mxu0 0.0
    %7538 = vmatpush1.msra.mxu0 0.0
    %7539 = vmatprep.subr.mxu0 0.0
    %7540 = vmatpush1.msra.mxu0 0.0
    %7541 = vmatprep.subr.mxu0 0.0
    %7542 = vmatpush1.msra.mxu0 0.0
    %7543 = vmatprep.subr.mxu0 0.0
    %7544 = vmatpush1.msra.mxu0 0.0
    %7545 = vmatprep.subr.mxu0 0.0
    %7546 = vmatpush1.msra.mxu0 0.0
    %7547 = vmatprep.subr.mxu0 0.0
    %7548 = vmatpush1.msra.mxu0 0.0
    %7549 = vmatprep.subr.mxu0 0.0
    %7550 = vmatpush1.msra.mxu0 0.0
    %7551 = vmatprep.subr.mxu0 0.0
    %7552 = vmatpush1.msra.mxu0 0.0
    %7553 = vmatprep.subr.mxu0 0.0
    %7554 = vmatpush1.msra.mxu0 0.0
    %7555 = vmatprep.subr.mxu0 0.0
    %7556 = vmatpush1.msra.mxu0 0.0
    %7557 = vmatprep.subr.mxu0 0.0
    %7558 = vmatpush1.msra.mxu0 0.0
    %7559 = vmatprep.subr.mxu0 0.0
    %7560 = vmatpush1.msra.mxu0 0.0
    %7561 = vmatprep.subr.mxu0 0.0
    %7562 = vmatpush1.msra.mxu0 0.0
    %7563 = vmatprep.mubr.f32.mxu0 0.0
    %7564 = vmatmul.mubr.f32.gmra.mrb[0].mxu0 %v7256
    %v7565 = vpop.f32.mrb[0].mxu0
    %v7566 = vadd.f32 0.0, %v7565
    %v7567 = vpop.f32.mrb[0].mxu0
    %v7568 = vadd.f32 0.0, %v7567
    %7569 = vdwg.mxu0
    %7570 = vmatprep.subr.mxu0 %v405
    %7571 = vmatpush1.msra.mxu0 %v404
    %7572 = vmatprep.subr.mxu0 %v409
    %7573 = vmatpush1.msra.mxu0 %v408
    %7574 = vmatprep.subr.mxu0 %v413
    %7575 = vmatpush1.msra.mxu0 %v412
    %7576 = vmatprep.subr.mxu0 %v417
    %7577 = vmatpush1.msra.mxu0 %v416
    %7578 = vmatprep.subr.mxu0 %v421
    %7579 = vmatpush1.msra.mxu0 %v420
    %7580 = vmatprep.subr.mxu0 %v425
    %7581 = vmatpush1.msra.mxu0 %v424
    %7582 = vmatprep.subr.mxu0 %v429
    %7583 = vmatpush1.msra.mxu0 %v428
    %7584 = vmatprep.subr.mxu0 %v433
    %7585 = vmatpush1.msra.mxu0 %v432
    %7586 = vmatprep.subr.mxu0 %v437
    %7587 = vmatpush1.msra.mxu0 %v436
    %7588 = vmatprep.subr.mxu0 %v441
    %7589 = vmatpush1.msra.mxu0 %v440
    %7590 = vmatprep.subr.mxu0 %v445
    %7591 = vmatpush1.msra.mxu0 %v444
    %7592 = vmatprep.subr.mxu0 %v449
    %7593 = vmatpush1.msra.mxu0 %v448
    %7594 = vmatprep.subr.mxu0 %v453
    %7595 = vmatpush1.msra.mxu0 %v452
    %7596 = vmatprep.subr.mxu0 %v457
    %7597 = vmatpush1.msra.mxu0 %v456
    %7598 = vmatprep.subr.mxu0 %v461
    %7599 = vmatpush1.msra.mxu0 %v460
    %7600 = vmatprep.subr.mxu0 %v465
    %7601 = vmatpush1.msra.mxu0 %v464
    %7602 = vmatprep.subr.mxu0 0.0
    %7603 = vmatpush1.msra.mxu0 0.0
    %7604 = vmatprep.subr.mxu0 0.0
    %7605 = vmatpush1.msra.mxu0 0.0
    %7606 = vmatprep.subr.mxu0 0.0
    %7607 = vmatpush1.msra.mxu0 0.0
    %7608 = vmatprep.subr.mxu0 0.0
    %7609 = vmatpush1.msra.mxu0 0.0
    %7610 = vmatprep.subr.mxu0 0.0
    %7611 = vmatpush1.msra.mxu0 0.0
    %7612 = vmatprep.subr.mxu0 0.0
    %7613 = vmatpush1.msra.mxu0 0.0
    %7614 = vmatprep.subr.mxu0 0.0
    %7615 = vmatpush1.msra.mxu0 0.0
    %7616 = vmatprep.subr.mxu0 0.0
    %7617 = vmatpush1.msra.mxu0 0.0
    %7618 = vmatprep.subr.mxu0 0.0
    %7619 = vmatpush1.msra.mxu0 0.0
    %7620 = vmatprep.subr.mxu0 0.0
    %7621 = vmatpush1.msra.mxu0 0.0
    %7622 = vmatprep.subr.mxu0 0.0
    %7623 = vmatpush1.msra.mxu0 0.0
    %7624 = vmatprep.subr.mxu0 0.0
    %7625 = vmatpush1.msra.mxu0 0.0
    %7626 = vmatprep.subr.mxu0 0.0
    %7627 = vmatpush1.msra.mxu0 0.0
    %7628 = vmatprep.subr.mxu0 0.0
    %7629 = vmatpush1.msra.mxu0 0.0
    %7630 = vmatprep.subr.mxu0 0.0
    %7631 = vmatpush1.msra.mxu0 0.0
    %7632 = vmatprep.subr.mxu0 0.0
    %7633 = vmatpush1.msra.mxu0 0.0
    %7634 = vmatprep.mubr.f32.mxu0 0.0
    %7635 = vmatmul.mubr.f32.gmra.mrb[0].mxu0 %v7427
    %v7636 = vpop.f32.mrb[0].mxu0
    %v7637 = vadd.f32 %v7495, %v7636
    %v7638 = vpop.f32.mrb[0].mxu0
    %v7639 = vadd.f32 %v7497, %v7638
    %7640 = vdwg.mxu0
    %7641 = vmatprep.subr.mxu0 %v407
    %7642 = vmatpush1.msra.mxu0 %v406
    %7643 = vmatprep.subr.mxu0 %v411
    %7644 = vmatpush1.msra.mxu0 %v410
    %7645 = vmatprep.subr.mxu0 %v415
    %7646 = vmatpush1.msra.mxu0 %v414
    %7647 = vmatprep.subr.mxu0 %v419
    %7648 = vmatpush1.msra.mxu0 %v418
    %7649 = vmatprep.subr.mxu0 %v423
    %7650 = vmatpush1.msra.mxu0 %v422
    %7651 = vmatprep.subr.mxu0 %v427
    %7652 = vmatpush1.msra.mxu0 %v426
    %7653 = vmatprep.subr.mxu0 %v431
    %7654 = vmatpush1.msra.mxu0 %v430
    %7655 = vmatprep.subr.mxu0 %v435
    %7656 = vmatpush1.msra.mxu0 %v434
    %7657 = vmatprep.subr.mxu0 %v439
    %7658 = vmatpush1.msra.mxu0 %v438
    %7659 = vmatprep.subr.mxu0 %v443
    %7660 = vmatpush1.msra.mxu0 %v442
    %7661 = vmatprep.subr.mxu0 %v447
    %7662 = vmatpush1.msra.mxu0 %v446
    %7663 = vmatprep.subr.mxu0 %v451
    %7664 = vmatpush1.msra.mxu0 %v450
    %7665 = vmatprep.subr.mxu0 %v455
    %7666 = vmatpush1.msra.mxu0 %v454
    %7667 = vmatprep.subr.mxu0 %v459
    %7668 = vmatpush1.msra.mxu0 %v458
    %7669 = vmatprep.subr.mxu0 %v463
    %7670 = vmatpush1.msra.mxu0 %v462
    %7671 = vmatprep.subr.mxu0 %v467
    %7672 = vmatpush1.msra.mxu0 %v466
    %7673 = vmatprep.subr.mxu0 0.0
    %7674 = vmatpush1.msra.mxu0 0.0
    %7675 = vmatprep.subr.mxu0 0.0
    %7676 = vmatpush1.msra.mxu0 0.0
    %7677 = vmatprep.subr.mxu0 0.0
    %7678 = vmatpush1.msra.mxu0 0.0
    %7679 = vmatprep.subr.mxu0 0.0
    %7680 = vmatpush1.msra.mxu0 0.0
    %7681 = vmatprep.subr.mxu0 0.0
    %7682 = vmatpush1.msra.mxu0 0.0
    %7683 = vmatprep.subr.mxu0 0.0
    %7684 = vmatpush1.msra.mxu0 0.0
    %7685 = vmatprep.subr.mxu0 0.0
    %7686 = vmatpush1.msra.mxu0 0.0
    %7687 = vmatprep.subr.mxu0 0.0
    %7688 = vmatpush1.msra.mxu0 0.0
    %7689 = vmatprep.subr.mxu0 0.0
    %7690 = vmatpush1.msra.mxu0 0.0
    %7691 = vmatprep.subr.mxu0 0.0
    %7692 = vmatpush1.msra.mxu0 0.0
    %7693 = vmatprep.subr.mxu0 0.0
    %7694 = vmatpush1.msra.mxu0 0.0
    %7695 = vmatprep.subr.mxu0 0.0
    %7696 = vmatpush1.msra.mxu0 0.0
    %7697 = vmatprep.subr.mxu0 0.0
    %7698 = vmatpush1.msra.mxu0 0.0
    %7699 = vmatprep.subr.mxu0 0.0
    %7700 = vmatpush1.msra.mxu0 0.0
    %7701 = vmatprep.subr.mxu0 0.0
    %7702 = vmatpush1.msra.mxu0 0.0
    %7703 = vmatprep.subr.mxu0 0.0
    %7704 = vmatpush1.msra.mxu0 0.0
    %7705 = vmatprep.mubr.f32.mxu0 0.0
    %7706 = vmatmul.mubr.f32.gmra.mrb[0].mxu0 %v7427
    %v7707 = vpop.f32.mrb[0].mxu0
    %v7708 = vadd.f32 %v7566, %v7707
    %v7709 = vpop.f32.mrb[0].mxu0
    %v7710 = vadd.f32 %v7568, %v7709
    %7711 = vdwg.mxu0
    %v7712 = vadd.f32 %v7637, %v5280
    %v7713 = vadd.f32 %v7639, %v5284
    %v7714 = vadd.f32 %v7708, %v5288
    %v7715 = vadd.f32 %v7710, %v5292
    %v7716 = vxor.u32 %v7712, 2147483648
    %v7717 = vxor.u32 %v7713, 2147483648
    %v7718 = vxor.u32 %v7714, 2147483648
    %v7719 = vmul.f32 %v7716, 1.442695
    %v7720 = vpow.pop %v7719
    %v7721 = vmul.f32 %v7717, 1.442695
    %v7722 = vpow.pop %v7721
    %v7723 = vmul.f32 %v7718, 1.442695
    %v7724 = vpow.pop %v7723
    %v7725 = vadd.f32 %v7720, 1.0
    %v7726 = vadd.f32 %v7722, 1.0
    %v7727 = vadd.f32 %v7724, 1.0
    %v7728 = vrcp.pop %v7725
    %v7729 = vmul.f32 1.0, %v7728
    %v7730 = vrcp.pop %v7726
    %v7731 = vmul.f32 1.0, %v7730
    %v7732 = vrcp.pop %v7727
    %v7733 = vmul.f32 1.0, %v7732
    %v7734 = vtanh.pop %v7715
    %v7735 = vmul.f32 %v7731, %v7254
    %v7736 = vmul.f32 %v7729, %v7734
    %v7737 = vadd.f32 %v7735, %v7736
    %v7738 = vtanh.pop %v7737
    %v7739 = vmul.f32 %v7733, %v7738
    %7740 = vst [vmem:[#allocation2 + $0x5] sm:$0x1] %v7739
    %7741 = vmatprep.subr.mxu0 %v341
    %7742 = vmatpush1.msra.mxu0 %v340
    %7743 = vmatprep.subr.mxu0 %v345
    %7744 = vmatpush1.msra.mxu0 %v344
    %7745 = vmatprep.subr.mxu0 %v349
    %7746 = vmatpush1.msra.mxu0 %v348
    %7747 = vmatprep.subr.mxu0 %v353
    %7748 = vmatpush1.msra.mxu0 %v352
    %7749 = vmatprep.subr.mxu0 %v357
    %7750 = vmatpush1.msra.mxu0 %v356
    %7751 = vmatprep.subr.mxu0 %v361
    %7752 = vmatpush1.msra.mxu0 %v360
    %7753 = vmatprep.subr.mxu0 %v365
    %7754 = vmatpush1.msra.mxu0 %v364
    %7755 = vmatprep.subr.mxu0 %v369
    %7756 = vmatpush1.msra.mxu0 %v368
    %7757 = vmatprep.subr.mxu0 %v373
    %7758 = vmatpush1.msra.mxu0 %v372
    %7759 = vmatprep.subr.mxu0 %v377
    %7760 = vmatpush1.msra.mxu0 %v376
    %7761 = vmatprep.subr.mxu0 %v381
    %7762 = vmatpush1.msra.mxu0 %v380
    %7763 = vmatprep.subr.mxu0 %v385
    %7764 = vmatpush1.msra.mxu0 %v384
    %7765 = vmatprep.subr.mxu0 %v389
    %7766 = vmatpush1.msra.mxu0 %v388
    %7767 = vmatprep.subr.mxu0 %v393
    %7768 = vmatpush1.msra.mxu0 %v392
    %7769 = vmatprep.subr.mxu0 %v397
    %7770 = vmatpush1.msra.mxu0 %v396
    %7771 = vmatprep.subr.mxu0 %v401
    %7772 = vmatpush1.msra.mxu0 %v400
    %7773 = vmatprep.subr.mxu0 0.0
    %7774 = vmatpush1.msra.mxu0 0.0
    %7775 = vmatprep.subr.mxu0 0.0
    %7776 = vmatpush1.msra.mxu0 0.0
    %7777 = vmatprep.subr.mxu0 0.0
    %7778 = vmatpush1.msra.mxu0 0.0
    %7779 = vmatprep.subr.mxu0 0.0
    %7780 = vmatpush1.msra.mxu0 0.0
    %7781 = vmatprep.subr.mxu0 0.0
    %7782 = vmatpush1.msra.mxu0 0.0
    %7783 = vmatprep.subr.mxu0 0.0
    %7784 = vmatpush1.msra.mxu0 0.0
    %7785 = vmatprep.subr.mxu0 0.0
    %7786 = vmatpush1.msra.mxu0 0.0
    %7787 = vmatprep.subr.mxu0 0.0
    %7788 = vmatpush1.msra.mxu0 0.0
    %7789 = vmatprep.subr.mxu0 0.0
    %7790 = vmatpush1.msra.mxu0 0.0
    %7791 = vmatprep.subr.mxu0 0.0
    %7792 = vmatpush1.msra.mxu0 0.0
    %7793 = vmatprep.subr.mxu0 0.0
    %7794 = vmatpush1.msra.mxu0 0.0
    %7795 = vmatprep.subr.mxu0 0.0
    %7796 = vmatpush1.msra.mxu0 0.0
    %7797 = vmatprep.subr.mxu0 0.0
    %7798 = vmatpush1.msra.mxu0 0.0
    %7799 = vmatprep.subr.mxu0 0.0
    %7800 = vmatpush1.msra.mxu0 0.0
    %7801 = vmatprep.subr.mxu0 0.0
    %7802 = vmatpush1.msra.mxu0 0.0
    %7803 = vmatprep.subr.mxu0 0.0
    %7804 = vmatpush1.msra.mxu0 0.0
    %7805 = vmatprep.mubr.f32.mxu0 0.0
    %7806 = vmatmul.mubr.f32.gmra.mrb[0].mxu0 %v7427
    %v7807 = vpop.f32.mrb[0].mxu0
    %v7808 = vadd.f32 0.0, %v7807
    %v7809 = vpop.f32.mrb[0].mxu0
    %v7810 = vadd.f32 0.0, %v7809
    %7811 = vdwg.mxu0
    %7812 = vmatprep.subr.mxu0 %v343
    %7813 = vmatpush1.msra.mxu0 %v342
    %7814 = vmatprep.subr.mxu0 %v347
    %7815 = vmatpush1.msra.mxu0 %v346
    %7816 = vmatprep.subr.mxu0 %v351
    %7817 = vmatpush1.msra.mxu0 %v350
    %7818 = vmatprep.subr.mxu0 %v355
    %7819 = vmatpush1.msra.mxu0 %v354
    %7820 = vmatprep.subr.mxu0 %v359
    %7821 = vmatpush1.msra.mxu0 %v358
    %7822 = vmatprep.subr.mxu0 %v363
    %7823 = vmatpush1.msra.mxu0 %v362
    %7824 = vmatprep.subr.mxu0 %v367
    %7825 = vmatpush1.msra.mxu0 %v366
    %7826 = vmatprep.subr.mxu0 %v371
    %7827 = vmatpush1.msra.mxu0 %v370
    %7828 = vmatprep.subr.mxu0 %v375
    %7829 = vmatpush1.msra.mxu0 %v374
    %7830 = vmatprep.subr.mxu0 %v379
    %7831 = vmatpush1.msra.mxu0 %v378
    %7832 = vmatprep.subr.mxu0 %v383
    %7833 = vmatpush1.msra.mxu0 %v382
    %7834 = vmatprep.subr.mxu0 %v387
    %7835 = vmatpush1.msra.mxu0 %v386
    %7836 = vmatprep.subr.mxu0 %v391
    %7837 = vmatpush1.msra.mxu0 %v390
    %7838 = vmatprep.subr.mxu0 %v395
    %7839 = vmatpush1.msra.mxu0 %v394
    %7840 = vmatprep.subr.mxu0 %v399
    %7841 = vmatpush1.msra.mxu0 %v398
    %7842 = vmatprep.subr.mxu0 %v403
    %7843 = vmatpush1.msra.mxu0 %v402
    %7844 = vmatprep.subr.mxu0 0.0
    %7845 = vmatpush1.msra.mxu0 0.0
    %7846 = vmatprep.subr.mxu0 0.0
    %7847 = vmatpush1.msra.mxu0 0.0
    %7848 = vmatprep.subr.mxu0 0.0
    %7849 = vmatpush1.msra.mxu0 0.0
    %7850 = vmatprep.subr.mxu0 0.0
    %7851 = vmatpush1.msra.mxu0 0.0
    %7852 = vmatprep.subr.mxu0 0.0
    %7853 = vmatpush1.msra.mxu0 0.0
    %7854 = vmatprep.subr.mxu0 0.0
    %7855 = vmatpush1.msra.mxu0 0.0
    %7856 = vmatprep.subr.mxu0 0.0
    %7857 = vmatpush1.msra.mxu0 0.0
    %7858 = vmatprep.subr.mxu0 0.0
    %7859 = vmatpush1.msra.mxu0 0.0
    %7860 = vmatprep.subr.mxu0 0.0
    %7861 = vmatpush1.msra.mxu0 0.0
    %7862 = vmatprep.subr.mxu0 0.0
    %7863 = vmatpush1.msra.mxu0 0.0
    %7864 = vmatprep.subr.mxu0 0.0
    %7865 = vmatpush1.msra.mxu0 0.0
    %7866 = vmatprep.subr.mxu0 0.0
    %7867 = vmatpush1.msra.mxu0 0.0
    %7868 = vmatprep.subr.mxu0 0.0
    %7869 = vmatpush1.msra.mxu0 0.0
    %7870 = vmatprep.subr.mxu0 0.0
    %7871 = vmatpush1.msra.mxu0 0.0
    %7872 = vmatprep.subr.mxu0 0.0
    %7873 = vmatpush1.msra.mxu0 0.0
    %7874 = vmatprep.subr.mxu0 0.0
    %7875 = vmatpush1.msra.mxu0 0.0
    %7876 = vmatprep.mubr.f32.mxu0 0.0
    %7877 = vmatmul.mubr.f32.gmra.mrb[0].mxu0 %v7427
    %v7878 = vpop.f32.mrb[0].mxu0
    %v7879 = vadd.f32 0.0, %v7878
    %v7880 = vpop.f32.mrb[0].mxu0
    %v7881 = vadd.f32 0.0, %v7880
    %7882 = vdwg.mxu0
    %v7883 = vadd.f32 %v4747, %v7808
    %v7884 = vadd.f32 %v4749, %v7810
    %v7885 = vadd.f32 %v4818, %v7879
    %v7886 = vadd.f32 %v4820, %v7881
    %v7887 = vxor.u32 %v7883, 2147483648
    %v7888 = vxor.u32 %v7884, 2147483648
    %v7889 = vxor.u32 %v7885, 2147483648
    %v7890 = vmul.f32 %v7887, 1.442695
    %v7891 = vpow.pop %v7890
    %v7892 = vmul.f32 %v7888, 1.442695
    %v7893 = vpow.pop %v7892
    %v7894 = vmul.f32 %v7889, 1.442695
    %v7895 = vpow.pop %v7894
    %v7896 = vadd.f32 %v7891, 1.0
    %v7897 = vadd.f32 %v7893, 1.0
    %v7898 = vadd.f32 %v7895, 1.0
    %v7899 = vrcp.pop %v7896
    %v7900 = vmul.f32 1.0, %v7899
    %v7901 = vrcp.pop %v7897
    %v7902 = vmul.f32 1.0, %v7901
    %v7903 = vrcp.pop %v7898
    %v7904 = vmul.f32 1.0, %v7903
    %v7905 = vtanh.pop %v7886
    %v7906 = vmul.f32 %v7902, %v7425
    %v7907 = vmul.f32 %v7900, %v7905
    %v7908 = vadd.f32 %v7906, %v7907
    %v7909 = vtanh.pop %v7908
    %v7910 = vmul.f32 %v7904, %v7909
    %7911 = vmatprep.subr.mxu0 %v469
    %7912 = vmatpush1.msra.mxu0 %v468
    %7913 = vmatprep.subr.mxu0 %v473
    %7914 = vmatpush1.msra.mxu0 %v472
    %7915 = vmatprep.subr.mxu0 %v477
    %7916 = vmatpush1.msra.mxu0 %v476
    %7917 = vmatprep.subr.mxu0 %v481
    %7918 = vmatpush1.msra.mxu0 %v480
    %7919 = vmatprep.subr.mxu0 %v485
    %7920 = vmatpush1.msra.mxu0 %v484
    %7921 = vmatprep.subr.mxu0 %v489
    %7922 = vmatpush1.msra.mxu0 %v488
    %7923 = vmatprep.subr.mxu0 %v493
    %7924 = vmatpush1.msra.mxu0 %v492
    %7925 = vmatprep.subr.mxu0 %v497
    %7926 = vmatpush1.msra.mxu0 %v496
    %7927 = vmatprep.subr.mxu0 %v501
    %7928 = vmatpush1.msra.mxu0 %v500
    %7929 = vmatprep.subr.mxu0 %v505
    %7930 = vmatpush1.msra.mxu0 %v504
    %7931 = vmatprep.subr.mxu0 %v509
    %7932 = vmatpush1.msra.mxu0 %v508
    %7933 = vmatprep.subr.mxu0 %v513
    %7934 = vmatpush1.msra.mxu0 %v512
    %7935 = vmatprep.subr.mxu0 %v517
    %7936 = vmatpush1.msra.mxu0 %v516
    %7937 = vmatprep.subr.mxu0 %v521
    %7938 = vmatpush1.msra.mxu0 %v520
    %7939 = vmatprep.subr.mxu0 %v525
    %7940 = vmatpush1.msra.mxu0 %v524
    %7941 = vmatprep.subr.mxu0 %v529
    %7942 = vmatpush1.msra.mxu0 %v528
    %7943 = vmatprep.subr.mxu0 0.0
    %7944 = vmatpush1.msra.mxu0 0.0
    %7945 = vmatprep.subr.mxu0 0.0
    %7946 = vmatpush1.msra.mxu0 0.0
    %7947 = vmatprep.subr.mxu0 0.0
    %7948 = vmatpush1.msra.mxu0 0.0
    %7949 = vmatprep.subr.mxu0 0.0
    %7950 = vmatpush1.msra.mxu0 0.0
    %7951 = vmatprep.subr.mxu0 0.0
    %7952 = vmatpush1.msra.mxu0 0.0
    %7953 = vmatprep.subr.mxu0 0.0
    %7954 = vmatpush1.msra.mxu0 0.0
    %7955 = vmatprep.subr.mxu0 0.0
    %7956 = vmatpush1.msra.mxu0 0.0
    %7957 = vmatprep.subr.mxu0 0.0
    %7958 = vmatpush1.msra.mxu0 0.0
    %7959 = vmatprep.subr.mxu0 0.0
    %7960 = vmatpush1.msra.mxu0 0.0
    %7961 = vmatprep.subr.mxu0 0.0
    %7962 = vmatpush1.msra.mxu0 0.0
    %7963 = vmatprep.subr.mxu0 0.0
    %7964 = vmatpush1.msra.mxu0 0.0
    %7965 = vmatprep.subr.mxu0 0.0
    %7966 = vmatpush1.msra.mxu0 0.0
    %7967 = vmatprep.subr.mxu0 0.0
    %7968 = vmatpush1.msra.mxu0 0.0
    %7969 = vmatprep.subr.mxu0 0.0
    %7970 = vmatpush1.msra.mxu0 0.0
    %7971 = vmatprep.subr.mxu0 0.0
    %7972 = vmatpush1.msra.mxu0 0.0
    %7973 = vmatprep.subr.mxu0 0.0
    %7974 = vmatpush1.msra.mxu0 0.0
    %7975 = vmatprep.mubr.f32.mxu0 0.0
    %7976 = vmatmul.mubr.f32.gmra.mrb[0].mxu0 %v7739
    %v7977 = vpop.f32.mrb[0].mxu0
    %v7978 = vadd.f32 0.0, %v7977
    %v7979 = vpop.f32.mrb[0].mxu0
    %v7980 = vadd.f32 0.0, %v7979
    %7981 = vdwg.mxu0
    %7982 = vmatprep.subr.mxu0 %v471
    %7983 = vmatpush1.msra.mxu0 %v470
    %7984 = vmatprep.subr.mxu0 %v475
    %7985 = vmatpush1.msra.mxu0 %v474
    %7986 = vmatprep.subr.mxu0 %v479
    %7987 = vmatpush1.msra.mxu0 %v478
    %7988 = vmatprep.subr.mxu0 %v483
    %7989 = vmatpush1.msra.mxu0 %v482
    %7990 = vmatprep.subr.mxu0 %v487
    %7991 = vmatpush1.msra.mxu0 %v486
    %7992 = vmatprep.subr.mxu0 %v491
    %7993 = vmatpush1.msra.mxu0 %v490
    %7994 = vmatprep.subr.mxu0 %v495
    %7995 = vmatpush1.msra.mxu0 %v494
    %7996 = vmatprep.subr.mxu0 %v499
    %7997 = vmatpush1.msra.mxu0 %v498
    %7998 = vmatprep.subr.mxu0 %v503
    %7999 = vmatpush1.msra.mxu0 %v502
    %8000 = vmatprep.subr.mxu0 %v507
    %8001 = vmatpush1.msra.mxu0 %v506
    %8002 = vmatprep.subr.mxu0 %v511
    %8003 = vmatpush1.msra.mxu0 %v510
    %8004 = vmatprep.subr.mxu0 %v515
    %8005 = vmatpush1.msra.mxu0 %v514
    %8006 = vmatprep.subr.mxu0 %v519
    %8007 = vmatpush1.msra.mxu0 %v518
    %8008 = vmatprep.subr.mxu0 %v523
    %8009 = vmatpush1.msra.mxu0 %v522
    %8010 = vmatprep.subr.mxu0 %v527
    %8011 = vmatpush1.msra.mxu0 %v526
    %8012 = vmatprep.subr.mxu0 %v531
    %8013 = vmatpush1.msra.mxu0 %v530
    %8014 = vmatprep.subr.mxu0 0.0
    %8015 = vmatpush1.msra.mxu0 0.0
    %8016 = vmatprep.subr.mxu0 0.0
    %8017 = vmatpush1.msra.mxu0 0.0
    %8018 = vmatprep.subr.mxu0 0.0
    %8019 = vmatpush1.msra.mxu0 0.0
    %8020 = vmatprep.subr.mxu0 0.0
    %8021 = vmatpush1.msra.mxu0 0.0
    %8022 = vmatprep.subr.mxu0 0.0
    %8023 = vmatpush1.msra.mxu0 0.0
    %8024 = vmatprep.subr.mxu0 0.0
    %8025 = vmatpush1.msra.mxu0 0.0
    %8026 = vmatprep.subr.mxu0 0.0
    %8027 = vmatpush1.msra.mxu0 0.0
    %8028 = vmatprep.subr.mxu0 0.0
    %8029 = vmatpush1.msra.mxu0 0.0
    %8030 = vmatprep.subr.mxu0 0.0
    %8031 = vmatpush1.msra.mxu0 0.0
    %8032 = vmatprep.subr.mxu0 0.0
    %8033 = vmatpush1.msra.mxu0 0.0
    %8034 = vmatprep.subr.mxu0 0.0
    %8035 = vmatpush1.msra.mxu0 0.0
    %8036 = vmatprep.subr.mxu0 0.0
    %8037 = vmatpush1.msra.mxu0 0.0
    %8038 = vmatprep.subr.mxu0 0.0
    %8039 = vmatpush1.msra.mxu0 0.0
    %8040 = vmatprep.subr.mxu0 0.0
    %8041 = vmatpush1.msra.mxu0 0.0
    %8042 = vmatprep.subr.mxu0 0.0
    %8043 = vmatpush1.msra.mxu0 0.0
    %8044 = vmatprep.subr.mxu0 0.0
    %8045 = vmatpush1.msra.mxu0 0.0
    %8046 = vmatprep.mubr.f32.mxu0 0.0
    %8047 = vmatmul.mubr.f32.gmra.mrb[0].mxu0 %v7739
    %v8048 = vpop.f32.mrb[0].mxu0
    %v8049 = vadd.f32 0.0, %v8048
    %v8050 = vpop.f32.mrb[0].mxu0
    %v8051 = vadd.f32 0.0, %v8050
    %8052 = vdwg.mxu0
    %8053 = vmatprep.subr.mxu0 %v405
    %8054 = vmatpush1.msra.mxu0 %v404
    %8055 = vmatprep.subr.mxu0 %v409
    %8056 = vmatpush1.msra.mxu0 %v408
    %8057 = vmatprep.subr.mxu0 %v413
    %8058 = vmatpush1.msra.mxu0 %v412
    %8059 = vmatprep.subr.mxu0 %v417
    %8060 = vmatpush1.msra.mxu0 %v416
    %8061 = vmatprep.subr.mxu0 %v421
    %8062 = vmatpush1.msra.mxu0 %v420
    %8063 = vmatprep.subr.mxu0 %v425
    %8064 = vmatpush1.msra.mxu0 %v424
    %8065 = vmatprep.subr.mxu0 %v429
    %8066 = vmatpush1.msra.mxu0 %v428
    %8067 = vmatprep.subr.mxu0 %v433
    %8068 = vmatpush1.msra.mxu0 %v432
    %8069 = vmatprep.subr.mxu0 %v437
    %8070 = vmatpush1.msra.mxu0 %v436
    %8071 = vmatprep.subr.mxu0 %v441
    %8072 = vmatpush1.msra.mxu0 %v440
    %8073 = vmatprep.subr.mxu0 %v445
    %8074 = vmatpush1.msra.mxu0 %v444
    %8075 = vmatprep.subr.mxu0 %v449
    %8076 = vmatpush1.msra.mxu0 %v448
    %8077 = vmatprep.subr.mxu0 %v453
    %8078 = vmatpush1.msra.mxu0 %v452
    %8079 = vmatprep.subr.mxu0 %v457
    %8080 = vmatpush1.msra.mxu0 %v456
    %8081 = vmatprep.subr.mxu0 %v461
    %8082 = vmatpush1.msra.mxu0 %v460
    %8083 = vmatprep.subr.mxu0 %v465
    %8084 = vmatpush1.msra.mxu0 %v464
    %8085 = vmatprep.subr.mxu0 0.0
    %8086 = vmatpush1.msra.mxu0 0.0
    %8087 = vmatprep.subr.mxu0 0.0
    %8088 = vmatpush1.msra.mxu0 0.0
    %8089 = vmatprep.subr.mxu0 0.0
    %8090 = vmatpush1.msra.mxu0 0.0
    %8091 = vmatprep.subr.mxu0 0.0
    %8092 = vmatpush1.msra.mxu0 0.0
    %8093 = vmatprep.subr.mxu0 0.0
    %8094 = vmatpush1.msra.mxu0 0.0
    %8095 = vmatprep.subr.mxu0 0.0
    %8096 = vmatpush1.msra.mxu0 0.0
    %8097 = vmatprep.subr.mxu0 0.0
    %8098 = vmatpush1.msra.mxu0 0.0
    %8099 = vmatprep.subr.mxu0 0.0
    %8100 = vmatpush1.msra.mxu0 0.0
    %8101 = vmatprep.subr.mxu0 0.0
    %8102 = vmatpush1.msra.mxu0 0.0
    %8103 = vmatprep.subr.mxu0 0.0
    %8104 = vmatpush1.msra.mxu0 0.0
    %8105 = vmatprep.subr.mxu0 0.0
    %8106 = vmatpush1.msra.mxu0 0.0
    %8107 = vmatprep.subr.mxu0 0.0
    %8108 = vmatpush1.msra.mxu0 0.0
    %8109 = vmatprep.subr.mxu0 0.0
    %8110 = vmatpush1.msra.mxu0 0.0
    %8111 = vmatprep.subr.mxu0 0.0
    %8112 = vmatpush1.msra.mxu0 0.0
    %8113 = vmatprep.subr.mxu0 0.0
    %8114 = vmatpush1.msra.mxu0 0.0
    %8115 = vmatprep.subr.mxu0 0.0
    %8116 = vmatpush1.msra.mxu0 0.0
    %8117 = vmatprep.mubr.f32.mxu0 0.0
    %8118 = vmatmul.mubr.f32.gmra.mrb[0].mxu0 %v7910
    %v8119 = vpop.f32.mrb[0].mxu0
    %v8120 = vadd.f32 %v7978, %v8119
    %v8121 = vpop.f32.mrb[0].mxu0
    %v8122 = vadd.f32 %v7980, %v8121
    %8123 = vdwg.mxu0
    %8124 = vmatprep.subr.mxu0 %v407
    %8125 = vmatpush1.msra.mxu0 %v406
    %8126 = vmatprep.subr.mxu0 %v411
    %8127 = vmatpush1.msra.mxu0 %v410
    %8128 = vmatprep.subr.mxu0 %v415
    %8129 = vmatpush1.msra.mxu0 %v414
    %8130 = vmatprep.subr.mxu0 %v419
    %8131 = vmatpush1.msra.mxu0 %v418
    %8132 = vmatprep.subr.mxu0 %v423
    %8133 = vmatpush1.msra.mxu0 %v422
    %8134 = vmatprep.subr.mxu0 %v427
    %8135 = vmatpush1.msra.mxu0 %v426
    %8136 = vmatprep.subr.mxu0 %v431
    %8137 = vmatpush1.msra.mxu0 %v430
    %8138 = vmatprep.subr.mxu0 %v435
    %8139 = vmatpush1.msra.mxu0 %v434
    %8140 = vmatprep.subr.mxu0 %v439
    %8141 = vmatpush1.msra.mxu0 %v438
    %8142 = vmatprep.subr.mxu0 %v443
    %8143 = vmatpush1.msra.mxu0 %v442
    %8144 = vmatprep.subr.mxu0 %v447
    %8145 = vmatpush1.msra.mxu0 %v446
    %8146 = vmatprep.subr.mxu0 %v451
    %8147 = vmatpush1.msra.mxu0 %v450
    %8148 = vmatprep.subr.mxu0 %v455
    %8149 = vmatpush1.msra.mxu0 %v454
    %8150 = vmatprep.subr.mxu0 %v459
    %8151 = vmatpush1.msra.mxu0 %v458
    %8152 = vmatprep.subr.mxu0 %v463
    %8153 = vmatpush1.msra.mxu0 %v462
    %8154 = vmatprep.subr.mxu0 %v467
    %8155 = vmatpush1.msra.mxu0 %v466
    %8156 = vmatprep.subr.mxu0 0.0
    %8157 = vmatpush1.msra.mxu0 0.0
    %8158 = vmatprep.subr.mxu0 0.0
    %8159 = vmatpush1.msra.mxu0 0.0
    %8160 = vmatprep.subr.mxu0 0.0
    %8161 = vmatpush1.msra.mxu0 0.0
    %8162 = vmatprep.subr.mxu0 0.0
    %8163 = vmatpush1.msra.mxu0 0.0
    %8164 = vmatprep.subr.mxu0 0.0
    %8165 = vmatpush1.msra.mxu0 0.0
    %8166 = vmatprep.subr.mxu0 0.0
    %8167 = vmatpush1.msra.mxu0 0.0
    %8168 = vmatprep.subr.mxu0 0.0
    %8169 = vmatpush1.msra.mxu0 0.0
    %8170 = vmatprep.subr.mxu0 0.0
    %8171 = vmatpush1.msra.mxu0 0.0
    %8172 = vmatprep.subr.mxu0 0.0
    %8173 = vmatpush1.msra.mxu0 0.0
    %8174 = vmatprep.subr.mxu0 0.0
    %8175 = vmatpush1.msra.mxu0 0.0
    %8176 = vmatprep.subr.mxu0 0.0
    %8177 = vmatpush1.msra.mxu0 0.0
    %8178 = vmatprep.subr.mxu0 0.0
    %8179 = vmatpush1.msra.mxu0 0.0
    %8180 = vmatprep.subr.mxu0 0.0
    %8181 = vmatpush1.msra.mxu0 0.0
    %8182 = vmatprep.subr.mxu0 0.0
    %8183 = vmatpush1.msra.mxu0 0.0
    %8184 = vmatprep.subr.mxu0 0.0
    %8185 = vmatpush1.msra.mxu0 0.0
    %8186 = vmatprep.subr.mxu0 0.0
    %8187 = vmatpush1.msra.mxu0 0.0
    %8188 = vmatprep.mubr.f32.mxu0 0.0
    %8189 = vmatmul.mubr.f32.gmra.mrb[0].mxu0 %v7910
    %v8190 = vpop.f32.mrb[0].mxu0
    %v8191 = vadd.f32 %v8049, %v8190
    %v8192 = vpop.f32.mrb[0].mxu0
    %v8193 = vadd.f32 %v8051, %v8192
    %8194 = vdwg.mxu0
    %v8195 = vadd.f32 %v8120, %v5280
    %v8196 = vadd.f32 %v8122, %v5284
    %v8197 = vadd.f32 %v8191, %v5288
    %v8198 = vadd.f32 %v8193, %v5292
    %v8199 = vxor.u32 %v8195, 2147483648
    %v8200 = vxor.u32 %v8196, 2147483648
    %v8201 = vxor.u32 %v8197, 2147483648
    %v8202 = vmul.f32 %v8199, 1.442695
    %v8203 = vpow.pop %v8202
    %v8204 = vmul.f32 %v8200, 1.442695
    %v8205 = vpow.pop %v8204
    %v8206 = vmul.f32 %v8201, 1.442695
    %v8207 = vpow.pop %v8206
    %v8208 = vadd.f32 %v8203, 1.0
    %v8209 = vadd.f32 %v8205, 1.0
    %v8210 = vadd.f32 %v8207, 1.0
    %v8211 = vrcp.pop %v8208
    %v8212 = vmul.f32 1.0, %v8211
    %v8213 = vrcp.pop %v8209
    %v8214 = vmul.f32 1.0, %v8213
    %v8215 = vrcp.pop %v8210
    %v8216 = vmul.f32 1.0, %v8215
    %v8217 = vtanh.pop %v8198
    %v8218 = vmul.f32 %v8214, %v7737
    %v8219 = vmul.f32 %v8212, %v8217
    %v8220 = vadd.f32 %v8218, %v8219
    %v8221 = vtanh.pop %v8220
    %v8222 = vmul.f32 %v8216, %v8221
    %8223 = vst [vmem:[#allocation2 + $0x6] sm:$0x1] %v8222
    %8224 = vmatprep.subr.mxu0 %v341
    %8225 = vmatpush1.msra.mxu0 %v340
    %8226 = vmatprep.subr.mxu0 %v345
    %8227 = vmatpush1.msra.mxu0 %v344
    %8228 = vmatprep.subr.mxu0 %v349
    %8229 = vmatpush1.msra.mxu0 %v348
    %8230 = vmatprep.subr.mxu0 %v353
    %8231 = vmatpush1.msra.mxu0 %v352
    %8232 = vmatprep.subr.mxu0 %v357
    %8233 = vmatpush1.msra.mxu0 %v356
    %8234 = vmatprep.subr.mxu0 %v361
    %8235 = vmatpush1.msra.mxu0 %v360
    %8236 = vmatprep.subr.mxu0 %v365
    %8237 = vmatpush1.msra.mxu0 %v364
    %8238 = vmatprep.subr.mxu0 %v369
    %8239 = vmatpush1.msra.mxu0 %v368
    %8240 = vmatprep.subr.mxu0 %v373
    %8241 = vmatpush1.msra.mxu0 %v372
    %8242 = vmatprep.subr.mxu0 %v377
    %8243 = vmatpush1.msra.mxu0 %v376
    %8244 = vmatprep.subr.mxu0 %v381
    %8245 = vmatpush1.msra.mxu0 %v380
    %8246 = vmatprep.subr.mxu0 %v385
    %8247 = vmatpush1.msra.mxu0 %v384
    %8248 = vmatprep.subr.mxu0 %v389
    %8249 = vmatpush1.msra.mxu0 %v388
    %8250 = vmatprep.subr.mxu0 %v393
    %8251 = vmatpush1.msra.mxu0 %v392
    %8252 = vmatprep.subr.mxu0 %v397
    %8253 = vmatpush1.msra.mxu0 %v396
    %8254 = vmatprep.subr.mxu0 %v401
    %8255 = vmatpush1.msra.mxu0 %v400
    %8256 = vmatprep.subr.mxu0 0.0
    %8257 = vmatpush1.msra.mxu0 0.0
    %8258 = vmatprep.subr.mxu0 0.0
    %8259 = vmatpush1.msra.mxu0 0.0
    %8260 = vmatprep.subr.mxu0 0.0
    %8261 = vmatpush1.msra.mxu0 0.0
    %8262 = vmatprep.subr.mxu0 0.0
    %8263 = vmatpush1.msra.mxu0 0.0
    %8264 = vmatprep.subr.mxu0 0.0
    %8265 = vmatpush1.msra.mxu0 0.0
    %8266 = vmatprep.subr.mxu0 0.0
    %8267 = vmatpush1.msra.mxu0 0.0
    %8268 = vmatprep.subr.mxu0 0.0
    %8269 = vmatpush1.msra.mxu0 0.0
    %8270 = vmatprep.subr.mxu0 0.0
    %8271 = vmatpush1.msra.mxu0 0.0
    %8272 = vmatprep.subr.mxu0 0.0
    %8273 = vmatpush1.msra.mxu0 0.0
    %8274 = vmatprep.subr.mxu0 0.0
    %8275 = vmatpush1.msra.mxu0 0.0
    %8276 = vmatprep.subr.mxu0 0.0
    %8277 = vmatpush1.msra.mxu0 0.0
    %8278 = vmatprep.subr.mxu0 0.0
    %8279 = vmatpush1.msra.mxu0 0.0
    %8280 = vmatprep.subr.mxu0 0.0
    %8281 = vmatpush1.msra.mxu0 0.0
    %8282 = vmatprep.subr.mxu0 0.0
    %8283 = vmatpush1.msra.mxu0 0.0
    %8284 = vmatprep.subr.mxu0 0.0
    %8285 = vmatpush1.msra.mxu0 0.0
    %8286 = vmatprep.subr.mxu0 0.0
    %8287 = vmatpush1.msra.mxu0 0.0
    %8288 = vmatprep.mubr.f32.mxu0 0.0
    %8289 = vmatmul.mubr.f32.gmra.mrb[0].mxu0 %v7910
    %v8290 = vpop.f32.mrb[0].mxu0
    %v8291 = vadd.f32 0.0, %v8290
    %v8292 = vpop.f32.mrb[0].mxu0
    %v8293 = vadd.f32 0.0, %v8292
    %8294 = vdwg.mxu0
    %8295 = vmatprep.subr.mxu0 %v343
    %8296 = vmatpush1.msra.mxu0 %v342
    %8297 = vmatprep.subr.mxu0 %v347
    %8298 = vmatpush1.msra.mxu0 %v346
    %8299 = vmatprep.subr.mxu0 %v351
    %8300 = vmatpush1.msra.mxu0 %v350
    %8301 = vmatprep.subr.mxu0 %v355
    %8302 = vmatpush1.msra.mxu0 %v354
    %8303 = vmatprep.subr.mxu0 %v359
    %8304 = vmatpush1.msra.mxu0 %v358
    %8305 = vmatprep.subr.mxu0 %v363
    %8306 = vmatpush1.msra.mxu0 %v362
    %8307 = vmatprep.subr.mxu0 %v367
    %8308 = vmatpush1.msra.mxu0 %v366
    %8309 = vmatprep.subr.mxu0 %v371
    %8310 = vmatpush1.msra.mxu0 %v370
    %8311 = vmatprep.subr.mxu0 %v375
    %8312 = vmatpush1.msra.mxu0 %v374
    %8313 = vmatprep.subr.mxu0 %v379
    %8314 = vmatpush1.msra.mxu0 %v378
    %8315 = vmatprep.subr.mxu0 %v383
    %8316 = vmatpush1.msra.mxu0 %v382
    %8317 = vmatprep.subr.mxu0 %v387
    %8318 = vmatpush1.msra.mxu0 %v386
    %8319 = vmatprep.subr.mxu0 %v391
    %8320 = vmatpush1.msra.mxu0 %v390
    %8321 = vmatprep.subr.mxu0 %v395
    %8322 = vmatpush1.msra.mxu0 %v394
    %8323 = vmatprep.subr.mxu0 %v399
    %8324 = vmatpush1.msra.mxu0 %v398
    %8325 = vmatprep.subr.mxu0 %v403
    %8326 = vmatpush1.msra.mxu0 %v402
    %8327 = vmatprep.subr.mxu0 0.0
    %8328 = vmatpush1.msra.mxu0 0.0
    %8329 = vmatprep.subr.mxu0 0.0
    %8330 = vmatpush1.msra.mxu0 0.0
    %8331 = vmatprep.subr.mxu0 0.0
    %8332 = vmatpush1.msra.mxu0 0.0
    %8333 = vmatprep.subr.mxu0 0.0
    %8334 = vmatpush1.msra.mxu0 0.0
    %8335 = vmatprep.subr.mxu0 0.0
    %8336 = vmatpush1.msra.mxu0 0.0
    %8337 = vmatprep.subr.mxu0 0.0
    %8338 = vmatpush1.msra.mxu0 0.0
    %8339 = vmatprep.subr.mxu0 0.0
    %8340 = vmatpush1.msra.mxu0 0.0
    %8341 = vmatprep.subr.mxu0 0.0
    %8342 = vmatpush1.msra.mxu0 0.0
    %8343 = vmatprep.subr.mxu0 0.0
    %8344 = vmatpush1.msra.mxu0 0.0
    %8345 = vmatprep.subr.mxu0 0.0
    %8346 = vmatpush1.msra.mxu0 0.0
    %8347 = vmatprep.subr.mxu0 0.0
    %8348 = vmatpush1.msra.mxu0 0.0
    %8349 = vmatprep.subr.mxu0 0.0
    %8350 = vmatpush1.msra.mxu0 0.0
    %8351 = vmatprep.subr.mxu0 0.0
    %8352 = vmatpush1.msra.mxu0 0.0
    %8353 = vmatprep.subr.mxu0 0.0
    %8354 = vmatpush1.msra.mxu0 0.0
    %8355 = vmatprep.subr.mxu0 0.0
    %8356 = vmatpush1.msra.mxu0 0.0
    %8357 = vmatprep.subr.mxu0 0.0
    %8358 = vmatpush1.msra.mxu0 0.0
    %8359 = vmatprep.mubr.f32.mxu0 0.0
    %8360 = vmatmul.mubr.f32.gmra.mrb[0].mxu0 %v7910
    %v8361 = vpop.f32.mrb[0].mxu0
    %v8362 = vadd.f32 0.0, %v8361
    %v8363 = vpop.f32.mrb[0].mxu0
    %v8364 = vadd.f32 0.0, %v8363
    %8365 = vdwg.mxu0
    %v8366 = vadd.f32 %v4747, %v8291
    %v8367 = vadd.f32 %v4749, %v8293
    %v8368 = vadd.f32 %v4818, %v8362
    %v8369 = vadd.f32 %v4820, %v8364
    %v8370 = vxor.u32 %v8366, 2147483648
    %v8371 = vxor.u32 %v8367, 2147483648
    %v8372 = vxor.u32 %v8368, 2147483648
    %v8373 = vmul.f32 %v8370, 1.442695
    %v8374 = vpow.pop %v8373
    %v8375 = vmul.f32 %v8371, 1.442695
    %v8376 = vpow.pop %v8375
    %v8377 = vmul.f32 %v8372, 1.442695
    %v8378 = vpow.pop %v8377
    %v8379 = vadd.f32 %v8374, 1.0
    %v8380 = vadd.f32 %v8376, 1.0
    %v8381 = vadd.f32 %v8378, 1.0
    %v8382 = vrcp.pop %v8379
    %v8383 = vmul.f32 1.0, %v8382
    %v8384 = vrcp.pop %v8380
    %v8385 = vmul.f32 1.0, %v8384
    %v8386 = vrcp.pop %v8381
    %v8387 = vmul.f32 1.0, %v8386
    %v8388 = vtanh.pop %v8369
    %v8389 = vmul.f32 %v8385, %v7908
    %v8390 = vmul.f32 %v8383, %v8388
    %v8391 = vadd.f32 %v8389, %v8390
    %v8392 = vtanh.pop %v8391
    %v8393 = vmul.f32 %v8387, %v8392
    %8394 = vmatprep.subr.mxu0 %v469
    %8395 = vmatpush1.msra.mxu0 %v468
    %8396 = vmatprep.subr.mxu0 %v473
    %8397 = vmatpush1.msra.mxu0 %v472
    %8398 = vmatprep.subr.mxu0 %v477
    %8399 = vmatpush1.msra.mxu0 %v476
    %8400 = vmatprep.subr.mxu0 %v481
    %8401 = vmatpush1.msra.mxu0 %v480
    %8402 = vmatprep.subr.mxu0 %v485
    %8403 = vmatpush1.msra.mxu0 %v484
    %8404 = vmatprep.subr.mxu0 %v489
    %8405 = vmatpush1.msra.mxu0 %v488
    %8406 = vmatprep.subr.mxu0 %v493
    %8407 = vmatpush1.msra.mxu0 %v492
    %8408 = vmatprep.subr.mxu0 %v497
    %8409 = vmatpush1.msra.mxu0 %v496
    %8410 = vmatprep.subr.mxu0 %v501
    %8411 = vmatpush1.msra.mxu0 %v500
    %8412 = vmatprep.subr.mxu0 %v505
    %8413 = vmatpush1.msra.mxu0 %v504
    %8414 = vmatprep.subr.mxu0 %v509
    %8415 = vmatpush1.msra.mxu0 %v508
    %8416 = vmatprep.subr.mxu0 %v513
    %8417 = vmatpush1.msra.mxu0 %v512
    %8418 = vmatprep.subr.mxu0 %v517
    %8419 = vmatpush1.msra.mxu0 %v516
    %8420 = vmatprep.subr.mxu0 %v521
    %8421 = vmatpush1.msra.mxu0 %v520
    %8422 = vmatprep.subr.mxu0 %v525
    %8423 = vmatpush1.msra.mxu0 %v524
    %8424 = vmatprep.subr.mxu0 %v529
    %8425 = vmatpush1.msra.mxu0 %v528
    %8426 = vmatprep.subr.mxu0 0.0
    %8427 = vmatpush1.msra.mxu0 0.0
    %8428 = vmatprep.subr.mxu0 0.0
    %8429 = vmatpush1.msra.mxu0 0.0
    %8430 = vmatprep.subr.mxu0 0.0
    %8431 = vmatpush1.msra.mxu0 0.0
    %8432 = vmatprep.subr.mxu0 0.0
    %8433 = vmatpush1.msra.mxu0 0.0
    %8434 = vmatprep.subr.mxu0 0.0
    %8435 = vmatpush1.msra.mxu0 0.0
    %8436 = vmatprep.subr.mxu0 0.0
    %8437 = vmatpush1.msra.mxu0 0.0
    %8438 = vmatprep.subr.mxu0 0.0
    %8439 = vmatpush1.msra.mxu0 0.0
    %8440 = vmatprep.subr.mxu0 0.0
    %8441 = vmatpush1.msra.mxu0 0.0
    %8442 = vmatprep.subr.mxu0 0.0
    %8443 = vmatpush1.msra.mxu0 0.0
    %8444 = vmatprep.subr.mxu0 0.0
    %8445 = vmatpush1.msra.mxu0 0.0
    %8446 = vmatprep.subr.mxu0 0.0
    %8447 = vmatpush1.msra.mxu0 0.0
    %8448 = vmatprep.subr.mxu0 0.0
    %8449 = vmatpush1.msra.mxu0 0.0
    %8450 = vmatprep.subr.mxu0 0.0
    %8451 = vmatpush1.msra.mxu0 0.0
    %8452 = vmatprep.subr.mxu0 0.0
    %8453 = vmatpush1.msra.mxu0 0.0
    %8454 = vmatprep.subr.mxu0 0.0
    %8455 = vmatpush1.msra.mxu0 0.0
    %8456 = vmatprep.subr.mxu0 0.0
    %8457 = vmatpush1.msra.mxu0 0.0
    %8458 = vmatprep.mubr.f32.mxu0 0.0
    %8459 = vmatmul.mubr.f32.gmra.mrb[0].mxu0 %v8222
    %v8460 = vpop.f32.mrb[0].mxu0
    %v8461 = vadd.f32 0.0, %v8460
    %v8462 = vpop.f32.mrb[0].mxu0
    %v8463 = vadd.f32 0.0, %v8462
    %8464 = vdwg.mxu0
    %8465 = vmatprep.subr.mxu0 %v471
    %8466 = vmatpush1.msra.mxu0 %v470
    %8467 = vmatprep.subr.mxu0 %v475
    %8468 = vmatpush1.msra.mxu0 %v474
    %8469 = vmatprep.subr.mxu0 %v479
    %8470 = vmatpush1.msra.mxu0 %v478
    %8471 = vmatprep.subr.mxu0 %v483
    %8472 = vmatpush1.msra.mxu0 %v482
    %8473 = vmatprep.subr.mxu0 %v487
    %8474 = vmatpush1.msra.mxu0 %v486
    %8475 = vmatprep.subr.mxu0 %v491
    %8476 = vmatpush1.msra.mxu0 %v490
    %8477 = vmatprep.subr.mxu0 %v495
    %8478 = vmatpush1.msra.mxu0 %v494
    %8479 = vmatprep.subr.mxu0 %v499
    %8480 = vmatpush1.msra.mxu0 %v498
    %8481 = vmatprep.subr.mxu0 %v503
    %8482 = vmatpush1.msra.mxu0 %v502
    %8483 = vmatprep.subr.mxu0 %v507
    %8484 = vmatpush1.msra.mxu0 %v506
    %8485 = vmatprep.subr.mxu0 %v511
    %8486 = vmatpush1.msra.mxu0 %v510
    %8487 = vmatprep.subr.mxu0 %v515
    %8488 = vmatpush1.msra.mxu0 %v514
    %8489 = vmatprep.subr.mxu0 %v519
    %8490 = vmatpush1.msra.mxu0 %v518
    %8491 = vmatprep.subr.mxu0 %v523
    %8492 = vmatpush1.msra.mxu0 %v522
    %8493 = vmatprep.subr.mxu0 %v527
    %8494 = vmatpush1.msra.mxu0 %v526
    %8495 = vmatprep.subr.mxu0 %v531
    %8496 = vmatpush1.msra.mxu0 %v530
    %8497 = vmatprep.subr.mxu0 0.0
    %8498 = vmatpush1.msra.mxu0 0.0
    %8499 = vmatprep.subr.mxu0 0.0
    %8500 = vmatpush1.msra.mxu0 0.0
    %8501 = vmatprep.subr.mxu0 0.0
    %8502 = vmatpush1.msra.mxu0 0.0
    %8503 = vmatprep.subr.mxu0 0.0
    %8504 = vmatpush1.msra.mxu0 0.0
    %8505 = vmatprep.subr.mxu0 0.0
    %8506 = vmatpush1.msra.mxu0 0.0
    %8507 = vmatprep.subr.mxu0 0.0
    %8508 = vmatpush1.msra.mxu0 0.0
    %8509 = vmatprep.subr.mxu0 0.0
    %8510 = vmatpush1.msra.mxu0 0.0
    %8511 = vmatprep.subr.mxu0 0.0
    %8512 = vmatpush1.msra.mxu0 0.0
    %8513 = vmatprep.subr.mxu0 0.0
    %8514 = vmatpush1.msra.mxu0 0.0
    %8515 = vmatprep.subr.mxu0 0.0
    %8516 = vmatpush1.msra.mxu0 0.0
    %8517 = vmatprep.subr.mxu0 0.0
    %8518 = vmatpush1.msra.mxu0 0.0
    %8519 = vmatprep.subr.mxu0 0.0
    %8520 = vmatpush1.msra.mxu0 0.0
    %8521 = vmatprep.subr.mxu0 0.0
    %8522 = vmatpush1.msra.mxu0 0.0
    %8523 = vmatprep.subr.mxu0 0.0
    %8524 = vmatpush1.msra.mxu0 0.0
    %8525 = vmatprep.subr.mxu0 0.0
    %8526 = vmatpush1.msra.mxu0 0.0
    %8527 = vmatprep.subr.mxu0 0.0
    %8528 = vmatpush1.msra.mxu0 0.0
    %8529 = vmatprep.mubr.f32.mxu0 0.0
    %8530 = vmatmul.mubr.f32.gmra.mrb[0].mxu0 %v8222
    %v8531 = vpop.f32.mrb[0].mxu0
    %v8532 = vadd.f32 0.0, %v8531
    %v8533 = vpop.f32.mrb[0].mxu0
    %v8534 = vadd.f32 0.0, %v8533
    %8535 = vdwg.mxu0
    %8536 = vmatprep.subr.mxu0 %v405
    %8537 = vmatpush1.msra.mxu0 %v404
    %8538 = vmatprep.subr.mxu0 %v409
    %8539 = vmatpush1.msra.mxu0 %v408
    %8540 = vmatprep.subr.mxu0 %v413
    %8541 = vmatpush1.msra.mxu0 %v412
    %8542 = vmatprep.subr.mxu0 %v417
    %8543 = vmatpush1.msra.mxu0 %v416
    %8544 = vmatprep.subr.mxu0 %v421
    %8545 = vmatpush1.msra.mxu0 %v420
    %8546 = vmatprep.subr.mxu0 %v425
    %8547 = vmatpush1.msra.mxu0 %v424
    %8548 = vmatprep.subr.mxu0 %v429
    %8549 = vmatpush1.msra.mxu0 %v428
    %8550 = vmatprep.subr.mxu0 %v433
    %8551 = vmatpush1.msra.mxu0 %v432
    %8552 = vmatprep.subr.mxu0 %v437
    %8553 = vmatpush1.msra.mxu0 %v436
    %8554 = vmatprep.subr.mxu0 %v441
    %8555 = vmatpush1.msra.mxu0 %v440
    %8556 = vmatprep.subr.mxu0 %v445
    %8557 = vmatpush1.msra.mxu0 %v444
    %8558 = vmatprep.subr.mxu0 %v449
    %8559 = vmatpush1.msra.mxu0 %v448
    %8560 = vmatprep.subr.mxu0 %v453
    %8561 = vmatpush1.msra.mxu0 %v452
    %8562 = vmatprep.subr.mxu0 %v457
    %8563 = vmatpush1.msra.mxu0 %v456
    %8564 = vmatprep.subr.mxu0 %v461
    %8565 = vmatpush1.msra.mxu0 %v460
    %8566 = vmatprep.subr.mxu0 %v465
    %8567 = vmatpush1.msra.mxu0 %v464
    %8568 = vmatprep.subr.mxu0 0.0
    %8569 = vmatpush1.msra.mxu0 0.0
    %8570 = vmatprep.subr.mxu0 0.0
    %8571 = vmatpush1.msra.mxu0 0.0
    %8572 = vmatprep.subr.mxu0 0.0
    %8573 = vmatpush1.msra.mxu0 0.0
    %8574 = vmatprep.subr.mxu0 0.0
    %8575 = vmatpush1.msra.mxu0 0.0
    %8576 = vmatprep.subr.mxu0 0.0
    %8577 = vmatpush1.msra.mxu0 0.0
    %8578 = vmatprep.subr.mxu0 0.0
    %8579 = vmatpush1.msra.mxu0 0.0
    %8580 = vmatprep.subr.mxu0 0.0
    %8581 = vmatpush1.msra.mxu0 0.0
    %8582 = vmatprep.subr.mxu0 0.0
    %8583 = vmatpush1.msra.mxu0 0.0
    %8584 = vmatprep.subr.mxu0 0.0
    %8585 = vmatpush1.msra.mxu0 0.0
    %8586 = vmatprep.subr.mxu0 0.0
    %8587 = vmatpush1.msra.mxu0 0.0
    %8588 = vmatprep.subr.mxu0 0.0
    %8589 = vmatpush1.msra.mxu0 0.0
    %8590 = vmatprep.subr.mxu0 0.0
    %8591 = vmatpush1.msra.mxu0 0.0
    %8592 = vmatprep.subr.mxu0 0.0
    %8593 = vmatpush1.msra.mxu0 0.0
    %8594 = vmatprep.subr.mxu0 0.0
    %8595 = vmatpush1.msra.mxu0 0.0
    %8596 = vmatprep.subr.mxu0 0.0
    %8597 = vmatpush1.msra.mxu0 0.0
    %8598 = vmatprep.subr.mxu0 0.0
    %8599 = vmatpush1.msra.mxu0 0.0
    %8600 = vmatprep.mubr.f32.mxu0 0.0
    %8601 = vmatmul.mubr.f32.gmra.mrb[0].mxu0 %v8393
    %v8602 = vpop.f32.mrb[0].mxu0
    %v8603 = vadd.f32 %v8461, %v8602
    %v8604 = vpop.f32.mrb[0].mxu0
    %v8605 = vadd.f32 %v8463, %v8604
    %8606 = vdwg.mxu0
    %8607 = vmatprep.subr.mxu0 %v407
    %8608 = vmatpush1.msra.mxu0 %v406
    %8609 = vmatprep.subr.mxu0 %v411
    %8610 = vmatpush1.msra.mxu0 %v410
    %8611 = vmatprep.subr.mxu0 %v415
    %8612 = vmatpush1.msra.mxu0 %v414
    %8613 = vmatprep.subr.mxu0 %v419
    %8614 = vmatpush1.msra.mxu0 %v418
    %8615 = vmatprep.subr.mxu0 %v423
    %8616 = vmatpush1.msra.mxu0 %v422
    %8617 = vmatprep.subr.mxu0 %v427
    %8618 = vmatpush1.msra.mxu0 %v426
    %8619 = vmatprep.subr.mxu0 %v431
    %8620 = vmatpush1.msra.mxu0 %v430
    %8621 = vmatprep.subr.mxu0 %v435
    %8622 = vmatpush1.msra.mxu0 %v434
    %8623 = vmatprep.subr.mxu0 %v439
    %8624 = vmatpush1.msra.mxu0 %v438
    %8625 = vmatprep.subr.mxu0 %v443
    %8626 = vmatpush1.msra.mxu0 %v442
    %8627 = vmatprep.subr.mxu0 %v447
    %8628 = vmatpush1.msra.mxu0 %v446
    %8629 = vmatprep.subr.mxu0 %v451
    %8630 = vmatpush1.msra.mxu0 %v450
    %8631 = vmatprep.subr.mxu0 %v455
    %8632 = vmatpush1.msra.mxu0 %v454
    %8633 = vmatprep.subr.mxu0 %v459
    %8634 = vmatpush1.msra.mxu0 %v458
    %8635 = vmatprep.subr.mxu0 %v463
    %8636 = vmatpush1.msra.mxu0 %v462
    %8637 = vmatprep.subr.mxu0 %v467
    %8638 = vmatpush1.msra.mxu0 %v466
    %8639 = vmatprep.subr.mxu0 0.0
    %8640 = vmatpush1.msra.mxu0 0.0
    %8641 = vmatprep.subr.mxu0 0.0
    %8642 = vmatpush1.msra.mxu0 0.0
    %8643 = vmatprep.subr.mxu0 0.0
    %8644 = vmatpush1.msra.mxu0 0.0
    %8645 = vmatprep.subr.mxu0 0.0
    %8646 = vmatpush1.msra.mxu0 0.0
    %8647 = vmatprep.subr.mxu0 0.0
    %8648 = vmatpush1.msra.mxu0 0.0
    %8649 = vmatprep.subr.mxu0 0.0
    %8650 = vmatpush1.msra.mxu0 0.0
    %8651 = vmatprep.subr.mxu0 0.0
    %8652 = vmatpush1.msra.mxu0 0.0
    %8653 = vmatprep.subr.mxu0 0.0
    %8654 = vmatpush1.msra.mxu0 0.0
    %8655 = vmatprep.subr.mxu0 0.0
    %8656 = vmatpush1.msra.mxu0 0.0
    %8657 = vmatprep.subr.mxu0 0.0
    %8658 = vmatpush1.msra.mxu0 0.0
    %8659 = vmatprep.subr.mxu0 0.0
    %8660 = vmatpush1.msra.mxu0 0.0
    %8661 = vmatprep.subr.mxu0 0.0
    %8662 = vmatpush1.msra.mxu0 0.0
    %8663 = vmatprep.subr.mxu0 0.0
    %8664 = vmatpush1.msra.mxu0 0.0
    %8665 = vmatprep.subr.mxu0 0.0
    %8666 = vmatpush1.msra.mxu0 0.0
    %8667 = vmatprep.subr.mxu0 0.0
    %8668 = vmatpush1.msra.mxu0 0.0
    %8669 = vmatprep.subr.mxu0 0.0
    %8670 = vmatpush1.msra.mxu0 0.0
    %8671 = vmatprep.mubr.f32.mxu0 0.0
    %8672 = vmatmul.mubr.f32.gmra.mrb[0].mxu0 %v8393
    %v8673 = vpop.f32.mrb[0].mxu0
    %v8674 = vadd.f32 %v8532, %v8673
    %v8675 = vpop.f32.mrb[0].mxu0
    %v8676 = vadd.f32 %v8534, %v8675
    %8677 = vdwg.mxu0
    %v8678 = vadd.f32 %v8603, %v5280
    %v8679 = vadd.f32 %v8605, %v5284
    %v8680 = vadd.f32 %v8674, %v5288
    %v8681 = vadd.f32 %v8676, %v5292
    %v8682 = vxor.u32 %v8678, 2147483648
    %v8683 = vxor.u32 %v8679, 2147483648
    %v8684 = vxor.u32 %v8680, 2147483648
    %v8685 = vmul.f32 %v8682, 1.442695
    %v8686 = vpow.pop %v8685
    %v8687 = vmul.f32 %v8683, 1.442695
    %v8688 = vpow.pop %v8687
    %v8689 = vmul.f32 %v8684, 1.442695
    %v8690 = vpow.pop %v8689
    %v8691 = vadd.f32 %v8686, 1.0
    %v8692 = vadd.f32 %v8688, 1.0
    %v8693 = vadd.f32 %v8690, 1.0
    %v8694 = vrcp.pop %v8691
    %v8695 = vmul.f32 1.0, %v8694
    %v8696 = vrcp.pop %v8692
    %v8697 = vmul.f32 1.0, %v8696
    %v8698 = vrcp.pop %v8693
    %v8699 = vmul.f32 1.0, %v8698
    %v8700 = vtanh.pop %v8681
    %v8701 = vmul.f32 %v8697, %v8220
    %v8702 = vmul.f32 %v8695, %v8700
    %v8703 = vadd.f32 %v8701, %v8702
    %v8704 = vtanh.pop %v8703
    %v8705 = vmul.f32 %v8699, %v8704
    %8706 = vst [vmem:[#allocation2 + $0x7] sm:$0x1] %v8705
    %v8707 = vld [vmem:[#allocation2] sm:$0xff]
    %v8708 = vld [vmem:[%s13] sm:$0x1]
    %v8710 = vlaneseq
    %v8711 = vshrl.u32 %v8710, 7
    %v8712 = vsub.s32 0, %v8711
    %v8713 = vrot.slane %v8708, %v8712
    %v8715 = vmul.f32 %v8707, %v8713
    %8716 = vadd.xlane.f32.xlu0 %v8715
    %v8717 = vpop.xlane.xlu0 %8716
    %v8718 = vld [vmem:[#allocation3] sm:$0x1]
    %v8720 = vlaneseq
    %v8721 = vshrl.u32 %v8720, 7
    %v8722 = vsub.s32 0, %v8721
    %v8723 = vrot.slane %v8718, %v8722
    %v8725 = vadd.f32 %v8717, %v8723
    %vm8726 = vcmask 7168
    %8727 = vst.msk [vmem:[%s15] sm:$0xff] %vm8726, %v8725
    // Predicated region
    $region90: #{recurrent_autoencoder_forward.1} parent=1 // pred_check
      _
    $region91: #{recurrent_autoencoder_forward.1} parent=1 // pred_check_branch
      %8729 = sbr.rel (0) target = $region93
    $region92: #{recurrent_autoencoder_forward.1} parent=1 // pred_region
      _
    $region93: #{recurrent_autoencoder_forward.1} parent=1 // pred_fallthru
      _
    // Predicated region
    $region94: #{recurrent_autoencoder_forward.1} parent=1 // pred_check
      _
    $region95: #{recurrent_autoencoder_forward.1} parent=1 // pred_check_branch
      %8731 = sbr.rel (0) target = $region97
    $region96: #{recurrent_autoencoder_forward.1} parent=1 // pred_region
      _
    $region97: #{recurrent_autoencoder_forward.1} parent=1 // pred_fallthru
      _
    %8732 = vsyncpa [#allocation5], 1
    %8733 = vsyncpa [#allocation7], 1
    %8734 = vsyncpa [#allocation10], 1
    %8735 = vsyncpa [#allocation13], 1

</llo_original>
